<compile_context>
chip_gen: v6e
topology: v6e:2x2x1
jax: 0.10.0
libtpu: 0.0.40
codegen_flags: <defaults>
</compile_context>

<pallas_src>
import functools

import jax
import jax.numpy as jnp
from jax import lax
from jax.experimental import pallas as pl
from jax.experimental.pallas import tpu as pltpu

BN_EPS = 1e-5

# (Cin, Cout, relu_after, maxpool_after) for the 8 conv+BN layers of stage1.
LAYERS = [
    (1,   16,  False, False),
    (16,  16,  True,  True),
    (16,  32,  False, False),
    (32,  32,  True,  True),
    (32,  64,  False, False),
    (64,  64,  True,  True),
    (64,  128, False, False),
    (128, 128, True,  True),
]


# ---------------------------------------------------------------------------
# generation-aware sizing
# ---------------------------------------------------------------------------
@functools.lru_cache(maxsize=None)
def _vmem_limit_bytes():
    cap = 128 * 1024 * 1024
    try:
        cap = int(pltpu.get_tpu_info().vmem_capacity_bytes)
    except Exception:
        pass
    # scoped limit: half of physical, clamped to [16 MiB, 64 MiB]
    return int(min(64 * 1024 * 1024, max(16 * 1024 * 1024, cap // 2)))


def _compiler_params():
    return pltpu.CompilerParams(
        dimension_semantics=("parallel",),
        vmem_limit_bytes=_vmem_limit_bytes(),
    )


def _pick_bt(batch, rows_per_elem, bytes_per_elem, *, max_rows=4096):
    """Largest batch-block that fits the VMEM budget, keeps >=2 grid steps when
    B >= 2 (so v7x's two TensorCores both get work), and caps block rows."""
    min_steps = 2 if batch >= 2 else 1
    budget = (_vmem_limit_bytes() * 3) // 4
    best = 1
    for bt in range(1, batch + 1):
        if batch % bt:
            continue
        if batch // bt < min_steps:
            continue
        if bt * bytes_per_elem > budget:
            continue
        if bt * rows_per_elem > max_rows:
            continue
        best = bt
    return best


# ---------------------------------------------------------------------------
# in-kernel helpers
# ---------------------------------------------------------------------------
def _stats(y):
    """Per-channel (sum, sum-of-squares) over the row axis -> (2, C) f32."""
    return jnp.concatenate(
        [jnp.sum(y, axis=0, keepdims=True), jnp.sum(y * y, axis=0, keepdims=True)],
        axis=0)


def _bn_fold(stats_sum, gamma, beta, count):
    """Fold training-mode BN (batch mean / biased var) into y -> a*y + b."""
    inv_n = 1.0 / count
    mu = stats_sum[0:1, :] * inv_n
    var = jnp.maximum(stats_sum[1:2, :] * inv_n - mu * mu, 0.0)
    a = gamma * lax.rsqrt(var + BN_EPS)
    b = beta - mu * a
    return a, b


def _shift_halo(z, bt, lp):
    """zprev[i] = z[i-1], znext[i] = z[i+1] within each length-lp batch segment
    of the flattened (bt*lp, C) array, zero-padded at segment edges.
    Uses pltpu.roll (XLU) + an iota edge mask (no sublane concatenates)."""
    m, cols = z.shape
    idx = lax.broadcasted_iota(jnp.int32, (bt, lp, cols), 1)
    not_first = jnp.where(idx == 0, 0.0, 1.0).reshape(m, cols)
    not_last = jnp.where(idx == lp - 1, 0.0, 1.0).reshape(m, cols)
    zprev = pltpu.roll(z, 1, axis=0) * not_first
    znext = pltpu.roll(z, m - 1, axis=0) * not_last
    return zprev, znext


# ---------------------------------------------------------------------------
# kernels
# ---------------------------------------------------------------------------
def _first_conv_kernel(x_ref, w_ref, cb_ref, o_ref, stat_ref, *, l_in):
    """Layer 0: Conv1d(1 -> 16, k=3, pad=1) on the VPU (Cin == 1).

    x_ref   : (Bt, L, 1) f32
    w_ref   : (3, 16)    f32   tap-major weights
    cb_ref  : (1, 16)    f32   conv bias
    o_ref   : (Bt, L, 16) bf16 un-normalized conv output
    stat_ref: (2, 16)    f32   per-step (sum, sumsq) of the conv output
    """
    bt = x_ref.shape[0]
    m = bt * l_in
    x = x_ref[...].reshape(m, 1)                           # flatten batch into rows
    xprev, xnext = _shift_halo(x, bt, l_in)
    w = w_ref[...]
    y = xprev * w[0:1, :] + x * w[1:2, :] + xnext * w[2:3, :] + cb_ref[...]
    stat_ref[...] = _stats(y)
    o_ref[...] = y.reshape(bt, l_in, w.shape[1]).astype(o_ref.dtype)


def _bn_conv_kernel(stats_ref, gamma_ref, beta_ref, y_ref, w_ref, cb_ref,
                    o_ref, stat_ref, *, relu, pool, count):
    """[BN(prev) (+ReLU) (+MaxPool2)] -> Conv1d(k=3, pad=1) as 3 MXU dots.

    stats_ref: (nprev, 2, Cin) f32  per-step stats of the previous conv output
    gamma_ref/beta_ref: (1, Cin) f32
    y_ref    : (Bt, Lin, Cin) bf16
    w_ref    : (3, Cin, Cout) bf16  tap-major conv weights
    cb_ref   : (1, Cout) f32
    o_ref    : (Bt, Lout, Cout) bf16
    stat_ref : (2, Cout) f32
    """
    bt, l_in, cin = y_ref.shape
    cout = o_ref.shape[2]

    # Fold training-mode BN of the previous layer (reduce per-step stats here so
    # no XLA fusion sits between the pallas_calls).
    a, b = _bn_fold(jnp.sum(stats_ref[...], axis=0), gamma_ref[...],
                    beta_ref[...], count)

    z = a * y_ref[...].astype(jnp.float32) + b             # (Bt, Lin, Cin)
    if relu:
        z = jnp.maximum(z, 0.0)
    z = z.reshape(bt * l_in, cin)                          # flatten: M = Bt*Lin
    if pool:
        z = jnp.max(z.reshape(bt * l_in // 2, 2, cin), axis=1)
    lp = z.shape[0] // bt

    zprev, znext = _shift_halo(z, bt, lp)
    zb = z.astype(jnp.bfloat16)
    pb = zprev.astype(jnp.bfloat16)
    nb = znext.astype(jnp.bfloat16)

    # 3 accumulating bf16 MXU dots (K = Cin) with f32 accumulation; no im2col
    # concat / scratch needed.
    y = jnp.dot(pb, w_ref[0], preferred_element_type=jnp.float32)
    y = y + jnp.dot(zb, w_ref[1], preferred_element_type=jnp.float32)
    y = y + jnp.dot(nb, w_ref[2], preferred_element_type=jnp.float32)
    y = y + cb_ref[...]

    stat_ref[...] = _stats(y)
    o_ref[...] = y.reshape(bt, lp, cout).astype(o_ref.dtype)


def _bn_relu_pool_kernel(stats_ref, gamma_ref, beta_ref, y_ref, o_ref, *, count):
    """Final epilogue: BN affine + ReLU + MaxPool1d(2,2).  Whole-array block."""
    bt, l_in, c = y_ref.shape
    a, b = _bn_fold(jnp.sum(stats_ref[...], axis=0), gamma_ref[...],
                    beta_ref[...], count)
    z = jnp.maximum(a * y_ref[...].astype(jnp.float32) + b, 0.0)
    z = z.reshape(bt * l_in, c)
    z = jnp.max(z.reshape(bt * l_in // 2, 2, c), axis=1)
    o_ref[...] = z.astype(o_ref.dtype)


# ---------------------------------------------------------------------------
# pallas_call wrappers (batch-blocked grid, "parallel")
# ---------------------------------------------------------------------------
def _first_conv(x_bl1, w_t, cb):
    B, L, _ = x_bl1.shape
    cout = w_t.shape[1]
    bytes_per_elem = int(1.25 * (2 * L * 4 + 2 * L * cout * 2 + L * (4 + cout * 4)))
    bt = _pick_bt(B, L, bytes_per_elem)
    nsteps = B // bt
    kernel = functools.partial(_first_conv_kernel, l_in=L)
    return pl.pallas_call(
        kernel,
        grid=(nsteps,),
        in_specs=[
            pl.BlockSpec((bt, L, 1), lambda i: (i, 0, 0)),
            pl.BlockSpec((3, cout), lambda i: (0, 0)),
            pl.BlockSpec((1, cout), lambda i: (0, 0)),
        ],
        out_specs=(
            pl.BlockSpec((bt, L, cout), lambda i: (i, 0, 0)),
            pl.BlockSpec((None, 2, cout), lambda i: (i, 0, 0)),
        ),
        out_shape=(
            jax.ShapeDtypeStruct((B, L, cout), jnp.bfloat16),
            jax.ShapeDtypeStruct((nsteps, 2, cout), jnp.float32),
        ),
        compiler_params=_compiler_params(),
    )(x_bl1, w_t, cb.reshape(1, cout))


def _bn_conv(y_in, stats_prev, gamma, beta, w3, cb, *, relu, pool):
    B, l_in, cin = y_in.shape
    lp = l_in // 2 if pool else l_in
    cout = w3.shape[2]
    nprev = stats_prev.shape[0]
    bytes_per_elem = int(1.25 * (2 * l_in * cin * 2 + 2 * lp * cout * 2
                                 + (l_in * cin + 3 * lp * cin + lp * cout) * 4))
    bt = _pick_bt(B, l_in, bytes_per_elem)
    nsteps = B // bt
    count = float(B * l_in)  # BN(prev) averages over B * Lin samples per channel
    kernel = functools.partial(_bn_conv_kernel, relu=relu, pool=pool, count=count)
    return pl.pallas_call(
        kernel,
        grid=(nsteps,),
        in_specs=[
            pl.BlockSpec((nprev, 2, cin), lambda i: (0, 0, 0)),
            pl.BlockSpec((1, cin), lambda i: (0, 0)),
            pl.BlockSpec((1, cin), lambda i: (0, 0)),
            pl.BlockSpec((bt, l_in, cin), lambda i: (i, 0, 0)),
            pl.BlockSpec((3, cin, cout), lambda i: (0, 0, 0)),
            pl.BlockSpec((1, cout), lambda i: (0, 0)),
        ],
        out_specs=(
            pl.BlockSpec((bt, lp, cout), lambda i: (i, 0, 0)),
            pl.BlockSpec((None, 2, cout), lambda i: (i, 0, 0)),
        ),
        out_shape=(
            jax.ShapeDtypeStruct((B, lp, cout), jnp.bfloat16),
            jax.ShapeDtypeStruct((nsteps, 2, cout), jnp.float32),
        ),
        compiler_params=_compiler_params(),
    )(stats_prev, gamma.reshape(1, cin), beta.reshape(1, cin), y_in, w3,
      cb.reshape(1, cout))


def _bn_relu_pool(y_in, stats_prev, gamma, beta, out_dtype):
    B, l_in, c = y_in.shape
    nprev = stats_prev.shape[0]
    count = float(B * l_in)
    kernel = functools.partial(_bn_relu_pool_kernel, count=count)
    return pl.pallas_call(
        kernel,
        grid=(1,),
        in_specs=[
            pl.BlockSpec((nprev, 2, c), lambda i: (0, 0, 0)),
            pl.BlockSpec((1, c), lambda i: (0, 0)),
            pl.BlockSpec((1, c), lambda i: (0, 0)),
            pl.BlockSpec((B, l_in, c), lambda i: (0, 0, 0)),
        ],
        out_specs=pl.BlockSpec((B * l_in // 2, c), lambda i: (0, 0)),
        out_shape=jax.ShapeDtypeStruct((B * l_in // 2, c), out_dtype),
        compiler_params=pltpu.CompilerParams(
            dimension_semantics=("arbitrary",),
            vmem_limit_bytes=_vmem_limit_bytes()),
    )(stats_prev, gamma.reshape(1, c), beta.reshape(1, c), y_in)


# ---------------------------------------------------------------------------
# parameters / forward
# ---------------------------------------------------------------------------
def init_params(key):
    """Deterministic synthetic parameters with the module's shapes."""
    params = []
    for (cin, cout, _, _) in LAYERS:
        key, kw, kb, kg, kbeta = jax.random.split(key, 5)
        w = 0.1 * jax.random.normal(kw, (cout, cin, 3), jnp.float32)     # Conv1d (O,I,K)
        cb = 0.1 * jax.random.normal(kb, (cout,), jnp.float32)           # Conv1d bias
        gamma = 1.0 + 0.1 * jax.random.normal(kg, (cout,), jnp.float32)  # BN weight
        beta = 0.1 * jax.random.normal(kbeta, (cout,), jnp.float32)      # BN bias
        params.append((w, cb, gamma, beta))
    return params


def cnn_forward(x_ncl, params, out_dtype=jnp.float32):
    """Equivalent of CNN.forward.  x_ncl: (B, 1, L) -> (B, 128, L // 16).

    out_dtype: downstream stages (attention/RNN) may pass jnp.bfloat16 to halve
    the final HBM write; default float32 matches the PyTorch module.
    """
    x = x_ncl.astype(jnp.float32)
    B, _, L = x.shape
    assert L % 16 == 0, "stage1 requires the length to be divisible by 16"
    x = jnp.transpose(x, (0, 2, 1))                      # (B, L, 1) channels-last

    # --- layer 0: Conv1d(1 -> 16) on the VPU, stats fused into the same pass
    w0, cb0, _, _ = params[0]
    w0_t = jnp.transpose(w0[:, 0, :], (1, 0))            # (3, 16) tap-major
    y, stats = _first_conv(x, w0_t, cb0)

    # --- layers 1..7: BN(prev) [+ReLU] [+MaxPool] fused into the next conv
    for idx in range(1, 8):
        cin, cout, _, _ = LAYERS[idx]
        _, _, prev_relu, prev_pool = LAYERS[idx - 1]
        _, _, g_prev, b_prev = params[idx - 1]
        w, cb, _, _ = params[idx]
        # (O,I,K) -> (K,I,O): tap-major weights for the 3 accumulating dots
        w3 = jnp.transpose(w, (2, 1, 0)).astype(jnp.bfloat16)
        y, stats = _bn_conv(y, stats, g_prev, b_prev, w3, cb,
                            relu=prev_relu, pool=prev_pool)

    # --- final BN + ReLU + MaxPool epilogue
    _, _, g_last, b_last = params[7]
    out2d = _bn_relu_pool(y, stats, g_last, b_last, out_dtype)   # (B*L/16, 128)
    l_out = y.shape[1] // 2
    out = out2d.reshape(B, l_out, 128)
    return jnp.transpose(out, (0, 2, 1))                 # back to PyTorch NCL


def reference_forward(x_ncl, params):
    """Pure-JAX f32 reference (NCL layout) for correctness checking."""
    x = x_ncl.astype(jnp.float32)
    for (_, _, relu, pool), (w, cb, gamma, beta) in zip(LAYERS, params):
        y = lax.conv_general_dilated(x, w, window_strides=(1,), padding=((1, 1),),
                                     dimension_numbers=("NCH", "OIH", "NCH"))
        y = y + cb[None, :, None]
        mu = jnp.mean(y, axis=(0, 2), keepdims=True)
        var = jnp.mean((y - mu) ** 2, axis=(0, 2), keepdims=True)
        y = gamma[None, :, None] * (y - mu) / jnp.sqrt(var + BN_EPS) + beta[None, :, None]
        if relu:
            y = jnp.maximum(y, 0.0)
        if pool:
            B, C, Lc = y.shape
            y = y.reshape(B, C, Lc // 2, 2).max(axis=3)
        x = y
    return x


if __name__ == "__main__":
    key = jax.random.PRNGKey(0)
    kx, kp = jax.random.split(key)

    # small shape consistent with the module: batch=4, 1 channel, length=64
    # (batch of 4 exercises the batch-blocked grid: Bt=2, 2 parallel steps).
    x = jax.random.normal(kx, (4, 1, 64), jnp.float32)
    params = init_params(kp)

    fwd = jax.jit(cnn_forward)
    out = jax.block_until_ready(fwd(x, params))
    assert out.shape == (4, 128, 64 // 16), out.shape
    assert bool(jnp.all(jnp.isfinite(out))), "non-finite output"

    ref = reference_forward(x, params)
    err = jnp.abs(out - ref)
    max_err = float(jnp.max(err))
    mean_err = float(jnp.mean(err))
    # bf16 activations / bf16 MXU matmuls over 8 conv+BN layers: small absolute
    # tolerance on the unit-scale (BatchNorm-normalized) outputs.
    assert max_err < 1e-1 and mean_err < 2e-2, (max_err, mean_err)

    print("KERNEL_OK")
</pallas_src>

<mosaic_0001>
module attributes {stable_mosaic.version = 11 : i64} {
  func.func @_first_conv_kernel(%arg0: i32, %arg1: memref<2x64x1xf32, #tpu.memory_space<vmem>>, %arg2: memref<3x16xf32, #tpu.memory_space<vmem>>, %arg3: memref<1x16xf32, #tpu.memory_space<vmem>>, %arg4: memref<2x64x16xbf16, #tpu.memory_space<vmem>>, %arg5: memref<1x2x16xf32, #tpu.memory_space<vmem>>) attributes {dimension_semantics = [#tpu.dimension_semantics<parallel>], iteration_bounds = array<i64: 2>, scalar_prefetch = 0 : i64, scratch_operands = 0 : i64, tpu.core_type = #tpu.core_type<tc>, window_params = [{transform_indices = @transform_0, window_bounds = array<i64: 2, 64, 1>}, {pipeline_mode = #tpu.pipeline_mode<synchronous>, transform_indices = @transform_1, window_bounds = array<i64: 3, 16>}, {pipeline_mode = #tpu.pipeline_mode<synchronous>, transform_indices = @transform_2, window_bounds = array<i64: 1, 16>}, {transform_indices = @transform_3, window_bounds = array<i64: 2, 64, 16>}, {transform_indices = @transform_4, window_bounds = array<i64: 1, 2, 16>}]} {
    %c0 = arith.constant 0 : index
    %c0_0 = arith.constant 0 : index
    %c0_1 = arith.constant 0 : index
    %0 = vector.load %arg1[%c0, %c0_0, %c0_1] : memref<2x64x1xf32, #tpu.memory_space<vmem>>, vector<2x64x1xf32>
    %1 = vector.shape_cast %0 : vector<2x64x1xf32> to vector<128x1xf32>
    %2 = tpu.iota {dimensions = array<i32: 1>} : vector<2x64x1xi32>
    %c0_i32 = arith.constant 0 : i32
    %3 = vector.broadcast %c0_i32 : i32 to vector<2x64x1xi32>
    %4 = arith.cmpi eq, %2, %3 : vector<2x64x1xi32>
    %cst = arith.constant 0.000000e+00 : f32
    %cst_2 = arith.constant 1.000000e+00 : f32
    %5 = vector.broadcast %cst : f32 to vector<2x64x1xf32>
    %6 = vector.broadcast %cst_2 : f32 to vector<2x64x1xf32>
    %7 = arith.select %4, %5, %6 : vector<2x64x1xi1>, vector<2x64x1xf32>
    %8 = vector.shape_cast %7 : vector<2x64x1xf32> to vector<128x1xf32>
    %c63_i32 = arith.constant 63 : i32
    %9 = vector.broadcast %c63_i32 : i32 to vector<2x64x1xi32>
    %10 = arith.cmpi eq, %2, %9 : vector<2x64x1xi32>
    %cst_3 = arith.constant 0.000000e+00 : f32
    %cst_4 = arith.constant 1.000000e+00 : f32
    %11 = vector.broadcast %cst_3 : f32 to vector<2x64x1xf32>
    %12 = vector.broadcast %cst_4 : f32 to vector<2x64x1xf32>
    %13 = arith.select %10, %11, %12 : vector<2x64x1xi1>, vector<2x64x1xf32>
    %14 = vector.shape_cast %13 : vector<2x64x1xf32> to vector<128x1xf32>
    %c1_i32 = arith.constant 1 : i32
    %15 = tpu.dynamic_rotate %1 by %c1_i32 dim 0 : vector<128x1xf32>, i32 -> vector<128x1xf32>
    %16 = arith.mulf %15, %8 : vector<128x1xf32>
    %c127_i32 = arith.constant 127 : i32
    %17 = tpu.dynamic_rotate %1 by %c127_i32 dim 0 : vector<128x1xf32>, i32 -> vector<128x1xf32>
    %18 = arith.mulf %17, %14 : vector<128x1xf32>
    %c0_5 = arith.constant 0 : index
    %c0_6 = arith.constant 0 : index
    %19 = vector.load %arg2[%c0_5, %c0_6] : memref<3x16xf32, #tpu.memory_space<vmem>>, vector<3x16xf32>
    %20 = vector.extract_strided_slice %19 {offsets = [0, 0], sizes = [1, 16], strides = [1, 1]} : vector<3x16xf32> to vector<1x16xf32>
    %21 = vector.broadcast %16 : vector<128x1xf32> to vector<128x16xf32>
    %22 = vector.broadcast %20 : vector<1x16xf32> to vector<128x16xf32>
    %23 = arith.mulf %21, %22 : vector<128x16xf32>
    %24 = vector.extract_strided_slice %19 {offsets = [1, 0], sizes = [1, 16], strides = [1, 1]} : vector<3x16xf32> to vector<1x16xf32>
    %25 = vector.broadcast %1 : vector<128x1xf32> to vector<128x16xf32>
    %26 = vector.broadcast %24 : vector<1x16xf32> to vector<128x16xf32>
    %27 = arith.mulf %25, %26 : vector<128x16xf32>
    %28 = arith.addf %23, %27 : vector<128x16xf32>
    %29 = vector.extract_strided_slice %19 {offsets = [2, 0], sizes = [1, 16], strides = [1, 1]} : vector<3x16xf32> to vector<1x16xf32>
    %30 = vector.broadcast %18 : vector<128x1xf32> to vector<128x16xf32>
    %31 = vector.broadcast %29 : vector<1x16xf32> to vector<128x16xf32>
    %32 = arith.mulf %30, %31 : vector<128x16xf32>
    %33 = arith.addf %28, %32 : vector<128x16xf32>
    %c0_7 = arith.constant 0 : index
    %c0_8 = arith.constant 0 : index
    %34 = vector.load %arg3[%c0_7, %c0_8] : memref<1x16xf32, #tpu.memory_space<vmem>>, vector<1x16xf32>
    %35 = vector.broadcast %34 : vector<1x16xf32> to vector<128x16xf32>
    %36 = arith.addf %33, %35 : vector<128x16xf32>
    %cst_9 = arith.constant dense<0.000000e+00> : vector<16xf32>
    %37 = vector.multi_reduction <add>, %36, %cst_9 [0] : vector<128x16xf32> to vector<16xf32>
    %38 = vector.shape_cast %37 : vector<16xf32> to vector<1x16xf32>
    %39 = arith.mulf %36, %36 : vector<128x16xf32>
    %cst_10 = arith.constant dense<0.000000e+00> : vector<16xf32>
    %40 = vector.multi_reduction <add>, %39, %cst_10 [0] : vector<128x16xf32> to vector<16xf32>
    %41 = vector.shape_cast %40 : vector<16xf32> to vector<1x16xf32>
    %42 = tpu.concatenate %38, %41 in 0 : vector<1x16xf32>, vector<1x16xf32> -> vector<2x16xf32>
    %c0_11 = arith.constant 0 : index
    %c0_12 = arith.constant 0 : index
    %c0_13 = arith.constant 0 : index
    %43 = vector.load %arg5[%c0_11, %c0_12, %c0_13] : memref<1x2x16xf32, #tpu.memory_space<vmem>>, vector<1x2x16xf32>
    %44 = vector.shape_cast %43 : vector<1x2x16xf32> to vector<2x16xf32>
    %45 = vector.shape_cast %42 : vector<2x16xf32> to vector<1x2x16xf32>
    tpu.vector_store %arg5[%c0_11, %c0_12, %c0_13], %45 {strides = array<i32>} : memref<1x2x16xf32, #tpu.memory_space<vmem>>, vector<1x2x16xf32>,
    %46 = vector.shape_cast %36 : vector<128x16xf32> to vector<2x64x16xf32>
    %47 = arith.truncf %46 : vector<2x64x16xf32> to vector<2x64x16xbf16>
    %c0_14 = arith.constant 0 : index
    %c0_15 = arith.constant 0 : index
    %c0_16 = arith.constant 0 : index
    %48 = vector.load %arg4[%c0_14, %c0_15, %c0_16] : memref<2x64x16xbf16, #tpu.memory_space<vmem>>, vector<2x64x16xbf16>
    tpu.vector_store %arg4[%c0_14, %c0_15, %c0_16], %47 {strides = array<i32>} : memref<2x64x16xbf16, #tpu.memory_space<vmem>>, vector<2x64x16xbf16>,
    return
  }
  func.func @transform_0(%arg0: i32) -> (i32, i32, i32) {
    %c0_i32 = arith.constant 0 : i32
    %c0_i32_0 = arith.constant 0 : i32
    %c0_i32_1 = arith.constant 0 : i32
    return %arg0, %c0_i32, %c0_i32_0 : i32, i32, i32
  }
  func.func @transform_1(%arg0: i32) -> (i32, i32) {
    %c0_i32 = arith.constant 0 : i32
    %c0_i32_0 = arith.constant 0 : i32
    %c0_i32_1 = arith.constant 0 : i32
    return %c0_i32, %c0_i32_0 : i32, i32
  }
  func.func @transform_2(%arg0: i32) -> (i32, i32) {
    %c0_i32 = arith.constant 0 : i32
    %c0_i32_0 = arith.constant 0 : i32
    %c0_i32_1 = arith.constant 0 : i32
    return %c0_i32, %c0_i32_0 : i32, i32
  }
  func.func @transform_3(%arg0: i32) -> (i32, i32, i32) {
    %c0_i32 = arith.constant 0 : i32
    %c0_i32_0 = arith.constant 0 : i32
    %c0_i32_1 = arith.constant 0 : i32
    return %arg0, %c0_i32, %c0_i32_0 : i32, i32, i32
  }
  func.func @transform_4(%arg0: i32) -> (i32, i32, i32) {
    %c0_i32 = arith.constant 0 : i32
    %c0_i32_0 = arith.constant 0 : i32
    %c0_i32_1 = arith.constant 0 : i32
    return %arg0, %c0_i32, %c0_i32_0 : i32, i32, i32
  }
}

module attributes {stable_mosaic.version = 11 : i64} {
  func.func @_bn_conv_kernel(%arg0: i32, %arg1: memref<2x2x16xf32, #tpu.memory_space<vmem>>, %arg2: memref<1x16xf32, #tpu.memory_space<vmem>>, %arg3: memref<1x16xf32, #tpu.memory_space<vmem>>, %arg4: memref<2x64x16xbf16, #tpu.memory_space<vmem>>, %arg5: memref<3x16x16xbf16, #tpu.memory_space<vmem>>, %arg6: memref<1x16xf32, #tpu.memory_space<vmem>>, %arg7: memref<2x64x16xbf16, #tpu.memory_space<vmem>>, %arg8: memref<1x2x16xf32, #tpu.memory_space<vmem>>) attributes {dimension_semantics = [#tpu.dimension_semantics<parallel>], iteration_bounds = array<i64: 2>, scalar_prefetch = 0 : i64, scratch_operands = 0 : i64, tpu.core_type = #tpu.core_type<tc>, window_params = [{pipeline_mode = #tpu.pipeline_mode<synchronous>, transform_indices = @transform_0, window_bounds = array<i64: 2, 2, 16>}, {pipeline_mode = #tpu.pipeline_mode<synchronous>, transform_indices = @transform_1, window_bounds = array<i64: 1, 16>}, {pipeline_mode = #tpu.pipeline_mode<synchronous>, transform_indices = @transform_2, window_bounds = array<i64: 1, 16>}, {transform_indices = @transform_3, window_bounds = array<i64: 2, 64, 16>}, {pipeline_mode = #tpu.pipeline_mode<synchronous>, transform_indices = @transform_4, window_bounds = array<i64: 3, 16, 16>}, {pipeline_mode = #tpu.pipeline_mode<synchronous>, transform_indices = @transform_5, window_bounds = array<i64: 1, 16>}, {transform_indices = @transform_6, window_bounds = array<i64: 2, 64, 16>}, {transform_indices = @transform_7, window_bounds = array<i64: 1, 2, 16>}]} {
    %c0 = arith.constant 0 : index
    %c0_0 = arith.constant 0 : index
    %c0_1 = arith.constant 0 : index
    %0 = vector.load %arg1[%c0, %c0_0, %c0_1] : memref<2x2x16xf32, #tpu.memory_space<vmem>>, vector<2x2x16xf32>
    %cst = arith.constant dense<0.000000e+00> : vector<2x16xf32>
    %1 = vector.multi_reduction <add>, %0, %cst [0] : vector<2x2x16xf32> to vector<2x16xf32>
    %c0_2 = arith.constant 0 : index
    %c0_3 = arith.constant 0 : index
    %2 = vector.load %arg2[%c0_2, %c0_3] : memref<1x16xf32, #tpu.memory_space<vmem>>, vector<1x16xf32>
    %c0_4 = arith.constant 0 : index
    %c0_5 = arith.constant 0 : index
    %3 = vector.load %arg3[%c0_4, %c0_5] : memref<1x16xf32, #tpu.memory_space<vmem>>, vector<1x16xf32>
    %4 = vector.extract_strided_slice %1 {offsets = [0, 0], sizes = [1, 16], strides = [1, 1]} : vector<2x16xf32> to vector<1x16xf32>
    %cst_6 = arith.constant 3.906250e-03 : f32
    %5 = vector.broadcast %cst_6 : f32 to vector<1x16xf32>
    %6 = arith.mulf %4, %5 : vector<1x16xf32>
    %7 = vector.extract_strided_slice %1 {offsets = [1, 0], sizes = [1, 16], strides = [1, 1]} : vector<2x16xf32> to vector<1x16xf32>
    %cst_7 = arith.constant 3.906250e-03 : f32
    %8 = vector.broadcast %cst_7 : f32 to vector<1x16xf32>
    %9 = arith.mulf %7, %8 : vector<1x16xf32>
    %10 = arith.mulf %6, %6 : vector<1x16xf32>
    %11 = arith.subf %9, %10 : vector<1x16xf32>
    %cst_8 = arith.constant 0.000000e+00 : f32
    %12 = vector.broadcast %cst_8 : f32 to vector<1x16xf32>
    %13 = arith.maximumf %11, %12 : vector<1x16xf32>
    %cst_9 = arith.constant 9.99999974E-6 : f32
    %14 = vector.broadcast %cst_9 : f32 to vector<1x16xf32>
    %15 = arith.addf %13, %14 : vector<1x16xf32>
    %16 = math.rsqrt %15 : vector<1x16xf32>
    %17 = arith.mulf %2, %16 : vector<1x16xf32>
    %18 = arith.mulf %6, %17 : vector<1x16xf32>
    %19 = arith.subf %3, %18 : vector<1x16xf32>
    %c0_10 = arith.constant 0 : index
    %c0_11 = arith.constant 0 : index
    %c0_12 = arith.constant 0 : index
    %20 = vector.load %arg4[%c0_10, %c0_11, %c0_12] : memref<2x64x16xbf16, #tpu.memory_space<vmem>>, vector<2x64x16xbf16>
    %21 = arith.extf %20 : vector<2x64x16xbf16> to vector<2x64x16xf32>
    %22 = vector.shape_cast %17 : vector<1x16xf32> to vector<1x1x16xf32>
    %23 = vector.broadcast %22 : vector<1x1x16xf32> to vector<2x64x16xf32>
    %24 = arith.mulf %23, %21 : vector<2x64x16xf32>
    %25 = vector.shape_cast %19 : vector<1x16xf32> to vector<1x1x16xf32>
    %26 = vector.broadcast %25 : vector<1x1x16xf32> to vector<2x64x16xf32>
    %27 = arith.addf %24, %26 : vector<2x64x16xf32>
    %28 = vector.shape_cast %27 : vector<2x64x16xf32> to vector<128x16xf32>
    %29 = tpu.iota {dimensions = array<i32: 1>} : vector<2x64x16xi32>
    %c0_i32 = arith.constant 0 : i32
    %30 = vector.broadcast %c0_i32 : i32 to vector<2x64x16xi32>
    %31 = arith.cmpi eq, %29, %30 : vector<2x64x16xi32>
    %cst_13 = arith.constant 0.000000e+00 : f32
    %cst_14 = arith.constant 1.000000e+00 : f32
    %32 = vector.broadcast %cst_13 : f32 to vector<2x64x16xf32>
    %33 = vector.broadcast %cst_14 : f32 to vector<2x64x16xf32>
    %34 = arith.select %31, %32, %33 : vector<2x64x16xi1>, vector<2x64x16xf32>
    %35 = vector.shape_cast %34 : vector<2x64x16xf32> to vector<128x16xf32>
    %c63_i32 = arith.constant 63 : i32
    %36 = vector.broadcast %c63_i32 : i32 to vector<2x64x16xi32>
    %37 = arith.cmpi eq, %29, %36 : vector<2x64x16xi32>
    %cst_15 = arith.constant 0.000000e+00 : f32
    %cst_16 = arith.constant 1.000000e+00 : f32
    %38 = vector.broadcast %cst_15 : f32 to vector<2x64x16xf32>
    %39 = vector.broadcast %cst_16 : f32 to vector<2x64x16xf32>
    %40 = arith.select %37, %38, %39 : vector<2x64x16xi1>, vector<2x64x16xf32>
    %41 = vector.shape_cast %40 : vector<2x64x16xf32> to vector<128x16xf32>
    %c1_i32 = arith.constant 1 : i32
    %42 = tpu.dynamic_rotate %28 by %c1_i32 dim 0 : vector<128x16xf32>, i32 -> vector<128x16xf32>
    %43 = arith.mulf %42, %35 : vector<128x16xf32>
    %c127_i32 = arith.constant 127 : i32
    %44 = tpu.dynamic_rotate %28 by %c127_i32 dim 0 : vector<128x16xf32>, i32 -> vector<128x16xf32>
    %45 = arith.mulf %44, %41 : vector<128x16xf32>
    %46 = arith.truncf %28 : vector<128x16xf32> to vector<128x16xbf16>
    %47 = arith.truncf %43 : vector<128x16xf32> to vector<128x16xbf16>
    %48 = arith.truncf %45 : vector<128x16xf32> to vector<128x16xbf16>
    %c0_17 = arith.constant 0 : index
    %c0_18 = arith.constant 0 : index
    %c0_19 = arith.constant 0 : index
    %49 = vector.load %arg5[%c0_17, %c0_18, %c0_19] : memref<3x16x16xbf16, #tpu.memory_space<vmem>>, vector<1x16x16xbf16>
    %50 = vector.shape_cast %49 : vector<1x16x16xbf16> to vector<16x16xbf16>
    %cst_20 = arith.constant dense<0.000000e+00> : vector<128x16xf32>
    %51 = tpu.matmul %47, %50, %cst_20 {dimension_numbers = #tpu.dot_dimension_numbers<[1], [0], [0], [1], [0, 0, 1, 1], [], []>} : vector<128x16xbf16>, vector<16x16xbf16>, vector<128x16xf32> -> vector<128x16xf32>
    %c1 = arith.constant 1 : index
    %c0_21 = arith.constant 0 : index
    %c0_22 = arith.constant 0 : index
    %52 = vector.load %arg5[%c1, %c0_21, %c0_22] : memref<3x16x16xbf16, #tpu.memory_space<vmem>>, vector<1x16x16xbf16>
    %53 = vector.shape_cast %52 : vector<1x16x16xbf16> to vector<16x16xbf16>
    %cst_23 = arith.constant dense<0.000000e+00> : vector<128x16xf32>
    %54 = tpu.matmul %46, %53, %cst_23 {dimension_numbers = #tpu.dot_dimension_numbers<[1], [0], [0], [1], [0, 0, 1, 1], [], []>} : vector<128x16xbf16>, vector<16x16xbf16>, vector<128x16xf32> -> vector<128x16xf32>
    %55 = arith.addf %51, %54 : vector<128x16xf32>
    %c2 = arith.constant 2 : index
    %c0_24 = arith.constant 0 : index
    %c0_25 = arith.constant 0 : index
    %56 = vector.load %arg5[%c2, %c0_24, %c0_25] : memref<3x16x16xbf16, #tpu.memory_space<vmem>>, vector<1x16x16xbf16>
    %57 = vector.shape_cast %56 : vector<1x16x16xbf16> to vector<16x16xbf16>
    %cst_26 = arith.constant dense<0.000000e+00> : vector<128x16xf32>
    %58 = tpu.matmul %48, %57, %cst_26 {dimension_numbers = #tpu.dot_dimension_numbers<[1], [0], [0], [1], [0, 0, 1, 1], [], []>} : vector<128x16xbf16>, vector<16x16xbf16>, vector<128x16xf32> -> vector<128x16xf32>
    %59 = arith.addf %55, %58 : vector<128x16xf32>
    %c0_27 = arith.constant 0 : index
    %c0_28 = arith.constant 0 : index
    %60 = vector.load %arg6[%c0_27, %c0_28] : memref<1x16xf32, #tpu.memory_space<vmem>>, vector<1x16xf32>
    %61 = vector.broadcast %60 : vector<1x16xf32> to vector<128x16xf32>
    %62 = arith.addf %59, %61 : vector<128x16xf32>
    %cst_29 = arith.constant dense<0.000000e+00> : vector<16xf32>
    %63 = vector.multi_reduction <add>, %62, %cst_29 [0] : vector<128x16xf32> to vector<16xf32>
    %64 = vector.shape_cast %63 : vector<16xf32> to vector<1x16xf32>
    %65 = arith.mulf %62, %62 : vector<128x16xf32>
    %cst_30 = arith.constant dense<0.000000e+00> : vector<16xf32>
    %66 = vector.multi_reduction <add>, %65, %cst_30 [0] : vector<128x16xf32> to vector<16xf32>
    %67 = vector.shape_cast %66 : vector<16xf32> to vector<1x16xf32>
    %68 = tpu.concatenate %64, %67 in 0 : vector<1x16xf32>, vector<1x16xf32> -> vector<2x16xf32>
    %c0_31 = arith.constant 0 : index
    %c0_32 = arith.constant 0 : index
    %c0_33 = arith.constant 0 : index
    %69 = vector.load %arg8[%c0_31, %c0_32, %c0_33] : memref<1x2x16xf32, #tpu.memory_space<vmem>>, vector<1x2x16xf32>
    %70 = vector.shape_cast %69 : vector<1x2x16xf32> to vector<2x16xf32>
    %71 = vector.shape_cast %68 : vector<2x16xf32> to vector<1x2x16xf32>
    tpu.vector_store %arg8[%c0_31, %c0_32, %c0_33], %71 {strides = array<i32>} : memref<1x2x16xf32, #tpu.memory_space<vmem>>, vector<1x2x16xf32>,
    %72 = vector.shape_cast %62 : vector<128x16xf32> to vector<2x64x16xf32>
    %73 = arith.truncf %72 : vector<2x64x16xf32> to vector<2x64x16xbf16>
    %c0_34 = arith.constant 0 : index
    %c0_35 = arith.constant 0 : index
    %c0_36 = arith.constant 0 : index
    %74 = vector.load %arg7[%c0_34, %c0_35, %c0_36] : memref<2x64x16xbf16, #tpu.memory_space<vmem>>, vector<2x64x16xbf16>
    tpu.vector_store %arg7[%c0_34, %c0_35, %c0_36], %73 {strides = array<i32>} : memref<2x64x16xbf16, #tpu.memory_space<vmem>>, vector<2x64x16xbf16>,
    return
  }
  func.func @transform_0(%arg0: i32) -> (i32, i32, i32) {
    %c0_i32 = arith.constant 0 : i32
    %c0_i32_0 = arith.constant 0 : i32
    %c0_i32_1 = arith.constant 0 : i32
    %c0_i32_2 = arith.constant 0 : i32
    return %c0_i32, %c0_i32_0, %c0_i32_1 : i32, i32, i32
  }
  func.func @transform_1(%arg0: i32) -> (i32, i32) {
    %c0_i32 = arith.constant 0 : i32
    %c0_i32_0 = arith.constant 0 : i32
    %c0_i32_1 = arith.constant 0 : i32
    return %c0_i32, %c0_i32_0 : i32, i32
  }
  func.func @transform_2(%arg0: i32) -> (i32, i32) {
    %c0_i32 = arith.constant 0 : i32
    %c0_i32_0 = arith.constant 0 : i32
    %c0_i32_1 = arith.constant 0 : i32
    return %c0_i32, %c0_i32_0 : i32, i32
  }
  func.func @transform_3(%arg0: i32) -> (i32, i32, i32) {
    %c0_i32 = arith.constant 0 : i32
    %c0_i32_0 = arith.constant 0 : i32
    %c0_i32_1 = arith.constant 0 : i32
    return %arg0, %c0_i32, %c0_i32_0 : i32, i32, i32
  }
  func.func @transform_4(%arg0: i32) -> (i32, i32, i32) {
    %c0_i32 = arith.constant 0 : i32
    %c0_i32_0 = arith.constant 0 : i32
    %c0_i32_1 = arith.constant 0 : i32
    %c0_i32_2 = arith.constant 0 : i32
    return %c0_i32, %c0_i32_0, %c0_i32_1 : i32, i32, i32
  }
  func.func @transform_5(%arg0: i32) -> (i32, i32) {
    %c0_i32 = arith.constant 0 : i32
    %c0_i32_0 = arith.constant 0 : i32
    %c0_i32_1 = arith.constant 0 : i32
    return %c0_i32, %c0_i32_0 : i32, i32
  }
  func.func @transform_6(%arg0: i32) -> (i32, i32, i32) {
    %c0_i32 = arith.constant 0 : i32
    %c0_i32_0 = arith.constant 0 : i32
    %c0_i32_1 = arith.constant 0 : i32
    return %arg0, %c0_i32, %c0_i32_0 : i32, i32, i32
  }
  func.func @transform_7(%arg0: i32) -> (i32, i32, i32) {
    %c0_i32 = arith.constant 0 : i32
    %c0_i32_0 = arith.constant 0 : i32
    %c0_i32_1 = arith.constant 0 : i32
    return %arg0, %c0_i32, %c0_i32_0 : i32, i32, i32
  }
}

module attributes {stable_mosaic.version = 11 : i64} {
  func.func @_bn_conv_kernel(%arg0: i32, %arg1: memref<2x2x16xf32, #tpu.memory_space<vmem>>, %arg2: memref<1x16xf32, #tpu.memory_space<vmem>>, %arg3: memref<1x16xf32, #tpu.memory_space<vmem>>, %arg4: memref<2x64x16xbf16, #tpu.memory_space<vmem>>, %arg5: memref<3x16x32xbf16, #tpu.memory_space<vmem>>, %arg6: memref<1x32xf32, #tpu.memory_space<vmem>>, %arg7: memref<2x32x32xbf16, #tpu.memory_space<vmem>>, %arg8: memref<1x2x32xf32, #tpu.memory_space<vmem>>) attributes {dimension_semantics = [#tpu.dimension_semantics<parallel>], iteration_bounds = array<i64: 2>, scalar_prefetch = 0 : i64, scratch_operands = 0 : i64, tpu.core_type = #tpu.core_type<tc>, window_params = [{pipeline_mode = #tpu.pipeline_mode<synchronous>, transform_indices = @transform_0, window_bounds = array<i64: 2, 2, 16>}, {pipeline_mode = #tpu.pipeline_mode<synchronous>, transform_indices = @transform_1, window_bounds = array<i64: 1, 16>}, {pipeline_mode = #tpu.pipeline_mode<synchronous>, transform_indices = @transform_2, window_bounds = array<i64: 1, 16>}, {transform_indices = @transform_3, window_bounds = array<i64: 2, 64, 16>}, {pipeline_mode = #tpu.pipeline_mode<synchronous>, transform_indices = @transform_4, window_bounds = array<i64: 3, 16, 32>}, {pipeline_mode = #tpu.pipeline_mode<synchronous>, transform_indices = @transform_5, window_bounds = array<i64: 1, 32>}, {transform_indices = @transform_6, window_bounds = array<i64: 2, 32, 32>}, {transform_indices = @transform_7, window_bounds = array<i64: 1, 2, 32>}]} {
    %c0 = arith.constant 0 : index
    %c0_0 = arith.constant 0 : index
    %c0_1 = arith.constant 0 : index
    %0 = vector.load %arg1[%c0, %c0_0, %c0_1] : memref<2x2x16xf32, #tpu.memory_space<vmem>>, vector<2x2x16xf32>
    %cst = arith.constant dense<0.000000e+00> : vector<2x16xf32>
    %1 = vector.multi_reduction <add>, %0, %cst [0] : vector<2x2x16xf32> to vector<2x16xf32>
    %c0_2 = arith.constant 0 : index
    %c0_3 = arith.constant 0 : index
    %2 = vector.load %arg2[%c0_2, %c0_3] : memref<1x16xf32, #tpu.memory_space<vmem>>, vector<1x16xf32>
    %c0_4 = arith.constant 0 : index
    %c0_5 = arith.constant 0 : index
    %3 = vector.load %arg3[%c0_4, %c0_5] : memref<1x16xf32, #tpu.memory_space<vmem>>, vector<1x16xf32>
    %4 = vector.extract_strided_slice %1 {offsets = [0, 0], sizes = [1, 16], strides = [1, 1]} : vector<2x16xf32> to vector<1x16xf32>
    %cst_6 = arith.constant 3.906250e-03 : f32
    %5 = vector.broadcast %cst_6 : f32 to vector<1x16xf32>
    %6 = arith.mulf %4, %5 : vector<1x16xf32>
    %7 = vector.extract_strided_slice %1 {offsets = [1, 0], sizes = [1, 16], strides = [1, 1]} : vector<2x16xf32> to vector<1x16xf32>
    %cst_7 = arith.constant 3.906250e-03 : f32
    %8 = vector.broadcast %cst_7 : f32 to vector<1x16xf32>
    %9 = arith.mulf %7, %8 : vector<1x16xf32>
    %10 = arith.mulf %6, %6 : vector<1x16xf32>
    %11 = arith.subf %9, %10 : vector<1x16xf32>
    %cst_8 = arith.constant 0.000000e+00 : f32
    %12 = vector.broadcast %cst_8 : f32 to vector<1x16xf32>
    %13 = arith.maximumf %11, %12 : vector<1x16xf32>
    %cst_9 = arith.constant 9.99999974E-6 : f32
    %14 = vector.broadcast %cst_9 : f32 to vector<1x16xf32>
    %15 = arith.addf %13, %14 : vector<1x16xf32>
    %16 = math.rsqrt %15 : vector<1x16xf32>
    %17 = arith.mulf %2, %16 : vector<1x16xf32>
    %18 = arith.mulf %6, %17 : vector<1x16xf32>
    %19 = arith.subf %3, %18 : vector<1x16xf32>
    %c0_10 = arith.constant 0 : index
    %c0_11 = arith.constant 0 : index
    %c0_12 = arith.constant 0 : index
    %20 = vector.load %arg4[%c0_10, %c0_11, %c0_12] : memref<2x64x16xbf16, #tpu.memory_space<vmem>>, vector<2x64x16xbf16>
    %21 = arith.extf %20 : vector<2x64x16xbf16> to vector<2x64x16xf32>
    %22 = vector.shape_cast %17 : vector<1x16xf32> to vector<1x1x16xf32>
    %23 = vector.broadcast %22 : vector<1x1x16xf32> to vector<2x64x16xf32>
    %24 = arith.mulf %23, %21 : vector<2x64x16xf32>
    %25 = vector.shape_cast %19 : vector<1x16xf32> to vector<1x1x16xf32>
    %26 = vector.broadcast %25 : vector<1x1x16xf32> to vector<2x64x16xf32>
    %27 = arith.addf %24, %26 : vector<2x64x16xf32>
    %cst_13 = arith.constant 0.000000e+00 : f32
    %28 = vector.broadcast %cst_13 : f32 to vector<2x64x16xf32>
    %29 = arith.maximumf %27, %28 : vector<2x64x16xf32>
    %30 = vector.shape_cast %29 : vector<2x64x16xf32> to vector<128x16xf32>
    %31 = vector.shape_cast %30 : vector<128x16xf32> to vector<64x2x16xf32>
    %cst_14 = arith.constant dense<0xFF800000> : vector<64x16xf32>
    %32 = vector.multi_reduction <maximumf>, %31, %cst_14 [1] : vector<64x2x16xf32> to vector<64x16xf32>
    %33 = tpu.iota {dimensions = array<i32: 1>} : vector<2x32x16xi32>
    %c0_i32 = arith.constant 0 : i32
    %34 = vector.broadcast %c0_i32 : i32 to vector<2x32x16xi32>
    %35 = arith.cmpi eq, %33, %34 : vector<2x32x16xi32>
    %cst_15 = arith.constant 0.000000e+00 : f32
    %cst_16 = arith.constant 1.000000e+00 : f32
    %36 = vector.broadcast %cst_15 : f32 to vector<2x32x16xf32>
    %37 = vector.broadcast %cst_16 : f32 to vector<2x32x16xf32>
    %38 = arith.select %35, %36, %37 : vector<2x32x16xi1>, vector<2x32x16xf32>
    %39 = vector.shape_cast %38 : vector<2x32x16xf32> to vector<64x16xf32>
    %c31_i32 = arith.constant 31 : i32
    %40 = vector.broadcast %c31_i32 : i32 to vector<2x32x16xi32>
    %41 = arith.cmpi eq, %33, %40 : vector<2x32x16xi32>
    %cst_17 = arith.constant 0.000000e+00 : f32
    %cst_18 = arith.constant 1.000000e+00 : f32
    %42 = vector.broadcast %cst_17 : f32 to vector<2x32x16xf32>
    %43 = vector.broadcast %cst_18 : f32 to vector<2x32x16xf32>
    %44 = arith.select %41, %42, %43 : vector<2x32x16xi1>, vector<2x32x16xf32>
    %45 = vector.shape_cast %44 : vector<2x32x16xf32> to vector<64x16xf32>
    %c1_i32 = arith.constant 1 : i32
    %46 = tpu.dynamic_rotate %32 by %c1_i32 dim 0 : vector<64x16xf32>, i32 -> vector<64x16xf32>
    %47 = arith.mulf %46, %39 : vector<64x16xf32>
    %c63_i32 = arith.constant 63 : i32
    %48 = tpu.dynamic_rotate %32 by %c63_i32 dim 0 : vector<64x16xf32>, i32 -> vector<64x16xf32>
    %49 = arith.mulf %48, %45 : vector<64x16xf32>
    %50 = arith.truncf %32 : vector<64x16xf32> to vector<64x16xbf16>
    %51 = arith.truncf %47 : vector<64x16xf32> to vector<64x16xbf16>
    %52 = arith.truncf %49 : vector<64x16xf32> to vector<64x16xbf16>
    %c0_19 = arith.constant 0 : index
    %c0_20 = arith.constant 0 : index
    %c0_21 = arith.constant 0 : index
    %53 = vector.load %arg5[%c0_19, %c0_20, %c0_21] : memref<3x16x32xbf16, #tpu.memory_space<vmem>>, vector<1x16x32xbf16>
    %54 = vector.shape_cast %53 : vector<1x16x32xbf16> to vector<16x32xbf16>
    %cst_22 = arith.constant dense<0.000000e+00> : vector<64x32xf32>
    %55 = tpu.matmul %51, %54, %cst_22 {dimension_numbers = #tpu.dot_dimension_numbers<[1], [0], [0], [1], [0, 0, 1, 1], [], []>} : vector<64x16xbf16>, vector<16x32xbf16>, vector<64x32xf32> -> vector<64x32xf32>
    %c1 = arith.constant 1 : index
    %c0_23 = arith.constant 0 : index
    %c0_24 = arith.constant 0 : index
    %56 = vector.load %arg5[%c1, %c0_23, %c0_24] : memref<3x16x32xbf16, #tpu.memory_space<vmem>>, vector<1x16x32xbf16>
    %57 = vector.shape_cast %56 : vector<1x16x32xbf16> to vector<16x32xbf16>
    %cst_25 = arith.constant dense<0.000000e+00> : vector<64x32xf32>
    %58 = tpu.matmul %50, %57, %cst_25 {dimension_numbers = #tpu.dot_dimension_numbers<[1], [0], [0], [1], [0, 0, 1, 1], [], []>} : vector<64x16xbf16>, vector<16x32xbf16>, vector<64x32xf32> -> vector<64x32xf32>
    %59 = arith.addf %55, %58 : vector<64x32xf32>
    %c2 = arith.constant 2 : index
    %c0_26 = arith.constant 0 : index
    %c0_27 = arith.constant 0 : index
    %60 = vector.load %arg5[%c2, %c0_26, %c0_27] : memref<3x16x32xbf16, #tpu.memory_space<vmem>>, vector<1x16x32xbf16>
    %61 = vector.shape_cast %60 : vector<1x16x32xbf16> to vector<16x32xbf16>
    %cst_28 = arith.constant dense<0.000000e+00> : vector<64x32xf32>
    %62 = tpu.matmul %52, %61, %cst_28 {dimension_numbers = #tpu.dot_dimension_numbers<[1], [0], [0], [1], [0, 0, 1, 1], [], []>} : vector<64x16xbf16>, vector<16x32xbf16>, vector<64x32xf32> -> vector<64x32xf32>
    %63 = arith.addf %59, %62 : vector<64x32xf32>
    %c0_29 = arith.constant 0 : index
    %c0_30 = arith.constant 0 : index
    %64 = vector.load %arg6[%c0_29, %c0_30] : memref<1x32xf32, #tpu.memory_space<vmem>>, vector<1x32xf32>
    %65 = vector.broadcast %64 : vector<1x32xf32> to vector<64x32xf32>
    %66 = arith.addf %63, %65 : vector<64x32xf32>
    %cst_31 = arith.constant dense<0.000000e+00> : vector<32xf32>
    %67 = vector.multi_reduction <add>, %66, %cst_31 [0] : vector<64x32xf32> to vector<32xf32>
    %68 = vector.shape_cast %67 : vector<32xf32> to vector<1x32xf32>
    %69 = arith.mulf %66, %66 : vector<64x32xf32>
    %cst_32 = arith.constant dense<0.000000e+00> : vector<32xf32>
    %70 = vector.multi_reduction <add>, %69, %cst_32 [0] : vector<64x32xf32> to vector<32xf32>
    %71 = vector.shape_cast %70 : vector<32xf32> to vector<1x32xf32>
    %72 = tpu.concatenate %68, %71 in 0 : vector<1x32xf32>, vector<1x32xf32> -> vector<2x32xf32>
    %c0_33 = arith.constant 0 : index
    %c0_34 = arith.constant 0 : index
    %c0_35 = arith.constant 0 : index
    %73 = vector.load %arg8[%c0_33, %c0_34, %c0_35] : memref<1x2x32xf32, #tpu.memory_space<vmem>>, vector<1x2x32xf32>
    %74 = vector.shape_cast %73 : vector<1x2x32xf32> to vector<2x32xf32>
    %75 = vector.shape_cast %72 : vector<2x32xf32> to vector<1x2x32xf32>
    tpu.vector_store %arg8[%c0_33, %c0_34, %c0_35], %75 {strides = array<i32>} : memref<1x2x32xf32, #tpu.memory_space<vmem>>, vector<1x2x32xf32>,
    %76 = vector.shape_cast %66 : vector<64x32xf32> to vector<2x32x32xf32>
    %77 = arith.truncf %76 : vector<2x32x32xf32> to vector<2x32x32xbf16>
    %c0_36 = arith.constant 0 : index
    %c0_37 = arith.constant 0 : index
    %c0_38 = arith.constant 0 : index
    %78 = vector.load %arg7[%c0_36, %c0_37, %c0_38] : memref<2x32x32xbf16, #tpu.memory_space<vmem>>, vector<2x32x32xbf16>
    tpu.vector_store %arg7[%c0_36, %c0_37, %c0_38], %77 {strides = array<i32>} : memref<2x32x32xbf16, #tpu.memory_space<vmem>>, vector<2x32x32xbf16>,
    return
  }
  func.func @transform_0(%arg0: i32) -> (i32, i32, i32) {
    %c0_i32 = arith.constant 0 : i32
    %c0_i32_0 = arith.constant 0 : i32
    %c0_i32_1 = arith.constant 0 : i32
    %c0_i32_2 = arith.constant 0 : i32
    return %c0_i32, %c0_i32_0, %c0_i32_1 : i32, i32, i32
  }
  func.func @transform_1(%arg0: i32) -> (i32, i32) {
    %c0_i32 = arith.constant 0 : i32
    %c0_i32_0 = arith.constant 0 : i32
    %c0_i32_1 = arith.constant 0 : i32
    return %c0_i32, %c0_i32_0 : i32, i32
  }
  func.func @transform_2(%arg0: i32) -> (i32, i32) {
    %c0_i32 = arith.constant 0 : i32
    %c0_i32_0 = arith.constant 0 : i32
    %c0_i32_1 = arith.constant 0 : i32
    return %c0_i32, %c0_i32_0 : i32, i32
  }
  func.func @transform_3(%arg0: i32) -> (i32, i32, i32) {
    %c0_i32 = arith.constant 0 : i32
    %c0_i32_0 = arith.constant 0 : i32
    %c0_i32_1 = arith.constant 0 : i32
    return %arg0, %c0_i32, %c0_i32_0 : i32, i32, i32
  }
  func.func @transform_4(%arg0: i32) -> (i32, i32, i32) {
    %c0_i32 = arith.constant 0 : i32
    %c0_i32_0 = arith.constant 0 : i32
    %c0_i32_1 = arith.constant 0 : i32
    %c0_i32_2 = arith.constant 0 : i32
    return %c0_i32, %c0_i32_0, %c0_i32_1 : i32, i32, i32
  }
  func.func @transform_5(%arg0: i32) -> (i32, i32) {
    %c0_i32 = arith.constant 0 : i32
    %c0_i32_0 = arith.constant 0 : i32
    %c0_i32_1 = arith.constant 0 : i32
    return %c0_i32, %c0_i32_0 : i32, i32
  }
  func.func @transform_6(%arg0: i32) -> (i32, i32, i32) {
    %c0_i32 = arith.constant 0 : i32
    %c0_i32_0 = arith.constant 0 : i32
    %c0_i32_1 = arith.constant 0 : i32
    return %arg0, %c0_i32, %c0_i32_0 : i32, i32, i32
  }
  func.func @transform_7(%arg0: i32) -> (i32, i32, i32) {
    %c0_i32 = arith.constant 0 : i32
    %c0_i32_0 = arith.constant 0 : i32
    %c0_i32_1 = arith.constant 0 : i32
    return %arg0, %c0_i32, %c0_i32_0 : i32, i32, i32
  }
}

module attributes {stable_mosaic.version = 11 : i64} {
  func.func @_bn_conv_kernel(%arg0: i32, %arg1: memref<2x2x32xf32, #tpu.memory_space<vmem>>, %arg2: memref<1x32xf32, #tpu.memory_space<vmem>>, %arg3: memref<1x32xf32, #tpu.memory_space<vmem>>, %arg4: memref<2x32x32xbf16, #tpu.memory_space<vmem>>, %arg5: memref<3x32x32xbf16, #tpu.memory_space<vmem>>, %arg6: memref<1x32xf32, #tpu.memory_space<vmem>>, %arg7: memref<2x32x32xbf16, #tpu.memory_space<vmem>>, %arg8: memref<1x2x32xf32, #tpu.memory_space<vmem>>) attributes {dimension_semantics = [#tpu.dimension_semantics<parallel>], iteration_bounds = array<i64: 2>, scalar_prefetch = 0 : i64, scratch_operands = 0 : i64, tpu.core_type = #tpu.core_type<tc>, window_params = [{pipeline_mode = #tpu.pipeline_mode<synchronous>, transform_indices = @transform_0, window_bounds = array<i64: 2, 2, 32>}, {pipeline_mode = #tpu.pipeline_mode<synchronous>, transform_indices = @transform_1, window_bounds = array<i64: 1, 32>}, {pipeline_mode = #tpu.pipeline_mode<synchronous>, transform_indices = @transform_2, window_bounds = array<i64: 1, 32>}, {transform_indices = @transform_3, window_bounds = array<i64: 2, 32, 32>}, {pipeline_mode = #tpu.pipeline_mode<synchronous>, transform_indices = @transform_4, window_bounds = array<i64: 3, 32, 32>}, {pipeline_mode = #tpu.pipeline_mode<synchronous>, transform_indices = @transform_5, window_bounds = array<i64: 1, 32>}, {transform_indices = @transform_6, window_bounds = array<i64: 2, 32, 32>}, {transform_indices = @transform_7, window_bounds = array<i64: 1, 2, 32>}]} {
    %c0 = arith.constant 0 : index
    %c0_0 = arith.constant 0 : index
    %c0_1 = arith.constant 0 : index
    %0 = vector.load %arg1[%c0, %c0_0, %c0_1] : memref<2x2x32xf32, #tpu.memory_space<vmem>>, vector<2x2x32xf32>
    %cst = arith.constant dense<0.000000e+00> : vector<2x32xf32>
    %1 = vector.multi_reduction <add>, %0, %cst [0] : vector<2x2x32xf32> to vector<2x32xf32>
    %c0_2 = arith.constant 0 : index
    %c0_3 = arith.constant 0 : index
    %2 = vector.load %arg2[%c0_2, %c0_3] : memref<1x32xf32, #tpu.memory_space<vmem>>, vector<1x32xf32>
    %c0_4 = arith.constant 0 : index
    %c0_5 = arith.constant 0 : index
    %3 = vector.load %arg3[%c0_4, %c0_5] : memref<1x32xf32, #tpu.memory_space<vmem>>, vector<1x32xf32>
    %4 = vector.extract_strided_slice %1 {offsets = [0, 0], sizes = [1, 32], strides = [1, 1]} : vector<2x32xf32> to vector<1x32xf32>
    %cst_6 = arith.constant 7.812500e-03 : f32
    %5 = vector.broadcast %cst_6 : f32 to vector<1x32xf32>
    %6 = arith.mulf %4, %5 : vector<1x32xf32>
    %7 = vector.extract_strided_slice %1 {offsets = [1, 0], sizes = [1, 32], strides = [1, 1]} : vector<2x32xf32> to vector<1x32xf32>
    %cst_7 = arith.constant 7.812500e-03 : f32
    %8 = vector.broadcast %cst_7 : f32 to vector<1x32xf32>
    %9 = arith.mulf %7, %8 : vector<1x32xf32>
    %10 = arith.mulf %6, %6 : vector<1x32xf32>
    %11 = arith.subf %9, %10 : vector<1x32xf32>
    %cst_8 = arith.constant 0.000000e+00 : f32
    %12 = vector.broadcast %cst_8 : f32 to vector<1x32xf32>
    %13 = arith.maximumf %11, %12 : vector<1x32xf32>
    %cst_9 = arith.constant 9.99999974E-6 : f32
    %14 = vector.broadcast %cst_9 : f32 to vector<1x32xf32>
    %15 = arith.addf %13, %14 : vector<1x32xf32>
    %16 = math.rsqrt %15 : vector<1x32xf32>
    %17 = arith.mulf %2, %16 : vector<1x32xf32>
    %18 = arith.mulf %6, %17 : vector<1x32xf32>
    %19 = arith.subf %3, %18 : vector<1x32xf32>
    %c0_10 = arith.constant 0 : index
    %c0_11 = arith.constant 0 : index
    %c0_12 = arith.constant 0 : index
    %20 = vector.load %arg4[%c0_10, %c0_11, %c0_12] : memref<2x32x32xbf16, #tpu.memory_space<vmem>>, vector<2x32x32xbf16>
    %21 = arith.extf %20 : vector<2x32x32xbf16> to vector<2x32x32xf32>
    %22 = vector.shape_cast %17 : vector<1x32xf32> to vector<1x1x32xf32>
    %23 = vector.broadcast %22 : vector<1x1x32xf32> to vector<2x32x32xf32>
    %24 = arith.mulf %23, %21 : vector<2x32x32xf32>
    %25 = vector.shape_cast %19 : vector<1x32xf32> to vector<1x1x32xf32>
    %26 = vector.broadcast %25 : vector<1x1x32xf32> to vector<2x32x32xf32>
    %27 = arith.addf %24, %26 : vector<2x32x32xf32>
    %28 = vector.shape_cast %27 : vector<2x32x32xf32> to vector<64x32xf32>
    %29 = tpu.iota {dimensions = array<i32: 1>} : vector<2x32x32xi32>
    %c0_i32 = arith.constant 0 : i32
    %30 = vector.broadcast %c0_i32 : i32 to vector<2x32x32xi32>
    %31 = arith.cmpi eq, %29, %30 : vector<2x32x32xi32>
    %cst_13 = arith.constant 0.000000e+00 : f32
    %cst_14 = arith.constant 1.000000e+00 : f32
    %32 = vector.broadcast %cst_13 : f32 to vector<2x32x32xf32>
    %33 = vector.broadcast %cst_14 : f32 to vector<2x32x32xf32>
    %34 = arith.select %31, %32, %33 : vector<2x32x32xi1>, vector<2x32x32xf32>
    %35 = vector.shape_cast %34 : vector<2x32x32xf32> to vector<64x32xf32>
    %c31_i32 = arith.constant 31 : i32
    %36 = vector.broadcast %c31_i32 : i32 to vector<2x32x32xi32>
    %37 = arith.cmpi eq, %29, %36 : vector<2x32x32xi32>
    %cst_15 = arith.constant 0.000000e+00 : f32
    %cst_16 = arith.constant 1.000000e+00 : f32
    %38 = vector.broadcast %cst_15 : f32 to vector<2x32x32xf32>
    %39 = vector.broadcast %cst_16 : f32 to vector<2x32x32xf32>
    %40 = arith.select %37, %38, %39 : vector<2x32x32xi1>, vector<2x32x32xf32>
    %41 = vector.shape_cast %40 : vector<2x32x32xf32> to vector<64x32xf32>
    %c1_i32 = arith.constant 1 : i32
    %42 = tpu.dynamic_rotate %28 by %c1_i32 dim 0 : vector<64x32xf32>, i32 -> vector<64x32xf32>
    %43 = arith.mulf %42, %35 : vector<64x32xf32>
    %c63_i32 = arith.constant 63 : i32
    %44 = tpu.dynamic_rotate %28 by %c63_i32 dim 0 : vector<64x32xf32>, i32 -> vector<64x32xf32>
    %45 = arith.mulf %44, %41 : vector<64x32xf32>
    %46 = arith.truncf %28 : vector<64x32xf32> to vector<64x32xbf16>
    %47 = arith.truncf %43 : vector<64x32xf32> to vector<64x32xbf16>
    %48 = arith.truncf %45 : vector<64x32xf32> to vector<64x32xbf16>
    %c0_17 = arith.constant 0 : index
    %c0_18 = arith.constant 0 : index
    %c0_19 = arith.constant 0 : index
    %49 = vector.load %arg5[%c0_17, %c0_18, %c0_19] : memref<3x32x32xbf16, #tpu.memory_space<vmem>>, vector<1x32x32xbf16>
    %50 = vector.shape_cast %49 : vector<1x32x32xbf16> to vector<32x32xbf16>
    %cst_20 = arith.constant dense<0.000000e+00> : vector<64x32xf32>
    %51 = tpu.matmul %47, %50, %cst_20 {dimension_numbers = #tpu.dot_dimension_numbers<[1], [0], [0], [1], [0, 0, 1, 1], [], []>} : vector<64x32xbf16>, vector<32x32xbf16>, vector<64x32xf32> -> vector<64x32xf32>
    %c1 = arith.constant 1 : index
    %c0_21 = arith.constant 0 : index
    %c0_22 = arith.constant 0 : index
    %52 = vector.load %arg5[%c1, %c0_21, %c0_22] : memref<3x32x32xbf16, #tpu.memory_space<vmem>>, vector<1x32x32xbf16>
    %53 = vector.shape_cast %52 : vector<1x32x32xbf16> to vector<32x32xbf16>
    %cst_23 = arith.constant dense<0.000000e+00> : vector<64x32xf32>
    %54 = tpu.matmul %46, %53, %cst_23 {dimension_numbers = #tpu.dot_dimension_numbers<[1], [0], [0], [1], [0, 0, 1, 1], [], []>} : vector<64x32xbf16>, vector<32x32xbf16>, vector<64x32xf32> -> vector<64x32xf32>
    %55 = arith.addf %51, %54 : vector<64x32xf32>
    %c2 = arith.constant 2 : index
    %c0_24 = arith.constant 0 : index
    %c0_25 = arith.constant 0 : index
    %56 = vector.load %arg5[%c2, %c0_24, %c0_25] : memref<3x32x32xbf16, #tpu.memory_space<vmem>>, vector<1x32x32xbf16>
    %57 = vector.shape_cast %56 : vector<1x32x32xbf16> to vector<32x32xbf16>
    %cst_26 = arith.constant dense<0.000000e+00> : vector<64x32xf32>
    %58 = tpu.matmul %48, %57, %cst_26 {dimension_numbers = #tpu.dot_dimension_numbers<[1], [0], [0], [1], [0, 0, 1, 1], [], []>} : vector<64x32xbf16>, vector<32x32xbf16>, vector<64x32xf32> -> vector<64x32xf32>
    %59 = arith.addf %55, %58 : vector<64x32xf32>
    %c0_27 = arith.constant 0 : index
    %c0_28 = arith.constant 0 : index
    %60 = vector.load %arg6[%c0_27, %c0_28] : memref<1x32xf32, #tpu.memory_space<vmem>>, vector<1x32xf32>
    %61 = vector.broadcast %60 : vector<1x32xf32> to vector<64x32xf32>
    %62 = arith.addf %59, %61 : vector<64x32xf32>
    %cst_29 = arith.constant dense<0.000000e+00> : vector<32xf32>
    %63 = vector.multi_reduction <add>, %62, %cst_29 [0] : vector<64x32xf32> to vector<32xf32>
    %64 = vector.shape_cast %63 : vector<32xf32> to vector<1x32xf32>
    %65 = arith.mulf %62, %62 : vector<64x32xf32>
    %cst_30 = arith.constant dense<0.000000e+00> : vector<32xf32>
    %66 = vector.multi_reduction <add>, %65, %cst_30 [0] : vector<64x32xf32> to vector<32xf32>
    %67 = vector.shape_cast %66 : vector<32xf32> to vector<1x32xf32>
    %68 = tpu.concatenate %64, %67 in 0 : vector<1x32xf32>, vector<1x32xf32> -> vector<2x32xf32>
    %c0_31 = arith.constant 0 : index
    %c0_32 = arith.constant 0 : index
    %c0_33 = arith.constant 0 : index
    %69 = vector.load %arg8[%c0_31, %c0_32, %c0_33] : memref<1x2x32xf32, #tpu.memory_space<vmem>>, vector<1x2x32xf32>
    %70 = vector.shape_cast %69 : vector<1x2x32xf32> to vector<2x32xf32>
    %71 = vector.shape_cast %68 : vector<2x32xf32> to vector<1x2x32xf32>
    tpu.vector_store %arg8[%c0_31, %c0_32, %c0_33], %71 {strides = array<i32>} : memref<1x2x32xf32, #tpu.memory_space<vmem>>, vector<1x2x32xf32>,
    %72 = vector.shape_cast %62 : vector<64x32xf32> to vector<2x32x32xf32>
    %73 = arith.truncf %72 : vector<2x32x32xf32> to vector<2x32x32xbf16>
    %c0_34 = arith.constant 0 : index
    %c0_35 = arith.constant 0 : index
    %c0_36 = arith.constant 0 : index
    %74 = vector.load %arg7[%c0_34, %c0_35, %c0_36] : memref<2x32x32xbf16, #tpu.memory_space<vmem>>, vector<2x32x32xbf16>
    tpu.vector_store %arg7[%c0_34, %c0_35, %c0_36], %73 {strides = array<i32>} : memref<2x32x32xbf16, #tpu.memory_space<vmem>>, vector<2x32x32xbf16>,
    return
  }
  func.func @transform_0(%arg0: i32) -> (i32, i32, i32) {
    %c0_i32 = arith.constant 0 : i32
    %c0_i32_0 = arith.constant 0 : i32
    %c0_i32_1 = arith.constant 0 : i32
    %c0_i32_2 = arith.constant 0 : i32
    return %c0_i32, %c0_i32_0, %c0_i32_1 : i32, i32, i32
  }
  func.func @transform_1(%arg0: i32) -> (i32, i32) {
    %c0_i32 = arith.constant 0 : i32
    %c0_i32_0 = arith.constant 0 : i32
    %c0_i32_1 = arith.constant 0 : i32
    return %c0_i32, %c0_i32_0 : i32, i32
  }
  func.func @transform_2(%arg0: i32) -> (i32, i32) {
    %c0_i32 = arith.constant 0 : i32
    %c0_i32_0 = arith.constant 0 : i32
    %c0_i32_1 = arith.constant 0 : i32
    return %c0_i32, %c0_i32_0 : i32, i32
  }
  func.func @transform_3(%arg0: i32) -> (i32, i32, i32) {
    %c0_i32 = arith.constant 0 : i32
    %c0_i32_0 = arith.constant 0 : i32
    %c0_i32_1 = arith.constant 0 : i32
    return %arg0, %c0_i32, %c0_i32_0 : i32, i32, i32
  }
  func.func @transform_4(%arg0: i32) -> (i32, i32, i32) {
    %c0_i32 = arith.constant 0 : i32
    %c0_i32_0 = arith.constant 0 : i32
    %c0_i32_1 = arith.constant 0 : i32
    %c0_i32_2 = arith.constant 0 : i32
    return %c0_i32, %c0_i32_0, %c0_i32_1 : i32, i32, i32
  }
  func.func @transform_5(%arg0: i32) -> (i32, i32) {
    %c0_i32 = arith.constant 0 : i32
    %c0_i32_0 = arith.constant 0 : i32
    %c0_i32_1 = arith.constant 0 : i32
    return %c0_i32, %c0_i32_0 : i32, i32
  }
  func.func @transform_6(%arg0: i32) -> (i32, i32, i32) {
    %c0_i32 = arith.constant 0 : i32
    %c0_i32_0 = arith.constant 0 : i32
    %c0_i32_1 = arith.constant 0 : i32
    return %arg0, %c0_i32, %c0_i32_0 : i32, i32, i32
  }
  func.func @transform_7(%arg0: i32) -> (i32, i32, i32) {
    %c0_i32 = arith.constant 0 : i32
    %c0_i32_0 = arith.constant 0 : i32
    %c0_i32_1 = arith.constant 0 : i32
    return %arg0, %c0_i32, %c0_i32_0 : i32, i32, i32
  }
}

module attributes {stable_mosaic.version = 11 : i64} {
  func.func @_bn_conv_kernel(%arg0: i32, %arg1: memref<2x2x32xf32, #tpu.memory_space<vmem>>, %arg2: memref<1x32xf32, #tpu.memory_space<vmem>>, %arg3: memref<1x32xf32, #tpu.memory_space<vmem>>, %arg4: memref<2x32x32xbf16, #tpu.memory_space<vmem>>, %arg5: memref<3x32x64xbf16, #tpu.memory_space<vmem>>, %arg6: memref<1x64xf32, #tpu.memory_space<vmem>>, %arg7: memref<2x16x64xbf16, #tpu.memory_space<vmem>>, %arg8: memref<1x2x64xf32, #tpu.memory_space<vmem>>) attributes {dimension_semantics = [#tpu.dimension_semantics<parallel>], iteration_bounds = array<i64: 2>, scalar_prefetch = 0 : i64, scratch_operands = 0 : i64, tpu.core_type = #tpu.core_type<tc>, window_params = [{pipeline_mode = #tpu.pipeline_mode<synchronous>, transform_indices = @transform_0, window_bounds = array<i64: 2, 2, 32>}, {pipeline_mode = #tpu.pipeline_mode<synchronous>, transform_indices = @transform_1, window_bounds = array<i64: 1, 32>}, {pipeline_mode = #tpu.pipeline_mode<synchronous>, transform_indices = @transform_2, window_bounds = array<i64: 1, 32>}, {transform_indices = @transform_3, window_bounds = array<i64: 2, 32, 32>}, {pipeline_mode = #tpu.pipeline_mode<synchronous>, transform_indices = @transform_4, window_bounds = array<i64: 3, 32, 64>}, {pipeline_mode = #tpu.pipeline_mode<synchronous>, transform_indices = @transform_5, window_bounds = array<i64: 1, 64>}, {transform_indices = @transform_6, window_bounds = array<i64: 2, 16, 64>}, {transform_indices = @transform_7, window_bounds = array<i64: 1, 2, 64>}]} {
    %c0 = arith.constant 0 : index
    %c0_0 = arith.constant 0 : index
    %c0_1 = arith.constant 0 : index
    %0 = vector.load %arg1[%c0, %c0_0, %c0_1] : memref<2x2x32xf32, #tpu.memory_space<vmem>>, vector<2x2x32xf32>
    %cst = arith.constant dense<0.000000e+00> : vector<2x32xf32>
    %1 = vector.multi_reduction <add>, %0, %cst [0] : vector<2x2x32xf32> to vector<2x32xf32>
    %c0_2 = arith.constant 0 : index
    %c0_3 = arith.constant 0 : index
    %2 = vector.load %arg2[%c0_2, %c0_3] : memref<1x32xf32, #tpu.memory_space<vmem>>, vector<1x32xf32>
    %c0_4 = arith.constant 0 : index
    %c0_5 = arith.constant 0 : index
    %3 = vector.load %arg3[%c0_4, %c0_5] : memref<1x32xf32, #tpu.memory_space<vmem>>, vector<1x32xf32>
    %4 = vector.extract_strided_slice %1 {offsets = [0, 0], sizes = [1, 32], strides = [1, 1]} : vector<2x32xf32> to vector<1x32xf32>
    %cst_6 = arith.constant 7.812500e-03 : f32
    %5 = vector.broadcast %cst_6 : f32 to vector<1x32xf32>
    %6 = arith.mulf %4, %5 : vector<1x32xf32>
    %7 = vector.extract_strided_slice %1 {offsets = [1, 0], sizes = [1, 32], strides = [1, 1]} : vector<2x32xf32> to vector<1x32xf32>
    %cst_7 = arith.constant 7.812500e-03 : f32
    %8 = vector.broadcast %cst_7 : f32 to vector<1x32xf32>
    %9 = arith.mulf %7, %8 : vector<1x32xf32>
    %10 = arith.mulf %6, %6 : vector<1x32xf32>
    %11 = arith.subf %9, %10 : vector<1x32xf32>
    %cst_8 = arith.constant 0.000000e+00 : f32
    %12 = vector.broadcast %cst_8 : f32 to vector<1x32xf32>
    %13 = arith.maximumf %11, %12 : vector<1x32xf32>
    %cst_9 = arith.constant 9.99999974E-6 : f32
    %14 = vector.broadcast %cst_9 : f32 to vector<1x32xf32>
    %15 = arith.addf %13, %14 : vector<1x32xf32>
    %16 = math.rsqrt %15 : vector<1x32xf32>
    %17 = arith.mulf %2, %16 : vector<1x32xf32>
    %18 = arith.mulf %6, %17 : vector<1x32xf32>
    %19 = arith.subf %3, %18 : vector<1x32xf32>
    %c0_10 = arith.constant 0 : index
    %c0_11 = arith.constant 0 : index
    %c0_12 = arith.constant 0 : index
    %20 = vector.load %arg4[%c0_10, %c0_11, %c0_12] : memref<2x32x32xbf16, #tpu.memory_space<vmem>>, vector<2x32x32xbf16>
    %21 = arith.extf %20 : vector<2x32x32xbf16> to vector<2x32x32xf32>
    %22 = vector.shape_cast %17 : vector<1x32xf32> to vector<1x1x32xf32>
    %23 = vector.broadcast %22 : vector<1x1x32xf32> to vector<2x32x32xf32>
    %24 = arith.mulf %23, %21 : vector<2x32x32xf32>
    %25 = vector.shape_cast %19 : vector<1x32xf32> to vector<1x1x32xf32>
    %26 = vector.broadcast %25 : vector<1x1x32xf32> to vector<2x32x32xf32>
    %27 = arith.addf %24, %26 : vector<2x32x32xf32>
    %cst_13 = arith.constant 0.000000e+00 : f32
    %28 = vector.broadcast %cst_13 : f32 to vector<2x32x32xf32>
    %29 = arith.maximumf %27, %28 : vector<2x32x32xf32>
    %30 = vector.shape_cast %29 : vector<2x32x32xf32> to vector<64x32xf32>
    %31 = vector.shape_cast %30 : vector<64x32xf32> to vector<32x2x32xf32>
    %cst_14 = arith.constant dense<0xFF800000> : vector<32x32xf32>
    %32 = vector.multi_reduction <maximumf>, %31, %cst_14 [1] : vector<32x2x32xf32> to vector<32x32xf32>
    %33 = tpu.iota {dimensions = array<i32: 1>} : vector<2x16x32xi32>
    %c0_i32 = arith.constant 0 : i32
    %34 = vector.broadcast %c0_i32 : i32 to vector<2x16x32xi32>
    %35 = arith.cmpi eq, %33, %34 : vector<2x16x32xi32>
    %cst_15 = arith.constant 0.000000e+00 : f32
    %cst_16 = arith.constant 1.000000e+00 : f32
    %36 = vector.broadcast %cst_15 : f32 to vector<2x16x32xf32>
    %37 = vector.broadcast %cst_16 : f32 to vector<2x16x32xf32>
    %38 = arith.select %35, %36, %37 : vector<2x16x32xi1>, vector<2x16x32xf32>
    %39 = vector.shape_cast %38 : vector<2x16x32xf32> to vector<32x32xf32>
    %c15_i32 = arith.constant 15 : i32
    %40 = vector.broadcast %c15_i32 : i32 to vector<2x16x32xi32>
    %41 = arith.cmpi eq, %33, %40 : vector<2x16x32xi32>
    %cst_17 = arith.constant 0.000000e+00 : f32
    %cst_18 = arith.constant 1.000000e+00 : f32
    %42 = vector.broadcast %cst_17 : f32 to vector<2x16x32xf32>
    %43 = vector.broadcast %cst_18 : f32 to vector<2x16x32xf32>
    %44 = arith.select %41, %42, %43 : vector<2x16x32xi1>, vector<2x16x32xf32>
    %45 = vector.shape_cast %44 : vector<2x16x32xf32> to vector<32x32xf32>
    %c1_i32 = arith.constant 1 : i32
    %46 = tpu.dynamic_rotate %32 by %c1_i32 dim 0 : vector<32x32xf32>, i32 -> vector<32x32xf32>
    %47 = arith.mulf %46, %39 : vector<32x32xf32>
    %c31_i32 = arith.constant 31 : i32
    %48 = tpu.dynamic_rotate %32 by %c31_i32 dim 0 : vector<32x32xf32>, i32 -> vector<32x32xf32>
    %49 = arith.mulf %48, %45 : vector<32x32xf32>
    %50 = arith.truncf %32 : vector<32x32xf32> to vector<32x32xbf16>
    %51 = arith.truncf %47 : vector<32x32xf32> to vector<32x32xbf16>
    %52 = arith.truncf %49 : vector<32x32xf32> to vector<32x32xbf16>
    %c0_19 = arith.constant 0 : index
    %c0_20 = arith.constant 0 : index
    %c0_21 = arith.constant 0 : index
    %53 = vector.load %arg5[%c0_19, %c0_20, %c0_21] : memref<3x32x64xbf16, #tpu.memory_space<vmem>>, vector<1x32x64xbf16>
    %54 = vector.shape_cast %53 : vector<1x32x64xbf16> to vector<32x64xbf16>
    %cst_22 = arith.constant dense<0.000000e+00> : vector<32x64xf32>
    %55 = tpu.matmul %51, %54, %cst_22 {dimension_numbers = #tpu.dot_dimension_numbers<[1], [0], [0], [1], [0, 0, 1, 1], [], []>} : vector<32x32xbf16>, vector<32x64xbf16>, vector<32x64xf32> -> vector<32x64xf32>
    %c1 = arith.constant 1 : index
    %c0_23 = arith.constant 0 : index
    %c0_24 = arith.constant 0 : index
    %56 = vector.load %arg5[%c1, %c0_23, %c0_24] : memref<3x32x64xbf16, #tpu.memory_space<vmem>>, vector<1x32x64xbf16>
    %57 = vector.shape_cast %56 : vector<1x32x64xbf16> to vector<32x64xbf16>
    %cst_25 = arith.constant dense<0.000000e+00> : vector<32x64xf32>
    %58 = tpu.matmul %50, %57, %cst_25 {dimension_numbers = #tpu.dot_dimension_numbers<[1], [0], [0], [1], [0, 0, 1, 1], [], []>} : vector<32x32xbf16>, vector<32x64xbf16>, vector<32x64xf32> -> vector<32x64xf32>
    %59 = arith.addf %55, %58 : vector<32x64xf32>
    %c2 = arith.constant 2 : index
    %c0_26 = arith.constant 0 : index
    %c0_27 = arith.constant 0 : index
    %60 = vector.load %arg5[%c2, %c0_26, %c0_27] : memref<3x32x64xbf16, #tpu.memory_space<vmem>>, vector<1x32x64xbf16>
    %61 = vector.shape_cast %60 : vector<1x32x64xbf16> to vector<32x64xbf16>
    %cst_28 = arith.constant dense<0.000000e+00> : vector<32x64xf32>
    %62 = tpu.matmul %52, %61, %cst_28 {dimension_numbers = #tpu.dot_dimension_numbers<[1], [0], [0], [1], [0, 0, 1, 1], [], []>} : vector<32x32xbf16>, vector<32x64xbf16>, vector<32x64xf32> -> vector<32x64xf32>
    %63 = arith.addf %59, %62 : vector<32x64xf32>
    %c0_29 = arith.constant 0 : index
    %c0_30 = arith.constant 0 : index
    %64 = vector.load %arg6[%c0_29, %c0_30] : memref<1x64xf32, #tpu.memory_space<vmem>>, vector<1x64xf32>
    %65 = vector.broadcast %64 : vector<1x64xf32> to vector<32x64xf32>
    %66 = arith.addf %63, %65 : vector<32x64xf32>
    %cst_31 = arith.constant dense<0.000000e+00> : vector<64xf32>
    %67 = vector.multi_reduction <add>, %66, %cst_31 [0] : vector<32x64xf32> to vector<64xf32>
    %68 = vector.shape_cast %67 : vector<64xf32> to vector<1x64xf32>
    %69 = arith.mulf %66, %66 : vector<32x64xf32>
    %cst_32 = arith.constant dense<0.000000e+00> : vector<64xf32>
    %70 = vector.multi_reduction <add>, %69, %cst_32 [0] : vector<32x64xf32> to vector<64xf32>
    %71 = vector.shape_cast %70 : vector<64xf32> to vector<1x64xf32>
    %72 = tpu.concatenate %68, %71 in 0 : vector<1x64xf32>, vector<1x64xf32> -> vector<2x64xf32>
    %c0_33 = arith.constant 0 : index
    %c0_34 = arith.constant 0 : index
    %c0_35 = arith.constant 0 : index
    %73 = vector.load %arg8[%c0_33, %c0_34, %c0_35] : memref<1x2x64xf32, #tpu.memory_space<vmem>>, vector<1x2x64xf32>
    %74 = vector.shape_cast %73 : vector<1x2x64xf32> to vector<2x64xf32>
    %75 = vector.shape_cast %72 : vector<2x64xf32> to vector<1x2x64xf32>
    tpu.vector_store %arg8[%c0_33, %c0_34, %c0_35], %75 {strides = array<i32>} : memref<1x2x64xf32, #tpu.memory_space<vmem>>, vector<1x2x64xf32>,
    %76 = vector.shape_cast %66 : vector<32x64xf32> to vector<2x16x64xf32>
    %77 = arith.truncf %76 : vector<2x16x64xf32> to vector<2x16x64xbf16>
    %c0_36 = arith.constant 0 : index
    %c0_37 = arith.constant 0 : index
    %c0_38 = arith.constant 0 : index
    %78 = vector.load %arg7[%c0_36, %c0_37, %c0_38] : memref<2x16x64xbf16, #tpu.memory_space<vmem>>, vector<2x16x64xbf16>
    tpu.vector_store %arg7[%c0_36, %c0_37, %c0_38], %77 {strides = array<i32>} : memref<2x16x64xbf16, #tpu.memory_space<vmem>>, vector<2x16x64xbf16>,
    return
  }
  func.func @transform_0(%arg0: i32) -> (i32, i32, i32) {
    %c0_i32 = arith.constant 0 : i32
    %c0_i32_0 = arith.constant 0 : i32
    %c0_i32_1 = arith.constant 0 : i32
    %c0_i32_2 = arith.constant 0 : i32
    return %c0_i32, %c0_i32_0, %c0_i32_1 : i32, i32, i32
  }
  func.func @transform_1(%arg0: i32) -> (i32, i32) {
    %c0_i32 = arith.constant 0 : i32
    %c0_i32_0 = arith.constant 0 : i32
    %c0_i32_1 = arith.constant 0 : i32
    return %c0_i32, %c0_i32_0 : i32, i32
  }
  func.func @transform_2(%arg0: i32) -> (i32, i32) {
    %c0_i32 = arith.constant 0 : i32
    %c0_i32_0 = arith.constant 0 : i32
    %c0_i32_1 = arith.constant 0 : i32
    return %c0_i32, %c0_i32_0 : i32, i32
  }
  func.func @transform_3(%arg0: i32) -> (i32, i32, i32) {
    %c0_i32 = arith.constant 0 : i32
    %c0_i32_0 = arith.constant 0 : i32
    %c0_i32_1 = arith.constant 0 : i32
    return %arg0, %c0_i32, %c0_i32_0 : i32, i32, i32
  }
  func.func @transform_4(%arg0: i32) -> (i32, i32, i32) {
    %c0_i32 = arith.constant 0 : i32
    %c0_i32_0 = arith.constant 0 : i32
    %c0_i32_1 = arith.constant 0 : i32
    %c0_i32_2 = arith.constant 0 : i32
    return %c0_i32, %c0_i32_0, %c0_i32_1 : i32, i32, i32
  }
  func.func @transform_5(%arg0: i32) -> (i32, i32) {
    %c0_i32 = arith.constant 0 : i32
    %c0_i32_0 = arith.constant 0 : i32
    %c0_i32_1 = arith.constant 0 : i32
    return %c0_i32, %c0_i32_0 : i32, i32
  }
  func.func @transform_6(%arg0: i32) -> (i32, i32, i32) {
    %c0_i32 = arith.constant 0 : i32
    %c0_i32_0 = arith.constant 0 : i32
    %c0_i32_1 = arith.constant 0 : i32
    return %arg0, %c0_i32, %c0_i32_0 : i32, i32, i32
  }
  func.func @transform_7(%arg0: i32) -> (i32, i32, i32) {
    %c0_i32 = arith.constant 0 : i32
    %c0_i32_0 = arith.constant 0 : i32
    %c0_i32_1 = arith.constant 0 : i32
    return %arg0, %c0_i32, %c0_i32_0 : i32, i32, i32
  }
}

module attributes {stable_mosaic.version = 11 : i64} {
  func.func @_bn_conv_kernel(%arg0: i32, %arg1: memref<2x2x64xf32, #tpu.memory_space<vmem>>, %arg2: memref<1x64xf32, #tpu.memory_space<vmem>>, %arg3: memref<1x64xf32, #tpu.memory_space<vmem>>, %arg4: memref<2x16x64xbf16, #tpu.memory_space<vmem>>, %arg5: memref<3x64x128xbf16, #tpu.memory_space<vmem>>, %arg6: memref<1x128xf32, #tpu.memory_space<vmem>>, %arg7: memref<2x8x128xbf16, #tpu.memory_space<vmem>>, %arg8: memref<1x2x128xf32, #tpu.memory_space<vmem>>) attributes {dimension_semantics = [#tpu.dimension_semantics<parallel>], iteration_bounds = array<i64: 2>, scalar_prefetch = 0 : i64, scratch_operands = 0 : i64, tpu.core_type = #tpu.core_type<tc>, window_params = [{pipeline_mode = #tpu.pipeline_mode<synchronous>, transform_indices = @transform_0, window_bounds = array<i64: 2, 2, 64>}, {pipeline_mode = #tpu.pipeline_mode<synchronous>, transform_indices = @transform_1, window_bounds = array<i64: 1, 64>}, {pipeline_mode = #tpu.pipeline_mode<synchronous>, transform_indices = @transform_2, window_bounds = array<i64: 1, 64>}, {transform_indices = @transform_3, window_bounds = array<i64: 2, 16, 64>}, {pipeline_mode = #tpu.pipeline_mode<synchronous>, transform_indices = @transform_4, window_bounds = array<i64: 3, 64, 128>}, {pipeline_mode = #tpu.pipeline_mode<synchronous>, transform_indices = @transform_5, window_bounds = array<i64: 1, 128>}, {transform_indices = @transform_6, window_bounds = array<i64: 2, 8, 128>}, {transform_indices = @transform_7, window_bounds = array<i64: 1, 2, 128>}]} {
    %c0 = arith.constant 0 : index
    %c0_0 = arith.constant 0 : index
    %c0_1 = arith.constant 0 : index
    %0 = vector.load %arg1[%c0, %c0_0, %c0_1] : memref<2x2x64xf32, #tpu.memory_space<vmem>>, vector<2x2x64xf32>
    %cst = arith.constant dense<0.000000e+00> : vector<2x64xf32>
    %1 = vector.multi_reduction <add>, %0, %cst [0] : vector<2x2x64xf32> to vector<2x64xf32>
    %c0_2 = arith.constant 0 : index
    %c0_3 = arith.constant 0 : index
    %2 = vector.load %arg2[%c0_2, %c0_3] : memref<1x64xf32, #tpu.memory_space<vmem>>, vector<1x64xf32>
    %c0_4 = arith.constant 0 : index
    %c0_5 = arith.constant 0 : index
    %3 = vector.load %arg3[%c0_4, %c0_5] : memref<1x64xf32, #tpu.memory_space<vmem>>, vector<1x64xf32>
    %4 = vector.extract_strided_slice %1 {offsets = [0, 0], sizes = [1, 64], strides = [1, 1]} : vector<2x64xf32> to vector<1x64xf32>
    %cst_6 = arith.constant 1.562500e-02 : f32
    %5 = vector.broadcast %cst_6 : f32 to vector<1x64xf32>
    %6 = arith.mulf %4, %5 : vector<1x64xf32>
    %7 = vector.extract_strided_slice %1 {offsets = [1, 0], sizes = [1, 64], strides = [1, 1]} : vector<2x64xf32> to vector<1x64xf32>
    %cst_7 = arith.constant 1.562500e-02 : f32
    %8 = vector.broadcast %cst_7 : f32 to vector<1x64xf32>
    %9 = arith.mulf %7, %8 : vector<1x64xf32>
    %10 = arith.mulf %6, %6 : vector<1x64xf32>
    %11 = arith.subf %9, %10 : vector<1x64xf32>
    %cst_8 = arith.constant 0.000000e+00 : f32
    %12 = vector.broadcast %cst_8 : f32 to vector<1x64xf32>
    %13 = arith.maximumf %11, %12 : vector<1x64xf32>
    %cst_9 = arith.constant 9.99999974E-6 : f32
    %14 = vector.broadcast %cst_9 : f32 to vector<1x64xf32>
    %15 = arith.addf %13, %14 : vector<1x64xf32>
    %16 = math.rsqrt %15 : vector<1x64xf32>
    %17 = arith.mulf %2, %16 : vector<1x64xf32>
    %18 = arith.mulf %6, %17 : vector<1x64xf32>
    %19 = arith.subf %3, %18 : vector<1x64xf32>
    %c0_10 = arith.constant 0 : index
    %c0_11 = arith.constant 0 : index
    %c0_12 = arith.constant 0 : index
    %20 = vector.load %arg4[%c0_10, %c0_11, %c0_12] : memref<2x16x64xbf16, #tpu.memory_space<vmem>>, vector<2x16x64xbf16>
    %21 = arith.extf %20 : vector<2x16x64xbf16> to vector<2x16x64xf32>
    %22 = vector.shape_cast %17 : vector<1x64xf32> to vector<1x1x64xf32>
    %23 = vector.broadcast %22 : vector<1x1x64xf32> to vector<2x16x64xf32>
    %24 = arith.mulf %23, %21 : vector<2x16x64xf32>
    %25 = vector.shape_cast %19 : vector<1x64xf32> to vector<1x1x64xf32>
    %26 = vector.broadcast %25 : vector<1x1x64xf32> to vector<2x16x64xf32>
    %27 = arith.addf %24, %26 : vector<2x16x64xf32>
    %cst_13 = arith.constant 0.000000e+00 : f32
    %28 = vector.broadcast %cst_13 : f32 to vector<2x16x64xf32>
    %29 = arith.maximumf %27, %28 : vector<2x16x64xf32>
    %30 = vector.shape_cast %29 : vector<2x16x64xf32> to vector<32x64xf32>
    %31 = vector.shape_cast %30 : vector<32x64xf32> to vector<16x2x64xf32>
    %cst_14 = arith.constant dense<0xFF800000> : vector<16x64xf32>
    %32 = vector.multi_reduction <maximumf>, %31, %cst_14 [1] : vector<16x2x64xf32> to vector<16x64xf32>
    %33 = tpu.iota {dimensions = array<i32: 1>} : vector<2x8x64xi32>
    %c0_i32 = arith.constant 0 : i32
    %34 = vector.broadcast %c0_i32 : i32 to vector<2x8x64xi32>
    %35 = arith.cmpi eq, %33, %34 : vector<2x8x64xi32>
    %cst_15 = arith.constant 0.000000e+00 : f32
    %cst_16 = arith.constant 1.000000e+00 : f32
    %36 = vector.broadcast %cst_15 : f32 to vector<2x8x64xf32>
    %37 = vector.broadcast %cst_16 : f32 to vector<2x8x64xf32>
    %38 = arith.select %35, %36, %37 : vector<2x8x64xi1>, vector<2x8x64xf32>
    %39 = vector.shape_cast %38 : vector<2x8x64xf32> to vector<16x64xf32>
    %c7_i32 = arith.constant 7 : i32
    %40 = vector.broadcast %c7_i32 : i32 to vector<2x8x64xi32>
    %41 = arith.cmpi eq, %33, %40 : vector<2x8x64xi32>
    %cst_17 = arith.constant 0.000000e+00 : f32
    %cst_18 = arith.constant 1.000000e+00 : f32
    %42 = vector.broadcast %cst_17 : f32 to vector<2x8x64xf32>
    %43 = vector.broadcast %cst_18 : f32 to vector<2x8x64xf32>
    %44 = arith.select %41, %42, %43 : vector<2x8x64xi1>, vector<2x8x64xf32>
    %45 = vector.shape_cast %44 : vector<2x8x64xf32> to vector<16x64xf32>
    %c1_i32 = arith.constant 1 : i32
    %46 = tpu.dynamic_rotate %32 by %c1_i32 dim 0 : vector<16x64xf32>, i32 -> vector<16x64xf32>
    %47 = arith.mulf %46, %39 : vector<16x64xf32>
    %c15_i32 = arith.constant 15 : i32
    %48 = tpu.dynamic_rotate %32 by %c15_i32 dim 0 : vector<16x64xf32>, i32 -> vector<16x64xf32>
    %49 = arith.mulf %48, %45 : vector<16x64xf32>
    %50 = arith.truncf %32 : vector<16x64xf32> to vector<16x64xbf16>
    %51 = arith.truncf %47 : vector<16x64xf32> to vector<16x64xbf16>
    %52 = arith.truncf %49 : vector<16x64xf32> to vector<16x64xbf16>
    %c0_19 = arith.constant 0 : index
    %c0_20 = arith.constant 0 : index
    %c0_21 = arith.constant 0 : index
    %53 = vector.load %arg5[%c0_19, %c0_20, %c0_21] : memref<3x64x128xbf16, #tpu.memory_space<vmem>>, vector<1x64x128xbf16>
    %54 = vector.shape_cast %53 : vector<1x64x128xbf16> to vector<64x128xbf16>
    %cst_22 = arith.constant dense<0.000000e+00> : vector<16x128xf32>
    %55 = tpu.matmul %51, %54, %cst_22 {dimension_numbers = #tpu.dot_dimension_numbers<[1], [0], [0], [1], [0, 0, 1, 1], [], []>} : vector<16x64xbf16>, vector<64x128xbf16>, vector<16x128xf32> -> vector<16x128xf32>
    %c1 = arith.constant 1 : index
    %c0_23 = arith.constant 0 : index
    %c0_24 = arith.constant 0 : index
    %56 = vector.load %arg5[%c1, %c0_23, %c0_24] : memref<3x64x128xbf16, #tpu.memory_space<vmem>>, vector<1x64x128xbf16>
    %57 = vector.shape_cast %56 : vector<1x64x128xbf16> to vector<64x128xbf16>
    %cst_25 = arith.constant dense<0.000000e+00> : vector<16x128xf32>
    %58 = tpu.matmul %50, %57, %cst_25 {dimension_numbers = #tpu.dot_dimension_numbers<[1], [0], [0], [1], [0, 0, 1, 1], [], []>} : vector<16x64xbf16>, vector<64x128xbf16>, vector<16x128xf32> -> vector<16x128xf32>
    %59 = arith.addf %55, %58 : vector<16x128xf32>
    %c2 = arith.constant 2 : index
    %c0_26 = arith.constant 0 : index
    %c0_27 = arith.constant 0 : index
    %60 = vector.load %arg5[%c2, %c0_26, %c0_27] : memref<3x64x128xbf16, #tpu.memory_space<vmem>>, vector<1x64x128xbf16>
    %61 = vector.shape_cast %60 : vector<1x64x128xbf16> to vector<64x128xbf16>
    %cst_28 = arith.constant dense<0.000000e+00> : vector<16x128xf32>
    %62 = tpu.matmul %52, %61, %cst_28 {dimension_numbers = #tpu.dot_dimension_numbers<[1], [0], [0], [1], [0, 0, 1, 1], [], []>} : vector<16x64xbf16>, vector<64x128xbf16>, vector<16x128xf32> -> vector<16x128xf32>
    %63 = arith.addf %59, %62 : vector<16x128xf32>
    %c0_29 = arith.constant 0 : index
    %c0_30 = arith.constant 0 : index
    %64 = vector.load %arg6[%c0_29, %c0_30] : memref<1x128xf32, #tpu.memory_space<vmem>>, vector<1x128xf32>
    %65 = vector.broadcast %64 : vector<1x128xf32> to vector<16x128xf32>
    %66 = arith.addf %63, %65 : vector<16x128xf32>
    %cst_31 = arith.constant dense<0.000000e+00> : vector<128xf32>
    %67 = vector.multi_reduction <add>, %66, %cst_31 [0] : vector<16x128xf32> to vector<128xf32>
    %68 = vector.shape_cast %67 : vector<128xf32> to vector<1x128xf32>
    %69 = arith.mulf %66, %66 : vector<16x128xf32>
    %cst_32 = arith.constant dense<0.000000e+00> : vector<128xf32>
    %70 = vector.multi_reduction <add>, %69, %cst_32 [0] : vector<16x128xf32> to vector<128xf32>
    %71 = vector.shape_cast %70 : vector<128xf32> to vector<1x128xf32>
    %72 = tpu.concatenate %68, %71 in 0 : vector<1x128xf32>, vector<1x128xf32> -> vector<2x128xf32>
    %c0_33 = arith.constant 0 : index
    %c0_34 = arith.constant 0 : index
    %c0_35 = arith.constant 0 : index
    %73 = vector.load %arg8[%c0_33, %c0_34, %c0_35] : memref<1x2x128xf32, #tpu.memory_space<vmem>>, vector<1x2x128xf32>
    %74 = vector.shape_cast %73 : vector<1x2x128xf32> to vector<2x128xf32>
    %75 = vector.shape_cast %72 : vector<2x128xf32> to vector<1x2x128xf32>
    tpu.vector_store %arg8[%c0_33, %c0_34, %c0_35], %75 {strides = array<i32>} : memref<1x2x128xf32, #tpu.memory_space<vmem>>, vector<1x2x128xf32>,
    %76 = vector.shape_cast %66 : vector<16x128xf32> to vector<2x8x128xf32>
    %77 = arith.truncf %76 : vector<2x8x128xf32> to vector<2x8x128xbf16>
    %c0_36 = arith.constant 0 : index
    %c0_37 = arith.constant 0 : index
    %c0_38 = arith.constant 0 : index
    %78 = vector.load %arg7[%c0_36, %c0_37, %c0_38] : memref<2x8x128xbf16, #tpu.memory_space<vmem>>, vector<2x8x128xbf16>
    tpu.vector_store %arg7[%c0_36, %c0_37, %c0_38], %77 {strides = array<i32>} : memref<2x8x128xbf16, #tpu.memory_space<vmem>>, vector<2x8x128xbf16>,
    return
  }
  func.func @transform_0(%arg0: i32) -> (i32, i32, i32) {
    %c0_i32 = arith.constant 0 : i32
    %c0_i32_0 = arith.constant 0 : i32
    %c0_i32_1 = arith.constant 0 : i32
    %c0_i32_2 = arith.constant 0 : i32
    return %c0_i32, %c0_i32_0, %c0_i32_1 : i32, i32, i32
  }
  func.func @transform_1(%arg0: i32) -> (i32, i32) {
    %c0_i32 = arith.constant 0 : i32
    %c0_i32_0 = arith.constant 0 : i32
    %c0_i32_1 = arith.constant 0 : i32
    return %c0_i32, %c0_i32_0 : i32, i32
  }
  func.func @transform_2(%arg0: i32) -> (i32, i32) {
    %c0_i32 = arith.constant 0 : i32
    %c0_i32_0 = arith.constant 0 : i32
    %c0_i32_1 = arith.constant 0 : i32
    return %c0_i32, %c0_i32_0 : i32, i32
  }
  func.func @transform_3(%arg0: i32) -> (i32, i32, i32) {
    %c0_i32 = arith.constant 0 : i32
    %c0_i32_0 = arith.constant 0 : i32
    %c0_i32_1 = arith.constant 0 : i32
    return %arg0, %c0_i32, %c0_i32_0 : i32, i32, i32
  }
  func.func @transform_4(%arg0: i32) -> (i32, i32, i32) {
    %c0_i32 = arith.constant 0 : i32
    %c0_i32_0 = arith.constant 0 : i32
    %c0_i32_1 = arith.constant 0 : i32
    %c0_i32_2 = arith.constant 0 : i32
    return %c0_i32, %c0_i32_0, %c0_i32_1 : i32, i32, i32
  }
  func.func @transform_5(%arg0: i32) -> (i32, i32) {
    %c0_i32 = arith.constant 0 : i32
    %c0_i32_0 = arith.constant 0 : i32
    %c0_i32_1 = arith.constant 0 : i32
    return %c0_i32, %c0_i32_0 : i32, i32
  }
  func.func @transform_6(%arg0: i32) -> (i32, i32, i32) {
    %c0_i32 = arith.constant 0 : i32
    %c0_i32_0 = arith.constant 0 : i32
    %c0_i32_1 = arith.constant 0 : i32
    return %arg0, %c0_i32, %c0_i32_0 : i32, i32, i32
  }
  func.func @transform_7(%arg0: i32) -> (i32, i32, i32) {
    %c0_i32 = arith.constant 0 : i32
    %c0_i32_0 = arith.constant 0 : i32
    %c0_i32_1 = arith.constant 0 : i32
    return %arg0, %c0_i32, %c0_i32_0 : i32, i32, i32
  }
}

module attributes {stable_mosaic.version = 11 : i64} {
  func.func @_bn_conv_kernel(%arg0: i32, %arg1: memref<2x2x64xf32, #tpu.memory_space<vmem>>, %arg2: memref<1x64xf32, #tpu.memory_space<vmem>>, %arg3: memref<1x64xf32, #tpu.memory_space<vmem>>, %arg4: memref<2x16x64xbf16, #tpu.memory_space<vmem>>, %arg5: memref<3x64x64xbf16, #tpu.memory_space<vmem>>, %arg6: memref<1x64xf32, #tpu.memory_space<vmem>>, %arg7: memref<2x16x64xbf16, #tpu.memory_space<vmem>>, %arg8: memref<1x2x64xf32, #tpu.memory_space<vmem>>) attributes {dimension_semantics = [#tpu.dimension_semantics<parallel>], iteration_bounds = array<i64: 2>, scalar_prefetch = 0 : i64, scratch_operands = 0 : i64, tpu.core_type = #tpu.core_type<tc>, window_params = [{pipeline_mode = #tpu.pipeline_mode<synchronous>, transform_indices = @transform_0, window_bounds = array<i64: 2, 2, 64>}, {pipeline_mode = #tpu.pipeline_mode<synchronous>, transform_indices = @transform_1, window_bounds = array<i64: 1, 64>}, {pipeline_mode = #tpu.pipeline_mode<synchronous>, transform_indices = @transform_2, window_bounds = array<i64: 1, 64>}, {transform_indices = @transform_3, window_bounds = array<i64: 2, 16, 64>}, {pipeline_mode = #tpu.pipeline_mode<synchronous>, transform_indices = @transform_4, window_bounds = array<i64: 3, 64, 64>}, {pipeline_mode = #tpu.pipeline_mode<synchronous>, transform_indices = @transform_5, window_bounds = array<i64: 1, 64>}, {transform_indices = @transform_6, window_bounds = array<i64: 2, 16, 64>}, {transform_indices = @transform_7, window_bounds = array<i64: 1, 2, 64>}]} {
    %c0 = arith.constant 0 : index
    %c0_0 = arith.constant 0 : index
    %c0_1 = arith.constant 0 : index
    %0 = vector.load %arg1[%c0, %c0_0, %c0_1] : memref<2x2x64xf32, #tpu.memory_space<vmem>>, vector<2x2x64xf32>
    %cst = arith.constant dense<0.000000e+00> : vector<2x64xf32>
    %1 = vector.multi_reduction <add>, %0, %cst [0] : vector<2x2x64xf32> to vector<2x64xf32>
    %c0_2 = arith.constant 0 : index
    %c0_3 = arith.constant 0 : index
    %2 = vector.load %arg2[%c0_2, %c0_3] : memref<1x64xf32, #tpu.memory_space<vmem>>, vector<1x64xf32>
    %c0_4 = arith.constant 0 : index
    %c0_5 = arith.constant 0 : index
    %3 = vector.load %arg3[%c0_4, %c0_5] : memref<1x64xf32, #tpu.memory_space<vmem>>, vector<1x64xf32>
    %4 = vector.extract_strided_slice %1 {offsets = [0, 0], sizes = [1, 64], strides = [1, 1]} : vector<2x64xf32> to vector<1x64xf32>
    %cst_6 = arith.constant 1.562500e-02 : f32
    %5 = vector.broadcast %cst_6 : f32 to vector<1x64xf32>
    %6 = arith.mulf %4, %5 : vector<1x64xf32>
    %7 = vector.extract_strided_slice %1 {offsets = [1, 0], sizes = [1, 64], strides = [1, 1]} : vector<2x64xf32> to vector<1x64xf32>
    %cst_7 = arith.constant 1.562500e-02 : f32
    %8 = vector.broadcast %cst_7 : f32 to vector<1x64xf32>
    %9 = arith.mulf %7, %8 : vector<1x64xf32>
    %10 = arith.mulf %6, %6 : vector<1x64xf32>
    %11 = arith.subf %9, %10 : vector<1x64xf32>
    %cst_8 = arith.constant 0.000000e+00 : f32
    %12 = vector.broadcast %cst_8 : f32 to vector<1x64xf32>
    %13 = arith.maximumf %11, %12 : vector<1x64xf32>
    %cst_9 = arith.constant 9.99999974E-6 : f32
    %14 = vector.broadcast %cst_9 : f32 to vector<1x64xf32>
    %15 = arith.addf %13, %14 : vector<1x64xf32>
    %16 = math.rsqrt %15 : vector<1x64xf32>
    %17 = arith.mulf %2, %16 : vector<1x64xf32>
    %18 = arith.mulf %6, %17 : vector<1x64xf32>
    %19 = arith.subf %3, %18 : vector<1x64xf32>
    %c0_10 = arith.constant 0 : index
    %c0_11 = arith.constant 0 : index
    %c0_12 = arith.constant 0 : index
    %20 = vector.load %arg4[%c0_10, %c0_11, %c0_12] : memref<2x16x64xbf16, #tpu.memory_space<vmem>>, vector<2x16x64xbf16>
    %21 = arith.extf %20 : vector<2x16x64xbf16> to vector<2x16x64xf32>
    %22 = vector.shape_cast %17 : vector<1x64xf32> to vector<1x1x64xf32>
    %23 = vector.broadcast %22 : vector<1x1x64xf32> to vector<2x16x64xf32>
    %24 = arith.mulf %23, %21 : vector<2x16x64xf32>
    %25 = vector.shape_cast %19 : vector<1x64xf32> to vector<1x1x64xf32>
    %26 = vector.broadcast %25 : vector<1x1x64xf32> to vector<2x16x64xf32>
    %27 = arith.addf %24, %26 : vector<2x16x64xf32>
    %28 = vector.shape_cast %27 : vector<2x16x64xf32> to vector<32x64xf32>
    %29 = tpu.iota {dimensions = array<i32: 1>} : vector<2x16x64xi32>
    %c0_i32 = arith.constant 0 : i32
    %30 = vector.broadcast %c0_i32 : i32 to vector<2x16x64xi32>
    %31 = arith.cmpi eq, %29, %30 : vector<2x16x64xi32>
    %cst_13 = arith.constant 0.000000e+00 : f32
    %cst_14 = arith.constant 1.000000e+00 : f32
    %32 = vector.broadcast %cst_13 : f32 to vector<2x16x64xf32>
    %33 = vector.broadcast %cst_14 : f32 to vector<2x16x64xf32>
    %34 = arith.select %31, %32, %33 : vector<2x16x64xi1>, vector<2x16x64xf32>
    %35 = vector.shape_cast %34 : vector<2x16x64xf32> to vector<32x64xf32>
    %c15_i32 = arith.constant 15 : i32
    %36 = vector.broadcast %c15_i32 : i32 to vector<2x16x64xi32>
    %37 = arith.cmpi eq, %29, %36 : vector<2x16x64xi32>
    %cst_15 = arith.constant 0.000000e+00 : f32
    %cst_16 = arith.constant 1.000000e+00 : f32
    %38 = vector.broadcast %cst_15 : f32 to vector<2x16x64xf32>
    %39 = vector.broadcast %cst_16 : f32 to vector<2x16x64xf32>
    %40 = arith.select %37, %38, %39 : vector<2x16x64xi1>, vector<2x16x64xf32>
    %41 = vector.shape_cast %40 : vector<2x16x64xf32> to vector<32x64xf32>
    %c1_i32 = arith.constant 1 : i32
    %42 = tpu.dynamic_rotate %28 by %c1_i32 dim 0 : vector<32x64xf32>, i32 -> vector<32x64xf32>
    %43 = arith.mulf %42, %35 : vector<32x64xf32>
    %c31_i32 = arith.constant 31 : i32
    %44 = tpu.dynamic_rotate %28 by %c31_i32 dim 0 : vector<32x64xf32>, i32 -> vector<32x64xf32>
    %45 = arith.mulf %44, %41 : vector<32x64xf32>
    %46 = arith.truncf %28 : vector<32x64xf32> to vector<32x64xbf16>
    %47 = arith.truncf %43 : vector<32x64xf32> to vector<32x64xbf16>
    %48 = arith.truncf %45 : vector<32x64xf32> to vector<32x64xbf16>
    %c0_17 = arith.constant 0 : index
    %c0_18 = arith.constant 0 : index
    %c0_19 = arith.constant 0 : index
    %49 = vector.load %arg5[%c0_17, %c0_18, %c0_19] : memref<3x64x64xbf16, #tpu.memory_space<vmem>>, vector<1x64x64xbf16>
    %50 = vector.shape_cast %49 : vector<1x64x64xbf16> to vector<64x64xbf16>
    %cst_20 = arith.constant dense<0.000000e+00> : vector<32x64xf32>
    %51 = tpu.matmul %47, %50, %cst_20 {dimension_numbers = #tpu.dot_dimension_numbers<[1], [0], [0], [1], [0, 0, 1, 1], [], []>} : vector<32x64xbf16>, vector<64x64xbf16>, vector<32x64xf32> -> vector<32x64xf32>
    %c1 = arith.constant 1 : index
    %c0_21 = arith.constant 0 : index
    %c0_22 = arith.constant 0 : index
    %52 = vector.load %arg5[%c1, %c0_21, %c0_22] : memref<3x64x64xbf16, #tpu.memory_space<vmem>>, vector<1x64x64xbf16>
    %53 = vector.shape_cast %52 : vector<1x64x64xbf16> to vector<64x64xbf16>
    %cst_23 = arith.constant dense<0.000000e+00> : vector<32x64xf32>
    %54 = tpu.matmul %46, %53, %cst_23 {dimension_numbers = #tpu.dot_dimension_numbers<[1], [0], [0], [1], [0, 0, 1, 1], [], []>} : vector<32x64xbf16>, vector<64x64xbf16>, vector<32x64xf32> -> vector<32x64xf32>
    %55 = arith.addf %51, %54 : vector<32x64xf32>
    %c2 = arith.constant 2 : index
    %c0_24 = arith.constant 0 : index
    %c0_25 = arith.constant 0 : index
    %56 = vector.load %arg5[%c2, %c0_24, %c0_25] : memref<3x64x64xbf16, #tpu.memory_space<vmem>>, vector<1x64x64xbf16>
    %57 = vector.shape_cast %56 : vector<1x64x64xbf16> to vector<64x64xbf16>
    %cst_26 = arith.constant dense<0.000000e+00> : vector<32x64xf32>
    %58 = tpu.matmul %48, %57, %cst_26 {dimension_numbers = #tpu.dot_dimension_numbers<[1], [0], [0], [1], [0, 0, 1, 1], [], []>} : vector<32x64xbf16>, vector<64x64xbf16>, vector<32x64xf32> -> vector<32x64xf32>
    %59 = arith.addf %55, %58 : vector<32x64xf32>
    %c0_27 = arith.constant 0 : index
    %c0_28 = arith.constant 0 : index
    %60 = vector.load %arg6[%c0_27, %c0_28] : memref<1x64xf32, #tpu.memory_space<vmem>>, vector<1x64xf32>
    %61 = vector.broadcast %60 : vector<1x64xf32> to vector<32x64xf32>
    %62 = arith.addf %59, %61 : vector<32x64xf32>
    %cst_29 = arith.constant dense<0.000000e+00> : vector<64xf32>
    %63 = vector.multi_reduction <add>, %62, %cst_29 [0] : vector<32x64xf32> to vector<64xf32>
    %64 = vector.shape_cast %63 : vector<64xf32> to vector<1x64xf32>
    %65 = arith.mulf %62, %62 : vector<32x64xf32>
    %cst_30 = arith.constant dense<0.000000e+00> : vector<64xf32>
    %66 = vector.multi_reduction <add>, %65, %cst_30 [0] : vector<32x64xf32> to vector<64xf32>
    %67 = vector.shape_cast %66 : vector<64xf32> to vector<1x64xf32>
    %68 = tpu.concatenate %64, %67 in 0 : vector<1x64xf32>, vector<1x64xf32> -> vector<2x64xf32>
    %c0_31 = arith.constant 0 : index
    %c0_32 = arith.constant 0 : index
    %c0_33 = arith.constant 0 : index
    %69 = vector.load %arg8[%c0_31, %c0_32, %c0_33] : memref<1x2x64xf32, #tpu.memory_space<vmem>>, vector<1x2x64xf32>
    %70 = vector.shape_cast %69 : vector<1x2x64xf32> to vector<2x64xf32>
    %71 = vector.shape_cast %68 : vector<2x64xf32> to vector<1x2x64xf32>
    tpu.vector_store %arg8[%c0_31, %c0_32, %c0_33], %71 {strides = array<i32>} : memref<1x2x64xf32, #tpu.memory_space<vmem>>, vector<1x2x64xf32>,
    %72 = vector.shape_cast %62 : vector<32x64xf32> to vector<2x16x64xf32>
    %73 = arith.truncf %72 : vector<2x16x64xf32> to vector<2x16x64xbf16>
    %c0_34 = arith.constant 0 : index
    %c0_35 = arith.constant 0 : index
    %c0_36 = arith.constant 0 : index
    %74 = vector.load %arg7[%c0_34, %c0_35, %c0_36] : memref<2x16x64xbf16, #tpu.memory_space<vmem>>, vector<2x16x64xbf16>
    tpu.vector_store %arg7[%c0_34, %c0_35, %c0_36], %73 {strides = array<i32>} : memref<2x16x64xbf16, #tpu.memory_space<vmem>>, vector<2x16x64xbf16>,
    return
  }
  func.func @transform_0(%arg0: i32) -> (i32, i32, i32) {
    %c0_i32 = arith.constant 0 : i32
    %c0_i32_0 = arith.constant 0 : i32
    %c0_i32_1 = arith.constant 0 : i32
    %c0_i32_2 = arith.constant 0 : i32
    return %c0_i32, %c0_i32_0, %c0_i32_1 : i32, i32, i32
  }
  func.func @transform_1(%arg0: i32) -> (i32, i32) {
    %c0_i32 = arith.constant 0 : i32
    %c0_i32_0 = arith.constant 0 : i32
    %c0_i32_1 = arith.constant 0 : i32
    return %c0_i32, %c0_i32_0 : i32, i32
  }
  func.func @transform_2(%arg0: i32) -> (i32, i32) {
    %c0_i32 = arith.constant 0 : i32
    %c0_i32_0 = arith.constant 0 : i32
    %c0_i32_1 = arith.constant 0 : i32
    return %c0_i32, %c0_i32_0 : i32, i32
  }
  func.func @transform_3(%arg0: i32) -> (i32, i32, i32) {
    %c0_i32 = arith.constant 0 : i32
    %c0_i32_0 = arith.constant 0 : i32
    %c0_i32_1 = arith.constant 0 : i32
    return %arg0, %c0_i32, %c0_i32_0 : i32, i32, i32
  }
  func.func @transform_4(%arg0: i32) -> (i32, i32, i32) {
    %c0_i32 = arith.constant 0 : i32
    %c0_i32_0 = arith.constant 0 : i32
    %c0_i32_1 = arith.constant 0 : i32
    %c0_i32_2 = arith.constant 0 : i32
    return %c0_i32, %c0_i32_0, %c0_i32_1 : i32, i32, i32
  }
  func.func @transform_5(%arg0: i32) -> (i32, i32) {
    %c0_i32 = arith.constant 0 : i32
    %c0_i32_0 = arith.constant 0 : i32
    %c0_i32_1 = arith.constant 0 : i32
    return %c0_i32, %c0_i32_0 : i32, i32
  }
  func.func @transform_6(%arg0: i32) -> (i32, i32, i32) {
    %c0_i32 = arith.constant 0 : i32
    %c0_i32_0 = arith.constant 0 : i32
    %c0_i32_1 = arith.constant 0 : i32
    return %arg0, %c0_i32, %c0_i32_0 : i32, i32, i32
  }
  func.func @transform_7(%arg0: i32) -> (i32, i32, i32) {
    %c0_i32 = arith.constant 0 : i32
    %c0_i32_0 = arith.constant 0 : i32
    %c0_i32_1 = arith.constant 0 : i32
    return %arg0, %c0_i32, %c0_i32_0 : i32, i32, i32
  }
}

module attributes {stable_mosaic.version = 11 : i64} {
  func.func @_bn_conv_kernel(%arg0: i32, %arg1: memref<2x2x128xf32, #tpu.memory_space<vmem>>, %arg2: memref<1x128xf32, #tpu.memory_space<vmem>>, %arg3: memref<1x128xf32, #tpu.memory_space<vmem>>, %arg4: memref<2x8x128xbf16, #tpu.memory_space<vmem>>, %arg5: memref<3x128x128xbf16, #tpu.memory_space<vmem>>, %arg6: memref<1x128xf32, #tpu.memory_space<vmem>>, %arg7: memref<2x8x128xbf16, #tpu.memory_space<vmem>>, %arg8: memref<1x2x128xf32, #tpu.memory_space<vmem>>) attributes {dimension_semantics = [#tpu.dimension_semantics<parallel>], iteration_bounds = array<i64: 2>, scalar_prefetch = 0 : i64, scratch_operands = 0 : i64, tpu.core_type = #tpu.core_type<tc>, window_params = [{pipeline_mode = #tpu.pipeline_mode<synchronous>, transform_indices = @transform_0, window_bounds = array<i64: 2, 2, 128>}, {pipeline_mode = #tpu.pipeline_mode<synchronous>, transform_indices = @transform_1, window_bounds = array<i64: 1, 128>}, {pipeline_mode = #tpu.pipeline_mode<synchronous>, transform_indices = @transform_2, window_bounds = array<i64: 1, 128>}, {transform_indices = @transform_3, window_bounds = array<i64: 2, 8, 128>}, {pipeline_mode = #tpu.pipeline_mode<synchronous>, transform_indices = @transform_4, window_bounds = array<i64: 3, 128, 128>}, {pipeline_mode = #tpu.pipeline_mode<synchronous>, transform_indices = @transform_5, window_bounds = array<i64: 1, 128>}, {transform_indices = @transform_6, window_bounds = array<i64: 2, 8, 128>}, {transform_indices = @transform_7, window_bounds = array<i64: 1, 2, 128>}]} {
    %c0 = arith.constant 0 : index
    %c0_0 = arith.constant 0 : index
    %c0_1 = arith.constant 0 : index
    %0 = vector.load %arg1[%c0, %c0_0, %c0_1] : memref<2x2x128xf32, #tpu.memory_space<vmem>>, vector<2x2x128xf32>
    %cst = arith.constant dense<0.000000e+00> : vector<2x128xf32>
    %1 = vector.multi_reduction <add>, %0, %cst [0] : vector<2x2x128xf32> to vector<2x128xf32>
    %c0_2 = arith.constant 0 : index
    %c0_3 = arith.constant 0 : index
    %2 = vector.load %arg2[%c0_2, %c0_3] : memref<1x128xf32, #tpu.memory_space<vmem>>, vector<1x128xf32>
    %c0_4 = arith.constant 0 : index
    %c0_5 = arith.constant 0 : index
    %3 = vector.load %arg3[%c0_4, %c0_5] : memref<1x128xf32, #tpu.memory_space<vmem>>, vector<1x128xf32>
    %4 = vector.extract_strided_slice %1 {offsets = [0, 0], sizes = [1, 128], strides = [1, 1]} : vector<2x128xf32> to vector<1x128xf32>
    %cst_6 = arith.constant 3.125000e-02 : f32
    %5 = vector.broadcast %cst_6 : f32 to vector<1x128xf32>
    %6 = arith.mulf %4, %5 : vector<1x128xf32>
    %7 = vector.extract_strided_slice %1 {offsets = [1, 0], sizes = [1, 128], strides = [1, 1]} : vector<2x128xf32> to vector<1x128xf32>
    %cst_7 = arith.constant 3.125000e-02 : f32
    %8 = vector.broadcast %cst_7 : f32 to vector<1x128xf32>
    %9 = arith.mulf %7, %8 : vector<1x128xf32>
    %10 = arith.mulf %6, %6 : vector<1x128xf32>
    %11 = arith.subf %9, %10 : vector<1x128xf32>
    %cst_8 = arith.constant 0.000000e+00 : f32
    %12 = vector.broadcast %cst_8 : f32 to vector<1x128xf32>
    %13 = arith.maximumf %11, %12 : vector<1x128xf32>
    %cst_9 = arith.constant 9.99999974E-6 : f32
    %14 = vector.broadcast %cst_9 : f32 to vector<1x128xf32>
    %15 = arith.addf %13, %14 : vector<1x128xf32>
    %16 = math.rsqrt %15 : vector<1x128xf32>
    %17 = arith.mulf %2, %16 : vector<1x128xf32>
    %18 = arith.mulf %6, %17 : vector<1x128xf32>
    %19 = arith.subf %3, %18 : vector<1x128xf32>
    %c0_10 = arith.constant 0 : index
    %c0_11 = arith.constant 0 : index
    %c0_12 = arith.constant 0 : index
    %20 = vector.load %arg4[%c0_10, %c0_11, %c0_12] : memref<2x8x128xbf16, #tpu.memory_space<vmem>>, vector<2x8x128xbf16>
    %21 = arith.extf %20 : vector<2x8x128xbf16> to vector<2x8x128xf32>
    %22 = vector.shape_cast %17 : vector<1x128xf32> to vector<1x1x128xf32>
    %23 = vector.broadcast %22 : vector<1x1x128xf32> to vector<2x8x128xf32>
    %24 = arith.mulf %23, %21 : vector<2x8x128xf32>
    %25 = vector.shape_cast %19 : vector<1x128xf32> to vector<1x1x128xf32>
    %26 = vector.broadcast %25 : vector<1x1x128xf32> to vector<2x8x128xf32>
    %27 = arith.addf %24, %26 : vector<2x8x128xf32>
    %28 = vector.shape_cast %27 : vector<2x8x128xf32> to vector<16x128xf32>
    %29 = tpu.iota {dimensions = array<i32: 1>} : vector<2x8x128xi32>
    %c0_i32 = arith.constant 0 : i32
    %30 = vector.broadcast %c0_i32 : i32 to vector<2x8x128xi32>
    %31 = arith.cmpi eq, %29, %30 : vector<2x8x128xi32>
    %cst_13 = arith.constant 0.000000e+00 : f32
    %cst_14 = arith.constant 1.000000e+00 : f32
    %32 = vector.broadcast %cst_13 : f32 to vector<2x8x128xf32>
    %33 = vector.broadcast %cst_14 : f32 to vector<2x8x128xf32>
    %34 = arith.select %31, %32, %33 : vector<2x8x128xi1>, vector<2x8x128xf32>
    %35 = vector.shape_cast %34 : vector<2x8x128xf32> to vector<16x128xf32>
    %c7_i32 = arith.constant 7 : i32
    %36 = vector.broadcast %c7_i32 : i32 to vector<2x8x128xi32>
    %37 = arith.cmpi eq, %29, %36 : vector<2x8x128xi32>
    %cst_15 = arith.constant 0.000000e+00 : f32
    %cst_16 = arith.constant 1.000000e+00 : f32
    %38 = vector.broadcast %cst_15 : f32 to vector<2x8x128xf32>
    %39 = vector.broadcast %cst_16 : f32 to vector<2x8x128xf32>
    %40 = arith.select %37, %38, %39 : vector<2x8x128xi1>, vector<2x8x128xf32>
    %41 = vector.shape_cast %40 : vector<2x8x128xf32> to vector<16x128xf32>
    %c1_i32 = arith.constant 1 : i32
    %42 = tpu.dynamic_rotate %28 by %c1_i32 dim 0 : vector<16x128xf32>, i32 -> vector<16x128xf32>
    %43 = arith.mulf %42, %35 : vector<16x128xf32>
    %c15_i32 = arith.constant 15 : i32
    %44 = tpu.dynamic_rotate %28 by %c15_i32 dim 0 : vector<16x128xf32>, i32 -> vector<16x128xf32>
    %45 = arith.mulf %44, %41 : vector<16x128xf32>
    %46 = arith.truncf %28 : vector<16x128xf32> to vector<16x128xbf16>
    %47 = arith.truncf %43 : vector<16x128xf32> to vector<16x128xbf16>
    %48 = arith.truncf %45 : vector<16x128xf32> to vector<16x128xbf16>
    %c0_17 = arith.constant 0 : index
    %c0_18 = arith.constant 0 : index
    %c0_19 = arith.constant 0 : index
    %49 = vector.load %arg5[%c0_17, %c0_18, %c0_19] : memref<3x128x128xbf16, #tpu.memory_space<vmem>>, vector<1x128x128xbf16>
    %50 = vector.shape_cast %49 : vector<1x128x128xbf16> to vector<128x128xbf16>
    %cst_20 = arith.constant dense<0.000000e+00> : vector<16x128xf32>
    %51 = tpu.matmul %47, %50, %cst_20 {dimension_numbers = #tpu.dot_dimension_numbers<[1], [0], [0], [1], [0, 0, 1, 1], [], []>} : vector<16x128xbf16>, vector<128x128xbf16>, vector<16x128xf32> -> vector<16x128xf32>
    %c1 = arith.constant 1 : index
    %c0_21 = arith.constant 0 : index
    %c0_22 = arith.constant 0 : index
    %52 = vector.load %arg5[%c1, %c0_21, %c0_22] : memref<3x128x128xbf16, #tpu.memory_space<vmem>>, vector<1x128x128xbf16>
    %53 = vector.shape_cast %52 : vector<1x128x128xbf16> to vector<128x128xbf16>
    %cst_23 = arith.constant dense<0.000000e+00> : vector<16x128xf32>
    %54 = tpu.matmul %46, %53, %cst_23 {dimension_numbers = #tpu.dot_dimension_numbers<[1], [0], [0], [1], [0, 0, 1, 1], [], []>} : vector<16x128xbf16>, vector<128x128xbf16>, vector<16x128xf32> -> vector<16x128xf32>
    %55 = arith.addf %51, %54 : vector<16x128xf32>
    %c2 = arith.constant 2 : index
    %c0_24 = arith.constant 0 : index
    %c0_25 = arith.constant 0 : index
    %56 = vector.load %arg5[%c2, %c0_24, %c0_25] : memref<3x128x128xbf16, #tpu.memory_space<vmem>>, vector<1x128x128xbf16>
    %57 = vector.shape_cast %56 : vector<1x128x128xbf16> to vector<128x128xbf16>
    %cst_26 = arith.constant dense<0.000000e+00> : vector<16x128xf32>
    %58 = tpu.matmul %48, %57, %cst_26 {dimension_numbers = #tpu.dot_dimension_numbers<[1], [0], [0], [1], [0, 0, 1, 1], [], []>} : vector<16x128xbf16>, vector<128x128xbf16>, vector<16x128xf32> -> vector<16x128xf32>
    %59 = arith.addf %55, %58 : vector<16x128xf32>
    %c0_27 = arith.constant 0 : index
    %c0_28 = arith.constant 0 : index
    %60 = vector.load %arg6[%c0_27, %c0_28] : memref<1x128xf32, #tpu.memory_space<vmem>>, vector<1x128xf32>
    %61 = vector.broadcast %60 : vector<1x128xf32> to vector<16x128xf32>
    %62 = arith.addf %59, %61 : vector<16x128xf32>
    %cst_29 = arith.constant dense<0.000000e+00> : vector<128xf32>
    %63 = vector.multi_reduction <add>, %62, %cst_29 [0] : vector<16x128xf32> to vector<128xf32>
    %64 = vector.shape_cast %63 : vector<128xf32> to vector<1x128xf32>
    %65 = arith.mulf %62, %62 : vector<16x128xf32>
    %cst_30 = arith.constant dense<0.000000e+00> : vector<128xf32>
    %66 = vector.multi_reduction <add>, %65, %cst_30 [0] : vector<16x128xf32> to vector<128xf32>
    %67 = vector.shape_cast %66 : vector<128xf32> to vector<1x128xf32>
    %68 = tpu.concatenate %64, %67 in 0 : vector<1x128xf32>, vector<1x128xf32> -> vector<2x128xf32>
    %c0_31 = arith.constant 0 : index
    %c0_32 = arith.constant 0 : index
    %c0_33 = arith.constant 0 : index
    %69 = vector.load %arg8[%c0_31, %c0_32, %c0_33] : memref<1x2x128xf32, #tpu.memory_space<vmem>>, vector<1x2x128xf32>
    %70 = vector.shape_cast %69 : vector<1x2x128xf32> to vector<2x128xf32>
    %71 = vector.shape_cast %68 : vector<2x128xf32> to vector<1x2x128xf32>
    tpu.vector_store %arg8[%c0_31, %c0_32, %c0_33], %71 {strides = array<i32>} : memref<1x2x128xf32, #tpu.memory_space<vmem>>, vector<1x2x128xf32>,
    %72 = vector.shape_cast %62 : vector<16x128xf32> to vector<2x8x128xf32>
    %73 = arith.truncf %72 : vector<2x8x128xf32> to vector<2x8x128xbf16>
    %c0_34 = arith.constant 0 : index
    %c0_35 = arith.constant 0 : index
    %c0_36 = arith.constant 0 : index
    %74 = vector.load %arg7[%c0_34, %c0_35, %c0_36] : memref<2x8x128xbf16, #tpu.memory_space<vmem>>, vector<2x8x128xbf16>
    tpu.vector_store %arg7[%c0_34, %c0_35, %c0_36], %73 {strides = array<i32>} : memref<2x8x128xbf16, #tpu.memory_space<vmem>>, vector<2x8x128xbf16>,
    return
  }
  func.func @transform_0(%arg0: i32) -> (i32, i32, i32) {
    %c0_i32 = arith.constant 0 : i32
    %c0_i32_0 = arith.constant 0 : i32
    %c0_i32_1 = arith.constant 0 : i32
    %c0_i32_2 = arith.constant 0 : i32
    return %c0_i32, %c0_i32_0, %c0_i32_1 : i32, i32, i32
  }
  func.func @transform_1(%arg0: i32) -> (i32, i32) {
    %c0_i32 = arith.constant 0 : i32
    %c0_i32_0 = arith.constant 0 : i32
    %c0_i32_1 = arith.constant 0 : i32
    return %c0_i32, %c0_i32_0 : i32, i32
  }
  func.func @transform_2(%arg0: i32) -> (i32, i32) {
    %c0_i32 = arith.constant 0 : i32
    %c0_i32_0 = arith.constant 0 : i32
    %c0_i32_1 = arith.constant 0 : i32
    return %c0_i32, %c0_i32_0 : i32, i32
  }
  func.func @transform_3(%arg0: i32) -> (i32, i32, i32) {
    %c0_i32 = arith.constant 0 : i32
    %c0_i32_0 = arith.constant 0 : i32
    %c0_i32_1 = arith.constant 0 : i32
    return %arg0, %c0_i32, %c0_i32_0 : i32, i32, i32
  }
  func.func @transform_4(%arg0: i32) -> (i32, i32, i32) {
    %c0_i32 = arith.constant 0 : i32
    %c0_i32_0 = arith.constant 0 : i32
    %c0_i32_1 = arith.constant 0 : i32
    %c0_i32_2 = arith.constant 0 : i32
    return %c0_i32, %c0_i32_0, %c0_i32_1 : i32, i32, i32
  }
  func.func @transform_5(%arg0: i32) -> (i32, i32) {
    %c0_i32 = arith.constant 0 : i32
    %c0_i32_0 = arith.constant 0 : i32
    %c0_i32_1 = arith.constant 0 : i32
    return %c0_i32, %c0_i32_0 : i32, i32
  }
  func.func @transform_6(%arg0: i32) -> (i32, i32, i32) {
    %c0_i32 = arith.constant 0 : i32
    %c0_i32_0 = arith.constant 0 : i32
    %c0_i32_1 = arith.constant 0 : i32
    return %arg0, %c0_i32, %c0_i32_0 : i32, i32, i32
  }
  func.func @transform_7(%arg0: i32) -> (i32, i32, i32) {
    %c0_i32 = arith.constant 0 : i32
    %c0_i32_0 = arith.constant 0 : i32
    %c0_i32_1 = arith.constant 0 : i32
    return %arg0, %c0_i32, %c0_i32_0 : i32, i32, i32
  }
}

module attributes {stable_mosaic.version = 11 : i64} {
  func.func @_bn_relu_pool_kernel(%arg0: i32, %arg1: memref<2x2x128xf32, #tpu.memory_space<vmem>>, %arg2: memref<1x128xf32, #tpu.memory_space<vmem>>, %arg3: memref<1x128xf32, #tpu.memory_space<vmem>>, %arg4: memref<4x8x128xbf16, #tpu.memory_space<vmem>>, %arg5: memref<16x128xf32, #tpu.memory_space<vmem>>) attributes {dimension_semantics = [#tpu.dimension_semantics<arbitrary>], iteration_bounds = array<i64: 1>, scalar_prefetch = 0 : i64, scratch_operands = 0 : i64, tpu.core_type = #tpu.core_type<tc>, window_params = [{pipeline_mode = #tpu.pipeline_mode<synchronous>, transform_indices = @transform_0, window_bounds = array<i64: 2, 2, 128>}, {pipeline_mode = #tpu.pipeline_mode<synchronous>, transform_indices = @transform_1, window_bounds = array<i64: 1, 128>}, {pipeline_mode = #tpu.pipeline_mode<synchronous>, transform_indices = @transform_2, window_bounds = array<i64: 1, 128>}, {pipeline_mode = #tpu.pipeline_mode<synchronous>, transform_indices = @transform_3, window_bounds = array<i64: 4, 8, 128>}, {pipeline_mode = #tpu.pipeline_mode<synchronous>, transform_indices = @transform_4, window_bounds = array<i64: 16, 128>}]} {
    %c0 = arith.constant 0 : index
    %c0_0 = arith.constant 0 : index
    %c0_1 = arith.constant 0 : index
    %0 = vector.load %arg1[%c0, %c0_0, %c0_1] : memref<2x2x128xf32, #tpu.memory_space<vmem>>, vector<2x2x128xf32>
    %cst = arith.constant dense<0.000000e+00> : vector<2x128xf32>
    %1 = vector.multi_reduction <add>, %0, %cst [0] : vector<2x2x128xf32> to vector<2x128xf32>
    %c0_2 = arith.constant 0 : index
    %c0_3 = arith.constant 0 : index
    %2 = vector.load %arg2[%c0_2, %c0_3] : memref<1x128xf32, #tpu.memory_space<vmem>>, vector<1x128xf32>
    %c0_4 = arith.constant 0 : index
    %c0_5 = arith.constant 0 : index
    %3 = vector.load %arg3[%c0_4, %c0_5] : memref<1x128xf32, #tpu.memory_space<vmem>>, vector<1x128xf32>
    %4 = vector.extract_strided_slice %1 {offsets = [0, 0], sizes = [1, 128], strides = [1, 1]} : vector<2x128xf32> to vector<1x128xf32>
    %cst_6 = arith.constant 3.125000e-02 : f32
    %5 = vector.broadcast %cst_6 : f32 to vector<1x128xf32>
    %6 = arith.mulf %4, %5 : vector<1x128xf32>
    %7 = vector.extract_strided_slice %1 {offsets = [1, 0], sizes = [1, 128], strides = [1, 1]} : vector<2x128xf32> to vector<1x128xf32>
    %cst_7 = arith.constant 3.125000e-02 : f32
    %8 = vector.broadcast %cst_7 : f32 to vector<1x128xf32>
    %9 = arith.mulf %7, %8 : vector<1x128xf32>
    %10 = arith.mulf %6, %6 : vector<1x128xf32>
    %11 = arith.subf %9, %10 : vector<1x128xf32>
    %cst_8 = arith.constant 0.000000e+00 : f32
    %12 = vector.broadcast %cst_8 : f32 to vector<1x128xf32>
    %13 = arith.maximumf %11, %12 : vector<1x128xf32>
    %cst_9 = arith.constant 9.99999974E-6 : f32
    %14 = vector.broadcast %cst_9 : f32 to vector<1x128xf32>
    %15 = arith.addf %13, %14 : vector<1x128xf32>
    %16 = math.rsqrt %15 : vector<1x128xf32>
    %17 = arith.mulf %2, %16 : vector<1x128xf32>
    %18 = arith.mulf %6, %17 : vector<1x128xf32>
    %19 = arith.subf %3, %18 : vector<1x128xf32>
    %c0_10 = arith.constant 0 : index
    %c0_11 = arith.constant 0 : index
    %c0_12 = arith.constant 0 : index
    %20 = vector.load %arg4[%c0_10, %c0_11, %c0_12] : memref<4x8x128xbf16, #tpu.memory_space<vmem>>, vector<4x8x128xbf16>
    %21 = arith.extf %20 : vector<4x8x128xbf16> to vector<4x8x128xf32>
    %22 = vector.shape_cast %17 : vector<1x128xf32> to vector<1x1x128xf32>
    %23 = vector.broadcast %22 : vector<1x1x128xf32> to vector<4x8x128xf32>
    %24 = arith.mulf %23, %21 : vector<4x8x128xf32>
    %25 = vector.shape_cast %19 : vector<1x128xf32> to vector<1x1x128xf32>
    %26 = vector.broadcast %25 : vector<1x1x128xf32> to vector<4x8x128xf32>
    %27 = arith.addf %24, %26 : vector<4x8x128xf32>
    %cst_13 = arith.constant 0.000000e+00 : f32
    %28 = vector.broadcast %cst_13 : f32 to vector<4x8x128xf32>
    %29 = arith.maximumf %27, %28 : vector<4x8x128xf32>
    %30 = vector.shape_cast %29 : vector<4x8x128xf32> to vector<32x128xf32>
    %31 = vector.shape_cast %30 : vector<32x128xf32> to vector<16x2x128xf32>
    %cst_14 = arith.constant dense<0xFF800000> : vector<16x128xf32>
    %32 = vector.multi_reduction <maximumf>, %31, %cst_14 [1] : vector<16x2x128xf32> to vector<16x128xf32>
    %c0_15 = arith.constant 0 : index
    %c0_16 = arith.constant 0 : index
    %33 = vector.load %arg5[%c0_15, %c0_16] : memref<16x128xf32, #tpu.memory_space<vmem>>, vector<16x128xf32>
    tpu.vector_store %arg5[%c0_15, %c0_16], %32 {strides = array<i32>} : memref<16x128xf32, #tpu.memory_space<vmem>>, vector<16x128xf32>,
    return
  }
  func.func @transform_0(%arg0: i32) -> (i32, i32, i32) {
    %c0_i32 = arith.constant 0 : i32
    %c0_i32_0 = arith.constant 0 : i32
    %c0_i32_1 = arith.constant 0 : i32
    %c0_i32_2 = arith.constant 0 : i32
    return %c0_i32, %c0_i32_0, %c0_i32_1 : i32, i32, i32
  }
  func.func @transform_1(%arg0: i32) -> (i32, i32) {
    %c0_i32 = arith.constant 0 : i32
    %c0_i32_0 = arith.constant 0 : i32
    %c0_i32_1 = arith.constant 0 : i32
    return %c0_i32, %c0_i32_0 : i32, i32
  }
  func.func @transform_2(%arg0: i32) -> (i32, i32) {
    %c0_i32 = arith.constant 0 : i32
    %c0_i32_0 = arith.constant 0 : i32
    %c0_i32_1 = arith.constant 0 : i32
    return %c0_i32, %c0_i32_0 : i32, i32
  }
  func.func @transform_3(%arg0: i32) -> (i32, i32, i32) {
    %c0_i32 = arith.constant 0 : i32
    %c0_i32_0 = arith.constant 0 : i32
    %c0_i32_1 = arith.constant 0 : i32
    %c0_i32_2 = arith.constant 0 : i32
    return %c0_i32, %c0_i32_0, %c0_i32_1 : i32, i32, i32
  }
  func.func @transform_4(%arg0: i32) -> (i32, i32) {
    %c0_i32 = arith.constant 0 : i32
    %c0_i32_0 = arith.constant 0 : i32
    %c0_i32_1 = arith.constant 0 : i32
    return %c0_i32, %c0_i32_0 : i32, i32
  }
}

</mosaic_0001>

<llo_original>
// kernel: cnn_forward.9
$region0: #{cnn_forward.9}
  #allocation0 [shape = 'u32[]', space=smem, size = 0x4, offset = 0x4, fixed_abs, tag = 'smem constant byte address 0x4 - core index']
  #allocation1 [shape = 'u32[144,128]{1,0:T(1,128)}', space=vmem, size = 0x12000, scoped, tag = 'internal scratch']
  %s0 = inlined_call_operand.vmem [shape: f32[4,64,1], index: 0, kind: input, shape index: {}]
  %s1 = inlined_call_operand.vmem [shape: f32[3,16], index: 1, kind: input, shape index: {}]
  %s2 = inlined_call_operand.vmem [shape: f32[1,16], index: 2, kind: input, shape index: {}]
  %s3 = inlined_call_operand.vmem [shape: bf16[4,64,16], index: 3, kind: output, shape index: {0}]
  %s4 = inlined_call_operand.vmem [shape: f32[2,2,16], index: 4, kind: output, shape index: {1}]
  %5 = xla_tuple %s3, %s4
  %s6 = sld [smem:[#allocation0]]
  $region53: #{cnn_forward.9} parent=0
    _
  %s8 = ssub.s32 1, %s6
  %s9 = scalar_select 0, %s8, %s6
  loop: start=0, step=1, limit=4
  $region2: #{cnn_forward.9} parent=0 // loop_pre_header
    _
  $region3: #{cnn_forward.9} parent=0 // loop_header
    %s11 = sphi 0, %s15
    %p12 = scmp.ge.s32.totalorder %s11, 4
    %s21 = sphi 0, %s23
    %s24 = sphi 0, %s21
    %s25 = sphi 0, %s24
    %s41 = sphi 0, %s25
    %s45 = sphi 0, %s45
    %s47 = sphi 0, %s45
    %s48 = sphi 0, %s47
    %s62 = sphi 0, %s48
    %s66 = sphi 0, %s66
    %s68 = sphi 0, %s66
    %s69 = sphi 0, %s68
    %s83 = sphi 0, %s69
    %s89 = sphi 0, %s91
    %s92 = sphi 0, %s89
    %s93 = sphi 0, %s92
    %s109 = sphi 0, %s93
    %s115 = sphi 0, %s117
    %s118 = sphi 0, %s115
    %s119 = sphi 0, %s118
    %s135 = sphi 0, %s119
  $region4: #{cnn_forward.9} parent=0 // loop_header_branch
    %14 = sbr.rel (%p12) target = $region8
  $region5: #{cnn_forward.9} parent=0 // loop_body
    %s16 = ssub.s32 %s11, 1
    %s17 = ssub.s32 %s11, 2
    %s18 = sadd.s32 %s11, 1
    %s19 = ssub.s32 %s11, %s18
    %p20 = scmp.eq.s32.totalorder %s19, 0
    %s22 = sadd.s32 %s21, 1
    %s23 = scalar_select %p20, %s21, %s22
    %p26 = pneg %p20
    %p27 = scmp.eq.s32.totalorder %s11, 1
    %p28 = por %p26, %p27
    %p29 = scmp.ne.s32.totalorder %s21, %s24
    %p30 = scmp.eq.s32.totalorder %s11, 0
    %p31 = por %p29, %p30
    %p32 = scmp.ne.s32.totalorder %s21, %s24
    %p33 = scmp.eq.s32.totalorder %s16, 1
    %p34 = por %p32, %p33
    %p35 = scmp.ne.s32.totalorder %s24, %s25
    %p36 = scmp.eq.s32.totalorder %s16, 0
    %p37 = por %p35, %p36
    %p38 = scmp.ne.s32.totalorder %s24, %s25
    %p39 = scmp.eq.s32.totalorder %s17, 1
    %p40 = por %p38, %p39
    %p42 = scmp.ne.s32.totalorder %s25, %s41
    %p43 = scmp.eq.s32.totalorder %s17, 0
    %p44 = por %p42, %p43
    %s46 = sadd.s32 %s45, 1
    %p49 = scmp.eq.s32.totalorder %s11, 1
    %p50 = scmp.ne.s32.totalorder %s45, %s47
    %p51 = scmp.eq.s32.totalorder %s11, 0
    %p52 = por %p50, %p51
    %p53 = scmp.ne.s32.totalorder %s45, %s47
    %p54 = scmp.eq.s32.totalorder %s16, 1
    %p55 = por %p53, %p54
    %p56 = scmp.ne.s32.totalorder %s47, %s48
    %p57 = scmp.eq.s32.totalorder %s16, 0
    %p58 = por %p56, %p57
    %p59 = scmp.ne.s32.totalorder %s47, %s48
    %p60 = scmp.eq.s32.totalorder %s17, 1
    %p61 = por %p59, %p60
    %p63 = scmp.ne.s32.totalorder %s48, %s62
    %p64 = scmp.eq.s32.totalorder %s17, 0
    %p65 = por %p63, %p64
    %s67 = sadd.s32 %s66, 1
    %p70 = scmp.eq.s32.totalorder %s11, 1
    %p71 = scmp.ne.s32.totalorder %s66, %s68
    %p72 = scmp.eq.s32.totalorder %s11, 0
    %p73 = por %p71, %p72
    %p74 = scmp.ne.s32.totalorder %s66, %s68
    %p75 = scmp.eq.s32.totalorder %s16, 1
    %p76 = por %p74, %p75
    %p77 = scmp.ne.s32.totalorder %s68, %s69
    %p78 = scmp.eq.s32.totalorder %s16, 0
    %p79 = por %p77, %p78
    %p80 = scmp.ne.s32.totalorder %s68, %s69
    %p81 = scmp.eq.s32.totalorder %s17, 1
    %p82 = por %p80, %p81
    %p84 = scmp.ne.s32.totalorder %s69, %s83
    %p85 = scmp.eq.s32.totalorder %s17, 0
    %p86 = por %p84, %p85
    %s87 = ssub.s32 %s11, %s18
    %p88 = scmp.eq.s32.totalorder %s87, 0
    %s90 = sadd.s32 %s89, 1
    %s91 = scalar_select %p88, %s89, %s90
    %p94 = pneg %p88
    %p95 = scmp.eq.s32.totalorder %s11, 1
    %p96 = por %p94, %p95
    %p97 = scmp.ne.s32.totalorder %s89, %s92
    %p98 = scmp.eq.s32.totalorder %s11, 0
    %p99 = por %p97, %p98
    %p100 = scmp.ne.s32.totalorder %s89, %s92
    %p101 = scmp.eq.s32.totalorder %s16, 1
    %p102 = por %p100, %p101
    %p103 = scmp.ne.s32.totalorder %s92, %s93
    %p104 = scmp.eq.s32.totalorder %s16, 0
    %p105 = por %p103, %p104
    %p106 = scmp.ne.s32.totalorder %s92, %s93
    %p107 = scmp.eq.s32.totalorder %s17, 1
    %p108 = por %p106, %p107
    %p110 = scmp.ne.s32.totalorder %s93, %s109
    %p111 = scmp.eq.s32.totalorder %s17, 0
    %p112 = por %p110, %p111
    %s113 = ssub.s32 %s11, %s18
    %p114 = scmp.eq.s32.totalorder %s113, 0
    %s116 = sadd.s32 %s115, 1
    %s117 = scalar_select %p114, %s115, %s116
    %p120 = pneg %p114
    %p121 = scmp.eq.s32.totalorder %s11, 1
    %p122 = por %p120, %p121
    %p123 = scmp.ne.s32.totalorder %s115, %s118
    %p124 = scmp.eq.s32.totalorder %s11, 0
    %p125 = por %p123, %p124
    %p126 = scmp.ne.s32.totalorder %s115, %s118
    %p127 = scmp.eq.s32.totalorder %s16, 1
    %p128 = por %p126, %p127
    %p129 = scmp.ne.s32.totalorder %s118, %s119
    %p130 = scmp.eq.s32.totalorder %s16, 0
    %p131 = por %p129, %p130
    %p132 = scmp.ne.s32.totalorder %s118, %s119
    %p133 = scmp.eq.s32.totalorder %s17, 1
    %p134 = por %p132, %p133
    %p136 = scmp.ne.s32.totalorder %s119, %s135
    %p137 = scmp.eq.s32.totalorder %s17, 0
    %p138 = por %p136, %p137
    %p139 = scmp.le.s32.totalorder 1, %s11
    %p140 = scmp.lt.s32.totalorder %s11, 3
    %p141 = pnand %p139, %p140
    %p142 = pneg %p141
    // Predicated region
    $region9: #{cnn_forward.9} parent=5 // pred_check
      _
    $region10: #{cnn_forward.9} parent=5 // pred_check_branch
      %144 = sbr.rel (%p141) target = $region12
    $region11: #{cnn_forward.9} parent=5 // pred_region
      %s145 = ssub.s32 %s11, 1
      // Predicated region
      $region13: #{cnn_forward.9} parent=11 // pred_check
        %p146 = pneg %p58
      $region14: #{cnn_forward.9} parent=11 // pred_check_branch
        %148 = sbr.rel (%p146) target = $region16
      $region15: #{cnn_forward.9} parent=11 // pred_region
        _
      $region16: #{cnn_forward.9} parent=11 // pred_fallthru
        _
      // Predicated region
      $region17: #{cnn_forward.9} parent=11 // pred_check
        %p149 = pneg %p79
      $region18: #{cnn_forward.9} parent=11 // pred_check_branch
        %151 = sbr.rel (%p149) target = $region20
      $region19: #{cnn_forward.9} parent=11 // pred_region
        _
      $region20: #{cnn_forward.9} parent=11 // pred_fallthru
        _
    $region12: #{cnn_forward.9} parent=5 // pred_fallthru
      _
    %p152 = scmp.lt.s32.totalorder %s11, 2
    // Predicated region
    $region21: #{cnn_forward.9} parent=5 // pred_check
      %p153 = pneg %p152
    $region22: #{cnn_forward.9} parent=5 // pred_check_branch
      %155 = sbr.rel (%p153) target = $region24
    $region23: #{cnn_forward.9} parent=5 // pred_region
      // Predicated region
      $region25: #{cnn_forward.9} parent=23 // pred_check
        %p156 = pneg %p31
      $region26: #{cnn_forward.9} parent=23 // pred_check_branch
        %158 = sbr.rel (%p156) target = $region28
      $region27: #{cnn_forward.9} parent=23 // pred_region
        %s159 = smul.u32 2, %s11
        %p160 = scmp.lt.s32.totalorder %s159, 3
        %s161 = scalar_select %p160, %s159, 3
        %s162 = smul.addr %s161, 8
        %s163 = smul.addr %s162, 8
        %s164 = scalar_lea.vmem %s0, %s163
        %s165 = smul.u32 2, %s11
      $region28: #{cnn_forward.9} parent=23 // pred_fallthru
        _
    $region24: #{cnn_forward.9} parent=5 // pred_fallthru
      _
    %p166 = scmp.le.s32.totalorder 1, %s11
    %p167 = scmp.lt.s32.totalorder %s11, 3
    %p168 = pnand %p166, %p167
    %p169 = pneg %p168
    // Predicated region
    $region29: #{cnn_forward.9} parent=5 // pred_check
      _
    $region30: #{cnn_forward.9} parent=5 // pred_check_branch
      %171 = sbr.rel (%p168) target = $region32
    $region31: #{cnn_forward.9} parent=5 // pred_region
      %s172 = ssub.s32 %s11, 1
      %s173 = smul.u32 2, %s16
      %p174 = scmp.lt.s32.totalorder %s173, 3
      %s175 = scalar_select %p174, %s173, 3
      %s176 = smul.addr %s175, 8
      %s177 = smul.addr %s176, 8
      %s178 = scalar_lea.vmem %s0, %s177
      %p179 = pneg %p37
      %p180 = pneg %p34
      %p181 = pneg %p58
      %p182 = pneg %p55
      %p183 = pneg %p79
      %p184 = pneg %p76
      %p185 = pneg %p105
      %p186 = pneg %p102
      %s187 = smul.u32 2, %s16
      %p188 = scmp.lt.s32.totalorder %s187, 3
      %s189 = scalar_select %p188, %s187, 3
      %s190 = smul.addr %s189, 8
      %s191 = smul.addr %s190, 4
      %s192 = scalar_lea.vmem %s3, %s191
      %p193 = pneg %p131
      %p194 = pneg %p128
      %p195 = scmp.lt.s32.totalorder %s16, 1
      %s196 = scalar_select %p195, %s16, 1
      %s197 = smul.addr %s196, 2
      %s198 = scalar_lea.vmem %s4, %s197
      %s199 = smul.u32 2, %s16
      %p200 = scmp.lt.s32.totalorder %s199, 3
      %s201 = scalar_select %p200, %s199, 3
      %s202 = smul.addr %s201, 8
      %s203 = smul.addr %s202, 8
      %s204 = scalar_lea.vmem %s0, %s203
      %s205 = smul.u32 2, %s16
      %s206 = smul.u32 2, %s16
      %p207 = scmp.lt.s32.totalorder %s206, 3
      %s208 = scalar_select %p207, %s206, 3
      %s209 = smul.addr %s208, 8
      %s210 = smul.addr %s209, 4
      %s211 = scalar_lea.vmem %s3, %s210
      %s212 = smul.u32 2, %s16
      %p213 = scmp.lt.s32.totalorder %s16, 1
      %s214 = scalar_select %p213, %s16, 1
      %s215 = smul.addr %s214, 2
      %s216 = scalar_lea.vmem %s4, %s215
      %v217 = vld [vmem:[%s204] sm:$0xff]
      %v218 = vld [vmem:[%s204 + $0x8] sm:$0xff]
      %v219 = vld [vmem:[%s204 + $0x10] sm:$0xff]
      %v220 = vld [vmem:[%s204 + $0x18] sm:$0xff]
      %v221 = vld [vmem:[%s204 + $0x20] sm:$0xff]
      %v222 = vld [vmem:[%s204 + $0x28] sm:$0xff]
      %v223 = vld [vmem:[%s204 + $0x30] sm:$0xff]
      %v224 = vld [vmem:[%s204 + $0x38] sm:$0xff]
      %v225 = vld [vmem:[%s204 + $0x40] sm:$0xff]
      %v226 = vld [vmem:[%s204 + $0x48] sm:$0xff]
      %v227 = vld [vmem:[%s204 + $0x50] sm:$0xff]
      %v228 = vld [vmem:[%s204 + $0x58] sm:$0xff]
      %v229 = vld [vmem:[%s204 + $0x60] sm:$0xff]
      %v230 = vld [vmem:[%s204 + $0x68] sm:$0xff]
      %v231 = vld [vmem:[%s204 + $0x70] sm:$0xff]
      %v232 = vld [vmem:[%s204 + $0x78] sm:$0xff]
      %v233 = vlaneseq
      %v234 = vshrl.u32 %v233, 7
      %v235 = vadd.s32 %v234, 8
      %v236 = vadd.s32 %v234, 16
      %v237 = vadd.s32 %v234, 24
      %v238 = vadd.s32 %v234, 32
      %v239 = vadd.s32 %v234, 40
      %v240 = vadd.s32 %v234, 48
      %v241 = vadd.s32 %v234, 56
      %vm242 = vcmp.eq.s32.totalorder %v234, 0
      %vm243 = vcmp.eq.s32.totalorder %v235, 0
      %vm244 = vcmp.eq.s32.totalorder %v236, 0
      %vm245 = vcmp.eq.s32.totalorder %v237, 0
      %vm246 = vcmp.eq.s32.totalorder %v238, 0
      %vm247 = vcmp.eq.s32.totalorder %v239, 0
      %vm248 = vcmp.eq.s32.totalorder %v240, 0
      %vm249 = vcmp.eq.s32.totalorder %v241, 0
      %v250 = vsel %vm242, 0.0, 1.0
      %v251 = vsel %vm243, 0.0, 1.0
      %v252 = vsel %vm244, 0.0, 1.0
      %v253 = vsel %vm245, 0.0, 1.0
      %v254 = vsel %vm246, 0.0, 1.0
      %v255 = vsel %vm247, 0.0, 1.0
      %v256 = vsel %vm248, 0.0, 1.0
      %v257 = vsel %vm249, 0.0, 1.0
      %vm258 = vcmp.eq.s32.totalorder %v234, 63
      %vm259 = vcmp.eq.s32.totalorder %v235, 63
      %vm260 = vcmp.eq.s32.totalorder %v236, 63
      %vm261 = vcmp.eq.s32.totalorder %v237, 63
      %vm262 = vcmp.eq.s32.totalorder %v238, 63
      %vm263 = vcmp.eq.s32.totalorder %v239, 63
      %vm264 = vcmp.eq.s32.totalorder %v240, 63
      %vm265 = vcmp.eq.s32.totalorder %v241, 63
      %v266 = vsel %vm258, 0.0, 1.0
      %v267 = vsel %vm259, 0.0, 1.0
      %v268 = vsel %vm260, 0.0, 1.0
      %v269 = vsel %vm261, 0.0, 1.0
      %v270 = vsel %vm262, 0.0, 1.0
      %v271 = vsel %vm263, 0.0, 1.0
      %v272 = vsel %vm264, 0.0, 1.0
      %v273 = vsel %vm265, 0.0, 1.0
      %v274 = vrot.slane %v217, 7
      %v275 = vrot.slane %v218, 7
      %v276 = vrot.slane %v219, 7
      %v277 = vrot.slane %v220, 7
      %v278 = vrot.slane %v221, 7
      %v279 = vrot.slane %v222, 7
      %v280 = vrot.slane %v223, 7
      %v281 = vrot.slane %v224, 7
      %v282 = vrot.slane %v225, 7
      %v283 = vrot.slane %v226, 7
      %v284 = vrot.slane %v227, 7
      %v285 = vrot.slane %v228, 7
      %v286 = vrot.slane %v229, 7
      %v287 = vrot.slane %v230, 7
      %v288 = vrot.slane %v231, 7
      %v289 = vrot.slane %v232, 7
      %vm290 = vcmp.lt.s32.totalorder %v234, 1
      %v291 = vsel %vm290, %v288, %v289
      %v292 = vsel %vm290, %v287, %v288
      %v293 = vsel %vm290, %v286, %v287
      %v294 = vsel %vm290, %v285, %v286
      %v295 = vsel %vm290, %v284, %v285
      %v296 = vsel %vm290, %v283, %v284
      %v297 = vsel %vm290, %v282, %v283
      %v298 = vsel %vm290, %v281, %v282
      %v299 = vsel %vm290, %v280, %v281
      %v300 = vsel %vm290, %v279, %v280
      %v301 = vsel %vm290, %v278, %v279
      %v302 = vsel %vm290, %v277, %v278
      %v303 = vsel %vm290, %v276, %v277
      %v304 = vsel %vm290, %v275, %v276
      %v305 = vsel %vm290, %v274, %v275
      %v306 = vsel %vm290, %v289, %v274
      %v307 = vmul.f32 %v306, %v250
      %v308 = vmul.f32 %v305, %v251
      %v309 = vmul.f32 %v304, %v252
      %v310 = vmul.f32 %v303, %v253
      %v311 = vmul.f32 %v302, %v254
      %v312 = vmul.f32 %v301, %v255
      %v313 = vmul.f32 %v300, %v256
      %v314 = vmul.f32 %v299, %v257
      %v315 = vmul.f32 %v298, %v250
      %v316 = vmul.f32 %v297, %v251
      %v317 = vmul.f32 %v296, %v252
      %v318 = vmul.f32 %v295, %v253
      %v319 = vmul.f32 %v294, %v254
      %v320 = vmul.f32 %v293, %v255
      %v321 = vmul.f32 %v292, %v256
      %v322 = vmul.f32 %v291, %v257
      %v323 = vrot.slane %v217, 1
      %v324 = vrot.slane %v218, 1
      %v325 = vrot.slane %v219, 1
      %v326 = vrot.slane %v220, 1
      %v327 = vrot.slane %v221, 1
      %v328 = vrot.slane %v222, 1
      %v329 = vrot.slane %v223, 1
      %v330 = vrot.slane %v224, 1
      %v331 = vrot.slane %v225, 1
      %v332 = vrot.slane %v226, 1
      %v333 = vrot.slane %v227, 1
      %v334 = vrot.slane %v228, 1
      %v335 = vrot.slane %v229, 1
      %v336 = vrot.slane %v230, 1
      %v337 = vrot.slane %v231, 1
      %v338 = vrot.slane %v232, 1
      %vm339 = vcmp.lt.s32.totalorder %v234, 7
      %v340 = vsel %vm339, %v337, %v338
      %v341 = vsel %vm339, %v336, %v337
      %v342 = vsel %vm339, %v335, %v336
      %v343 = vsel %vm339, %v334, %v335
      %v344 = vsel %vm339, %v333, %v334
      %v345 = vsel %vm339, %v332, %v333
      %v346 = vsel %vm339, %v331, %v332
      %v347 = vsel %vm339, %v330, %v331
      %v348 = vsel %vm339, %v329, %v330
      %v349 = vsel %vm339, %v328, %v329
      %v350 = vsel %vm339, %v327, %v328
      %v351 = vsel %vm339, %v326, %v327
      %v352 = vsel %vm339, %v325, %v326
      %v353 = vsel %vm339, %v324, %v325
      %v354 = vsel %vm339, %v323, %v324
      %v355 = vsel %vm339, %v338, %v323
      %v356 = vmul.f32 %v354, %v266
      %v357 = vmul.f32 %v353, %v267
      %v358 = vmul.f32 %v352, %v268
      %v359 = vmul.f32 %v351, %v269
      %v360 = vmul.f32 %v350, %v270
      %v361 = vmul.f32 %v349, %v271
      %v362 = vmul.f32 %v348, %v272
      %v363 = vmul.f32 %v347, %v273
      %v364 = vmul.f32 %v346, %v266
      %v365 = vmul.f32 %v345, %v267
      %v366 = vmul.f32 %v344, %v268
      %v367 = vmul.f32 %v343, %v269
      %v368 = vmul.f32 %v342, %v270
      %v369 = vmul.f32 %v341, %v271
      %v370 = vmul.f32 %v340, %v272
      %v371 = vmul.f32 %v355, %v273
      %v372 = vld [vmem:[%s1] sm:$0x7]
      %374 = vset.pattern.permute.xlu0 0
      %375 = vperm.xlu0 %374, %v307
      %v376 = vpop.permute.xlu0 %375
      %379 = vset.pattern.permute.xlu0 0
      %380 = vperm.xlu0 %379, %v308
      %v381 = vpop.permute.xlu0 %380
      %384 = vset.pattern.permute.xlu0 0
      %385 = vperm.xlu0 %384, %v309
      %v386 = vpop.permute.xlu0 %385
      %389 = vset.pattern.permute.xlu0 0
      %390 = vperm.xlu0 %389, %v310
      %v391 = vpop.permute.xlu0 %390
      %394 = vset.pattern.permute.xlu0 0
      %395 = vperm.xlu0 %394, %v311
      %v396 = vpop.permute.xlu0 %395
      %399 = vset.pattern.permute.xlu0 0
      %400 = vperm.xlu0 %399, %v312
      %v401 = vpop.permute.xlu0 %400
      %404 = vset.pattern.permute.xlu0 0
      %405 = vperm.xlu0 %404, %v313
      %v406 = vpop.permute.xlu0 %405
      %409 = vset.pattern.permute.xlu0 0
      %410 = vperm.xlu0 %409, %v314
      %v411 = vpop.permute.xlu0 %410
      %414 = vset.pattern.permute.xlu0 0
      %415 = vperm.xlu0 %414, %v315
      %v416 = vpop.permute.xlu0 %415
      %419 = vset.pattern.permute.xlu0 0
      %420 = vperm.xlu0 %419, %v316
      %v421 = vpop.permute.xlu0 %420
      %424 = vset.pattern.permute.xlu0 0
      %425 = vperm.xlu0 %424, %v317
      %v426 = vpop.permute.xlu0 %425
      %429 = vset.pattern.permute.xlu0 0
      %430 = vperm.xlu0 %429, %v318
      %v431 = vpop.permute.xlu0 %430
      %434 = vset.pattern.permute.xlu0 0
      %435 = vperm.xlu0 %434, %v319
      %v436 = vpop.permute.xlu0 %435
      %439 = vset.pattern.permute.xlu0 0
      %440 = vperm.xlu0 %439, %v320
      %v441 = vpop.permute.xlu0 %440
      %444 = vset.pattern.permute.xlu0 0
      %445 = vperm.xlu0 %444, %v321
      %v446 = vpop.permute.xlu0 %445
      %449 = vset.pattern.permute.xlu0 0
      %450 = vperm.xlu0 %449, %v322
      %v451 = vpop.permute.xlu0 %450
      %v453 = vlaneseq
      %v454 = vshrl.u32 %v453, 7
      %v455 = vsub.s32 0, %v454
      %v456 = vrot.slane %v372, %v455
      %v457 = vmul.f32 %v376, %v456
      %v458 = vmul.f32 %v381, %v456
      %v459 = vmul.f32 %v386, %v456
      %v460 = vmul.f32 %v391, %v456
      %v461 = vmul.f32 %v396, %v456
      %v462 = vmul.f32 %v401, %v456
      %v463 = vmul.f32 %v406, %v456
      %v464 = vmul.f32 %v411, %v456
      %v465 = vmul.f32 %v416, %v456
      %v466 = vmul.f32 %v421, %v456
      %v467 = vmul.f32 %v426, %v456
      %v468 = vmul.f32 %v431, %v456
      %v469 = vmul.f32 %v436, %v456
      %v470 = vmul.f32 %v441, %v456
      %v471 = vmul.f32 %v446, %v456
      %v472 = vmul.f32 %v451, %v456
      %474 = vset.pattern.permute.xlu0 0
      %475 = vperm.xlu0 %474, %v217
      %v476 = vpop.permute.xlu0 %475
      %479 = vset.pattern.permute.xlu0 0
      %480 = vperm.xlu0 %479, %v218
      %v481 = vpop.permute.xlu0 %480
      %484 = vset.pattern.permute.xlu0 0
      %485 = vperm.xlu0 %484, %v219
      %v486 = vpop.permute.xlu0 %485
      %489 = vset.pattern.permute.xlu0 0
      %490 = vperm.xlu0 %489, %v220
      %v491 = vpop.permute.xlu0 %490
      %494 = vset.pattern.permute.xlu0 0
      %495 = vperm.xlu0 %494, %v221
      %v496 = vpop.permute.xlu0 %495
      %499 = vset.pattern.permute.xlu0 0
      %500 = vperm.xlu0 %499, %v222
      %v501 = vpop.permute.xlu0 %500
      %504 = vset.pattern.permute.xlu0 0
      %505 = vperm.xlu0 %504, %v223
      %v506 = vpop.permute.xlu0 %505
      %509 = vset.pattern.permute.xlu0 0
      %510 = vperm.xlu0 %509, %v224
      %v511 = vpop.permute.xlu0 %510
      %514 = vset.pattern.permute.xlu0 0
      %515 = vperm.xlu0 %514, %v225
      %v516 = vpop.permute.xlu0 %515
      %519 = vset.pattern.permute.xlu0 0
      %520 = vperm.xlu0 %519, %v226
      %v521 = vpop.permute.xlu0 %520
      %524 = vset.pattern.permute.xlu0 0
      %525 = vperm.xlu0 %524, %v227
      %v526 = vpop.permute.xlu0 %525
      %529 = vset.pattern.permute.xlu0 0
      %530 = vperm.xlu0 %529, %v228
      %v531 = vpop.permute.xlu0 %530
      %534 = vset.pattern.permute.xlu0 0
      %535 = vperm.xlu0 %534, %v229
      %v536 = vpop.permute.xlu0 %535
      %539 = vset.pattern.permute.xlu0 0
      %540 = vperm.xlu0 %539, %v230
      %v541 = vpop.permute.xlu0 %540
      %544 = vset.pattern.permute.xlu0 0
      %545 = vperm.xlu0 %544, %v231
      %v546 = vpop.permute.xlu0 %545
      %549 = vset.pattern.permute.xlu0 0
      %550 = vperm.xlu0 %549, %v232
      %v551 = vpop.permute.xlu0 %550
      %v553 = vlaneseq
      %v554 = vshrl.u32 %v553, 7
      %v555 = vsub.s32 1, %v554
      %v556 = vrot.slane %v372, %v555
      %v557 = vmul.f32 %v476, %v556
      %v558 = vmul.f32 %v481, %v556
      %v559 = vmul.f32 %v486, %v556
      %v560 = vmul.f32 %v491, %v556
      %v561 = vmul.f32 %v496, %v556
      %v562 = vmul.f32 %v501, %v556
      %v563 = vmul.f32 %v506, %v556
      %v564 = vmul.f32 %v511, %v556
      %v565 = vmul.f32 %v516, %v556
      %v566 = vmul.f32 %v521, %v556
      %v567 = vmul.f32 %v526, %v556
      %v568 = vmul.f32 %v531, %v556
      %v569 = vmul.f32 %v536, %v556
      %v570 = vmul.f32 %v541, %v556
      %v571 = vmul.f32 %v546, %v556
      %v572 = vmul.f32 %v551, %v556
      %v573 = vadd.f32 %v457, %v557
      %v574 = vadd.f32 %v458, %v558
      %v575 = vadd.f32 %v459, %v559
      %v576 = vadd.f32 %v460, %v560
      %v577 = vadd.f32 %v461, %v561
      %v578 = vadd.f32 %v462, %v562
      %v579 = vadd.f32 %v463, %v563
      %v580 = vadd.f32 %v464, %v564
      %v581 = vadd.f32 %v465, %v565
      %v582 = vadd.f32 %v466, %v566
      %v583 = vadd.f32 %v467, %v567
      %v584 = vadd.f32 %v468, %v568
      %v585 = vadd.f32 %v469, %v569
      %v586 = vadd.f32 %v470, %v570
      %v587 = vadd.f32 %v471, %v571
      %v588 = vadd.f32 %v472, %v572
      %590 = vset.pattern.permute.xlu0 0
      %591 = vperm.xlu0 %590, %v356
      %v592 = vpop.permute.xlu0 %591
      %595 = vset.pattern.permute.xlu0 0
      %596 = vperm.xlu0 %595, %v357
      %v597 = vpop.permute.xlu0 %596
      %600 = vset.pattern.permute.xlu0 0
      %601 = vperm.xlu0 %600, %v358
      %v602 = vpop.permute.xlu0 %601
      %605 = vset.pattern.permute.xlu0 0
      %606 = vperm.xlu0 %605, %v359
      %v607 = vpop.permute.xlu0 %606
      %610 = vset.pattern.permute.xlu0 0
      %611 = vperm.xlu0 %610, %v360
      %v612 = vpop.permute.xlu0 %611
      %615 = vset.pattern.permute.xlu0 0
      %616 = vperm.xlu0 %615, %v361
      %v617 = vpop.permute.xlu0 %616
      %620 = vset.pattern.permute.xlu0 0
      %621 = vperm.xlu0 %620, %v362
      %v622 = vpop.permute.xlu0 %621
      %625 = vset.pattern.permute.xlu0 0
      %626 = vperm.xlu0 %625, %v363
      %v627 = vpop.permute.xlu0 %626
      %630 = vset.pattern.permute.xlu0 0
      %631 = vperm.xlu0 %630, %v364
      %v632 = vpop.permute.xlu0 %631
      %635 = vset.pattern.permute.xlu0 0
      %636 = vperm.xlu0 %635, %v365
      %v637 = vpop.permute.xlu0 %636
      %640 = vset.pattern.permute.xlu0 0
      %641 = vperm.xlu0 %640, %v366
      %v642 = vpop.permute.xlu0 %641
      %645 = vset.pattern.permute.xlu0 0
      %646 = vperm.xlu0 %645, %v367
      %v647 = vpop.permute.xlu0 %646
      %650 = vset.pattern.permute.xlu0 0
      %651 = vperm.xlu0 %650, %v368
      %v652 = vpop.permute.xlu0 %651
      %655 = vset.pattern.permute.xlu0 0
      %656 = vperm.xlu0 %655, %v369
      %v657 = vpop.permute.xlu0 %656
      %660 = vset.pattern.permute.xlu0 0
      %661 = vperm.xlu0 %660, %v370
      %v662 = vpop.permute.xlu0 %661
      %665 = vset.pattern.permute.xlu0 0
      %666 = vperm.xlu0 %665, %v371
      %v667 = vpop.permute.xlu0 %666
      %v669 = vlaneseq
      %v670 = vshrl.u32 %v669, 7
      %v671 = vsub.s32 2, %v670
      %v672 = vrot.slane %v372, %v671
      %v673 = vmul.f32 %v592, %v672
      %v674 = vmul.f32 %v597, %v672
      %v675 = vmul.f32 %v602, %v672
      %v676 = vmul.f32 %v607, %v672
      %v677 = vmul.f32 %v612, %v672
      %v678 = vmul.f32 %v617, %v672
      %v679 = vmul.f32 %v622, %v672
      %v680 = vmul.f32 %v627, %v672
      %v681 = vmul.f32 %v632, %v672
      %v682 = vmul.f32 %v637, %v672
      %v683 = vmul.f32 %v642, %v672
      %v684 = vmul.f32 %v647, %v672
      %v685 = vmul.f32 %v652, %v672
      %v686 = vmul.f32 %v657, %v672
      %v687 = vmul.f32 %v662, %v672
      %v688 = vmul.f32 %v667, %v672
      %v689 = vadd.f32 %v573, %v673
      %v690 = vadd.f32 %v574, %v674
      %v691 = vadd.f32 %v575, %v675
      %v692 = vadd.f32 %v576, %v676
      %v693 = vadd.f32 %v577, %v677
      %v694 = vadd.f32 %v578, %v678
      %v695 = vadd.f32 %v579, %v679
      %v696 = vadd.f32 %v580, %v680
      %v697 = vadd.f32 %v581, %v681
      %v698 = vadd.f32 %v582, %v682
      %v699 = vadd.f32 %v583, %v683
      %v700 = vadd.f32 %v584, %v684
      %v701 = vadd.f32 %v585, %v685
      %v702 = vadd.f32 %v586, %v686
      %v703 = vadd.f32 %v587, %v687
      %v704 = vadd.f32 %v588, %v688
      %v705 = vld [vmem:[%s2] sm:$0x1]
      %v707 = vlaneseq
      %v708 = vshrl.u32 %v707, 7
      %v709 = vsub.s32 0, %v708
      %v710 = vrot.slane %v705, %v709
      %v712 = vadd.f32 %v689, %v710
      %v713 = vadd.f32 %v690, %v710
      %v714 = vadd.f32 %v691, %v710
      %v715 = vadd.f32 %v692, %v710
      %v716 = vadd.f32 %v693, %v710
      %v717 = vadd.f32 %v694, %v710
      %v718 = vadd.f32 %v695, %v710
      %v719 = vadd.f32 %v696, %v710
      %v720 = vadd.f32 %v697, %v710
      %v721 = vadd.f32 %v698, %v710
      %v722 = vadd.f32 %v699, %v710
      %v723 = vadd.f32 %v700, %v710
      %v724 = vadd.f32 %v701, %v710
      %v725 = vadd.f32 %v702, %v710
      %v726 = vadd.f32 %v703, %v710
      %v727 = vadd.f32 %v704, %v710
      %vm728 = vcmask 130048
      %v729 = vsel %vm728, %v712, 0.0
      %v730 = vsel %vm728, %v713, 0.0
      %v731 = vadd.f32 %v729, %v730
      %v732 = vsel %vm728, %v714, 0.0
      %v733 = vadd.f32 %v731, %v732
      %v734 = vsel %vm728, %v715, 0.0
      %v735 = vadd.f32 %v733, %v734
      %v736 = vsel %vm728, %v716, 0.0
      %v737 = vadd.f32 %v735, %v736
      %v738 = vsel %vm728, %v717, 0.0
      %v739 = vadd.f32 %v737, %v738
      %v740 = vsel %vm728, %v718, 0.0
      %v741 = vadd.f32 %v739, %v740
      %v742 = vsel %vm728, %v719, 0.0
      %v743 = vadd.f32 %v741, %v742
      %v744 = vsel %vm728, %v720, 0.0
      %v745 = vadd.f32 %v743, %v744
      %v746 = vsel %vm728, %v721, 0.0
      %v747 = vadd.f32 %v745, %v746
      %v748 = vsel %vm728, %v722, 0.0
      %v749 = vadd.f32 %v747, %v748
      %v750 = vsel %vm728, %v723, 0.0
      %v751 = vadd.f32 %v749, %v750
      %v752 = vsel %vm728, %v724, 0.0
      %v753 = vadd.f32 %v751, %v752
      %v754 = vsel %vm728, %v725, 0.0
      %v755 = vadd.f32 %v753, %v754
      %v756 = vsel %vm728, %v726, 0.0
      %v757 = vadd.f32 %v755, %v756
      %v758 = vsel %vm728, %v727, 0.0
      %v759 = vadd.f32 %v757, %v758
      %v760 = vrot.slane %v759, 4
      %v761 = vadd.f32 %v759, %v760
      %v762 = vrot.slane %v761, 2
      %v763 = vadd.f32 %v761, %v762
      %v764 = vrot.slane %v763, 1
      %v765 = vadd.f32 %v763, %v764
      %v766 = vmul.f32 %v712, %v712
      %v767 = vmul.f32 %v713, %v713
      %v768 = vmul.f32 %v714, %v714
      %v769 = vmul.f32 %v715, %v715
      %v770 = vmul.f32 %v716, %v716
      %v771 = vmul.f32 %v717, %v717
      %v772 = vmul.f32 %v718, %v718
      %v773 = vmul.f32 %v719, %v719
      %v774 = vmul.f32 %v720, %v720
      %v775 = vmul.f32 %v721, %v721
      %v776 = vmul.f32 %v722, %v722
      %v777 = vmul.f32 %v723, %v723
      %v778 = vmul.f32 %v724, %v724
      %v779 = vmul.f32 %v725, %v725
      %v780 = vmul.f32 %v726, %v726
      %v781 = vmul.f32 %v727, %v727
      %v782 = vsel %vm728, %v766, 0.0
      %v783 = vsel %vm728, %v767, 0.0
      %v784 = vadd.f32 %v782, %v783
      %v785 = vsel %vm728, %v768, 0.0
      %v786 = vadd.f32 %v784, %v785
      %v787 = vsel %vm728, %v769, 0.0
      %v788 = vadd.f32 %v786, %v787
      %v789 = vsel %vm728, %v770, 0.0
      %v790 = vadd.f32 %v788, %v789
      %v791 = vsel %vm728, %v771, 0.0
      %v792 = vadd.f32 %v790, %v791
      %v793 = vsel %vm728, %v772, 0.0
      %v794 = vadd.f32 %v792, %v793
      %v795 = vsel %vm728, %v773, 0.0
      %v796 = vadd.f32 %v794, %v795
      %v797 = vsel %vm728, %v774, 0.0
      %v798 = vadd.f32 %v796, %v797
      %v799 = vsel %vm728, %v775, 0.0
      %v800 = vadd.f32 %v798, %v799
      %v801 = vsel %vm728, %v776, 0.0
      %v802 = vadd.f32 %v800, %v801
      %v803 = vsel %vm728, %v777, 0.0
      %v804 = vadd.f32 %v802, %v803
      %v805 = vsel %vm728, %v778, 0.0
      %v806 = vadd.f32 %v804, %v805
      %v807 = vsel %vm728, %v779, 0.0
      %v808 = vadd.f32 %v806, %v807
      %v809 = vsel %vm728, %v780, 0.0
      %v810 = vadd.f32 %v808, %v809
      %v811 = vsel %vm728, %v781, 0.0
      %v812 = vadd.f32 %v810, %v811
      %v813 = vrot.slane %v812, 4
      %v814 = vadd.f32 %v812, %v813
      %v815 = vrot.slane %v814, 2
      %v816 = vadd.f32 %v814, %v815
      %v817 = vrot.slane %v816, 1
      %v818 = vadd.f32 %v816, %v817
      %vm819 = vcmask 1040384
      %v820 = vsel %vm819, %v765, %v818
      %vm821 = vcmask 123904
      %822 = vst.msk [vmem:[%s216] sm:$0x3] %vm821, %v820
      %v823 = vpack.c.bf16 %v713, %v712
      %v824 = vpack.c.bf16 %v715, %v714
      %v825 = vpack.c.bf16 %v717, %v716
      %v826 = vpack.c.bf16 %v719, %v718
      %v827 = vpack.c.bf16 %v721, %v720
      %v828 = vpack.c.bf16 %v723, %v722
      %v829 = vpack.c.bf16 %v725, %v724
      %v830 = vpack.c.bf16 %v727, %v726
      %v839 = vunpack.c.l.b16 %v823
      %v840 = vunpack.c.h.b16 %v823
      %v841 = vunpack.c.l.b16 %v824
      %v842 = vunpack.c.h.b16 %v824
      %v843 = vunpack.c.l.b16 %v825
      %v844 = vunpack.c.h.b16 %v825
      %v845 = vunpack.c.l.b16 %v826
      %v846 = vunpack.c.h.b16 %v826
      %v847 = vunpack.c.l.b16 %v827
      %v848 = vunpack.c.h.b16 %v827
      %v849 = vunpack.c.l.b16 %v828
      %v850 = vunpack.c.h.b16 %v828
      %v851 = vunpack.c.l.b16 %v829
      %v852 = vunpack.c.h.b16 %v829
      %v853 = vunpack.c.l.b16 %v830
      %v854 = vunpack.c.h.b16 %v830
      %v855 = vpack.c.b16 %v839, %v839
      %v856 = vpack.c.b16 %v840, %v840
      %v857 = vpack.c.b16 %v841, %v841
      %v858 = vpack.c.b16 %v842, %v842
      %v859 = vpack.c.b16 %v843, %v843
      %v860 = vpack.c.b16 %v844, %v844
      %v861 = vpack.c.b16 %v845, %v845
      %v862 = vpack.c.b16 %v846, %v846
      %v863 = vpack.c.b16 %v847, %v847
      %v864 = vpack.c.b16 %v848, %v848
      %v865 = vpack.c.b16 %v849, %v849
      %v866 = vpack.c.b16 %v850, %v850
      %v867 = vpack.c.b16 %v851, %v851
      %v868 = vpack.c.b16 %v852, %v852
      %v869 = vpack.c.b16 %v853, %v853
      %v870 = vpack.c.b16 %v854, %v854
      %vm887 = vcmask 125952
      %888 = vst.msk [vmem:[%s211] sm:$0xf] %vm887, %v855
      %889 = vst.msk [vmem:[%s211 + $0x4] sm:$0xf] %vm887, %v856
      %890 = vst.msk [vmem:[%s211 + $0x8] sm:$0xf] %vm887, %v857
      %891 = vst.msk [vmem:[%s211 + $0xc] sm:$0xf] %vm887, %v858
      %892 = vst.msk [vmem:[%s211 + $0x10] sm:$0xf] %vm887, %v859
      %893 = vst.msk [vmem:[%s211 + $0x14] sm:$0xf] %vm887, %v860
      %894 = vst.msk [vmem:[%s211 + $0x18] sm:$0xf] %vm887, %v861
      %895 = vst.msk [vmem:[%s211 + $0x1c] sm:$0xf] %vm887, %v862
      %896 = vst.msk [vmem:[%s211 + $0x20] sm:$0xf] %vm887, %v863
      %897 = vst.msk [vmem:[%s211 + $0x24] sm:$0xf] %vm887, %v864
      %898 = vst.msk [vmem:[%s211 + $0x28] sm:$0xf] %vm887, %v865
      %899 = vst.msk [vmem:[%s211 + $0x2c] sm:$0xf] %vm887, %v866
      %900 = vst.msk [vmem:[%s211 + $0x30] sm:$0xf] %vm887, %v867
      %901 = vst.msk [vmem:[%s211 + $0x34] sm:$0xf] %vm887, %v868
      %902 = vst.msk [vmem:[%s211 + $0x38] sm:$0xf] %vm887, %v869
      %903 = vst.msk [vmem:[%s211 + $0x3c] sm:$0xf] %vm887, %v870
      %s904 = smul.u32 2, %s16
      %p905 = scmp.lt.s32.totalorder %s904, 3
      %s906 = scalar_select %p905, %s904, 3
      %s907 = smul.addr %s906, 8
      %s908 = smul.addr %s907, 4
      %s909 = scalar_lea.vmem %s3, %s908
      %p910 = scmp.lt.s32.totalorder %s16, 1
      %s911 = scalar_select %p910, %s16, 1
      %s912 = smul.addr %s911, 2
      %s913 = scalar_lea.vmem %s4, %s912
      // Predicated region
      $region33: #{cnn_forward.9} parent=31 // pred_check
        %p914 = pneg %p102
      $region34: #{cnn_forward.9} parent=31 // pred_check_branch
        %916 = sbr.rel (%p914) target = $region36
      $region35: #{cnn_forward.9} parent=31 // pred_region
        %s917 = smul.u32 2, %s16
      $region36: #{cnn_forward.9} parent=31 // pred_fallthru
        _
      // Predicated region
      $region37: #{cnn_forward.9} parent=31 // pred_check
        %p918 = pneg %p128
      $region38: #{cnn_forward.9} parent=31 // pred_check_branch
        %920 = sbr.rel (%p918) target = $region40
      $region39: #{cnn_forward.9} parent=31 // pred_region
        _
      $region40: #{cnn_forward.9} parent=31 // pred_fallthru
        _
    $region32: #{cnn_forward.9} parent=5 // pred_fallthru
      _
    %p921 = scmp.le.s32.totalorder 2, %s11
    // Predicated region
    $region41: #{cnn_forward.9} parent=5 // pred_check
      %p922 = pneg %p921
    $region42: #{cnn_forward.9} parent=5 // pred_check_branch
      %924 = sbr.rel (%p922) target = $region44
    $region43: #{cnn_forward.9} parent=5 // pred_region
      %s925 = ssub.s32 %s11, 2
      // Predicated region
      $region45: #{cnn_forward.9} parent=43 // pred_check
        %p926 = pneg %p108
      $region46: #{cnn_forward.9} parent=43 // pred_check_branch
        %928 = sbr.rel (%p926) target = $region48
      $region47: #{cnn_forward.9} parent=43 // pred_region
        %s929 = smul.u32 2, %s17
        %p930 = scmp.lt.s32.totalorder %s929, 3
        %s931 = scalar_select %p930, %s929, 3
        %s932 = smul.addr %s931, 8
        %s933 = smul.addr %s932, 4
        %s934 = scalar_lea.vmem %s3, %s933
      $region48: #{cnn_forward.9} parent=43 // pred_fallthru
        _
      // Predicated region
      $region49: #{cnn_forward.9} parent=43 // pred_check
        %p935 = pneg %p134
      $region50: #{cnn_forward.9} parent=43 // pred_check_branch
        %937 = sbr.rel (%p935) target = $region52
      $region51: #{cnn_forward.9} parent=43 // pred_region
        %p938 = scmp.lt.s32.totalorder %s17, 1
        %s939 = scalar_select %p938, %s17, 1
        %s940 = smul.addr %s939, 2
        %s941 = scalar_lea.vmem %s4, %s940
      $region52: #{cnn_forward.9} parent=43 // pred_fallthru
        _
    $region44: #{cnn_forward.9} parent=5 // pred_fallthru
      _
  $region6: #{cnn_forward.9} parent=0 // loop_footer
    %s15 = sadd.s32 1, %s11
  $region7: #{cnn_forward.9} parent=0 // loop_footer_branch
    %10 = sbr.rel target = $region3
  $region8: #{cnn_forward.9} parent=0 // loop_exit
    _

// kernel: cnn_forward.12
$region0: #{cnn_forward.12}
  #allocation0 [shape = 'u32[]', space=smem, size = 0x4, offset = 0x4, fixed_abs, tag = 'smem constant byte address 0x4 - core index']
  #allocation1 [shape = 'u32[144,128]{1,0:T(1,128)}', space=vmem, size = 0x12000, scoped, tag = 'internal scratch']
  %s0 = inlined_call_operand.vmem [shape: f32[2,2,32], index: 0, kind: input, shape index: {}]
  %s1 = inlined_call_operand.vmem [shape: f32[1,32], index: 1, kind: input, shape index: {}]
  %s2 = inlined_call_operand.vmem [shape: f32[1,32], index: 2, kind: input, shape index: {}]
  %s3 = inlined_call_operand.vmem [shape: bf16[4,32,32], index: 3, kind: input, shape index: {}]
  %s4 = inlined_call_operand.vmem [shape: bf16[3,32,32], index: 4, kind: input, shape index: {}]
  %s5 = inlined_call_operand.vmem [shape: f32[1,32], index: 5, kind: input, shape index: {}]
  %s6 = inlined_call_operand.vmem [shape: bf16[4,32,32], index: 6, kind: output, shape index: {0}]
  %s7 = inlined_call_operand.vmem [shape: f32[2,2,32], index: 7, kind: output, shape index: {1}]
  %8 = xla_tuple %s6, %s7
  %s9 = sld [smem:[#allocation0]]
  $region65: #{cnn_forward.12} parent=0
    _
  %s11 = ssub.s32 1, %s9
  %s12 = scalar_select 0, %s11, %s9
  loop: start=0, step=1, limit=4
  $region2: #{cnn_forward.12} parent=0 // loop_pre_header
    _
  $region3: #{cnn_forward.12} parent=0 // loop_header
    %s14 = sphi 0, %s18
    %p15 = scmp.ge.s32.totalorder %s14, 4
    %s22 = sphi 0, %s22
    %s24 = sphi 0, %s22
    %s25 = sphi 0, %s24
    %s39 = sphi 0, %s25
    %s43 = sphi 0, %s43
    %s45 = sphi 0, %s43
    %s46 = sphi 0, %s45
    %s60 = sphi 0, %s46
    %s64 = sphi 0, %s64
    %s66 = sphi 0, %s64
    %s67 = sphi 0, %s66
    %s81 = sphi 0, %s67
    %s87 = sphi 0, %s89
    %s90 = sphi 0, %s87
    %s91 = sphi 0, %s90
    %s107 = sphi 0, %s91
    %s111 = sphi 0, %s111
    %s113 = sphi 0, %s111
    %s114 = sphi 0, %s113
    %s128 = sphi 0, %s114
    %s132 = sphi 0, %s132
    %s134 = sphi 0, %s132
    %s135 = sphi 0, %s134
    %s149 = sphi 0, %s135
    %s155 = sphi 0, %s157
    %s158 = sphi 0, %s155
    %s159 = sphi 0, %s158
    %s175 = sphi 0, %s159
    %s181 = sphi 0, %s183
    %s184 = sphi 0, %s181
    %s185 = sphi 0, %s184
    %s201 = sphi 0, %s185
  $region4: #{cnn_forward.12} parent=0 // loop_header_branch
    %17 = sbr.rel (%p15) target = $region8
  $region5: #{cnn_forward.12} parent=0 // loop_body
    %s19 = ssub.s32 %s14, 1
    %s20 = ssub.s32 %s14, 2
    %s21 = sadd.s32 %s14, 1
    %s23 = sadd.s32 %s22, 1
    %p26 = scmp.eq.s32.totalorder %s14, 1
    %p27 = scmp.ne.s32.totalorder %s22, %s24
    %p28 = scmp.eq.s32.totalorder %s14, 0
    %p29 = por %p27, %p28
    %p30 = scmp.ne.s32.totalorder %s22, %s24
    %p31 = scmp.eq.s32.totalorder %s19, 1
    %p32 = por %p30, %p31
    %p33 = scmp.ne.s32.totalorder %s24, %s25
    %p34 = scmp.eq.s32.totalorder %s19, 0
    %p35 = por %p33, %p34
    %p36 = scmp.ne.s32.totalorder %s24, %s25
    %p37 = scmp.eq.s32.totalorder %s20, 1
    %p38 = por %p36, %p37
    %p40 = scmp.ne.s32.totalorder %s25, %s39
    %p41 = scmp.eq.s32.totalorder %s20, 0
    %p42 = por %p40, %p41
    %s44 = sadd.s32 %s43, 1
    %p47 = scmp.eq.s32.totalorder %s14, 1
    %p48 = scmp.ne.s32.totalorder %s43, %s45
    %p49 = scmp.eq.s32.totalorder %s14, 0
    %p50 = por %p48, %p49
    %p51 = scmp.ne.s32.totalorder %s43, %s45
    %p52 = scmp.eq.s32.totalorder %s19, 1
    %p53 = por %p51, %p52
    %p54 = scmp.ne.s32.totalorder %s45, %s46
    %p55 = scmp.eq.s32.totalorder %s19, 0
    %p56 = por %p54, %p55
    %p57 = scmp.ne.s32.totalorder %s45, %s46
    %p58 = scmp.eq.s32.totalorder %s20, 1
    %p59 = por %p57, %p58
    %p61 = scmp.ne.s32.totalorder %s46, %s60
    %p62 = scmp.eq.s32.totalorder %s20, 0
    %p63 = por %p61, %p62
    %s65 = sadd.s32 %s64, 1
    %p68 = scmp.eq.s32.totalorder %s14, 1
    %p69 = scmp.ne.s32.totalorder %s64, %s66
    %p70 = scmp.eq.s32.totalorder %s14, 0
    %p71 = por %p69, %p70
    %p72 = scmp.ne.s32.totalorder %s64, %s66
    %p73 = scmp.eq.s32.totalorder %s19, 1
    %p74 = por %p72, %p73
    %p75 = scmp.ne.s32.totalorder %s66, %s67
    %p76 = scmp.eq.s32.totalorder %s19, 0
    %p77 = por %p75, %p76
    %p78 = scmp.ne.s32.totalorder %s66, %s67
    %p79 = scmp.eq.s32.totalorder %s20, 1
    %p80 = por %p78, %p79
    %p82 = scmp.ne.s32.totalorder %s67, %s81
    %p83 = scmp.eq.s32.totalorder %s20, 0
    %p84 = por %p82, %p83
    %s85 = ssub.s32 %s14, %s21
    %p86 = scmp.eq.s32.totalorder %s85, 0
    %s88 = sadd.s32 %s87, 1
    %s89 = scalar_select %p86, %s87, %s88
    %p92 = pneg %p86
    %p93 = scmp.eq.s32.totalorder %s14, 1
    %p94 = por %p92, %p93
    %p95 = scmp.ne.s32.totalorder %s87, %s90
    %p96 = scmp.eq.s32.totalorder %s14, 0
    %p97 = por %p95, %p96
    %p98 = scmp.ne.s32.totalorder %s87, %s90
    %p99 = scmp.eq.s32.totalorder %s19, 1
    %p100 = por %p98, %p99
    %p101 = scmp.ne.s32.totalorder %s90, %s91
    %p102 = scmp.eq.s32.totalorder %s19, 0
    %p103 = por %p101, %p102
    %p104 = scmp.ne.s32.totalorder %s90, %s91
    %p105 = scmp.eq.s32.totalorder %s20, 1
    %p106 = por %p104, %p105
    %p108 = scmp.ne.s32.totalorder %s91, %s107
    %p109 = scmp.eq.s32.totalorder %s20, 0
    %p110 = por %p108, %p109
    %s112 = sadd.s32 %s111, 1
    %p115 = scmp.eq.s32.totalorder %s14, 1
    %p116 = scmp.ne.s32.totalorder %s111, %s113
    %p117 = scmp.eq.s32.totalorder %s14, 0
    %p118 = por %p116, %p117
    %p119 = scmp.ne.s32.totalorder %s111, %s113
    %p120 = scmp.eq.s32.totalorder %s19, 1
    %p121 = por %p119, %p120
    %p122 = scmp.ne.s32.totalorder %s113, %s114
    %p123 = scmp.eq.s32.totalorder %s19, 0
    %p124 = por %p122, %p123
    %p125 = scmp.ne.s32.totalorder %s113, %s114
    %p126 = scmp.eq.s32.totalorder %s20, 1
    %p127 = por %p125, %p126
    %p129 = scmp.ne.s32.totalorder %s114, %s128
    %p130 = scmp.eq.s32.totalorder %s20, 0
    %p131 = por %p129, %p130
    %s133 = sadd.s32 %s132, 1
    %p136 = scmp.eq.s32.totalorder %s14, 1
    %p137 = scmp.ne.s32.totalorder %s132, %s134
    %p138 = scmp.eq.s32.totalorder %s14, 0
    %p139 = por %p137, %p138
    %p140 = scmp.ne.s32.totalorder %s132, %s134
    %p141 = scmp.eq.s32.totalorder %s19, 1
    %p142 = por %p140, %p141
    %p143 = scmp.ne.s32.totalorder %s134, %s135
    %p144 = scmp.eq.s32.totalorder %s19, 0
    %p145 = por %p143, %p144
    %p146 = scmp.ne.s32.totalorder %s134, %s135
    %p147 = scmp.eq.s32.totalorder %s20, 1
    %p148 = por %p146, %p147
    %p150 = scmp.ne.s32.totalorder %s135, %s149
    %p151 = scmp.eq.s32.totalorder %s20, 0
    %p152 = por %p150, %p151
    %s153 = ssub.s32 %s14, %s21
    %p154 = scmp.eq.s32.totalorder %s153, 0
    %s156 = sadd.s32 %s155, 1
    %s157 = scalar_select %p154, %s155, %s156
    %p160 = pneg %p154
    %p161 = scmp.eq.s32.totalorder %s14, 1
    %p162 = por %p160, %p161
    %p163 = scmp.ne.s32.totalorder %s155, %s158
    %p164 = scmp.eq.s32.totalorder %s14, 0
    %p165 = por %p163, %p164
    %p166 = scmp.ne.s32.totalorder %s155, %s158
    %p167 = scmp.eq.s32.totalorder %s19, 1
    %p168 = por %p166, %p167
    %p169 = scmp.ne.s32.totalorder %s158, %s159
    %p170 = scmp.eq.s32.totalorder %s19, 0
    %p171 = por %p169, %p170
    %p172 = scmp.ne.s32.totalorder %s158, %s159
    %p173 = scmp.eq.s32.totalorder %s20, 1
    %p174 = por %p172, %p173
    %p176 = scmp.ne.s32.totalorder %s159, %s175
    %p177 = scmp.eq.s32.totalorder %s20, 0
    %p178 = por %p176, %p177
    %s179 = ssub.s32 %s14, %s21
    %p180 = scmp.eq.s32.totalorder %s179, 0
    %s182 = sadd.s32 %s181, 1
    %s183 = scalar_select %p180, %s181, %s182
    %p186 = pneg %p180
    %p187 = scmp.eq.s32.totalorder %s14, 1
    %p188 = por %p186, %p187
    %p189 = scmp.ne.s32.totalorder %s181, %s184
    %p190 = scmp.eq.s32.totalorder %s14, 0
    %p191 = por %p189, %p190
    %p192 = scmp.ne.s32.totalorder %s181, %s184
    %p193 = scmp.eq.s32.totalorder %s19, 1
    %p194 = por %p192, %p193
    %p195 = scmp.ne.s32.totalorder %s184, %s185
    %p196 = scmp.eq.s32.totalorder %s19, 0
    %p197 = por %p195, %p196
    %p198 = scmp.ne.s32.totalorder %s184, %s185
    %p199 = scmp.eq.s32.totalorder %s20, 1
    %p200 = por %p198, %p199
    %p202 = scmp.ne.s32.totalorder %s185, %s201
    %p203 = scmp.eq.s32.totalorder %s20, 0
    %p204 = por %p202, %p203
    %p205 = scmp.le.s32.totalorder 1, %s14
    %p206 = scmp.lt.s32.totalorder %s14, 3
    %p207 = pnand %p205, %p206
    %p208 = pneg %p207
    // Predicated region
    $region9: #{cnn_forward.12} parent=5 // pred_check
      _
    $region10: #{cnn_forward.12} parent=5 // pred_check_branch
      %210 = sbr.rel (%p207) target = $region12
    $region11: #{cnn_forward.12} parent=5 // pred_region
      %s211 = ssub.s32 %s14, 1
      // Predicated region
      $region13: #{cnn_forward.12} parent=11 // pred_check
        %p212 = pneg %p35
      $region14: #{cnn_forward.12} parent=11 // pred_check_branch
        %214 = sbr.rel (%p212) target = $region16
      $region15: #{cnn_forward.12} parent=11 // pred_region
        _
      $region16: #{cnn_forward.12} parent=11 // pred_fallthru
        _
      // Predicated region
      $region17: #{cnn_forward.12} parent=11 // pred_check
        %p215 = pneg %p56
      $region18: #{cnn_forward.12} parent=11 // pred_check_branch
        %217 = sbr.rel (%p215) target = $region20
      $region19: #{cnn_forward.12} parent=11 // pred_region
        _
      $region20: #{cnn_forward.12} parent=11 // pred_fallthru
        _
      // Predicated region
      $region21: #{cnn_forward.12} parent=11 // pred_check
        %p218 = pneg %p77
      $region22: #{cnn_forward.12} parent=11 // pred_check_branch
        %220 = sbr.rel (%p218) target = $region24
      $region23: #{cnn_forward.12} parent=11 // pred_region
        _
      $region24: #{cnn_forward.12} parent=11 // pred_fallthru
        _
      // Predicated region
      $region25: #{cnn_forward.12} parent=11 // pred_check
        %p221 = pneg %p124
      $region26: #{cnn_forward.12} parent=11 // pred_check_branch
        %223 = sbr.rel (%p221) target = $region28
      $region27: #{cnn_forward.12} parent=11 // pred_region
        _
      $region28: #{cnn_forward.12} parent=11 // pred_fallthru
        _
      // Predicated region
      $region29: #{cnn_forward.12} parent=11 // pred_check
        %p224 = pneg %p145
      $region30: #{cnn_forward.12} parent=11 // pred_check_branch
        %226 = sbr.rel (%p224) target = $region32
      $region31: #{cnn_forward.12} parent=11 // pred_region
        _
      $region32: #{cnn_forward.12} parent=11 // pred_fallthru
        _
    $region12: #{cnn_forward.12} parent=5 // pred_fallthru
      _
    %p227 = scmp.lt.s32.totalorder %s14, 2
    // Predicated region
    $region33: #{cnn_forward.12} parent=5 // pred_check
      %p228 = pneg %p227
    $region34: #{cnn_forward.12} parent=5 // pred_check_branch
      %230 = sbr.rel (%p228) target = $region36
    $region35: #{cnn_forward.12} parent=5 // pred_region
      // Predicated region
      $region37: #{cnn_forward.12} parent=35 // pred_check
        %p231 = pneg %p97
      $region38: #{cnn_forward.12} parent=35 // pred_check_branch
        %233 = sbr.rel (%p231) target = $region40
      $region39: #{cnn_forward.12} parent=35 // pred_region
        %s234 = smul.u32 2, %s14
        %p235 = scmp.lt.s32.totalorder %s234, 3
        %s236 = scalar_select %p235, %s234, 3
        %s237 = smul.addr %s236, 4
        %s238 = smul.addr %s237, 4
        %s239 = scalar_lea.vmem %s3, %s238
        %s240 = smul.u32 2, %s14
      $region40: #{cnn_forward.12} parent=35 // pred_fallthru
        _
    $region36: #{cnn_forward.12} parent=5 // pred_fallthru
      _
    %p241 = scmp.le.s32.totalorder 1, %s14
    %p242 = scmp.lt.s32.totalorder %s14, 3
    %p243 = pnand %p241, %p242
    %p244 = pneg %p243
    // Predicated region
    $region41: #{cnn_forward.12} parent=5 // pred_check
      _
    $region42: #{cnn_forward.12} parent=5 // pred_check_branch
      %246 = sbr.rel (%p243) target = $region44
    $region43: #{cnn_forward.12} parent=5 // pred_region
      %s247 = ssub.s32 %s14, 1
      %p248 = pneg %p35
      %p249 = pneg %p32
      %p250 = pneg %p56
      %p251 = pneg %p53
      %p252 = pneg %p77
      %p253 = pneg %p74
      %s254 = smul.u32 2, %s19
      %p255 = scmp.lt.s32.totalorder %s254, 3
      %s256 = scalar_select %p255, %s254, 3
      %s257 = smul.addr %s256, 4
      %s258 = smul.addr %s257, 4
      %s259 = scalar_lea.vmem %s3, %s258
      %p260 = pneg %p103
      %p261 = pneg %p100
      %p262 = pneg %p124
      %p263 = pneg %p121
      %p264 = pneg %p145
      %p265 = pneg %p142
      %p266 = pneg %p171
      %p267 = pneg %p168
      %s268 = smul.u32 2, %s19
      %p269 = scmp.lt.s32.totalorder %s268, 3
      %s270 = scalar_select %p269, %s268, 3
      %s271 = smul.addr %s270, 4
      %s272 = smul.addr %s271, 4
      %s273 = scalar_lea.vmem %s6, %s272
      %p274 = pneg %p197
      %p275 = pneg %p194
      %p276 = scmp.lt.s32.totalorder %s19, 1
      %s277 = scalar_select %p276, %s19, 1
      %s278 = smul.addr %s277, 2
      %s279 = scalar_lea.vmem %s7, %s278
      %s280 = smul.u32 2, %s19
      %p281 = scmp.lt.s32.totalorder %s280, 3
      %s282 = scalar_select %p281, %s280, 3
      %s283 = smul.addr %s282, 4
      %s284 = smul.addr %s283, 4
      %s285 = scalar_lea.vmem %s3, %s284
      %s286 = smul.u32 2, %s19
      %s287 = smul.u32 2, %s19
      %p288 = scmp.lt.s32.totalorder %s287, 3
      %s289 = scalar_select %p288, %s287, 3
      %s290 = smul.addr %s289, 4
      %s291 = smul.addr %s290, 4
      %s292 = scalar_lea.vmem %s6, %s291
      %s293 = smul.u32 2, %s19
      %p294 = scmp.lt.s32.totalorder %s19, 1
      %s295 = scalar_select %p294, %s19, 1
      %s296 = smul.addr %s295, 2
      %s297 = scalar_lea.vmem %s7, %s296
      %v299 = vld [vmem:[%s0] sm:$0x3]
      %v300 = vld [vmem:[%s0 + $0x2] sm:$0x3]
      %vm301 = vcmask 254976
      %v302 = vsel %vm301, %v299, 0.0
      %v303 = vsel %vm301, %v300, 0.0
      %v304 = vadd.f32 %v302, %v303
      %v305 = vld [vmem:[%s1] sm:$0x1]
      %v306 = vld [vmem:[%s2] sm:$0x1]
      %v307 = vmul.f32 %v304, 0.0078125
      %v308 = vmul.f32 %v307, %v307
      %v310 = vrot.slane %v308, 7
      %v312 = vsub.f32 %v307, %v310
      %v313 = vmax.f32 %v312, 0.0
      %v314 = vadd.f32 %v313, 1e-05
      %v315 = vrsqrt.pop %v314
      %v318 = vunpack.c.l.s4 1966171168
      %v319 = vunpack.c.0.s8 %v318
      %v320 = vlaneseq
      %v321 = vshrl.u32 %v320, 7
      %v322 = vsub.s32 %v319, %v321
      %v323 = vrot.slane %v315, %v322
      %v324 = vcombine.high %v323, %v323
      %v326 = vunpack.c.l.s4 1966171168
      %v327 = vunpack.c.0.s8 %v326
      %v328 = vlaneseq
      %v329 = vshrl.u32 %v328, 7
      %v330 = vsub.s32 %v327, %v329
      %v331 = vrot.slane %v324, %v330
      %v333 = vmul.f32 %v305, %v331
      %v334 = vmul.f32 %v307, %v333
      %v335 = vsub.f32 %v306, %v334
      %v336 = vld [vmem:[%s285] sm:$0xf]
      %v337 = vld [vmem:[%s285 + $0x4] sm:$0xf]
      %v338 = vld [vmem:[%s285 + $0x8] sm:$0xf]
      %v339 = vld [vmem:[%s285 + $0xc] sm:$0xf]
      %v340 = vld [vmem:[%s285 + $0x10] sm:$0xf]
      %v341 = vld [vmem:[%s285 + $0x14] sm:$0xf]
      %v342 = vld [vmem:[%s285 + $0x18] sm:$0xf]
      %v343 = vld [vmem:[%s285 + $0x1c] sm:$0xf]
      %v344 = vunpack.c.l.bf16 %v336
      %v345 = vunpack.c.l.bf16 %v337
      %v346 = vunpack.c.l.bf16 %v338
      %v347 = vunpack.c.l.bf16 %v339
      %v348 = vunpack.c.l.bf16 %v340
      %v349 = vunpack.c.l.bf16 %v341
      %v350 = vunpack.c.l.bf16 %v342
      %v351 = vunpack.c.l.bf16 %v343
      %v353 = vlaneseq
      %v354 = vshrl.u32 %v353, 7
      %v355 = vsub.s32 0, %v354
      %v356 = vrot.slane %v333, %v355
      %v358 = vmul.f32 %v356, %v344
      %v359 = vmul.f32 %v356, %v345
      %v360 = vmul.f32 %v356, %v346
      %v361 = vmul.f32 %v356, %v347
      %v362 = vmul.f32 %v356, %v348
      %v363 = vmul.f32 %v356, %v349
      %v364 = vmul.f32 %v356, %v350
      %v365 = vmul.f32 %v356, %v351
      %v367 = vlaneseq
      %v368 = vshrl.u32 %v367, 7
      %v369 = vsub.s32 0, %v368
      %v370 = vrot.slane %v335, %v369
      %v372 = vadd.f32 %v358, %v370
      %v373 = vadd.f32 %v359, %v370
      %v374 = vadd.f32 %v360, %v370
      %v375 = vadd.f32 %v361, %v370
      %v376 = vadd.f32 %v362, %v370
      %v377 = vadd.f32 %v363, %v370
      %v378 = vadd.f32 %v364, %v370
      %v379 = vadd.f32 %v365, %v370
      %v380 = vlaneseq
      %v381 = vshrl.u32 %v380, 7
      %v382 = vadd.s32 %v381, 8
      %v383 = vadd.s32 %v381, 16
      %v384 = vadd.s32 %v381, 24
      %vm385 = vcmp.eq.s32.totalorder %v381, 0
      %vm386 = vcmp.eq.s32.totalorder %v382, 0
      %vm387 = vcmp.eq.s32.totalorder %v383, 0
      %vm388 = vcmp.eq.s32.totalorder %v384, 0
      %v389 = vsel %vm385, 0.0, 1.0
      %v390 = vsel %vm386, 0.0, 1.0
      %v391 = vsel %vm387, 0.0, 1.0
      %v392 = vsel %vm388, 0.0, 1.0
      %vm393 = vcmp.eq.s32.totalorder %v381, 31
      %vm394 = vcmp.eq.s32.totalorder %v382, 31
      %vm395 = vcmp.eq.s32.totalorder %v383, 31
      %vm396 = vcmp.eq.s32.totalorder %v384, 31
      %v397 = vsel %vm393, 0.0, 1.0
      %v398 = vsel %vm394, 0.0, 1.0
      %v399 = vsel %vm395, 0.0, 1.0
      %v400 = vsel %vm396, 0.0, 1.0
      %v401 = vrot.slane %v372, 7
      %v402 = vrot.slane %v373, 7
      %v403 = vrot.slane %v374, 7
      %v404 = vrot.slane %v375, 7
      %v405 = vrot.slane %v376, 7
      %v406 = vrot.slane %v377, 7
      %v407 = vrot.slane %v378, 7
      %v408 = vrot.slane %v379, 7
      %vm409 = vcmp.lt.s32.totalorder %v381, 1
      %v410 = vsel %vm409, %v407, %v408
      %v411 = vsel %vm409, %v406, %v407
      %v412 = vsel %vm409, %v405, %v406
      %v413 = vsel %vm409, %v404, %v405
      %v414 = vsel %vm409, %v403, %v404
      %v415 = vsel %vm409, %v402, %v403
      %v416 = vsel %vm409, %v401, %v402
      %v417 = vsel %vm409, %v408, %v401
      %v418 = vmul.f32 %v417, %v389
      %v419 = vmul.f32 %v416, %v390
      %v420 = vmul.f32 %v415, %v391
      %v421 = vmul.f32 %v414, %v392
      %v422 = vmul.f32 %v413, %v389
      %v423 = vmul.f32 %v412, %v390
      %v424 = vmul.f32 %v411, %v391
      %v425 = vmul.f32 %v410, %v392
      %v426 = vrot.slane %v372, 1
      %v427 = vrot.slane %v373, 1
      %v428 = vrot.slane %v374, 1
      %v429 = vrot.slane %v375, 1
      %v430 = vrot.slane %v376, 1
      %v431 = vrot.slane %v377, 1
      %v432 = vrot.slane %v378, 1
      %v433 = vrot.slane %v379, 1
      %vm434 = vcmp.lt.s32.totalorder %v381, 7
      %v435 = vsel %vm434, %v432, %v433
      %v436 = vsel %vm434, %v431, %v432
      %v437 = vsel %vm434, %v430, %v431
      %v438 = vsel %vm434, %v429, %v430
      %v439 = vsel %vm434, %v428, %v429
      %v440 = vsel %vm434, %v427, %v428
      %v441 = vsel %vm434, %v426, %v427
      %v442 = vsel %vm434, %v433, %v426
      %v443 = vmul.f32 %v441, %v397
      %v444 = vmul.f32 %v440, %v398
      %v445 = vmul.f32 %v439, %v399
      %v446 = vmul.f32 %v438, %v400
      %v447 = vmul.f32 %v437, %v397
      %v448 = vmul.f32 %v436, %v398
      %v449 = vmul.f32 %v435, %v399
      %v450 = vmul.f32 %v442, %v400
      %v451 = vpack.c.bf16 %v373, %v372
      %v452 = vpack.c.bf16 %v375, %v374
      %v453 = vpack.c.bf16 %v377, %v376
      %v454 = vpack.c.bf16 %v379, %v378
      %v455 = vpack.c.bf16 %v419, %v418
      %v456 = vpack.c.bf16 %v421, %v420
      %v457 = vpack.c.bf16 %v423, %v422
      %v458 = vpack.c.bf16 %v425, %v424
      %v459 = vpack.c.bf16 %v444, %v443
      %v460 = vpack.c.bf16 %v446, %v445
      %v461 = vpack.c.bf16 %v448, %v447
      %v462 = vpack.c.bf16 %v450, %v449
      %v463 = vld [vmem:[%s4] sm:$0xf]
      %v464 = vld [vmem:[%s4 + $0x4] sm:$0xf]
      %v465 = vld [vmem:[%s4 + $0x8] sm:$0xf]
      %v466 = vld [vmem:[%s4 + $0xc] sm:$0xf]
      %s467 = scalar_lea.vmem %s4, 16
      %v468 = vld [vmem:[%s467] sm:$0xf]
      %v469 = vld [vmem:[%s467 + $0x4] sm:$0xf]
      %v470 = vld [vmem:[%s467 + $0x8] sm:$0xf]
      %v471 = vld [vmem:[%s467 + $0xc] sm:$0xf]
      %v476 = vunpack.c.l.b16 %v468
      %v477 = vunpack.c.l.b16 %v469
      %v478 = vunpack.c.l.b16 %v470
      %v479 = vunpack.c.l.b16 %v471
      %v480 = vpack.c.b16 %v477, %v476
      %v481 = vpack.c.b16 %v479, %v478
      %vm484 = vcmask 261120
      %v486 = vsel %vm484, %v451, 0
      %v489 = vsel %vm484, %v452, 0
      %v492 = vsel %vm484, %v453, 0
      %v495 = vsel %vm484, %v454, 0
      %497 = vmatprep.subr.bf16.mxu0 0
      %498 = vmatpush1.bf16.msra.mxu0 0
      %499 = vmatprep.subr.bf16.mxu0 0
      %500 = vmatpush1.bf16.msra.mxu0 0
      %501 = vmatprep.subr.bf16.mxu0 0
      %502 = vmatpush1.bf16.msra.mxu0 0
      %503 = vmatprep.subr.bf16.mxu0 0
      %504 = vmatpush1.bf16.msra.mxu0 0
      %505 = vmatprep.subr.bf16.mxu0 0
      %506 = vmatpush1.bf16.msra.mxu0 0
      %507 = vmatprep.subr.bf16.mxu0 0
      %508 = vmatpush1.bf16.msra.mxu0 0
      %509 = vmatprep.subr.bf16.mxu0 0
      %510 = vmatpush1.bf16.msra.mxu0 %v481
      %511 = vmatprep.subr.bf16.mxu0 0
      %512 = vmatpush1.bf16.msra.mxu0 %v480
      %513 = vmatprep.subr.bf16.mxu0 0
      %514 = vmatpush2.bf16.msra.mxu0 0
      %515 = vmatprep.subr.bf16.mxu0 0
      %516 = vmatpush2.bf16.msra.mxu0 0
      %517 = vmatprep.subr.bf16.mxu0 0
      %518 = vmatpush2.bf16.msra.mxu0 0
      %519 = vmatprep.subr.bf16.mxu0 0
      %520 = vmatpush2.bf16.msra.mxu0 0
      %521 = vmatprep.subr.bf16.mxu0 0
      %522 = vmatpush2.bf16.msra.mxu0 0
      %523 = vmatprep.subr.bf16.mxu0 0
      %524 = vmatpush2.bf16.msra.mxu0 0
      %525 = vmatprep.subr.bf16.mxu0 0
      %526 = vmatpush2.bf16.msra.mxu0 0
      %527 = vmatprep.subr.bf16.mxu0 0
      %528 = vmatpush2.bf16.msra.mxu0 0
      %529 = vmatprep.mubr.bf16.mxu0 0
      %530 = vmatmul.mubr.bf16.gmra.mxu0 %v486
      %v531 = vpop.f32.mrf.mxu0
      %v532 = vadd.f32 0.0, %v531
      %v533 = vpop.f32.mrf.mxu0
      %v534 = vpop.f32.mrf.mxu0
      %v535 = vadd.f32 0.0, %v534
      %v536 = vpop.f32.mrf.mxu0
      %537 = vmatprep.mubr.bf16.mxu0 0
      %538 = vmatmul.mubr.bf16.gmra.mxu0 %v489
      %v539 = vpop.f32.mrf.mxu0
      %v540 = vadd.f32 0.0, %v539
      %v541 = vpop.f32.mrf.mxu0
      %v542 = vpop.f32.mrf.mxu0
      %v543 = vadd.f32 0.0, %v542
      %v544 = vpop.f32.mrf.mxu0
      %545 = vmatprep.mubr.bf16.mxu0 0
      %546 = vmatmul.mubr.bf16.gmra.mxu0 %v492
      %v547 = vpop.f32.mrf.mxu0
      %v548 = vadd.f32 0.0, %v547
      %v549 = vpop.f32.mrf.mxu0
      %v550 = vpop.f32.mrf.mxu0
      %v551 = vadd.f32 0.0, %v550
      %v552 = vpop.f32.mrf.mxu0
      %553 = vmatprep.mubr.bf16.mxu0 0
      %554 = vmatmul.mubr.bf16.gmra.mxu0 %v495
      %v555 = vpop.f32.mrf.mxu0
      %v556 = vadd.f32 0.0, %v555
      %v557 = vpop.f32.mrf.mxu0
      %v558 = vpop.f32.mrf.mxu0
      %v559 = vadd.f32 0.0, %v558
      %v560 = vpop.f32.mrf.mxu0
      %561 = vdwg.mxu0
      %v566 = vunpack.c.l.b16 %v463
      %v567 = vunpack.c.l.b16 %v464
      %v568 = vunpack.c.l.b16 %v465
      %v569 = vunpack.c.l.b16 %v466
      %v570 = vpack.c.b16 %v567, %v566
      %v571 = vpack.c.b16 %v569, %v568
      %v575 = vsel %vm484, %v455, 0
      %v578 = vsel %vm484, %v456, 0
      %v581 = vsel %vm484, %v457, 0
      %v584 = vsel %vm484, %v458, 0
      %586 = vmatprep.subr.bf16.mxu0 0
      %587 = vmatpush1.bf16.msra.mxu0 0
      %588 = vmatprep.subr.bf16.mxu0 0
      %589 = vmatpush1.bf16.msra.mxu0 0
      %590 = vmatprep.subr.bf16.mxu0 0
      %591 = vmatpush1.bf16.msra.mxu0 0
      %592 = vmatprep.subr.bf16.mxu0 0
      %593 = vmatpush1.bf16.msra.mxu0 0
      %594 = vmatprep.subr.bf16.mxu0 0
      %595 = vmatpush1.bf16.msra.mxu0 0
      %596 = vmatprep.subr.bf16.mxu0 0
      %597 = vmatpush1.bf16.msra.mxu0 0
      %598 = vmatprep.subr.bf16.mxu0 0
      %599 = vmatpush1.bf16.msra.mxu0 %v571
      %600 = vmatprep.subr.bf16.mxu0 0
      %601 = vmatpush1.bf16.msra.mxu0 %v570
      %602 = vmatprep.subr.bf16.mxu0 0
      %603 = vmatpush2.bf16.msra.mxu0 0
      %604 = vmatprep.subr.bf16.mxu0 0
      %605 = vmatpush2.bf16.msra.mxu0 0
      %606 = vmatprep.subr.bf16.mxu0 0
      %607 = vmatpush2.bf16.msra.mxu0 0
      %608 = vmatprep.subr.bf16.mxu0 0
      %609 = vmatpush2.bf16.msra.mxu0 0
      %610 = vmatprep.subr.bf16.mxu0 0
      %611 = vmatpush2.bf16.msra.mxu0 0
      %612 = vmatprep.subr.bf16.mxu0 0
      %613 = vmatpush2.bf16.msra.mxu0 0
      %614 = vmatprep.subr.bf16.mxu0 0
      %615 = vmatpush2.bf16.msra.mxu0 0
      %616 = vmatprep.subr.bf16.mxu0 0
      %617 = vmatpush2.bf16.msra.mxu0 0
      %618 = vmatprep.mubr.bf16.mxu0 0
      %619 = vmatmul.mubr.bf16.gmra.mxu0 %v575
      %v620 = vpop.f32.mrf.mxu0
      %v621 = vadd.f32 %v532, %v620
      %v622 = vpop.f32.mrf.mxu0
      %v623 = vpop.f32.mrf.mxu0
      %v624 = vadd.f32 %v535, %v623
      %v625 = vpop.f32.mrf.mxu0
      %626 = vmatprep.mubr.bf16.mxu0 0
      %627 = vmatmul.mubr.bf16.gmra.mxu0 %v578
      %v628 = vpop.f32.mrf.mxu0
      %v629 = vadd.f32 %v540, %v628
      %v630 = vpop.f32.mrf.mxu0
      %v631 = vpop.f32.mrf.mxu0
      %v632 = vadd.f32 %v543, %v631
      %v633 = vpop.f32.mrf.mxu0
      %634 = vmatprep.mubr.bf16.mxu0 0
      %635 = vmatmul.mubr.bf16.gmra.mxu0 %v581
      %v636 = vpop.f32.mrf.mxu0
      %v637 = vadd.f32 %v548, %v636
      %v638 = vpop.f32.mrf.mxu0
      %v639 = vpop.f32.mrf.mxu0
      %v640 = vadd.f32 %v551, %v639
      %v641 = vpop.f32.mrf.mxu0
      %642 = vmatprep.mubr.bf16.mxu0 0
      %643 = vmatmul.mubr.bf16.gmra.mxu0 %v584
      %v644 = vpop.f32.mrf.mxu0
      %v645 = vadd.f32 %v556, %v644
      %v646 = vpop.f32.mrf.mxu0
      %v647 = vpop.f32.mrf.mxu0
      %v648 = vadd.f32 %v559, %v647
      %v649 = vpop.f32.mrf.mxu0
      %650 = vdwg.mxu0
      %s651 = scalar_lea.vmem %s4, 32
      %v652 = vld [vmem:[%s651] sm:$0xf]
      %v653 = vld [vmem:[%s651 + $0x4] sm:$0xf]
      %v654 = vld [vmem:[%s651 + $0x8] sm:$0xf]
      %v655 = vld [vmem:[%s651 + $0xc] sm:$0xf]
      %v660 = vunpack.c.l.b16 %v652
      %v661 = vunpack.c.l.b16 %v653
      %v662 = vunpack.c.l.b16 %v654
      %v663 = vunpack.c.l.b16 %v655
      %v664 = vpack.c.b16 %v661, %v660
      %v665 = vpack.c.b16 %v663, %v662
      %v669 = vsel %vm484, %v459, 0
      %v672 = vsel %vm484, %v460, 0
      %v675 = vsel %vm484, %v461, 0
      %v678 = vsel %vm484, %v462, 0
      %680 = vmatprep.subr.bf16.mxu0 0
      %681 = vmatpush1.bf16.msra.mxu0 0
      %682 = vmatprep.subr.bf16.mxu0 0
      %683 = vmatpush1.bf16.msra.mxu0 0
      %684 = vmatprep.subr.bf16.mxu0 0
      %685 = vmatpush1.bf16.msra.mxu0 0
      %686 = vmatprep.subr.bf16.mxu0 0
      %687 = vmatpush1.bf16.msra.mxu0 0
      %688 = vmatprep.subr.bf16.mxu0 0
      %689 = vmatpush1.bf16.msra.mxu0 0
      %690 = vmatprep.subr.bf16.mxu0 0
      %691 = vmatpush1.bf16.msra.mxu0 0
      %692 = vmatprep.subr.bf16.mxu0 0
      %693 = vmatpush1.bf16.msra.mxu0 %v665
      %694 = vmatprep.subr.bf16.mxu0 0
      %695 = vmatpush1.bf16.msra.mxu0 %v664
      %696 = vmatprep.subr.bf16.mxu0 0
      %697 = vmatpush2.bf16.msra.mxu0 0
      %698 = vmatprep.subr.bf16.mxu0 0
      %699 = vmatpush2.bf16.msra.mxu0 0
      %700 = vmatprep.subr.bf16.mxu0 0
      %701 = vmatpush2.bf16.msra.mxu0 0
      %702 = vmatprep.subr.bf16.mxu0 0
      %703 = vmatpush2.bf16.msra.mxu0 0
      %704 = vmatprep.subr.bf16.mxu0 0
      %705 = vmatpush2.bf16.msra.mxu0 0
      %706 = vmatprep.subr.bf16.mxu0 0
      %707 = vmatpush2.bf16.msra.mxu0 0
      %708 = vmatprep.subr.bf16.mxu0 0
      %709 = vmatpush2.bf16.msra.mxu0 0
      %710 = vmatprep.subr.bf16.mxu0 0
      %711 = vmatpush2.bf16.msra.mxu0 0
      %712 = vmatprep.mubr.bf16.mxu0 0
      %713 = vmatmul.mubr.bf16.gmra.mxu0 %v669
      %v714 = vpop.f32.mrf.mxu0
      %v715 = vadd.f32 0.0, %v714
      %v716 = vpop.f32.mrf.mxu0
      %v717 = vpop.f32.mrf.mxu0
      %v718 = vadd.f32 0.0, %v717
      %v719 = vpop.f32.mrf.mxu0
      %720 = vmatprep.mubr.bf16.mxu0 0
      %721 = vmatmul.mubr.bf16.gmra.mxu0 %v672
      %v722 = vpop.f32.mrf.mxu0
      %v723 = vadd.f32 0.0, %v722
      %v724 = vpop.f32.mrf.mxu0
      %v725 = vpop.f32.mrf.mxu0
      %v726 = vadd.f32 0.0, %v725
      %v727 = vpop.f32.mrf.mxu0
      %728 = vmatprep.mubr.bf16.mxu0 0
      %729 = vmatmul.mubr.bf16.gmra.mxu0 %v675
      %v730 = vpop.f32.mrf.mxu0
      %v731 = vadd.f32 0.0, %v730
      %v732 = vpop.f32.mrf.mxu0
      %v733 = vpop.f32.mrf.mxu0
      %v734 = vadd.f32 0.0, %v733
      %v735 = vpop.f32.mrf.mxu0
      %736 = vmatprep.mubr.bf16.mxu0 0
      %737 = vmatmul.mubr.bf16.gmra.mxu0 %v678
      %v738 = vpop.f32.mrf.mxu0
      %v739 = vadd.f32 0.0, %v738
      %v740 = vpop.f32.mrf.mxu0
      %v741 = vpop.f32.mrf.mxu0
      %v742 = vadd.f32 0.0, %v741
      %v743 = vpop.f32.mrf.mxu0
      %744 = vdwg.mxu0
      %v745 = vadd.f32 %v621, %v715
      %v746 = vadd.f32 %v624, %v718
      %v747 = vadd.f32 %v629, %v723
      %v748 = vadd.f32 %v632, %v726
      %v749 = vadd.f32 %v637, %v731
      %v750 = vadd.f32 %v640, %v734
      %v751 = vadd.f32 %v645, %v739
      %v752 = vadd.f32 %v648, %v742
      %v753 = vld [vmem:[%s5] sm:$0x1]
      %v755 = vlaneseq
      %v756 = vshrl.u32 %v755, 7
      %v757 = vsub.s32 0, %v756
      %v758 = vrot.slane %v753, %v757
      %v760 = vadd.f32 %v745, %v758
      %v761 = vadd.f32 %v746, %v758
      %v762 = vadd.f32 %v747, %v758
      %v763 = vadd.f32 %v748, %v758
      %v764 = vadd.f32 %v749, %v758
      %v765 = vadd.f32 %v750, %v758
      %v766 = vadd.f32 %v751, %v758
      %v767 = vadd.f32 %v752, %v758
      %v768 = vsel %vm484, %v760, 0.0
      %v769 = vsel %vm484, %v761, 0.0
      %v770 = vadd.f32 %v768, %v769
      %v771 = vsel %vm484, %v762, 0.0
      %v772 = vadd.f32 %v770, %v771
      %v773 = vsel %vm484, %v763, 0.0
      %v774 = vadd.f32 %v772, %v773
      %v775 = vsel %vm484, %v764, 0.0
      %v776 = vadd.f32 %v774, %v775
      %v777 = vsel %vm484, %v765, 0.0
      %v778 = vadd.f32 %v776, %v777
      %v779 = vsel %vm484, %v766, 0.0
      %v780 = vadd.f32 %v778, %v779
      %v781 = vsel %vm484, %v767, 0.0
      %v782 = vadd.f32 %v780, %v781
      %v783 = vrot.slane %v782, 4
      %v784 = vadd.f32 %v782, %v783
      %v785 = vrot.slane %v784, 2
      %v786 = vadd.f32 %v784, %v785
      %v787 = vrot.slane %v786, 1
      %v788 = vadd.f32 %v786, %v787
      %v789 = vmul.f32 %v760, %v760
      %v790 = vmul.f32 %v761, %v761
      %v791 = vmul.f32 %v762, %v762
      %v792 = vmul.f32 %v763, %v763
      %v793 = vmul.f32 %v764, %v764
      %v794 = vmul.f32 %v765, %v765
      %v795 = vmul.f32 %v766, %v766
      %v796 = vmul.f32 %v767, %v767
      %v797 = vsel %vm484, %v789, 0.0
      %v798 = vsel %vm484, %v790, 0.0
      %v799 = vadd.f32 %v797, %v798
      %v800 = vsel %vm484, %v791, 0.0
      %v801 = vadd.f32 %v799, %v800
      %v802 = vsel %vm484, %v792, 0.0
      %v803 = vadd.f32 %v801, %v802
      %v804 = vsel %vm484, %v793, 0.0
      %v805 = vadd.f32 %v803, %v804
      %v806 = vsel %vm484, %v794, 0.0
      %v807 = vadd.f32 %v805, %v806
      %v808 = vsel %vm484, %v795, 0.0
      %v809 = vadd.f32 %v807, %v808
      %v810 = vsel %vm484, %v796, 0.0
      %v811 = vadd.f32 %v809, %v810
      %v812 = vrot.slane %v811, 4
      %v813 = vadd.f32 %v811, %v812
      %v814 = vrot.slane %v813, 2
      %v815 = vadd.f32 %v813, %v814
      %v816 = vrot.slane %v815, 1
      %v817 = vadd.f32 %v815, %v816
      %vm818 = vcmask 1040384
      %v819 = vsel %vm818, %v788, %v817
      %820 = vst.msk [vmem:[%s297] sm:$0x3] %vm301, %v819
      %v821 = vpack.c.bf16 %v761, %v760
      %v822 = vpack.c.bf16 %v763, %v762
      %v823 = vpack.c.bf16 %v765, %v764
      %v824 = vpack.c.bf16 %v767, %v766
      %v829 = vunpack.c.l.b16 %v821
      %v830 = vunpack.c.h.b16 %v821
      %v831 = vunpack.c.l.b16 %v822
      %v832 = vunpack.c.h.b16 %v822
      %v833 = vunpack.c.l.b16 %v823
      %v834 = vunpack.c.h.b16 %v823
      %v835 = vunpack.c.l.b16 %v824
      %v836 = vunpack.c.h.b16 %v824
      %v837 = vpack.c.b16 %v829, %v829
      %v838 = vpack.c.b16 %v830, %v830
      %v839 = vpack.c.b16 %v831, %v831
      %v840 = vpack.c.b16 %v832, %v832
      %v841 = vpack.c.b16 %v833, %v833
      %v842 = vpack.c.b16 %v834, %v834
      %v843 = vpack.c.b16 %v835, %v835
      %v844 = vpack.c.b16 %v836, %v836
      %vm853 = vcmask 257024
      %854 = vst.msk [vmem:[%s292] sm:$0xf] %vm853, %v837
      %855 = vst.msk [vmem:[%s292 + $0x4] sm:$0xf] %vm853, %v838
      %856 = vst.msk [vmem:[%s292 + $0x8] sm:$0xf] %vm853, %v839
      %857 = vst.msk [vmem:[%s292 + $0xc] sm:$0xf] %vm853, %v840
      %858 = vst.msk [vmem:[%s292 + $0x10] sm:$0xf] %vm853, %v841
      %859 = vst.msk [vmem:[%s292 + $0x14] sm:$0xf] %vm853, %v842
      %860 = vst.msk [vmem:[%s292 + $0x18] sm:$0xf] %vm853, %v843
      %861 = vst.msk [vmem:[%s292 + $0x1c] sm:$0xf] %vm853, %v844
      %s862 = smul.u32 2, %s19
      %p863 = scmp.lt.s32.totalorder %s862, 3
      %s864 = scalar_select %p863, %s862, 3
      %s865 = smul.addr %s864, 4
      %s866 = smul.addr %s865, 4
      %s867 = scalar_lea.vmem %s6, %s866
      %p868 = scmp.lt.s32.totalorder %s19, 1
      %s869 = scalar_select %p868, %s19, 1
      %s870 = smul.addr %s869, 2
      %s871 = scalar_lea.vmem %s7, %s870
      // Predicated region
      $region45: #{cnn_forward.12} parent=43 // pred_check
        %p872 = pneg %p168
      $region46: #{cnn_forward.12} parent=43 // pred_check_branch
        %874 = sbr.rel (%p872) target = $region48
      $region47: #{cnn_forward.12} parent=43 // pred_region
        %s875 = smul.u32 2, %s19
      $region48: #{cnn_forward.12} parent=43 // pred_fallthru
        _
      // Predicated region
      $region49: #{cnn_forward.12} parent=43 // pred_check
        %p876 = pneg %p194
      $region50: #{cnn_forward.12} parent=43 // pred_check_branch
        %878 = sbr.rel (%p876) target = $region52
      $region51: #{cnn_forward.12} parent=43 // pred_region
        _
      $region52: #{cnn_forward.12} parent=43 // pred_fallthru
        _
    $region44: #{cnn_forward.12} parent=5 // pred_fallthru
      _
    %p879 = scmp.le.s32.totalorder 2, %s14
    // Predicated region
    $region53: #{cnn_forward.12} parent=5 // pred_check
      %p880 = pneg %p879
    $region54: #{cnn_forward.12} parent=5 // pred_check_branch
      %882 = sbr.rel (%p880) target = $region56
    $region55: #{cnn_forward.12} parent=5 // pred_region
      %s883 = ssub.s32 %s14, 2
      // Predicated region
      $region57: #{cnn_forward.12} parent=55 // pred_check
        %p884 = pneg %p174
      $region58: #{cnn_forward.12} parent=55 // pred_check_branch
        %886 = sbr.rel (%p884) target = $region60
      $region59: #{cnn_forward.12} parent=55 // pred_region
        %s887 = smul.u32 2, %s20
        %p888 = scmp.lt.s32.totalorder %s887, 3
        %s889 = scalar_select %p888, %s887, 3
        %s890 = smul.addr %s889, 4
        %s891 = smul.addr %s890, 4
        %s892 = scalar_lea.vmem %s6, %s891
      $region60: #{cnn_forward.12} parent=55 // pred_fallthru
        _
      // Predicated region
      $region61: #{cnn_forward.12} parent=55 // pred_check
        %p893 = pneg %p200
      $region62: #{cnn_forward.12} parent=55 // pred_check_branch
        %895 = sbr.rel (%p893) target = $region64
      $region63: #{cnn_forward.12} parent=55 // pred_region
        %p896 = scmp.lt.s32.totalorder %s20, 1
        %s897 = scalar_select %p896, %s20, 1
        %s898 = smul.addr %s897, 2
        %s899 = scalar_lea.vmem %s7, %s898
      $region64: #{cnn_forward.12} parent=55 // pred_fallthru
        _
    $region56: #{cnn_forward.12} parent=5 // pred_fallthru
      _
  $region6: #{cnn_forward.12} parent=0 // loop_footer
    %s18 = sadd.s32 1, %s14
  $region7: #{cnn_forward.12} parent=0 // loop_footer_branch
    %13 = sbr.rel target = $region3
  $region8: #{cnn_forward.12} parent=0 // loop_exit
    _

// kernel: cnn_forward.10
$region0: #{cnn_forward.10}
  #allocation0 [shape = 'u32[]', space=smem, size = 0x4, offset = 0x4, fixed_abs, tag = 'smem constant byte address 0x4 - core index']
  #allocation1 [shape = 'u32[144,128]{1,0:T(1,128)}', space=vmem, size = 0x12000, scoped, tag = 'internal scratch']
  %s0 = inlined_call_operand.vmem [shape: f32[2,2,16], index: 0, kind: input, shape index: {}]
  %s1 = inlined_call_operand.vmem [shape: f32[1,16], index: 1, kind: input, shape index: {}]
  %s2 = inlined_call_operand.vmem [shape: f32[1,16], index: 2, kind: input, shape index: {}]
  %s3 = inlined_call_operand.vmem [shape: bf16[4,64,16], index: 3, kind: input, shape index: {}]
  %s4 = inlined_call_operand.vmem [shape: bf16[3,16,16], index: 4, kind: input, shape index: {}]
  %s5 = inlined_call_operand.vmem [shape: f32[1,16], index: 5, kind: input, shape index: {}]
  %s6 = inlined_call_operand.vmem [shape: bf16[4,64,16], index: 6, kind: output, shape index: {0}]
  %s7 = inlined_call_operand.vmem [shape: f32[2,2,16], index: 7, kind: output, shape index: {1}]
  %8 = xla_tuple %s6, %s7
  %s9 = sld [smem:[#allocation0]]
  $region65: #{cnn_forward.10} parent=0
    _
  %s11 = ssub.s32 1, %s9
  %s12 = scalar_select 0, %s11, %s9
  loop: start=0, step=1, limit=4
  $region2: #{cnn_forward.10} parent=0 // loop_pre_header
    _
  $region3: #{cnn_forward.10} parent=0 // loop_header
    %s14 = sphi 0, %s18
    %p15 = scmp.ge.s32.totalorder %s14, 4
    %s22 = sphi 0, %s22
    %s24 = sphi 0, %s22
    %s25 = sphi 0, %s24
    %s39 = sphi 0, %s25
    %s43 = sphi 0, %s43
    %s45 = sphi 0, %s43
    %s46 = sphi 0, %s45
    %s60 = sphi 0, %s46
    %s64 = sphi 0, %s64
    %s66 = sphi 0, %s64
    %s67 = sphi 0, %s66
    %s81 = sphi 0, %s67
    %s87 = sphi 0, %s89
    %s90 = sphi 0, %s87
    %s91 = sphi 0, %s90
    %s107 = sphi 0, %s91
    %s111 = sphi 0, %s111
    %s113 = sphi 0, %s111
    %s114 = sphi 0, %s113
    %s128 = sphi 0, %s114
    %s132 = sphi 0, %s132
    %s134 = sphi 0, %s132
    %s135 = sphi 0, %s134
    %s149 = sphi 0, %s135
    %s155 = sphi 0, %s157
    %s158 = sphi 0, %s155
    %s159 = sphi 0, %s158
    %s175 = sphi 0, %s159
    %s181 = sphi 0, %s183
    %s184 = sphi 0, %s181
    %s185 = sphi 0, %s184
    %s201 = sphi 0, %s185
  $region4: #{cnn_forward.10} parent=0 // loop_header_branch
    %17 = sbr.rel (%p15) target = $region8
  $region5: #{cnn_forward.10} parent=0 // loop_body
    %s19 = ssub.s32 %s14, 1
    %s20 = ssub.s32 %s14, 2
    %s21 = sadd.s32 %s14, 1
    %s23 = sadd.s32 %s22, 1
    %p26 = scmp.eq.s32.totalorder %s14, 1
    %p27 = scmp.ne.s32.totalorder %s22, %s24
    %p28 = scmp.eq.s32.totalorder %s14, 0
    %p29 = por %p27, %p28
    %p30 = scmp.ne.s32.totalorder %s22, %s24
    %p31 = scmp.eq.s32.totalorder %s19, 1
    %p32 = por %p30, %p31
    %p33 = scmp.ne.s32.totalorder %s24, %s25
    %p34 = scmp.eq.s32.totalorder %s19, 0
    %p35 = por %p33, %p34
    %p36 = scmp.ne.s32.totalorder %s24, %s25
    %p37 = scmp.eq.s32.totalorder %s20, 1
    %p38 = por %p36, %p37
    %p40 = scmp.ne.s32.totalorder %s25, %s39
    %p41 = scmp.eq.s32.totalorder %s20, 0
    %p42 = por %p40, %p41
    %s44 = sadd.s32 %s43, 1
    %p47 = scmp.eq.s32.totalorder %s14, 1
    %p48 = scmp.ne.s32.totalorder %s43, %s45
    %p49 = scmp.eq.s32.totalorder %s14, 0
    %p50 = por %p48, %p49
    %p51 = scmp.ne.s32.totalorder %s43, %s45
    %p52 = scmp.eq.s32.totalorder %s19, 1
    %p53 = por %p51, %p52
    %p54 = scmp.ne.s32.totalorder %s45, %s46
    %p55 = scmp.eq.s32.totalorder %s19, 0
    %p56 = por %p54, %p55
    %p57 = scmp.ne.s32.totalorder %s45, %s46
    %p58 = scmp.eq.s32.totalorder %s20, 1
    %p59 = por %p57, %p58
    %p61 = scmp.ne.s32.totalorder %s46, %s60
    %p62 = scmp.eq.s32.totalorder %s20, 0
    %p63 = por %p61, %p62
    %s65 = sadd.s32 %s64, 1
    %p68 = scmp.eq.s32.totalorder %s14, 1
    %p69 = scmp.ne.s32.totalorder %s64, %s66
    %p70 = scmp.eq.s32.totalorder %s14, 0
    %p71 = por %p69, %p70
    %p72 = scmp.ne.s32.totalorder %s64, %s66
    %p73 = scmp.eq.s32.totalorder %s19, 1
    %p74 = por %p72, %p73
    %p75 = scmp.ne.s32.totalorder %s66, %s67
    %p76 = scmp.eq.s32.totalorder %s19, 0
    %p77 = por %p75, %p76
    %p78 = scmp.ne.s32.totalorder %s66, %s67
    %p79 = scmp.eq.s32.totalorder %s20, 1
    %p80 = por %p78, %p79
    %p82 = scmp.ne.s32.totalorder %s67, %s81
    %p83 = scmp.eq.s32.totalorder %s20, 0
    %p84 = por %p82, %p83
    %s85 = ssub.s32 %s14, %s21
    %p86 = scmp.eq.s32.totalorder %s85, 0
    %s88 = sadd.s32 %s87, 1
    %s89 = scalar_select %p86, %s87, %s88
    %p92 = pneg %p86
    %p93 = scmp.eq.s32.totalorder %s14, 1
    %p94 = por %p92, %p93
    %p95 = scmp.ne.s32.totalorder %s87, %s90
    %p96 = scmp.eq.s32.totalorder %s14, 0
    %p97 = por %p95, %p96
    %p98 = scmp.ne.s32.totalorder %s87, %s90
    %p99 = scmp.eq.s32.totalorder %s19, 1
    %p100 = por %p98, %p99
    %p101 = scmp.ne.s32.totalorder %s90, %s91
    %p102 = scmp.eq.s32.totalorder %s19, 0
    %p103 = por %p101, %p102
    %p104 = scmp.ne.s32.totalorder %s90, %s91
    %p105 = scmp.eq.s32.totalorder %s20, 1
    %p106 = por %p104, %p105
    %p108 = scmp.ne.s32.totalorder %s91, %s107
    %p109 = scmp.eq.s32.totalorder %s20, 0
    %p110 = por %p108, %p109
    %s112 = sadd.s32 %s111, 1
    %p115 = scmp.eq.s32.totalorder %s14, 1
    %p116 = scmp.ne.s32.totalorder %s111, %s113
    %p117 = scmp.eq.s32.totalorder %s14, 0
    %p118 = por %p116, %p117
    %p119 = scmp.ne.s32.totalorder %s111, %s113
    %p120 = scmp.eq.s32.totalorder %s19, 1
    %p121 = por %p119, %p120
    %p122 = scmp.ne.s32.totalorder %s113, %s114
    %p123 = scmp.eq.s32.totalorder %s19, 0
    %p124 = por %p122, %p123
    %p125 = scmp.ne.s32.totalorder %s113, %s114
    %p126 = scmp.eq.s32.totalorder %s20, 1
    %p127 = por %p125, %p126
    %p129 = scmp.ne.s32.totalorder %s114, %s128
    %p130 = scmp.eq.s32.totalorder %s20, 0
    %p131 = por %p129, %p130
    %s133 = sadd.s32 %s132, 1
    %p136 = scmp.eq.s32.totalorder %s14, 1
    %p137 = scmp.ne.s32.totalorder %s132, %s134
    %p138 = scmp.eq.s32.totalorder %s14, 0
    %p139 = por %p137, %p138
    %p140 = scmp.ne.s32.totalorder %s132, %s134
    %p141 = scmp.eq.s32.totalorder %s19, 1
    %p142 = por %p140, %p141
    %p143 = scmp.ne.s32.totalorder %s134, %s135
    %p144 = scmp.eq.s32.totalorder %s19, 0
    %p145 = por %p143, %p144
    %p146 = scmp.ne.s32.totalorder %s134, %s135
    %p147 = scmp.eq.s32.totalorder %s20, 1
    %p148 = por %p146, %p147
    %p150 = scmp.ne.s32.totalorder %s135, %s149
    %p151 = scmp.eq.s32.totalorder %s20, 0
    %p152 = por %p150, %p151
    %s153 = ssub.s32 %s14, %s21
    %p154 = scmp.eq.s32.totalorder %s153, 0
    %s156 = sadd.s32 %s155, 1
    %s157 = scalar_select %p154, %s155, %s156
    %p160 = pneg %p154
    %p161 = scmp.eq.s32.totalorder %s14, 1
    %p162 = por %p160, %p161
    %p163 = scmp.ne.s32.totalorder %s155, %s158
    %p164 = scmp.eq.s32.totalorder %s14, 0
    %p165 = por %p163, %p164
    %p166 = scmp.ne.s32.totalorder %s155, %s158
    %p167 = scmp.eq.s32.totalorder %s19, 1
    %p168 = por %p166, %p167
    %p169 = scmp.ne.s32.totalorder %s158, %s159
    %p170 = scmp.eq.s32.totalorder %s19, 0
    %p171 = por %p169, %p170
    %p172 = scmp.ne.s32.totalorder %s158, %s159
    %p173 = scmp.eq.s32.totalorder %s20, 1
    %p174 = por %p172, %p173
    %p176 = scmp.ne.s32.totalorder %s159, %s175
    %p177 = scmp.eq.s32.totalorder %s20, 0
    %p178 = por %p176, %p177
    %s179 = ssub.s32 %s14, %s21
    %p180 = scmp.eq.s32.totalorder %s179, 0
    %s182 = sadd.s32 %s181, 1
    %s183 = scalar_select %p180, %s181, %s182
    %p186 = pneg %p180
    %p187 = scmp.eq.s32.totalorder %s14, 1
    %p188 = por %p186, %p187
    %p189 = scmp.ne.s32.totalorder %s181, %s184
    %p190 = scmp.eq.s32.totalorder %s14, 0
    %p191 = por %p189, %p190
    %p192 = scmp.ne.s32.totalorder %s181, %s184
    %p193 = scmp.eq.s32.totalorder %s19, 1
    %p194 = por %p192, %p193
    %p195 = scmp.ne.s32.totalorder %s184, %s185
    %p196 = scmp.eq.s32.totalorder %s19, 0
    %p197 = por %p195, %p196
    %p198 = scmp.ne.s32.totalorder %s184, %s185
    %p199 = scmp.eq.s32.totalorder %s20, 1
    %p200 = por %p198, %p199
    %p202 = scmp.ne.s32.totalorder %s185, %s201
    %p203 = scmp.eq.s32.totalorder %s20, 0
    %p204 = por %p202, %p203
    %p205 = scmp.le.s32.totalorder 1, %s14
    %p206 = scmp.lt.s32.totalorder %s14, 3
    %p207 = pnand %p205, %p206
    %p208 = pneg %p207
    // Predicated region
    $region9: #{cnn_forward.10} parent=5 // pred_check
      _
    $region10: #{cnn_forward.10} parent=5 // pred_check_branch
      %210 = sbr.rel (%p207) target = $region12
    $region11: #{cnn_forward.10} parent=5 // pred_region
      %s211 = ssub.s32 %s14, 1
      // Predicated region
      $region13: #{cnn_forward.10} parent=11 // pred_check
        %p212 = pneg %p35
      $region14: #{cnn_forward.10} parent=11 // pred_check_branch
        %214 = sbr.rel (%p212) target = $region16
      $region15: #{cnn_forward.10} parent=11 // pred_region
        _
      $region16: #{cnn_forward.10} parent=11 // pred_fallthru
        _
      // Predicated region
      $region17: #{cnn_forward.10} parent=11 // pred_check
        %p215 = pneg %p56
      $region18: #{cnn_forward.10} parent=11 // pred_check_branch
        %217 = sbr.rel (%p215) target = $region20
      $region19: #{cnn_forward.10} parent=11 // pred_region
        _
      $region20: #{cnn_forward.10} parent=11 // pred_fallthru
        _
      // Predicated region
      $region21: #{cnn_forward.10} parent=11 // pred_check
        %p218 = pneg %p77
      $region22: #{cnn_forward.10} parent=11 // pred_check_branch
        %220 = sbr.rel (%p218) target = $region24
      $region23: #{cnn_forward.10} parent=11 // pred_region
        _
      $region24: #{cnn_forward.10} parent=11 // pred_fallthru
        _
      // Predicated region
      $region25: #{cnn_forward.10} parent=11 // pred_check
        %p221 = pneg %p124
      $region26: #{cnn_forward.10} parent=11 // pred_check_branch
        %223 = sbr.rel (%p221) target = $region28
      $region27: #{cnn_forward.10} parent=11 // pred_region
        _
      $region28: #{cnn_forward.10} parent=11 // pred_fallthru
        _
      // Predicated region
      $region29: #{cnn_forward.10} parent=11 // pred_check
        %p224 = pneg %p145
      $region30: #{cnn_forward.10} parent=11 // pred_check_branch
        %226 = sbr.rel (%p224) target = $region32
      $region31: #{cnn_forward.10} parent=11 // pred_region
        _
      $region32: #{cnn_forward.10} parent=11 // pred_fallthru
        _
    $region12: #{cnn_forward.10} parent=5 // pred_fallthru
      _
    %p227 = scmp.lt.s32.totalorder %s14, 2
    // Predicated region
    $region33: #{cnn_forward.10} parent=5 // pred_check
      %p228 = pneg %p227
    $region34: #{cnn_forward.10} parent=5 // pred_check_branch
      %230 = sbr.rel (%p228) target = $region36
    $region35: #{cnn_forward.10} parent=5 // pred_region
      // Predicated region
      $region37: #{cnn_forward.10} parent=35 // pred_check
        %p231 = pneg %p97
      $region38: #{cnn_forward.10} parent=35 // pred_check_branch
        %233 = sbr.rel (%p231) target = $region40
      $region39: #{cnn_forward.10} parent=35 // pred_region
        %s234 = smul.u32 2, %s14
        %p235 = scmp.lt.s32.totalorder %s234, 3
        %s236 = scalar_select %p235, %s234, 3
        %s237 = smul.addr %s236, 8
        %s238 = smul.addr %s237, 4
        %s239 = scalar_lea.vmem %s3, %s238
        %s240 = smul.u32 2, %s14
      $region40: #{cnn_forward.10} parent=35 // pred_fallthru
        _
    $region36: #{cnn_forward.10} parent=5 // pred_fallthru
      _
    %p241 = scmp.le.s32.totalorder 1, %s14
    %p242 = scmp.lt.s32.totalorder %s14, 3
    %p243 = pnand %p241, %p242
    %p244 = pneg %p243
    // Predicated region
    $region41: #{cnn_forward.10} parent=5 // pred_check
      _
    $region42: #{cnn_forward.10} parent=5 // pred_check_branch
      %246 = sbr.rel (%p243) target = $region44
    $region43: #{cnn_forward.10} parent=5 // pred_region
      %s247 = ssub.s32 %s14, 1
      %p248 = pneg %p35
      %p249 = pneg %p32
      %p250 = pneg %p56
      %p251 = pneg %p53
      %p252 = pneg %p77
      %p253 = pneg %p74
      %s254 = smul.u32 2, %s19
      %p255 = scmp.lt.s32.totalorder %s254, 3
      %s256 = scalar_select %p255, %s254, 3
      %s257 = smul.addr %s256, 8
      %s258 = smul.addr %s257, 4
      %s259 = scalar_lea.vmem %s3, %s258
      %p260 = pneg %p103
      %p261 = pneg %p100
      %p262 = pneg %p124
      %p263 = pneg %p121
      %p264 = pneg %p145
      %p265 = pneg %p142
      %p266 = pneg %p171
      %p267 = pneg %p168
      %s268 = smul.u32 2, %s19
      %p269 = scmp.lt.s32.totalorder %s268, 3
      %s270 = scalar_select %p269, %s268, 3
      %s271 = smul.addr %s270, 8
      %s272 = smul.addr %s271, 4
      %s273 = scalar_lea.vmem %s6, %s272
      %p274 = pneg %p197
      %p275 = pneg %p194
      %p276 = scmp.lt.s32.totalorder %s19, 1
      %s277 = scalar_select %p276, %s19, 1
      %s278 = smul.addr %s277, 2
      %s279 = scalar_lea.vmem %s7, %s278
      %s280 = smul.u32 2, %s19
      %p281 = scmp.lt.s32.totalorder %s280, 3
      %s282 = scalar_select %p281, %s280, 3
      %s283 = smul.addr %s282, 8
      %s284 = smul.addr %s283, 4
      %s285 = scalar_lea.vmem %s3, %s284
      %s286 = smul.u32 2, %s19
      %s287 = smul.u32 2, %s19
      %p288 = scmp.lt.s32.totalorder %s287, 3
      %s289 = scalar_select %p288, %s287, 3
      %s290 = smul.addr %s289, 8
      %s291 = smul.addr %s290, 4
      %s292 = scalar_lea.vmem %s6, %s291
      %s293 = smul.u32 2, %s19
      %p294 = scmp.lt.s32.totalorder %s19, 1
      %s295 = scalar_select %p294, %s19, 1
      %s296 = smul.addr %s295, 2
      %s297 = scalar_lea.vmem %s7, %s296
      %v299 = vld [vmem:[%s0] sm:$0x3]
      %v300 = vld [vmem:[%s0 + $0x2] sm:$0x3]
      %vm301 = vcmask 123904
      %v302 = vsel %vm301, %v299, 0.0
      %v303 = vsel %vm301, %v300, 0.0
      %v304 = vadd.f32 %v302, %v303
      %v305 = vld [vmem:[%s1] sm:$0x1]
      %v306 = vld [vmem:[%s2] sm:$0x1]
      %v307 = vmul.f32 %v304, 0.00390625
      %v308 = vmul.f32 %v307, %v307
      %v310 = vrot.slane %v308, 7
      %v312 = vsub.f32 %v307, %v310
      %v313 = vmax.f32 %v312, 0.0
      %v314 = vadd.f32 %v313, 1e-05
      %v315 = vrsqrt.pop %v314
      %v318 = vunpack.c.l.s4 1966171168
      %v319 = vunpack.c.0.s8 %v318
      %v320 = vlaneseq
      %v321 = vshrl.u32 %v320, 7
      %v322 = vsub.s32 %v319, %v321
      %v323 = vrot.slane %v315, %v322
      %v324 = vcombine.high %v323, %v323
      %v326 = vunpack.c.l.s4 1966171168
      %v327 = vunpack.c.0.s8 %v326
      %v328 = vlaneseq
      %v329 = vshrl.u32 %v328, 7
      %v330 = vsub.s32 %v327, %v329
      %v331 = vrot.slane %v324, %v330
      %v333 = vmul.f32 %v305, %v331
      %v334 = vmul.f32 %v307, %v333
      %v335 = vsub.f32 %v306, %v334
      %v336 = vld [vmem:[%s285] sm:$0xf]
      %v337 = vld [vmem:[%s285 + $0x4] sm:$0xf]
      %v338 = vld [vmem:[%s285 + $0x8] sm:$0xf]
      %v339 = vld [vmem:[%s285 + $0xc] sm:$0xf]
      %v340 = vld [vmem:[%s285 + $0x10] sm:$0xf]
      %v341 = vld [vmem:[%s285 + $0x14] sm:$0xf]
      %v342 = vld [vmem:[%s285 + $0x18] sm:$0xf]
      %v343 = vld [vmem:[%s285 + $0x1c] sm:$0xf]
      %v344 = vld [vmem:[%s285 + $0x20] sm:$0xf]
      %v345 = vld [vmem:[%s285 + $0x24] sm:$0xf]
      %v346 = vld [vmem:[%s285 + $0x28] sm:$0xf]
      %v347 = vld [vmem:[%s285 + $0x2c] sm:$0xf]
      %v348 = vld [vmem:[%s285 + $0x30] sm:$0xf]
      %v349 = vld [vmem:[%s285 + $0x34] sm:$0xf]
      %v350 = vld [vmem:[%s285 + $0x38] sm:$0xf]
      %v351 = vld [vmem:[%s285 + $0x3c] sm:$0xf]
      %v352 = vunpack.c.l.bf16 %v336
      %v353 = vunpack.c.l.bf16 %v337
      %v354 = vunpack.c.l.bf16 %v338
      %v355 = vunpack.c.l.bf16 %v339
      %v356 = vunpack.c.l.bf16 %v340
      %v357 = vunpack.c.l.bf16 %v341
      %v358 = vunpack.c.l.bf16 %v342
      %v359 = vunpack.c.l.bf16 %v343
      %v360 = vunpack.c.l.bf16 %v344
      %v361 = vunpack.c.l.bf16 %v345
      %v362 = vunpack.c.l.bf16 %v346
      %v363 = vunpack.c.l.bf16 %v347
      %v364 = vunpack.c.l.bf16 %v348
      %v365 = vunpack.c.l.bf16 %v349
      %v366 = vunpack.c.l.bf16 %v350
      %v367 = vunpack.c.l.bf16 %v351
      %v369 = vlaneseq
      %v370 = vshrl.u32 %v369, 7
      %v371 = vsub.s32 0, %v370
      %v372 = vrot.slane %v333, %v371
      %v374 = vmul.f32 %v372, %v352
      %v375 = vmul.f32 %v372, %v353
      %v376 = vmul.f32 %v372, %v354
      %v377 = vmul.f32 %v372, %v355
      %v378 = vmul.f32 %v372, %v356
      %v379 = vmul.f32 %v372, %v357
      %v380 = vmul.f32 %v372, %v358
      %v381 = vmul.f32 %v372, %v359
      %v382 = vmul.f32 %v372, %v360
      %v383 = vmul.f32 %v372, %v361
      %v384 = vmul.f32 %v372, %v362
      %v385 = vmul.f32 %v372, %v363
      %v386 = vmul.f32 %v372, %v364
      %v387 = vmul.f32 %v372, %v365
      %v388 = vmul.f32 %v372, %v366
      %v389 = vmul.f32 %v372, %v367
      %v391 = vlaneseq
      %v392 = vshrl.u32 %v391, 7
      %v393 = vsub.s32 0, %v392
      %v394 = vrot.slane %v335, %v393
      %v396 = vadd.f32 %v374, %v394
      %v397 = vadd.f32 %v375, %v394
      %v398 = vadd.f32 %v376, %v394
      %v399 = vadd.f32 %v377, %v394
      %v400 = vadd.f32 %v378, %v394
      %v401 = vadd.f32 %v379, %v394
      %v402 = vadd.f32 %v380, %v394
      %v403 = vadd.f32 %v381, %v394
      %v404 = vadd.f32 %v382, %v394
      %v405 = vadd.f32 %v383, %v394
      %v406 = vadd.f32 %v384, %v394
      %v407 = vadd.f32 %v385, %v394
      %v408 = vadd.f32 %v386, %v394
      %v409 = vadd.f32 %v387, %v394
      %v410 = vadd.f32 %v388, %v394
      %v411 = vadd.f32 %v389, %v394
      %v412 = vlaneseq
      %v413 = vshrl.u32 %v412, 7
      %v414 = vadd.s32 %v413, 8
      %v415 = vadd.s32 %v413, 16
      %v416 = vadd.s32 %v413, 24
      %v417 = vadd.s32 %v413, 32
      %v418 = vadd.s32 %v413, 40
      %v419 = vadd.s32 %v413, 48
      %v420 = vadd.s32 %v413, 56
      %vm421 = vcmp.eq.s32.totalorder %v413, 0
      %vm422 = vcmp.eq.s32.totalorder %v414, 0
      %vm423 = vcmp.eq.s32.totalorder %v415, 0
      %vm424 = vcmp.eq.s32.totalorder %v416, 0
      %vm425 = vcmp.eq.s32.totalorder %v417, 0
      %vm426 = vcmp.eq.s32.totalorder %v418, 0
      %vm427 = vcmp.eq.s32.totalorder %v419, 0
      %vm428 = vcmp.eq.s32.totalorder %v420, 0
      %v429 = vsel %vm421, 0.0, 1.0
      %v430 = vsel %vm422, 0.0, 1.0
      %v431 = vsel %vm423, 0.0, 1.0
      %v432 = vsel %vm424, 0.0, 1.0
      %v433 = vsel %vm425, 0.0, 1.0
      %v434 = vsel %vm426, 0.0, 1.0
      %v435 = vsel %vm427, 0.0, 1.0
      %v436 = vsel %vm428, 0.0, 1.0
      %vm437 = vcmp.eq.s32.totalorder %v413, 63
      %vm438 = vcmp.eq.s32.totalorder %v414, 63
      %vm439 = vcmp.eq.s32.totalorder %v415, 63
      %vm440 = vcmp.eq.s32.totalorder %v416, 63
      %vm441 = vcmp.eq.s32.totalorder %v417, 63
      %vm442 = vcmp.eq.s32.totalorder %v418, 63
      %vm443 = vcmp.eq.s32.totalorder %v419, 63
      %vm444 = vcmp.eq.s32.totalorder %v420, 63
      %v445 = vsel %vm437, 0.0, 1.0
      %v446 = vsel %vm438, 0.0, 1.0
      %v447 = vsel %vm439, 0.0, 1.0
      %v448 = vsel %vm440, 0.0, 1.0
      %v449 = vsel %vm441, 0.0, 1.0
      %v450 = vsel %vm442, 0.0, 1.0
      %v451 = vsel %vm443, 0.0, 1.0
      %v452 = vsel %vm444, 0.0, 1.0
      %v453 = vrot.slane %v396, 7
      %v454 = vrot.slane %v397, 7
      %v455 = vrot.slane %v398, 7
      %v456 = vrot.slane %v399, 7
      %v457 = vrot.slane %v400, 7
      %v458 = vrot.slane %v401, 7
      %v459 = vrot.slane %v402, 7
      %v460 = vrot.slane %v403, 7
      %v461 = vrot.slane %v404, 7
      %v462 = vrot.slane %v405, 7
      %v463 = vrot.slane %v406, 7
      %v464 = vrot.slane %v407, 7
      %v465 = vrot.slane %v408, 7
      %v466 = vrot.slane %v409, 7
      %v467 = vrot.slane %v410, 7
      %v468 = vrot.slane %v411, 7
      %vm469 = vcmp.lt.s32.totalorder %v413, 1
      %v470 = vsel %vm469, %v467, %v468
      %v471 = vsel %vm469, %v466, %v467
      %v472 = vsel %vm469, %v465, %v466
      %v473 = vsel %vm469, %v464, %v465
      %v474 = vsel %vm469, %v463, %v464
      %v475 = vsel %vm469, %v462, %v463
      %v476 = vsel %vm469, %v461, %v462
      %v477 = vsel %vm469, %v460, %v461
      %v478 = vsel %vm469, %v459, %v460
      %v479 = vsel %vm469, %v458, %v459
      %v480 = vsel %vm469, %v457, %v458
      %v481 = vsel %vm469, %v456, %v457
      %v482 = vsel %vm469, %v455, %v456
      %v483 = vsel %vm469, %v454, %v455
      %v484 = vsel %vm469, %v453, %v454
      %v485 = vsel %vm469, %v468, %v453
      %v486 = vmul.f32 %v485, %v429
      %v487 = vmul.f32 %v484, %v430
      %v488 = vmul.f32 %v483, %v431
      %v489 = vmul.f32 %v482, %v432
      %v490 = vmul.f32 %v481, %v433
      %v491 = vmul.f32 %v480, %v434
      %v492 = vmul.f32 %v479, %v435
      %v493 = vmul.f32 %v478, %v436
      %v494 = vmul.f32 %v477, %v429
      %v495 = vmul.f32 %v476, %v430
      %v496 = vmul.f32 %v475, %v431
      %v497 = vmul.f32 %v474, %v432
      %v498 = vmul.f32 %v473, %v433
      %v499 = vmul.f32 %v472, %v434
      %v500 = vmul.f32 %v471, %v435
      %v501 = vmul.f32 %v470, %v436
      %v502 = vrot.slane %v396, 1
      %v503 = vrot.slane %v397, 1
      %v504 = vrot.slane %v398, 1
      %v505 = vrot.slane %v399, 1
      %v506 = vrot.slane %v400, 1
      %v507 = vrot.slane %v401, 1
      %v508 = vrot.slane %v402, 1
      %v509 = vrot.slane %v403, 1
      %v510 = vrot.slane %v404, 1
      %v511 = vrot.slane %v405, 1
      %v512 = vrot.slane %v406, 1
      %v513 = vrot.slane %v407, 1
      %v514 = vrot.slane %v408, 1
      %v515 = vrot.slane %v409, 1
      %v516 = vrot.slane %v410, 1
      %v517 = vrot.slane %v411, 1
      %vm518 = vcmp.lt.s32.totalorder %v413, 7
      %v519 = vsel %vm518, %v516, %v517
      %v520 = vsel %vm518, %v515, %v516
      %v521 = vsel %vm518, %v514, %v515
      %v522 = vsel %vm518, %v513, %v514
      %v523 = vsel %vm518, %v512, %v513
      %v524 = vsel %vm518, %v511, %v512
      %v525 = vsel %vm518, %v510, %v511
      %v526 = vsel %vm518, %v509, %v510
      %v527 = vsel %vm518, %v508, %v509
      %v528 = vsel %vm518, %v507, %v508
      %v529 = vsel %vm518, %v506, %v507
      %v530 = vsel %vm518, %v505, %v506
      %v531 = vsel %vm518, %v504, %v505
      %v532 = vsel %vm518, %v503, %v504
      %v533 = vsel %vm518, %v502, %v503
      %v534 = vsel %vm518, %v517, %v502
      %v535 = vmul.f32 %v533, %v445
      %v536 = vmul.f32 %v532, %v446
      %v537 = vmul.f32 %v531, %v447
      %v538 = vmul.f32 %v530, %v448
      %v539 = vmul.f32 %v529, %v449
      %v540 = vmul.f32 %v528, %v450
      %v541 = vmul.f32 %v527, %v451
      %v542 = vmul.f32 %v526, %v452
      %v543 = vmul.f32 %v525, %v445
      %v544 = vmul.f32 %v524, %v446
      %v545 = vmul.f32 %v523, %v447
      %v546 = vmul.f32 %v522, %v448
      %v547 = vmul.f32 %v521, %v449
      %v548 = vmul.f32 %v520, %v450
      %v549 = vmul.f32 %v519, %v451
      %v550 = vmul.f32 %v534, %v452
      %v551 = vpack.c.bf16 %v397, %v396
      %v552 = vpack.c.bf16 %v399, %v398
      %v553 = vpack.c.bf16 %v401, %v400
      %v554 = vpack.c.bf16 %v403, %v402
      %v555 = vpack.c.bf16 %v405, %v404
      %v556 = vpack.c.bf16 %v407, %v406
      %v557 = vpack.c.bf16 %v409, %v408
      %v558 = vpack.c.bf16 %v411, %v410
      %v559 = vpack.c.bf16 %v487, %v486
      %v560 = vpack.c.bf16 %v489, %v488
      %v561 = vpack.c.bf16 %v491, %v490
      %v562 = vpack.c.bf16 %v493, %v492
      %v563 = vpack.c.bf16 %v495, %v494
      %v564 = vpack.c.bf16 %v497, %v496
      %v565 = vpack.c.bf16 %v499, %v498
      %v566 = vpack.c.bf16 %v501, %v500
      %v567 = vpack.c.bf16 %v536, %v535
      %v568 = vpack.c.bf16 %v538, %v537
      %v569 = vpack.c.bf16 %v540, %v539
      %v570 = vpack.c.bf16 %v542, %v541
      %v571 = vpack.c.bf16 %v544, %v543
      %v572 = vpack.c.bf16 %v546, %v545
      %v573 = vpack.c.bf16 %v548, %v547
      %v574 = vpack.c.bf16 %v550, %v549
      %v575 = vld [vmem:[%s4] sm:$0xf]
      %v576 = vld [vmem:[%s4 + $0x4] sm:$0xf]
      %s577 = scalar_lea.vmem %s4, 8
      %v578 = vld [vmem:[%s577] sm:$0xf]
      %v579 = vld [vmem:[%s577 + $0x4] sm:$0xf]
      %v582 = vunpack.c.l.b16 %v578
      %v583 = vunpack.c.l.b16 %v579
      %v584 = vpack.c.b16 %v583, %v582
      %vm586 = vcmask 130048
      %v588 = vsel %vm586, %v551, 0
      %v591 = vsel %vm586, %v552, 0
      %v594 = vsel %vm586, %v553, 0
      %v597 = vsel %vm586, %v554, 0
      %v600 = vsel %vm586, %v555, 0
      %v603 = vsel %vm586, %v556, 0
      %v606 = vsel %vm586, %v557, 0
      %v609 = vsel %vm586, %v558, 0
      %611 = vmatprep.subr.bf16.mxu0 0
      %612 = vmatpush1.bf16.msra.mxu0 0
      %613 = vmatprep.subr.bf16.mxu0 0
      %614 = vmatpush1.bf16.msra.mxu0 0
      %615 = vmatprep.subr.bf16.mxu0 0
      %616 = vmatpush1.bf16.msra.mxu0 0
      %617 = vmatprep.subr.bf16.mxu0 0
      %618 = vmatpush1.bf16.msra.mxu0 0
      %619 = vmatprep.subr.bf16.mxu0 0
      %620 = vmatpush1.bf16.msra.mxu0 0
      %621 = vmatprep.subr.bf16.mxu0 0
      %622 = vmatpush1.bf16.msra.mxu0 0
      %623 = vmatprep.subr.bf16.mxu0 0
      %624 = vmatpush1.bf16.msra.mxu0 0
      %625 = vmatprep.subr.bf16.mxu0 0
      %626 = vmatpush1.bf16.msra.mxu0 %v584
      %627 = vmatprep.subr.bf16.mxu0 0
      %628 = vmatpush2.bf16.msra.mxu0 0
      %629 = vmatprep.subr.bf16.mxu0 0
      %630 = vmatpush2.bf16.msra.mxu0 0
      %631 = vmatprep.subr.bf16.mxu0 0
      %632 = vmatpush2.bf16.msra.mxu0 0
      %633 = vmatprep.subr.bf16.mxu0 0
      %634 = vmatpush2.bf16.msra.mxu0 0
      %635 = vmatprep.subr.bf16.mxu0 0
      %636 = vmatpush2.bf16.msra.mxu0 0
      %637 = vmatprep.subr.bf16.mxu0 0
      %638 = vmatpush2.bf16.msra.mxu0 0
      %639 = vmatprep.subr.bf16.mxu0 0
      %640 = vmatpush2.bf16.msra.mxu0 0
      %641 = vmatprep.subr.bf16.mxu0 0
      %642 = vmatpush2.bf16.msra.mxu0 0
      %643 = vmatprep.mubr.bf16.mxu0 0
      %644 = vmatmul.mubr.bf16.gmra.mxu0 %v588
      %v645 = vpop.f32.mrf.mxu0
      %v646 = vadd.f32 0.0, %v645
      %v647 = vpop.f32.mrf.mxu0
      %v648 = vpop.f32.mrf.mxu0
      %v649 = vadd.f32 0.0, %v648
      %v650 = vpop.f32.mrf.mxu0
      %651 = vmatprep.mubr.bf16.mxu0 0
      %652 = vmatmul.mubr.bf16.gmra.mxu0 %v591
      %v653 = vpop.f32.mrf.mxu0
      %v654 = vadd.f32 0.0, %v653
      %v655 = vpop.f32.mrf.mxu0
      %v656 = vpop.f32.mrf.mxu0
      %v657 = vadd.f32 0.0, %v656
      %v658 = vpop.f32.mrf.mxu0
      %659 = vmatprep.mubr.bf16.mxu0 0
      %660 = vmatmul.mubr.bf16.gmra.mxu0 %v594
      %v661 = vpop.f32.mrf.mxu0
      %v662 = vadd.f32 0.0, %v661
      %v663 = vpop.f32.mrf.mxu0
      %v664 = vpop.f32.mrf.mxu0
      %v665 = vadd.f32 0.0, %v664
      %v666 = vpop.f32.mrf.mxu0
      %667 = vmatprep.mubr.bf16.mxu0 0
      %668 = vmatmul.mubr.bf16.gmra.mxu0 %v597
      %v669 = vpop.f32.mrf.mxu0
      %v670 = vadd.f32 0.0, %v669
      %v671 = vpop.f32.mrf.mxu0
      %v672 = vpop.f32.mrf.mxu0
      %v673 = vadd.f32 0.0, %v672
      %v674 = vpop.f32.mrf.mxu0
      %675 = vmatprep.mubr.bf16.mxu0 0
      %676 = vmatmul.mubr.bf16.gmra.mxu0 %v600
      %v677 = vpop.f32.mrf.mxu0
      %v678 = vadd.f32 0.0, %v677
      %v679 = vpop.f32.mrf.mxu0
      %v680 = vpop.f32.mrf.mxu0
      %v681 = vadd.f32 0.0, %v680
      %v682 = vpop.f32.mrf.mxu0
      %683 = vmatprep.mubr.bf16.mxu0 0
      %684 = vmatmul.mubr.bf16.gmra.mxu0 %v603
      %v685 = vpop.f32.mrf.mxu0
      %v686 = vadd.f32 0.0, %v685
      %v687 = vpop.f32.mrf.mxu0
      %v688 = vpop.f32.mrf.mxu0
      %v689 = vadd.f32 0.0, %v688
      %v690 = vpop.f32.mrf.mxu0
      %691 = vmatprep.mubr.bf16.mxu0 0
      %692 = vmatmul.mubr.bf16.gmra.mxu0 %v606
      %v693 = vpop.f32.mrf.mxu0
      %v694 = vadd.f32 0.0, %v693
      %v695 = vpop.f32.mrf.mxu0
      %v696 = vpop.f32.mrf.mxu0
      %v697 = vadd.f32 0.0, %v696
      %v698 = vpop.f32.mrf.mxu0
      %699 = vmatprep.mubr.bf16.mxu0 0
      %700 = vmatmul.mubr.bf16.gmra.mxu0 %v609
      %v701 = vpop.f32.mrf.mxu0
      %v702 = vadd.f32 0.0, %v701
      %v703 = vpop.f32.mrf.mxu0
      %v704 = vpop.f32.mrf.mxu0
      %v705 = vadd.f32 0.0, %v704
      %v706 = vpop.f32.mrf.mxu0
      %707 = vdwg.mxu0
      %v710 = vunpack.c.l.b16 %v575
      %v711 = vunpack.c.l.b16 %v576
      %v712 = vpack.c.b16 %v711, %v710
      %v715 = vsel %vm586, %v559, 0
      %v718 = vsel %vm586, %v560, 0
      %v721 = vsel %vm586, %v561, 0
      %v724 = vsel %vm586, %v562, 0
      %v727 = vsel %vm586, %v563, 0
      %v730 = vsel %vm586, %v564, 0
      %v733 = vsel %vm586, %v565, 0
      %v736 = vsel %vm586, %v566, 0
      %738 = vmatprep.subr.bf16.mxu0 0
      %739 = vmatpush1.bf16.msra.mxu0 0
      %740 = vmatprep.subr.bf16.mxu0 0
      %741 = vmatpush1.bf16.msra.mxu0 0
      %742 = vmatprep.subr.bf16.mxu0 0
      %743 = vmatpush1.bf16.msra.mxu0 0
      %744 = vmatprep.subr.bf16.mxu0 0
      %745 = vmatpush1.bf16.msra.mxu0 0
      %746 = vmatprep.subr.bf16.mxu0 0
      %747 = vmatpush1.bf16.msra.mxu0 0
      %748 = vmatprep.subr.bf16.mxu0 0
      %749 = vmatpush1.bf16.msra.mxu0 0
      %750 = vmatprep.subr.bf16.mxu0 0
      %751 = vmatpush1.bf16.msra.mxu0 0
      %752 = vmatprep.subr.bf16.mxu0 0
      %753 = vmatpush1.bf16.msra.mxu0 %v712
      %754 = vmatprep.subr.bf16.mxu0 0
      %755 = vmatpush2.bf16.msra.mxu0 0
      %756 = vmatprep.subr.bf16.mxu0 0
      %757 = vmatpush2.bf16.msra.mxu0 0
      %758 = vmatprep.subr.bf16.mxu0 0
      %759 = vmatpush2.bf16.msra.mxu0 0
      %760 = vmatprep.subr.bf16.mxu0 0
      %761 = vmatpush2.bf16.msra.mxu0 0
      %762 = vmatprep.subr.bf16.mxu0 0
      %763 = vmatpush2.bf16.msra.mxu0 0
      %764 = vmatprep.subr.bf16.mxu0 0
      %765 = vmatpush2.bf16.msra.mxu0 0
      %766 = vmatprep.subr.bf16.mxu0 0
      %767 = vmatpush2.bf16.msra.mxu0 0
      %768 = vmatprep.subr.bf16.mxu0 0
      %769 = vmatpush2.bf16.msra.mxu0 0
      %770 = vmatprep.mubr.bf16.mxu0 0
      %771 = vmatmul.mubr.bf16.gmra.mxu0 %v715
      %v772 = vpop.f32.mrf.mxu0
      %v773 = vadd.f32 %v646, %v772
      %v774 = vpop.f32.mrf.mxu0
      %v775 = vpop.f32.mrf.mxu0
      %v776 = vadd.f32 %v649, %v775
      %v777 = vpop.f32.mrf.mxu0
      %778 = vmatprep.mubr.bf16.mxu0 0
      %779 = vmatmul.mubr.bf16.gmra.mxu0 %v718
      %v780 = vpop.f32.mrf.mxu0
      %v781 = vadd.f32 %v654, %v780
      %v782 = vpop.f32.mrf.mxu0
      %v783 = vpop.f32.mrf.mxu0
      %v784 = vadd.f32 %v657, %v783
      %v785 = vpop.f32.mrf.mxu0
      %786 = vmatprep.mubr.bf16.mxu0 0
      %787 = vmatmul.mubr.bf16.gmra.mxu0 %v721
      %v788 = vpop.f32.mrf.mxu0
      %v789 = vadd.f32 %v662, %v788
      %v790 = vpop.f32.mrf.mxu0
      %v791 = vpop.f32.mrf.mxu0
      %v792 = vadd.f32 %v665, %v791
      %v793 = vpop.f32.mrf.mxu0
      %794 = vmatprep.mubr.bf16.mxu0 0
      %795 = vmatmul.mubr.bf16.gmra.mxu0 %v724
      %v796 = vpop.f32.mrf.mxu0
      %v797 = vadd.f32 %v670, %v796
      %v798 = vpop.f32.mrf.mxu0
      %v799 = vpop.f32.mrf.mxu0
      %v800 = vadd.f32 %v673, %v799
      %v801 = vpop.f32.mrf.mxu0
      %802 = vmatprep.mubr.bf16.mxu0 0
      %803 = vmatmul.mubr.bf16.gmra.mxu0 %v727
      %v804 = vpop.f32.mrf.mxu0
      %v805 = vadd.f32 %v678, %v804
      %v806 = vpop.f32.mrf.mxu0
      %v807 = vpop.f32.mrf.mxu0
      %v808 = vadd.f32 %v681, %v807
      %v809 = vpop.f32.mrf.mxu0
      %810 = vmatprep.mubr.bf16.mxu0 0
      %811 = vmatmul.mubr.bf16.gmra.mxu0 %v730
      %v812 = vpop.f32.mrf.mxu0
      %v813 = vadd.f32 %v686, %v812
      %v814 = vpop.f32.mrf.mxu0
      %v815 = vpop.f32.mrf.mxu0
      %v816 = vadd.f32 %v689, %v815
      %v817 = vpop.f32.mrf.mxu0
      %818 = vmatprep.mubr.bf16.mxu0 0
      %819 = vmatmul.mubr.bf16.gmra.mxu0 %v733
      %v820 = vpop.f32.mrf.mxu0
      %v821 = vadd.f32 %v694, %v820
      %v822 = vpop.f32.mrf.mxu0
      %v823 = vpop.f32.mrf.mxu0
      %v824 = vadd.f32 %v697, %v823
      %v825 = vpop.f32.mrf.mxu0
      %826 = vmatprep.mubr.bf16.mxu0 0
      %827 = vmatmul.mubr.bf16.gmra.mxu0 %v736
      %v828 = vpop.f32.mrf.mxu0
      %v829 = vadd.f32 %v702, %v828
      %v830 = vpop.f32.mrf.mxu0
      %v831 = vpop.f32.mrf.mxu0
      %v832 = vadd.f32 %v705, %v831
      %v833 = vpop.f32.mrf.mxu0
      %834 = vdwg.mxu0
      %s835 = scalar_lea.vmem %s4, 16
      %v836 = vld [vmem:[%s835] sm:$0xf]
      %v837 = vld [vmem:[%s835 + $0x4] sm:$0xf]
      %v840 = vunpack.c.l.b16 %v836
      %v841 = vunpack.c.l.b16 %v837
      %v842 = vpack.c.b16 %v841, %v840
      %v845 = vsel %vm586, %v567, 0
      %v848 = vsel %vm586, %v568, 0
      %v851 = vsel %vm586, %v569, 0
      %v854 = vsel %vm586, %v570, 0
      %v857 = vsel %vm586, %v571, 0
      %v860 = vsel %vm586, %v572, 0
      %v863 = vsel %vm586, %v573, 0
      %v866 = vsel %vm586, %v574, 0
      %868 = vmatprep.subr.bf16.mxu0 0
      %869 = vmatpush1.bf16.msra.mxu0 0
      %870 = vmatprep.subr.bf16.mxu0 0
      %871 = vmatpush1.bf16.msra.mxu0 0
      %872 = vmatprep.subr.bf16.mxu0 0
      %873 = vmatpush1.bf16.msra.mxu0 0
      %874 = vmatprep.subr.bf16.mxu0 0
      %875 = vmatpush1.bf16.msra.mxu0 0
      %876 = vmatprep.subr.bf16.mxu0 0
      %877 = vmatpush1.bf16.msra.mxu0 0
      %878 = vmatprep.subr.bf16.mxu0 0
      %879 = vmatpush1.bf16.msra.mxu0 0
      %880 = vmatprep.subr.bf16.mxu0 0
      %881 = vmatpush1.bf16.msra.mxu0 0
      %882 = vmatprep.subr.bf16.mxu0 0
      %883 = vmatpush1.bf16.msra.mxu0 %v842
      %884 = vmatprep.subr.bf16.mxu0 0
      %885 = vmatpush2.bf16.msra.mxu0 0
      %886 = vmatprep.subr.bf16.mxu0 0
      %887 = vmatpush2.bf16.msra.mxu0 0
      %888 = vmatprep.subr.bf16.mxu0 0
      %889 = vmatpush2.bf16.msra.mxu0 0
      %890 = vmatprep.subr.bf16.mxu0 0
      %891 = vmatpush2.bf16.msra.mxu0 0
      %892 = vmatprep.subr.bf16.mxu0 0
      %893 = vmatpush2.bf16.msra.mxu0 0
      %894 = vmatprep.subr.bf16.mxu0 0
      %895 = vmatpush2.bf16.msra.mxu0 0
      %896 = vmatprep.subr.bf16.mxu0 0
      %897 = vmatpush2.bf16.msra.mxu0 0
      %898 = vmatprep.subr.bf16.mxu0 0
      %899 = vmatpush2.bf16.msra.mxu0 0
      %900 = vmatprep.mubr.bf16.mxu0 0
      %901 = vmatmul.mubr.bf16.gmra.mxu0 %v845
      %v902 = vpop.f32.mrf.mxu0
      %v903 = vadd.f32 0.0, %v902
      %v904 = vpop.f32.mrf.mxu0
      %v905 = vpop.f32.mrf.mxu0
      %v906 = vadd.f32 0.0, %v905
      %v907 = vpop.f32.mrf.mxu0
      %908 = vmatprep.mubr.bf16.mxu0 0
      %909 = vmatmul.mubr.bf16.gmra.mxu0 %v848
      %v910 = vpop.f32.mrf.mxu0
      %v911 = vadd.f32 0.0, %v910
      %v912 = vpop.f32.mrf.mxu0
      %v913 = vpop.f32.mrf.mxu0
      %v914 = vadd.f32 0.0, %v913
      %v915 = vpop.f32.mrf.mxu0
      %916 = vmatprep.mubr.bf16.mxu0 0
      %917 = vmatmul.mubr.bf16.gmra.mxu0 %v851
      %v918 = vpop.f32.mrf.mxu0
      %v919 = vadd.f32 0.0, %v918
      %v920 = vpop.f32.mrf.mxu0
      %v921 = vpop.f32.mrf.mxu0
      %v922 = vadd.f32 0.0, %v921
      %v923 = vpop.f32.mrf.mxu0
      %924 = vmatprep.mubr.bf16.mxu0 0
      %925 = vmatmul.mubr.bf16.gmra.mxu0 %v854
      %v926 = vpop.f32.mrf.mxu0
      %v927 = vadd.f32 0.0, %v926
      %v928 = vpop.f32.mrf.mxu0
      %v929 = vpop.f32.mrf.mxu0
      %v930 = vadd.f32 0.0, %v929
      %v931 = vpop.f32.mrf.mxu0
      %932 = vmatprep.mubr.bf16.mxu0 0
      %933 = vmatmul.mubr.bf16.gmra.mxu0 %v857
      %v934 = vpop.f32.mrf.mxu0
      %v935 = vadd.f32 0.0, %v934
      %v936 = vpop.f32.mrf.mxu0
      %v937 = vpop.f32.mrf.mxu0
      %v938 = vadd.f32 0.0, %v937
      %v939 = vpop.f32.mrf.mxu0
      %940 = vmatprep.mubr.bf16.mxu0 0
      %941 = vmatmul.mubr.bf16.gmra.mxu0 %v860
      %v942 = vpop.f32.mrf.mxu0
      %v943 = vadd.f32 0.0, %v942
      %v944 = vpop.f32.mrf.mxu0
      %v945 = vpop.f32.mrf.mxu0
      %v946 = vadd.f32 0.0, %v945
      %v947 = vpop.f32.mrf.mxu0
      %948 = vmatprep.mubr.bf16.mxu0 0
      %949 = vmatmul.mubr.bf16.gmra.mxu0 %v863
      %v950 = vpop.f32.mrf.mxu0
      %v951 = vadd.f32 0.0, %v950
      %v952 = vpop.f32.mrf.mxu0
      %v953 = vpop.f32.mrf.mxu0
      %v954 = vadd.f32 0.0, %v953
      %v955 = vpop.f32.mrf.mxu0
      %956 = vmatprep.mubr.bf16.mxu0 0
      %957 = vmatmul.mubr.bf16.gmra.mxu0 %v866
      %v958 = vpop.f32.mrf.mxu0
      %v959 = vadd.f32 0.0, %v958
      %v960 = vpop.f32.mrf.mxu0
      %v961 = vpop.f32.mrf.mxu0
      %v962 = vadd.f32 0.0, %v961
      %v963 = vpop.f32.mrf.mxu0
      %964 = vdwg.mxu0
      %v965 = vadd.f32 %v773, %v903
      %v966 = vadd.f32 %v776, %v906
      %v967 = vadd.f32 %v781, %v911
      %v968 = vadd.f32 %v784, %v914
      %v969 = vadd.f32 %v789, %v919
      %v970 = vadd.f32 %v792, %v922
      %v971 = vadd.f32 %v797, %v927
      %v972 = vadd.f32 %v800, %v930
      %v973 = vadd.f32 %v805, %v935
      %v974 = vadd.f32 %v808, %v938
      %v975 = vadd.f32 %v813, %v943
      %v976 = vadd.f32 %v816, %v946
      %v977 = vadd.f32 %v821, %v951
      %v978 = vadd.f32 %v824, %v954
      %v979 = vadd.f32 %v829, %v959
      %v980 = vadd.f32 %v832, %v962
      %v981 = vld [vmem:[%s5] sm:$0x1]
      %v983 = vlaneseq
      %v984 = vshrl.u32 %v983, 7
      %v985 = vsub.s32 0, %v984
      %v986 = vrot.slane %v981, %v985
      %v988 = vadd.f32 %v965, %v986
      %v989 = vadd.f32 %v966, %v986
      %v990 = vadd.f32 %v967, %v986
      %v991 = vadd.f32 %v968, %v986
      %v992 = vadd.f32 %v969, %v986
      %v993 = vadd.f32 %v970, %v986
      %v994 = vadd.f32 %v971, %v986
      %v995 = vadd.f32 %v972, %v986
      %v996 = vadd.f32 %v973, %v986
      %v997 = vadd.f32 %v974, %v986
      %v998 = vadd.f32 %v975, %v986
      %v999 = vadd.f32 %v976, %v986
      %v1000 = vadd.f32 %v977, %v986
      %v1001 = vadd.f32 %v978, %v986
      %v1002 = vadd.f32 %v979, %v986
      %v1003 = vadd.f32 %v980, %v986
      %v1004 = vsel %vm586, %v988, 0.0
      %v1005 = vsel %vm586, %v989, 0.0
      %v1006 = vadd.f32 %v1004, %v1005
      %v1007 = vsel %vm586, %v990, 0.0
      %v1008 = vadd.f32 %v1006, %v1007
      %v1009 = vsel %vm586, %v991, 0.0
      %v1010 = vadd.f32 %v1008, %v1009
      %v1011 = vsel %vm586, %v992, 0.0
      %v1012 = vadd.f32 %v1010, %v1011
      %v1013 = vsel %vm586, %v993, 0.0
      %v1014 = vadd.f32 %v1012, %v1013
      %v1015 = vsel %vm586, %v994, 0.0
      %v1016 = vadd.f32 %v1014, %v1015
      %v1017 = vsel %vm586, %v995, 0.0
      %v1018 = vadd.f32 %v1016, %v1017
      %v1019 = vsel %vm586, %v996, 0.0
      %v1020 = vadd.f32 %v1018, %v1019
      %v1021 = vsel %vm586, %v997, 0.0
      %v1022 = vadd.f32 %v1020, %v1021
      %v1023 = vsel %vm586, %v998, 0.0
      %v1024 = vadd.f32 %v1022, %v1023
      %v1025 = vsel %vm586, %v999, 0.0
      %v1026 = vadd.f32 %v1024, %v1025
      %v1027 = vsel %vm586, %v1000, 0.0
      %v1028 = vadd.f32 %v1026, %v1027
      %v1029 = vsel %vm586, %v1001, 0.0
      %v1030 = vadd.f32 %v1028, %v1029
      %v1031 = vsel %vm586, %v1002, 0.0
      %v1032 = vadd.f32 %v1030, %v1031
      %v1033 = vsel %vm586, %v1003, 0.0
      %v1034 = vadd.f32 %v1032, %v1033
      %v1035 = vrot.slane %v1034, 4
      %v1036 = vadd.f32 %v1034, %v1035
      %v1037 = vrot.slane %v1036, 2
      %v1038 = vadd.f32 %v1036, %v1037
      %v1039 = vrot.slane %v1038, 1
      %v1040 = vadd.f32 %v1038, %v1039
      %v1041 = vmul.f32 %v988, %v988
      %v1042 = vmul.f32 %v989, %v989
      %v1043 = vmul.f32 %v990, %v990
      %v1044 = vmul.f32 %v991, %v991
      %v1045 = vmul.f32 %v992, %v992
      %v1046 = vmul.f32 %v993, %v993
      %v1047 = vmul.f32 %v994, %v994
      %v1048 = vmul.f32 %v995, %v995
      %v1049 = vmul.f32 %v996, %v996
      %v1050 = vmul.f32 %v997, %v997
      %v1051 = vmul.f32 %v998, %v998
      %v1052 = vmul.f32 %v999, %v999
      %v1053 = vmul.f32 %v1000, %v1000
      %v1054 = vmul.f32 %v1001, %v1001
      %v1055 = vmul.f32 %v1002, %v1002
      %v1056 = vmul.f32 %v1003, %v1003
      %v1057 = vsel %vm586, %v1041, 0.0
      %v1058 = vsel %vm586, %v1042, 0.0
      %v1059 = vadd.f32 %v1057, %v1058
      %v1060 = vsel %vm586, %v1043, 0.0
      %v1061 = vadd.f32 %v1059, %v1060
      %v1062 = vsel %vm586, %v1044, 0.0
      %v1063 = vadd.f32 %v1061, %v1062
      %v1064 = vsel %vm586, %v1045, 0.0
      %v1065 = vadd.f32 %v1063, %v1064
      %v1066 = vsel %vm586, %v1046, 0.0
      %v1067 = vadd.f32 %v1065, %v1066
      %v1068 = vsel %vm586, %v1047, 0.0
      %v1069 = vadd.f32 %v1067, %v1068
      %v1070 = vsel %vm586, %v1048, 0.0
      %v1071 = vadd.f32 %v1069, %v1070
      %v1072 = vsel %vm586, %v1049, 0.0
      %v1073 = vadd.f32 %v1071, %v1072
      %v1074 = vsel %vm586, %v1050, 0.0
      %v1075 = vadd.f32 %v1073, %v1074
      %v1076 = vsel %vm586, %v1051, 0.0
      %v1077 = vadd.f32 %v1075, %v1076
      %v1078 = vsel %vm586, %v1052, 0.0
      %v1079 = vadd.f32 %v1077, %v1078
      %v1080 = vsel %vm586, %v1053, 0.0
      %v1081 = vadd.f32 %v1079, %v1080
      %v1082 = vsel %vm586, %v1054, 0.0
      %v1083 = vadd.f32 %v1081, %v1082
      %v1084 = vsel %vm586, %v1055, 0.0
      %v1085 = vadd.f32 %v1083, %v1084
      %v1086 = vsel %vm586, %v1056, 0.0
      %v1087 = vadd.f32 %v1085, %v1086
      %v1088 = vrot.slane %v1087, 4
      %v1089 = vadd.f32 %v1087, %v1088
      %v1090 = vrot.slane %v1089, 2
      %v1091 = vadd.f32 %v1089, %v1090
      %v1092 = vrot.slane %v1091, 1
      %v1093 = vadd.f32 %v1091, %v1092
      %vm1094 = vcmask 1040384
      %v1095 = vsel %vm1094, %v1040, %v1093
      %1096 = vst.msk [vmem:[%s297] sm:$0x3] %vm301, %v1095
      %v1097 = vpack.c.bf16 %v989, %v988
      %v1098 = vpack.c.bf16 %v991, %v990
      %v1099 = vpack.c.bf16 %v993, %v992
      %v1100 = vpack.c.bf16 %v995, %v994
      %v1101 = vpack.c.bf16 %v997, %v996
      %v1102 = vpack.c.bf16 %v999, %v998
      %v1103 = vpack.c.bf16 %v1001, %v1000
      %v1104 = vpack.c.bf16 %v1003, %v1002
      %v1113 = vunpack.c.l.b16 %v1097
      %v1114 = vunpack.c.h.b16 %v1097
      %v1115 = vunpack.c.l.b16 %v1098
      %v1116 = vunpack.c.h.b16 %v1098
      %v1117 = vunpack.c.l.b16 %v1099
      %v1118 = vunpack.c.h.b16 %v1099
      %v1119 = vunpack.c.l.b16 %v1100
      %v1120 = vunpack.c.h.b16 %v1100
      %v1121 = vunpack.c.l.b16 %v1101
      %v1122 = vunpack.c.h.b16 %v1101
      %v1123 = vunpack.c.l.b16 %v1102
      %v1124 = vunpack.c.h.b16 %v1102
      %v1125 = vunpack.c.l.b16 %v1103
      %v1126 = vunpack.c.h.b16 %v1103
      %v1127 = vunpack.c.l.b16 %v1104
      %v1128 = vunpack.c.h.b16 %v1104
      %v1129 = vpack.c.b16 %v1113, %v1113
      %v1130 = vpack.c.b16 %v1114, %v1114
      %v1131 = vpack.c.b16 %v1115, %v1115
      %v1132 = vpack.c.b16 %v1116, %v1116
      %v1133 = vpack.c.b16 %v1117, %v1117
      %v1134 = vpack.c.b16 %v1118, %v1118
      %v1135 = vpack.c.b16 %v1119, %v1119
      %v1136 = vpack.c.b16 %v1120, %v1120
      %v1137 = vpack.c.b16 %v1121, %v1121
      %v1138 = vpack.c.b16 %v1122, %v1122
      %v1139 = vpack.c.b16 %v1123, %v1123
      %v1140 = vpack.c.b16 %v1124, %v1124
      %v1141 = vpack.c.b16 %v1125, %v1125
      %v1142 = vpack.c.b16 %v1126, %v1126
      %v1143 = vpack.c.b16 %v1127, %v1127
      %v1144 = vpack.c.b16 %v1128, %v1128
      %vm1161 = vcmask 125952
      %1162 = vst.msk [vmem:[%s292] sm:$0xf] %vm1161, %v1129
      %1163 = vst.msk [vmem:[%s292 + $0x4] sm:$0xf] %vm1161, %v1130
      %1164 = vst.msk [vmem:[%s292 + $0x8] sm:$0xf] %vm1161, %v1131
      %1165 = vst.msk [vmem:[%s292 + $0xc] sm:$0xf] %vm1161, %v1132
      %1166 = vst.msk [vmem:[%s292 + $0x10] sm:$0xf] %vm1161, %v1133
      %1167 = vst.msk [vmem:[%s292 + $0x14] sm:$0xf] %vm1161, %v1134
      %1168 = vst.msk [vmem:[%s292 + $0x18] sm:$0xf] %vm1161, %v1135
      %1169 = vst.msk [vmem:[%s292 + $0x1c] sm:$0xf] %vm1161, %v1136
      %1170 = vst.msk [vmem:[%s292 + $0x20] sm:$0xf] %vm1161, %v1137
      %1171 = vst.msk [vmem:[%s292 + $0x24] sm:$0xf] %vm1161, %v1138
      %1172 = vst.msk [vmem:[%s292 + $0x28] sm:$0xf] %vm1161, %v1139
      %1173 = vst.msk [vmem:[%s292 + $0x2c] sm:$0xf] %vm1161, %v1140
      %1174 = vst.msk [vmem:[%s292 + $0x30] sm:$0xf] %vm1161, %v1141
      %1175 = vst.msk [vmem:[%s292 + $0x34] sm:$0xf] %vm1161, %v1142
      %1176 = vst.msk [vmem:[%s292 + $0x38] sm:$0xf] %vm1161, %v1143
      %1177 = vst.msk [vmem:[%s292 + $0x3c] sm:$0xf] %vm1161, %v1144
      %s1178 = smul.u32 2, %s19
      %p1179 = scmp.lt.s32.totalorder %s1178, 3
      %s1180 = scalar_select %p1179, %s1178, 3
      %s1181 = smul.addr %s1180, 8
      %s1182 = smul.addr %s1181, 4
      %s1183 = scalar_lea.vmem %s6, %s1182
      %p1184 = scmp.lt.s32.totalorder %s19, 1
      %s1185 = scalar_select %p1184, %s19, 1
      %s1186 = smul.addr %s1185, 2
      %s1187 = scalar_lea.vmem %s7, %s1186
      // Predicated region
      $region45: #{cnn_forward.10} parent=43 // pred_check
        %p1188 = pneg %p168
      $region46: #{cnn_forward.10} parent=43 // pred_check_branch
        %1190 = sbr.rel (%p1188) target = $region48
      $region47: #{cnn_forward.10} parent=43 // pred_region
        %s1191 = smul.u32 2, %s19
      $region48: #{cnn_forward.10} parent=43 // pred_fallthru
        _
      // Predicated region
      $region49: #{cnn_forward.10} parent=43 // pred_check
        %p1192 = pneg %p194
      $region50: #{cnn_forward.10} parent=43 // pred_check_branch
        %1194 = sbr.rel (%p1192) target = $region52
      $region51: #{cnn_forward.10} parent=43 // pred_region
        _
      $region52: #{cnn_forward.10} parent=43 // pred_fallthru
        _
    $region44: #{cnn_forward.10} parent=5 // pred_fallthru
      _
    %p1195 = scmp.le.s32.totalorder 2, %s14
    // Predicated region
    $region53: #{cnn_forward.10} parent=5 // pred_check
      %p1196 = pneg %p1195
    $region54: #{cnn_forward.10} parent=5 // pred_check_branch
      %1198 = sbr.rel (%p1196) target = $region56
    $region55: #{cnn_forward.10} parent=5 // pred_region
      %s1199 = ssub.s32 %s14, 2
      // Predicated region
      $region57: #{cnn_forward.10} parent=55 // pred_check
        %p1200 = pneg %p174
      $region58: #{cnn_forward.10} parent=55 // pred_check_branch
        %1202 = sbr.rel (%p1200) target = $region60
      $region59: #{cnn_forward.10} parent=55 // pred_region
        %s1203 = smul.u32 2, %s20
        %p1204 = scmp.lt.s32.totalorder %s1203, 3
        %s1205 = scalar_select %p1204, %s1203, 3
        %s1206 = smul.addr %s1205, 8
        %s1207 = smul.addr %s1206, 4
        %s1208 = scalar_lea.vmem %s6, %s1207
      $region60: #{cnn_forward.10} parent=55 // pred_fallthru
        _
      // Predicated region
      $region61: #{cnn_forward.10} parent=55 // pred_check
        %p1209 = pneg %p200
      $region62: #{cnn_forward.10} parent=55 // pred_check_branch
        %1211 = sbr.rel (%p1209) target = $region64
      $region63: #{cnn_forward.10} parent=55 // pred_region
        %p1212 = scmp.lt.s32.totalorder %s20, 1
        %s1213 = scalar_select %p1212, %s20, 1
        %s1214 = smul.addr %s1213, 2
        %s1215 = scalar_lea.vmem %s7, %s1214
      $region64: #{cnn_forward.10} parent=55 // pred_fallthru
        _
    $region56: #{cnn_forward.10} parent=5 // pred_fallthru
      _
  $region6: #{cnn_forward.10} parent=0 // loop_footer
    %s18 = sadd.s32 1, %s14
  $region7: #{cnn_forward.10} parent=0 // loop_footer_branch
    %13 = sbr.rel target = $region3
  $region8: #{cnn_forward.10} parent=0 // loop_exit
    _

// kernel: cnn_forward.11
$region0: #{cnn_forward.11}
  #allocation0 [shape = 'u32[]', space=smem, size = 0x4, offset = 0x4, fixed_abs, tag = 'smem constant byte address 0x4 - core index']
  #allocation1 [shape = 'u32[144,128]{1,0:T(1,128)}', space=vmem, size = 0x12000, scoped, tag = 'internal scratch']
  %s0 = inlined_call_operand.vmem [shape: f32[2,2,16], index: 0, kind: input, shape index: {}]
  %s1 = inlined_call_operand.vmem [shape: f32[1,16], index: 1, kind: input, shape index: {}]
  %s2 = inlined_call_operand.vmem [shape: f32[1,16], index: 2, kind: input, shape index: {}]
  %s3 = inlined_call_operand.vmem [shape: bf16[4,64,16], index: 3, kind: input, shape index: {}]
  %s4 = inlined_call_operand.vmem [shape: bf16[3,16,32], index: 4, kind: input, shape index: {}]
  %s5 = inlined_call_operand.vmem [shape: f32[1,32], index: 5, kind: input, shape index: {}]
  %s6 = inlined_call_operand.vmem [shape: bf16[4,32,32], index: 6, kind: output, shape index: {0}]
  %s7 = inlined_call_operand.vmem [shape: f32[2,2,32], index: 7, kind: output, shape index: {1}]
  %8 = xla_tuple %s6, %s7
  %s9 = sld [smem:[#allocation0]]
  $region65: #{cnn_forward.11} parent=0
    _
  %s11 = ssub.s32 1, %s9
  %s12 = scalar_select 0, %s11, %s9
  loop: start=0, step=1, limit=4
  $region2: #{cnn_forward.11} parent=0 // loop_pre_header
    _
  $region3: #{cnn_forward.11} parent=0 // loop_header
    %s14 = sphi 0, %s18
    %p15 = scmp.ge.s32.totalorder %s14, 4
    %s22 = sphi 0, %s22
    %s24 = sphi 0, %s22
    %s25 = sphi 0, %s24
    %s39 = sphi 0, %s25
    %s43 = sphi 0, %s43
    %s45 = sphi 0, %s43
    %s46 = sphi 0, %s45
    %s60 = sphi 0, %s46
    %s64 = sphi 0, %s64
    %s66 = sphi 0, %s64
    %s67 = sphi 0, %s66
    %s81 = sphi 0, %s67
    %s87 = sphi 0, %s89
    %s90 = sphi 0, %s87
    %s91 = sphi 0, %s90
    %s107 = sphi 0, %s91
    %s111 = sphi 0, %s111
    %s113 = sphi 0, %s111
    %s114 = sphi 0, %s113
    %s128 = sphi 0, %s114
    %s132 = sphi 0, %s132
    %s134 = sphi 0, %s132
    %s135 = sphi 0, %s134
    %s149 = sphi 0, %s135
    %s155 = sphi 0, %s157
    %s158 = sphi 0, %s155
    %s159 = sphi 0, %s158
    %s175 = sphi 0, %s159
    %s181 = sphi 0, %s183
    %s184 = sphi 0, %s181
    %s185 = sphi 0, %s184
    %s201 = sphi 0, %s185
  $region4: #{cnn_forward.11} parent=0 // loop_header_branch
    %17 = sbr.rel (%p15) target = $region8
  $region5: #{cnn_forward.11} parent=0 // loop_body
    %s19 = ssub.s32 %s14, 1
    %s20 = ssub.s32 %s14, 2
    %s21 = sadd.s32 %s14, 1
    %s23 = sadd.s32 %s22, 1
    %p26 = scmp.eq.s32.totalorder %s14, 1
    %p27 = scmp.ne.s32.totalorder %s22, %s24
    %p28 = scmp.eq.s32.totalorder %s14, 0
    %p29 = por %p27, %p28
    %p30 = scmp.ne.s32.totalorder %s22, %s24
    %p31 = scmp.eq.s32.totalorder %s19, 1
    %p32 = por %p30, %p31
    %p33 = scmp.ne.s32.totalorder %s24, %s25
    %p34 = scmp.eq.s32.totalorder %s19, 0
    %p35 = por %p33, %p34
    %p36 = scmp.ne.s32.totalorder %s24, %s25
    %p37 = scmp.eq.s32.totalorder %s20, 1
    %p38 = por %p36, %p37
    %p40 = scmp.ne.s32.totalorder %s25, %s39
    %p41 = scmp.eq.s32.totalorder %s20, 0
    %p42 = por %p40, %p41
    %s44 = sadd.s32 %s43, 1
    %p47 = scmp.eq.s32.totalorder %s14, 1
    %p48 = scmp.ne.s32.totalorder %s43, %s45
    %p49 = scmp.eq.s32.totalorder %s14, 0
    %p50 = por %p48, %p49
    %p51 = scmp.ne.s32.totalorder %s43, %s45
    %p52 = scmp.eq.s32.totalorder %s19, 1
    %p53 = por %p51, %p52
    %p54 = scmp.ne.s32.totalorder %s45, %s46
    %p55 = scmp.eq.s32.totalorder %s19, 0
    %p56 = por %p54, %p55
    %p57 = scmp.ne.s32.totalorder %s45, %s46
    %p58 = scmp.eq.s32.totalorder %s20, 1
    %p59 = por %p57, %p58
    %p61 = scmp.ne.s32.totalorder %s46, %s60
    %p62 = scmp.eq.s32.totalorder %s20, 0
    %p63 = por %p61, %p62
    %s65 = sadd.s32 %s64, 1
    %p68 = scmp.eq.s32.totalorder %s14, 1
    %p69 = scmp.ne.s32.totalorder %s64, %s66
    %p70 = scmp.eq.s32.totalorder %s14, 0
    %p71 = por %p69, %p70
    %p72 = scmp.ne.s32.totalorder %s64, %s66
    %p73 = scmp.eq.s32.totalorder %s19, 1
    %p74 = por %p72, %p73
    %p75 = scmp.ne.s32.totalorder %s66, %s67
    %p76 = scmp.eq.s32.totalorder %s19, 0
    %p77 = por %p75, %p76
    %p78 = scmp.ne.s32.totalorder %s66, %s67
    %p79 = scmp.eq.s32.totalorder %s20, 1
    %p80 = por %p78, %p79
    %p82 = scmp.ne.s32.totalorder %s67, %s81
    %p83 = scmp.eq.s32.totalorder %s20, 0
    %p84 = por %p82, %p83
    %s85 = ssub.s32 %s14, %s21
    %p86 = scmp.eq.s32.totalorder %s85, 0
    %s88 = sadd.s32 %s87, 1
    %s89 = scalar_select %p86, %s87, %s88
    %p92 = pneg %p86
    %p93 = scmp.eq.s32.totalorder %s14, 1
    %p94 = por %p92, %p93
    %p95 = scmp.ne.s32.totalorder %s87, %s90
    %p96 = scmp.eq.s32.totalorder %s14, 0
    %p97 = por %p95, %p96
    %p98 = scmp.ne.s32.totalorder %s87, %s90
    %p99 = scmp.eq.s32.totalorder %s19, 1
    %p100 = por %p98, %p99
    %p101 = scmp.ne.s32.totalorder %s90, %s91
    %p102 = scmp.eq.s32.totalorder %s19, 0
    %p103 = por %p101, %p102
    %p104 = scmp.ne.s32.totalorder %s90, %s91
    %p105 = scmp.eq.s32.totalorder %s20, 1
    %p106 = por %p104, %p105
    %p108 = scmp.ne.s32.totalorder %s91, %s107
    %p109 = scmp.eq.s32.totalorder %s20, 0
    %p110 = por %p108, %p109
    %s112 = sadd.s32 %s111, 1
    %p115 = scmp.eq.s32.totalorder %s14, 1
    %p116 = scmp.ne.s32.totalorder %s111, %s113
    %p117 = scmp.eq.s32.totalorder %s14, 0
    %p118 = por %p116, %p117
    %p119 = scmp.ne.s32.totalorder %s111, %s113
    %p120 = scmp.eq.s32.totalorder %s19, 1
    %p121 = por %p119, %p120
    %p122 = scmp.ne.s32.totalorder %s113, %s114
    %p123 = scmp.eq.s32.totalorder %s19, 0
    %p124 = por %p122, %p123
    %p125 = scmp.ne.s32.totalorder %s113, %s114
    %p126 = scmp.eq.s32.totalorder %s20, 1
    %p127 = por %p125, %p126
    %p129 = scmp.ne.s32.totalorder %s114, %s128
    %p130 = scmp.eq.s32.totalorder %s20, 0
    %p131 = por %p129, %p130
    %s133 = sadd.s32 %s132, 1
    %p136 = scmp.eq.s32.totalorder %s14, 1
    %p137 = scmp.ne.s32.totalorder %s132, %s134
    %p138 = scmp.eq.s32.totalorder %s14, 0
    %p139 = por %p137, %p138
    %p140 = scmp.ne.s32.totalorder %s132, %s134
    %p141 = scmp.eq.s32.totalorder %s19, 1
    %p142 = por %p140, %p141
    %p143 = scmp.ne.s32.totalorder %s134, %s135
    %p144 = scmp.eq.s32.totalorder %s19, 0
    %p145 = por %p143, %p144
    %p146 = scmp.ne.s32.totalorder %s134, %s135
    %p147 = scmp.eq.s32.totalorder %s20, 1
    %p148 = por %p146, %p147
    %p150 = scmp.ne.s32.totalorder %s135, %s149
    %p151 = scmp.eq.s32.totalorder %s20, 0
    %p152 = por %p150, %p151
    %s153 = ssub.s32 %s14, %s21
    %p154 = scmp.eq.s32.totalorder %s153, 0
    %s156 = sadd.s32 %s155, 1
    %s157 = scalar_select %p154, %s155, %s156
    %p160 = pneg %p154
    %p161 = scmp.eq.s32.totalorder %s14, 1
    %p162 = por %p160, %p161
    %p163 = scmp.ne.s32.totalorder %s155, %s158
    %p164 = scmp.eq.s32.totalorder %s14, 0
    %p165 = por %p163, %p164
    %p166 = scmp.ne.s32.totalorder %s155, %s158
    %p167 = scmp.eq.s32.totalorder %s19, 1
    %p168 = por %p166, %p167
    %p169 = scmp.ne.s32.totalorder %s158, %s159
    %p170 = scmp.eq.s32.totalorder %s19, 0
    %p171 = por %p169, %p170
    %p172 = scmp.ne.s32.totalorder %s158, %s159
    %p173 = scmp.eq.s32.totalorder %s20, 1
    %p174 = por %p172, %p173
    %p176 = scmp.ne.s32.totalorder %s159, %s175
    %p177 = scmp.eq.s32.totalorder %s20, 0
    %p178 = por %p176, %p177
    %s179 = ssub.s32 %s14, %s21
    %p180 = scmp.eq.s32.totalorder %s179, 0
    %s182 = sadd.s32 %s181, 1
    %s183 = scalar_select %p180, %s181, %s182
    %p186 = pneg %p180
    %p187 = scmp.eq.s32.totalorder %s14, 1
    %p188 = por %p186, %p187
    %p189 = scmp.ne.s32.totalorder %s181, %s184
    %p190 = scmp.eq.s32.totalorder %s14, 0
    %p191 = por %p189, %p190
    %p192 = scmp.ne.s32.totalorder %s181, %s184
    %p193 = scmp.eq.s32.totalorder %s19, 1
    %p194 = por %p192, %p193
    %p195 = scmp.ne.s32.totalorder %s184, %s185
    %p196 = scmp.eq.s32.totalorder %s19, 0
    %p197 = por %p195, %p196
    %p198 = scmp.ne.s32.totalorder %s184, %s185
    %p199 = scmp.eq.s32.totalorder %s20, 1
    %p200 = por %p198, %p199
    %p202 = scmp.ne.s32.totalorder %s185, %s201
    %p203 = scmp.eq.s32.totalorder %s20, 0
    %p204 = por %p202, %p203
    %p205 = scmp.le.s32.totalorder 1, %s14
    %p206 = scmp.lt.s32.totalorder %s14, 3
    %p207 = pnand %p205, %p206
    %p208 = pneg %p207
    // Predicated region
    $region9: #{cnn_forward.11} parent=5 // pred_check
      _
    $region10: #{cnn_forward.11} parent=5 // pred_check_branch
      %210 = sbr.rel (%p207) target = $region12
    $region11: #{cnn_forward.11} parent=5 // pred_region
      %s211 = ssub.s32 %s14, 1
      // Predicated region
      $region13: #{cnn_forward.11} parent=11 // pred_check
        %p212 = pneg %p35
      $region14: #{cnn_forward.11} parent=11 // pred_check_branch
        %214 = sbr.rel (%p212) target = $region16
      $region15: #{cnn_forward.11} parent=11 // pred_region
        _
      $region16: #{cnn_forward.11} parent=11 // pred_fallthru
        _
      // Predicated region
      $region17: #{cnn_forward.11} parent=11 // pred_check
        %p215 = pneg %p56
      $region18: #{cnn_forward.11} parent=11 // pred_check_branch
        %217 = sbr.rel (%p215) target = $region20
      $region19: #{cnn_forward.11} parent=11 // pred_region
        _
      $region20: #{cnn_forward.11} parent=11 // pred_fallthru
        _
      // Predicated region
      $region21: #{cnn_forward.11} parent=11 // pred_check
        %p218 = pneg %p77
      $region22: #{cnn_forward.11} parent=11 // pred_check_branch
        %220 = sbr.rel (%p218) target = $region24
      $region23: #{cnn_forward.11} parent=11 // pred_region
        _
      $region24: #{cnn_forward.11} parent=11 // pred_fallthru
        _
      // Predicated region
      $region25: #{cnn_forward.11} parent=11 // pred_check
        %p221 = pneg %p124
      $region26: #{cnn_forward.11} parent=11 // pred_check_branch
        %223 = sbr.rel (%p221) target = $region28
      $region27: #{cnn_forward.11} parent=11 // pred_region
        _
      $region28: #{cnn_forward.11} parent=11 // pred_fallthru
        _
      // Predicated region
      $region29: #{cnn_forward.11} parent=11 // pred_check
        %p224 = pneg %p145
      $region30: #{cnn_forward.11} parent=11 // pred_check_branch
        %226 = sbr.rel (%p224) target = $region32
      $region31: #{cnn_forward.11} parent=11 // pred_region
        _
      $region32: #{cnn_forward.11} parent=11 // pred_fallthru
        _
    $region12: #{cnn_forward.11} parent=5 // pred_fallthru
      _
    %p227 = scmp.lt.s32.totalorder %s14, 2
    // Predicated region
    $region33: #{cnn_forward.11} parent=5 // pred_check
      %p228 = pneg %p227
    $region34: #{cnn_forward.11} parent=5 // pred_check_branch
      %230 = sbr.rel (%p228) target = $region36
    $region35: #{cnn_forward.11} parent=5 // pred_region
      // Predicated region
      $region37: #{cnn_forward.11} parent=35 // pred_check
        %p231 = pneg %p97
      $region38: #{cnn_forward.11} parent=35 // pred_check_branch
        %233 = sbr.rel (%p231) target = $region40
      $region39: #{cnn_forward.11} parent=35 // pred_region
        %s234 = smul.u32 2, %s14
        %p235 = scmp.lt.s32.totalorder %s234, 3
        %s236 = scalar_select %p235, %s234, 3
        %s237 = smul.addr %s236, 8
        %s238 = smul.addr %s237, 4
        %s239 = scalar_lea.vmem %s3, %s238
        %s240 = smul.u32 2, %s14
      $region40: #{cnn_forward.11} parent=35 // pred_fallthru
        _
    $region36: #{cnn_forward.11} parent=5 // pred_fallthru
      _
    %p241 = scmp.le.s32.totalorder 1, %s14
    %p242 = scmp.lt.s32.totalorder %s14, 3
    %p243 = pnand %p241, %p242
    %p244 = pneg %p243
    // Predicated region
    $region41: #{cnn_forward.11} parent=5 // pred_check
      _
    $region42: #{cnn_forward.11} parent=5 // pred_check_branch
      %246 = sbr.rel (%p243) target = $region44
    $region43: #{cnn_forward.11} parent=5 // pred_region
      %s247 = ssub.s32 %s14, 1
      %p248 = pneg %p35
      %p249 = pneg %p32
      %p250 = pneg %p56
      %p251 = pneg %p53
      %p252 = pneg %p77
      %p253 = pneg %p74
      %s254 = smul.u32 2, %s19
      %p255 = scmp.lt.s32.totalorder %s254, 3
      %s256 = scalar_select %p255, %s254, 3
      %s257 = smul.addr %s256, 8
      %s258 = smul.addr %s257, 4
      %s259 = scalar_lea.vmem %s3, %s258
      %p260 = pneg %p103
      %p261 = pneg %p100
      %p262 = pneg %p124
      %p263 = pneg %p121
      %p264 = pneg %p145
      %p265 = pneg %p142
      %p266 = pneg %p171
      %p267 = pneg %p168
      %s268 = smul.u32 2, %s19
      %p269 = scmp.lt.s32.totalorder %s268, 3
      %s270 = scalar_select %p269, %s268, 3
      %s271 = smul.addr %s270, 4
      %s272 = smul.addr %s271, 4
      %s273 = scalar_lea.vmem %s6, %s272
      %p274 = pneg %p197
      %p275 = pneg %p194
      %p276 = scmp.lt.s32.totalorder %s19, 1
      %s277 = scalar_select %p276, %s19, 1
      %s278 = smul.addr %s277, 2
      %s279 = scalar_lea.vmem %s7, %s278
      %s280 = smul.u32 2, %s19
      %p281 = scmp.lt.s32.totalorder %s280, 3
      %s282 = scalar_select %p281, %s280, 3
      %s283 = smul.addr %s282, 8
      %s284 = smul.addr %s283, 4
      %s285 = scalar_lea.vmem %s3, %s284
      %s286 = smul.u32 2, %s19
      %s287 = smul.u32 2, %s19
      %p288 = scmp.lt.s32.totalorder %s287, 3
      %s289 = scalar_select %p288, %s287, 3
      %s290 = smul.addr %s289, 4
      %s291 = smul.addr %s290, 4
      %s292 = scalar_lea.vmem %s6, %s291
      %s293 = smul.u32 2, %s19
      %p294 = scmp.lt.s32.totalorder %s19, 1
      %s295 = scalar_select %p294, %s19, 1
      %s296 = smul.addr %s295, 2
      %s297 = scalar_lea.vmem %s7, %s296
      %v299 = vld [vmem:[%s0] sm:$0x3]
      %v300 = vld [vmem:[%s0 + $0x2] sm:$0x3]
      %vm301 = vcmask 123904
      %v302 = vsel %vm301, %v299, 0.0
      %v303 = vsel %vm301, %v300, 0.0
      %v304 = vadd.f32 %v302, %v303
      %v305 = vld [vmem:[%s1] sm:$0x1]
      %v306 = vld [vmem:[%s2] sm:$0x1]
      %v307 = vmul.f32 %v304, 0.00390625
      %v308 = vmul.f32 %v307, %v307
      %v310 = vrot.slane %v308, 7
      %v312 = vsub.f32 %v307, %v310
      %v313 = vmax.f32 %v312, 0.0
      %v314 = vadd.f32 %v313, 1e-05
      %v315 = vrsqrt.pop %v314
      %v318 = vunpack.c.l.s4 1966171168
      %v319 = vunpack.c.0.s8 %v318
      %v320 = vlaneseq
      %v321 = vshrl.u32 %v320, 7
      %v322 = vsub.s32 %v319, %v321
      %v323 = vrot.slane %v315, %v322
      %v324 = vcombine.high %v323, %v323
      %v326 = vunpack.c.l.s4 1966171168
      %v327 = vunpack.c.0.s8 %v326
      %v328 = vlaneseq
      %v329 = vshrl.u32 %v328, 7
      %v330 = vsub.s32 %v327, %v329
      %v331 = vrot.slane %v324, %v330
      %v333 = vmul.f32 %v305, %v331
      %v334 = vmul.f32 %v307, %v333
      %v335 = vsub.f32 %v306, %v334
      %v336 = vld [vmem:[%s285] sm:$0xf]
      %v337 = vld [vmem:[%s285 + $0x4] sm:$0xf]
      %v338 = vld [vmem:[%s285 + $0x8] sm:$0xf]
      %v339 = vld [vmem:[%s285 + $0xc] sm:$0xf]
      %v340 = vld [vmem:[%s285 + $0x10] sm:$0xf]
      %v341 = vld [vmem:[%s285 + $0x14] sm:$0xf]
      %v342 = vld [vmem:[%s285 + $0x18] sm:$0xf]
      %v343 = vld [vmem:[%s285 + $0x1c] sm:$0xf]
      %v344 = vld [vmem:[%s285 + $0x20] sm:$0xf]
      %v345 = vld [vmem:[%s285 + $0x24] sm:$0xf]
      %v346 = vld [vmem:[%s285 + $0x28] sm:$0xf]
      %v347 = vld [vmem:[%s285 + $0x2c] sm:$0xf]
      %v348 = vld [vmem:[%s285 + $0x30] sm:$0xf]
      %v349 = vld [vmem:[%s285 + $0x34] sm:$0xf]
      %v350 = vld [vmem:[%s285 + $0x38] sm:$0xf]
      %v351 = vld [vmem:[%s285 + $0x3c] sm:$0xf]
      %v352 = vunpack.c.l.bf16 %v336
      %v353 = vunpack.c.l.bf16 %v337
      %v354 = vunpack.c.l.bf16 %v338
      %v355 = vunpack.c.l.bf16 %v339
      %v356 = vunpack.c.l.bf16 %v340
      %v357 = vunpack.c.l.bf16 %v341
      %v358 = vunpack.c.l.bf16 %v342
      %v359 = vunpack.c.l.bf16 %v343
      %v360 = vunpack.c.l.bf16 %v344
      %v361 = vunpack.c.l.bf16 %v345
      %v362 = vunpack.c.l.bf16 %v346
      %v363 = vunpack.c.l.bf16 %v347
      %v364 = vunpack.c.l.bf16 %v348
      %v365 = vunpack.c.l.bf16 %v349
      %v366 = vunpack.c.l.bf16 %v350
      %v367 = vunpack.c.l.bf16 %v351
      %v369 = vlaneseq
      %v370 = vshrl.u32 %v369, 7
      %v371 = vsub.s32 0, %v370
      %v372 = vrot.slane %v333, %v371
      %v374 = vmul.f32 %v372, %v352
      %v375 = vmul.f32 %v372, %v353
      %v376 = vmul.f32 %v372, %v354
      %v377 = vmul.f32 %v372, %v355
      %v378 = vmul.f32 %v372, %v356
      %v379 = vmul.f32 %v372, %v357
      %v380 = vmul.f32 %v372, %v358
      %v381 = vmul.f32 %v372, %v359
      %v382 = vmul.f32 %v372, %v360
      %v383 = vmul.f32 %v372, %v361
      %v384 = vmul.f32 %v372, %v362
      %v385 = vmul.f32 %v372, %v363
      %v386 = vmul.f32 %v372, %v364
      %v387 = vmul.f32 %v372, %v365
      %v388 = vmul.f32 %v372, %v366
      %v389 = vmul.f32 %v372, %v367
      %v391 = vlaneseq
      %v392 = vshrl.u32 %v391, 7
      %v393 = vsub.s32 0, %v392
      %v394 = vrot.slane %v335, %v393
      %v396 = vadd.f32 %v374, %v394
      %v397 = vadd.f32 %v375, %v394
      %v398 = vadd.f32 %v376, %v394
      %v399 = vadd.f32 %v377, %v394
      %v400 = vadd.f32 %v378, %v394
      %v401 = vadd.f32 %v379, %v394
      %v402 = vadd.f32 %v380, %v394
      %v403 = vadd.f32 %v381, %v394
      %v404 = vadd.f32 %v382, %v394
      %v405 = vadd.f32 %v383, %v394
      %v406 = vadd.f32 %v384, %v394
      %v407 = vadd.f32 %v385, %v394
      %v408 = vadd.f32 %v386, %v394
      %v409 = vadd.f32 %v387, %v394
      %v410 = vadd.f32 %v388, %v394
      %v411 = vadd.f32 %v389, %v394
      %v412 = vmax.f32 %v396, 0.0
      %v413 = vmax.f32 %v397, 0.0
      %v414 = vmax.f32 %v398, 0.0
      %v415 = vmax.f32 %v399, 0.0
      %v416 = vmax.f32 %v400, 0.0
      %v417 = vmax.f32 %v401, 0.0
      %v418 = vmax.f32 %v402, 0.0
      %v419 = vmax.f32 %v403, 0.0
      %v420 = vmax.f32 %v404, 0.0
      %v421 = vmax.f32 %v405, 0.0
      %v422 = vmax.f32 %v406, 0.0
      %v423 = vmax.f32 %v407, 0.0
      %v424 = vmax.f32 %v408, 0.0
      %v425 = vmax.f32 %v409, 0.0
      %v426 = vmax.f32 %v410, 0.0
      %v427 = vmax.f32 %v411, 0.0
      %v444 = vcombine.high %v412, %v412
      %v446 = vunpack.c.l.s4 1983009808
      %v447 = vunpack.c.0.s8 %v446
      %v448 = vlaneseq
      %v449 = vshrl.u32 %v448, 7
      %v450 = vsub.s32 %v447, %v449
      %v451 = vrot.slane %v412, %v450
      %v453 = vunpack.c.l.s4 1983009808
      %v454 = vunpack.c.0.s8 %v453
      %v455 = vlaneseq
      %v456 = vshrl.u32 %v455, 7
      %v457 = vsub.s32 %v454, %v456
      %v458 = vrot.slane %v444, %v457
      %v459 = vcombine.high %v451, %v451
      %v460 = vcombine.high %v458, %v458
      %v461 = vcombine.high %v413, %v413
      %v463 = vunpack.c.l.s4 1983009808
      %v464 = vunpack.c.0.s8 %v463
      %v465 = vlaneseq
      %v466 = vshrl.u32 %v465, 7
      %v467 = vsub.s32 %v464, %v466
      %v468 = vrot.slane %v413, %v467
      %v470 = vunpack.c.l.s4 1983009808
      %v471 = vunpack.c.0.s8 %v470
      %v472 = vlaneseq
      %v473 = vshrl.u32 %v472, 7
      %v474 = vsub.s32 %v471, %v473
      %v475 = vrot.slane %v461, %v474
      %v476 = vcombine.high %v468, %v468
      %v477 = vcombine.high %v475, %v475
      %v478 = vcombine.high %v414, %v414
      %v480 = vunpack.c.l.s4 1983009808
      %v481 = vunpack.c.0.s8 %v480
      %v482 = vlaneseq
      %v483 = vshrl.u32 %v482, 7
      %v484 = vsub.s32 %v481, %v483
      %v485 = vrot.slane %v414, %v484
      %v487 = vunpack.c.l.s4 1983009808
      %v488 = vunpack.c.0.s8 %v487
      %v489 = vlaneseq
      %v490 = vshrl.u32 %v489, 7
      %v491 = vsub.s32 %v488, %v490
      %v492 = vrot.slane %v478, %v491
      %v493 = vcombine.high %v485, %v485
      %v494 = vcombine.high %v492, %v492
      %v495 = vcombine.high %v415, %v415
      %v497 = vunpack.c.l.s4 1983009808
      %v498 = vunpack.c.0.s8 %v497
      %v499 = vlaneseq
      %v500 = vshrl.u32 %v499, 7
      %v501 = vsub.s32 %v498, %v500
      %v502 = vrot.slane %v415, %v501
      %v504 = vunpack.c.l.s4 1983009808
      %v505 = vunpack.c.0.s8 %v504
      %v506 = vlaneseq
      %v507 = vshrl.u32 %v506, 7
      %v508 = vsub.s32 %v505, %v507
      %v509 = vrot.slane %v495, %v508
      %v510 = vcombine.high %v502, %v502
      %v511 = vcombine.high %v509, %v509
      %v512 = vcombine.high %v416, %v416
      %v514 = vunpack.c.l.s4 1983009808
      %v515 = vunpack.c.0.s8 %v514
      %v516 = vlaneseq
      %v517 = vshrl.u32 %v516, 7
      %v518 = vsub.s32 %v515, %v517
      %v519 = vrot.slane %v416, %v518
      %v521 = vunpack.c.l.s4 1983009808
      %v522 = vunpack.c.0.s8 %v521
      %v523 = vlaneseq
      %v524 = vshrl.u32 %v523, 7
      %v525 = vsub.s32 %v522, %v524
      %v526 = vrot.slane %v512, %v525
      %v527 = vcombine.high %v519, %v519
      %v528 = vcombine.high %v526, %v526
      %v529 = vcombine.high %v417, %v417
      %v531 = vunpack.c.l.s4 1983009808
      %v532 = vunpack.c.0.s8 %v531
      %v533 = vlaneseq
      %v534 = vshrl.u32 %v533, 7
      %v535 = vsub.s32 %v532, %v534
      %v536 = vrot.slane %v417, %v535
      %v538 = vunpack.c.l.s4 1983009808
      %v539 = vunpack.c.0.s8 %v538
      %v540 = vlaneseq
      %v541 = vshrl.u32 %v540, 7
      %v542 = vsub.s32 %v539, %v541
      %v543 = vrot.slane %v529, %v542
      %v544 = vcombine.high %v536, %v536
      %v545 = vcombine.high %v543, %v543
      %v546 = vcombine.high %v418, %v418
      %v548 = vunpack.c.l.s4 1983009808
      %v549 = vunpack.c.0.s8 %v548
      %v550 = vlaneseq
      %v551 = vshrl.u32 %v550, 7
      %v552 = vsub.s32 %v549, %v551
      %v553 = vrot.slane %v418, %v552
      %v555 = vunpack.c.l.s4 1983009808
      %v556 = vunpack.c.0.s8 %v555
      %v557 = vlaneseq
      %v558 = vshrl.u32 %v557, 7
      %v559 = vsub.s32 %v556, %v558
      %v560 = vrot.slane %v546, %v559
      %v561 = vcombine.high %v553, %v553
      %v562 = vcombine.high %v560, %v560
      %v563 = vcombine.high %v419, %v419
      %v565 = vunpack.c.l.s4 1983009808
      %v566 = vunpack.c.0.s8 %v565
      %v567 = vlaneseq
      %v568 = vshrl.u32 %v567, 7
      %v569 = vsub.s32 %v566, %v568
      %v570 = vrot.slane %v419, %v569
      %v572 = vunpack.c.l.s4 1983009808
      %v573 = vunpack.c.0.s8 %v572
      %v574 = vlaneseq
      %v575 = vshrl.u32 %v574, 7
      %v576 = vsub.s32 %v573, %v575
      %v577 = vrot.slane %v563, %v576
      %v578 = vcombine.high %v570, %v570
      %v579 = vcombine.high %v577, %v577
      %v580 = vcombine.high %v420, %v420
      %v582 = vunpack.c.l.s4 1983009808
      %v583 = vunpack.c.0.s8 %v582
      %v584 = vlaneseq
      %v585 = vshrl.u32 %v584, 7
      %v586 = vsub.s32 %v583, %v585
      %v587 = vrot.slane %v420, %v586
      %v589 = vunpack.c.l.s4 1983009808
      %v590 = vunpack.c.0.s8 %v589
      %v591 = vlaneseq
      %v592 = vshrl.u32 %v591, 7
      %v593 = vsub.s32 %v590, %v592
      %v594 = vrot.slane %v580, %v593
      %v595 = vcombine.high %v587, %v587
      %v596 = vcombine.high %v594, %v594
      %v597 = vcombine.high %v421, %v421
      %v599 = vunpack.c.l.s4 1983009808
      %v600 = vunpack.c.0.s8 %v599
      %v601 = vlaneseq
      %v602 = vshrl.u32 %v601, 7
      %v603 = vsub.s32 %v600, %v602
      %v604 = vrot.slane %v421, %v603
      %v606 = vunpack.c.l.s4 1983009808
      %v607 = vunpack.c.0.s8 %v606
      %v608 = vlaneseq
      %v609 = vshrl.u32 %v608, 7
      %v610 = vsub.s32 %v607, %v609
      %v611 = vrot.slane %v597, %v610
      %v612 = vcombine.high %v604, %v604
      %v613 = vcombine.high %v611, %v611
      %v614 = vcombine.high %v422, %v422
      %v616 = vunpack.c.l.s4 1983009808
      %v617 = vunpack.c.0.s8 %v616
      %v618 = vlaneseq
      %v619 = vshrl.u32 %v618, 7
      %v620 = vsub.s32 %v617, %v619
      %v621 = vrot.slane %v422, %v620
      %v623 = vunpack.c.l.s4 1983009808
      %v624 = vunpack.c.0.s8 %v623
      %v625 = vlaneseq
      %v626 = vshrl.u32 %v625, 7
      %v627 = vsub.s32 %v624, %v626
      %v628 = vrot.slane %v614, %v627
      %v629 = vcombine.high %v621, %v621
      %v630 = vcombine.high %v628, %v628
      %v631 = vcombine.high %v423, %v423
      %v633 = vunpack.c.l.s4 1983009808
      %v634 = vunpack.c.0.s8 %v633
      %v635 = vlaneseq
      %v636 = vshrl.u32 %v635, 7
      %v637 = vsub.s32 %v634, %v636
      %v638 = vrot.slane %v423, %v637
      %v640 = vunpack.c.l.s4 1983009808
      %v641 = vunpack.c.0.s8 %v640
      %v642 = vlaneseq
      %v643 = vshrl.u32 %v642, 7
      %v644 = vsub.s32 %v641, %v643
      %v645 = vrot.slane %v631, %v644
      %v646 = vcombine.high %v638, %v638
      %v647 = vcombine.high %v645, %v645
      %v648 = vcombine.high %v424, %v424
      %v650 = vunpack.c.l.s4 1983009808
      %v651 = vunpack.c.0.s8 %v650
      %v652 = vlaneseq
      %v653 = vshrl.u32 %v652, 7
      %v654 = vsub.s32 %v651, %v653
      %v655 = vrot.slane %v424, %v654
      %v657 = vunpack.c.l.s4 1983009808
      %v658 = vunpack.c.0.s8 %v657
      %v659 = vlaneseq
      %v660 = vshrl.u32 %v659, 7
      %v661 = vsub.s32 %v658, %v660
      %v662 = vrot.slane %v648, %v661
      %v663 = vcombine.high %v655, %v655
      %v664 = vcombine.high %v662, %v662
      %v665 = vcombine.high %v425, %v425
      %v667 = vunpack.c.l.s4 1983009808
      %v668 = vunpack.c.0.s8 %v667
      %v669 = vlaneseq
      %v670 = vshrl.u32 %v669, 7
      %v671 = vsub.s32 %v668, %v670
      %v672 = vrot.slane %v425, %v671
      %v674 = vunpack.c.l.s4 1983009808
      %v675 = vunpack.c.0.s8 %v674
      %v676 = vlaneseq
      %v677 = vshrl.u32 %v676, 7
      %v678 = vsub.s32 %v675, %v677
      %v679 = vrot.slane %v665, %v678
      %v680 = vcombine.high %v672, %v672
      %v681 = vcombine.high %v679, %v679
      %v682 = vcombine.high %v426, %v426
      %v684 = vunpack.c.l.s4 1983009808
      %v685 = vunpack.c.0.s8 %v684
      %v686 = vlaneseq
      %v687 = vshrl.u32 %v686, 7
      %v688 = vsub.s32 %v685, %v687
      %v689 = vrot.slane %v426, %v688
      %v691 = vunpack.c.l.s4 1983009808
      %v692 = vunpack.c.0.s8 %v691
      %v693 = vlaneseq
      %v694 = vshrl.u32 %v693, 7
      %v695 = vsub.s32 %v692, %v694
      %v696 = vrot.slane %v682, %v695
      %v697 = vcombine.high %v689, %v689
      %v698 = vcombine.high %v696, %v696
      %v699 = vcombine.high %v427, %v427
      %v701 = vunpack.c.l.s4 1983009808
      %v702 = vunpack.c.0.s8 %v701
      %v703 = vlaneseq
      %v704 = vshrl.u32 %v703, 7
      %v705 = vsub.s32 %v702, %v704
      %v706 = vrot.slane %v427, %v705
      %v708 = vunpack.c.l.s4 1983009808
      %v709 = vunpack.c.0.s8 %v708
      %v710 = vlaneseq
      %v711 = vshrl.u32 %v710, 7
      %v712 = vsub.s32 %v709, %v711
      %v713 = vrot.slane %v699, %v712
      %v714 = vcombine.high %v706, %v706
      %v715 = vcombine.high %v713, %v713
      %v780 = vsel %vm301, %v451, -inf
      %v781 = vrot.slane %v780, 4
      %v782 = vmax.f32 %v780, %v781
      %v783 = vrot.slane %v782, 2
      %v784 = vmax.f32 %v782, %v783
      %v785 = vrot.slane %v784, 1
      %v786 = vmax.f32 %v784, %v785
      %v787 = vsel %vm301, %v459, -inf
      %v788 = vrot.slane %v787, 4
      %v789 = vmax.f32 %v787, %v788
      %v790 = vrot.slane %v789, 2
      %v791 = vmax.f32 %v789, %v790
      %v792 = vrot.slane %v791, 1
      %v793 = vmax.f32 %v791, %v792
      %v794 = vsel %vm301, %v458, -inf
      %v795 = vrot.slane %v794, 4
      %v796 = vmax.f32 %v794, %v795
      %v797 = vrot.slane %v796, 2
      %v798 = vmax.f32 %v796, %v797
      %v799 = vrot.slane %v798, 1
      %v800 = vmax.f32 %v798, %v799
      %v801 = vsel %vm301, %v460, -inf
      %v802 = vrot.slane %v801, 4
      %v803 = vmax.f32 %v801, %v802
      %v804 = vrot.slane %v803, 2
      %v805 = vmax.f32 %v803, %v804
      %v806 = vrot.slane %v805, 1
      %v807 = vmax.f32 %v805, %v806
      %v808 = vsel %vm301, %v468, -inf
      %v809 = vrot.slane %v808, 4
      %v810 = vmax.f32 %v808, %v809
      %v811 = vrot.slane %v810, 2
      %v812 = vmax.f32 %v810, %v811
      %v813 = vrot.slane %v812, 1
      %v814 = vmax.f32 %v812, %v813
      %v815 = vsel %vm301, %v476, -inf
      %v816 = vrot.slane %v815, 4
      %v817 = vmax.f32 %v815, %v816
      %v818 = vrot.slane %v817, 2
      %v819 = vmax.f32 %v817, %v818
      %v820 = vrot.slane %v819, 1
      %v821 = vmax.f32 %v819, %v820
      %v822 = vsel %vm301, %v475, -inf
      %v823 = vrot.slane %v822, 4
      %v824 = vmax.f32 %v822, %v823
      %v825 = vrot.slane %v824, 2
      %v826 = vmax.f32 %v824, %v825
      %v827 = vrot.slane %v826, 1
      %v828 = vmax.f32 %v826, %v827
      %v829 = vsel %vm301, %v477, -inf
      %v830 = vrot.slane %v829, 4
      %v831 = vmax.f32 %v829, %v830
      %v832 = vrot.slane %v831, 2
      %v833 = vmax.f32 %v831, %v832
      %v834 = vrot.slane %v833, 1
      %v835 = vmax.f32 %v833, %v834
      %v836 = vsel %vm301, %v485, -inf
      %v837 = vrot.slane %v836, 4
      %v838 = vmax.f32 %v836, %v837
      %v839 = vrot.slane %v838, 2
      %v840 = vmax.f32 %v838, %v839
      %v841 = vrot.slane %v840, 1
      %v842 = vmax.f32 %v840, %v841
      %v843 = vsel %vm301, %v493, -inf
      %v844 = vrot.slane %v843, 4
      %v845 = vmax.f32 %v843, %v844
      %v846 = vrot.slane %v845, 2
      %v847 = vmax.f32 %v845, %v846
      %v848 = vrot.slane %v847, 1
      %v849 = vmax.f32 %v847, %v848
      %v850 = vsel %vm301, %v492, -inf
      %v851 = vrot.slane %v850, 4
      %v852 = vmax.f32 %v850, %v851
      %v853 = vrot.slane %v852, 2
      %v854 = vmax.f32 %v852, %v853
      %v855 = vrot.slane %v854, 1
      %v856 = vmax.f32 %v854, %v855
      %v857 = vsel %vm301, %v494, -inf
      %v858 = vrot.slane %v857, 4
      %v859 = vmax.f32 %v857, %v858
      %v860 = vrot.slane %v859, 2
      %v861 = vmax.f32 %v859, %v860
      %v862 = vrot.slane %v861, 1
      %v863 = vmax.f32 %v861, %v862
      %v864 = vsel %vm301, %v502, -inf
      %v865 = vrot.slane %v864, 4
      %v866 = vmax.f32 %v864, %v865
      %v867 = vrot.slane %v866, 2
      %v868 = vmax.f32 %v866, %v867
      %v869 = vrot.slane %v868, 1
      %v870 = vmax.f32 %v868, %v869
      %v871 = vsel %vm301, %v510, -inf
      %v872 = vrot.slane %v871, 4
      %v873 = vmax.f32 %v871, %v872
      %v874 = vrot.slane %v873, 2
      %v875 = vmax.f32 %v873, %v874
      %v876 = vrot.slane %v875, 1
      %v877 = vmax.f32 %v875, %v876
      %v878 = vsel %vm301, %v509, -inf
      %v879 = vrot.slane %v878, 4
      %v880 = vmax.f32 %v878, %v879
      %v881 = vrot.slane %v880, 2
      %v882 = vmax.f32 %v880, %v881
      %v883 = vrot.slane %v882, 1
      %v884 = vmax.f32 %v882, %v883
      %v885 = vsel %vm301, %v511, -inf
      %v886 = vrot.slane %v885, 4
      %v887 = vmax.f32 %v885, %v886
      %v888 = vrot.slane %v887, 2
      %v889 = vmax.f32 %v887, %v888
      %v890 = vrot.slane %v889, 1
      %v891 = vmax.f32 %v889, %v890
      %v892 = vsel %vm301, %v519, -inf
      %v893 = vrot.slane %v892, 4
      %v894 = vmax.f32 %v892, %v893
      %v895 = vrot.slane %v894, 2
      %v896 = vmax.f32 %v894, %v895
      %v897 = vrot.slane %v896, 1
      %v898 = vmax.f32 %v896, %v897
      %v899 = vsel %vm301, %v527, -inf
      %v900 = vrot.slane %v899, 4
      %v901 = vmax.f32 %v899, %v900
      %v902 = vrot.slane %v901, 2
      %v903 = vmax.f32 %v901, %v902
      %v904 = vrot.slane %v903, 1
      %v905 = vmax.f32 %v903, %v904
      %v906 = vsel %vm301, %v526, -inf
      %v907 = vrot.slane %v906, 4
      %v908 = vmax.f32 %v906, %v907
      %v909 = vrot.slane %v908, 2
      %v910 = vmax.f32 %v908, %v909
      %v911 = vrot.slane %v910, 1
      %v912 = vmax.f32 %v910, %v911
      %v913 = vsel %vm301, %v528, -inf
      %v914 = vrot.slane %v913, 4
      %v915 = vmax.f32 %v913, %v914
      %v916 = vrot.slane %v915, 2
      %v917 = vmax.f32 %v915, %v916
      %v918 = vrot.slane %v917, 1
      %v919 = vmax.f32 %v917, %v918
      %v920 = vsel %vm301, %v536, -inf
      %v921 = vrot.slane %v920, 4
      %v922 = vmax.f32 %v920, %v921
      %v923 = vrot.slane %v922, 2
      %v924 = vmax.f32 %v922, %v923
      %v925 = vrot.slane %v924, 1
      %v926 = vmax.f32 %v924, %v925
      %v927 = vsel %vm301, %v544, -inf
      %v928 = vrot.slane %v927, 4
      %v929 = vmax.f32 %v927, %v928
      %v930 = vrot.slane %v929, 2
      %v931 = vmax.f32 %v929, %v930
      %v932 = vrot.slane %v931, 1
      %v933 = vmax.f32 %v931, %v932
      %v934 = vsel %vm301, %v543, -inf
      %v935 = vrot.slane %v934, 4
      %v936 = vmax.f32 %v934, %v935
      %v937 = vrot.slane %v936, 2
      %v938 = vmax.f32 %v936, %v937
      %v939 = vrot.slane %v938, 1
      %v940 = vmax.f32 %v938, %v939
      %v941 = vsel %vm301, %v545, -inf
      %v942 = vrot.slane %v941, 4
      %v943 = vmax.f32 %v941, %v942
      %v944 = vrot.slane %v943, 2
      %v945 = vmax.f32 %v943, %v944
      %v946 = vrot.slane %v945, 1
      %v947 = vmax.f32 %v945, %v946
      %v948 = vsel %vm301, %v553, -inf
      %v949 = vrot.slane %v948, 4
      %v950 = vmax.f32 %v948, %v949
      %v951 = vrot.slane %v950, 2
      %v952 = vmax.f32 %v950, %v951
      %v953 = vrot.slane %v952, 1
      %v954 = vmax.f32 %v952, %v953
      %v955 = vsel %vm301, %v561, -inf
      %v956 = vrot.slane %v955, 4
      %v957 = vmax.f32 %v955, %v956
      %v958 = vrot.slane %v957, 2
      %v959 = vmax.f32 %v957, %v958
      %v960 = vrot.slane %v959, 1
      %v961 = vmax.f32 %v959, %v960
      %v962 = vsel %vm301, %v560, -inf
      %v963 = vrot.slane %v962, 4
      %v964 = vmax.f32 %v962, %v963
      %v965 = vrot.slane %v964, 2
      %v966 = vmax.f32 %v964, %v965
      %v967 = vrot.slane %v966, 1
      %v968 = vmax.f32 %v966, %v967
      %v969 = vsel %vm301, %v562, -inf
      %v970 = vrot.slane %v969, 4
      %v971 = vmax.f32 %v969, %v970
      %v972 = vrot.slane %v971, 2
      %v973 = vmax.f32 %v971, %v972
      %v974 = vrot.slane %v973, 1
      %v975 = vmax.f32 %v973, %v974
      %v976 = vsel %vm301, %v570, -inf
      %v977 = vrot.slane %v976, 4
      %v978 = vmax.f32 %v976, %v977
      %v979 = vrot.slane %v978, 2
      %v980 = vmax.f32 %v978, %v979
      %v981 = vrot.slane %v980, 1
      %v982 = vmax.f32 %v980, %v981
      %v983 = vsel %vm301, %v578, -inf
      %v984 = vrot.slane %v983, 4
      %v985 = vmax.f32 %v983, %v984
      %v986 = vrot.slane %v985, 2
      %v987 = vmax.f32 %v985, %v986
      %v988 = vrot.slane %v987, 1
      %v989 = vmax.f32 %v987, %v988
      %v990 = vsel %vm301, %v577, -inf
      %v991 = vrot.slane %v990, 4
      %v992 = vmax.f32 %v990, %v991
      %v993 = vrot.slane %v992, 2
      %v994 = vmax.f32 %v992, %v993
      %v995 = vrot.slane %v994, 1
      %v996 = vmax.f32 %v994, %v995
      %v997 = vsel %vm301, %v579, -inf
      %v998 = vrot.slane %v997, 4
      %v999 = vmax.f32 %v997, %v998
      %v1000 = vrot.slane %v999, 2
      %v1001 = vmax.f32 %v999, %v1000
      %v1002 = vrot.slane %v1001, 1
      %v1003 = vmax.f32 %v1001, %v1002
      %v1004 = vsel %vm301, %v587, -inf
      %v1005 = vrot.slane %v1004, 4
      %v1006 = vmax.f32 %v1004, %v1005
      %v1007 = vrot.slane %v1006, 2
      %v1008 = vmax.f32 %v1006, %v1007
      %v1009 = vrot.slane %v1008, 1
      %v1010 = vmax.f32 %v1008, %v1009
      %v1011 = vsel %vm301, %v595, -inf
      %v1012 = vrot.slane %v1011, 4
      %v1013 = vmax.f32 %v1011, %v1012
      %v1014 = vrot.slane %v1013, 2
      %v1015 = vmax.f32 %v1013, %v1014
      %v1016 = vrot.slane %v1015, 1
      %v1017 = vmax.f32 %v1015, %v1016
      %v1018 = vsel %vm301, %v594, -inf
      %v1019 = vrot.slane %v1018, 4
      %v1020 = vmax.f32 %v1018, %v1019
      %v1021 = vrot.slane %v1020, 2
      %v1022 = vmax.f32 %v1020, %v1021
      %v1023 = vrot.slane %v1022, 1
      %v1024 = vmax.f32 %v1022, %v1023
      %v1025 = vsel %vm301, %v596, -inf
      %v1026 = vrot.slane %v1025, 4
      %v1027 = vmax.f32 %v1025, %v1026
      %v1028 = vrot.slane %v1027, 2
      %v1029 = vmax.f32 %v1027, %v1028
      %v1030 = vrot.slane %v1029, 1
      %v1031 = vmax.f32 %v1029, %v1030
      %v1032 = vsel %vm301, %v604, -inf
      %v1033 = vrot.slane %v1032, 4
      %v1034 = vmax.f32 %v1032, %v1033
      %v1035 = vrot.slane %v1034, 2
      %v1036 = vmax.f32 %v1034, %v1035
      %v1037 = vrot.slane %v1036, 1
      %v1038 = vmax.f32 %v1036, %v1037
      %v1039 = vsel %vm301, %v612, -inf
      %v1040 = vrot.slane %v1039, 4
      %v1041 = vmax.f32 %v1039, %v1040
      %v1042 = vrot.slane %v1041, 2
      %v1043 = vmax.f32 %v1041, %v1042
      %v1044 = vrot.slane %v1043, 1
      %v1045 = vmax.f32 %v1043, %v1044
      %v1046 = vsel %vm301, %v611, -inf
      %v1047 = vrot.slane %v1046, 4
      %v1048 = vmax.f32 %v1046, %v1047
      %v1049 = vrot.slane %v1048, 2
      %v1050 = vmax.f32 %v1048, %v1049
      %v1051 = vrot.slane %v1050, 1
      %v1052 = vmax.f32 %v1050, %v1051
      %v1053 = vsel %vm301, %v613, -inf
      %v1054 = vrot.slane %v1053, 4
      %v1055 = vmax.f32 %v1053, %v1054
      %v1056 = vrot.slane %v1055, 2
      %v1057 = vmax.f32 %v1055, %v1056
      %v1058 = vrot.slane %v1057, 1
      %v1059 = vmax.f32 %v1057, %v1058
      %v1060 = vsel %vm301, %v621, -inf
      %v1061 = vrot.slane %v1060, 4
      %v1062 = vmax.f32 %v1060, %v1061
      %v1063 = vrot.slane %v1062, 2
      %v1064 = vmax.f32 %v1062, %v1063
      %v1065 = vrot.slane %v1064, 1
      %v1066 = vmax.f32 %v1064, %v1065
      %v1067 = vsel %vm301, %v629, -inf
      %v1068 = vrot.slane %v1067, 4
      %v1069 = vmax.f32 %v1067, %v1068
      %v1070 = vrot.slane %v1069, 2
      %v1071 = vmax.f32 %v1069, %v1070
      %v1072 = vrot.slane %v1071, 1
      %v1073 = vmax.f32 %v1071, %v1072
      %v1074 = vsel %vm301, %v628, -inf
      %v1075 = vrot.slane %v1074, 4
      %v1076 = vmax.f32 %v1074, %v1075
      %v1077 = vrot.slane %v1076, 2
      %v1078 = vmax.f32 %v1076, %v1077
      %v1079 = vrot.slane %v1078, 1
      %v1080 = vmax.f32 %v1078, %v1079
      %v1081 = vsel %vm301, %v630, -inf
      %v1082 = vrot.slane %v1081, 4
      %v1083 = vmax.f32 %v1081, %v1082
      %v1084 = vrot.slane %v1083, 2
      %v1085 = vmax.f32 %v1083, %v1084
      %v1086 = vrot.slane %v1085, 1
      %v1087 = vmax.f32 %v1085, %v1086
      %v1088 = vsel %vm301, %v638, -inf
      %v1089 = vrot.slane %v1088, 4
      %v1090 = vmax.f32 %v1088, %v1089
      %v1091 = vrot.slane %v1090, 2
      %v1092 = vmax.f32 %v1090, %v1091
      %v1093 = vrot.slane %v1092, 1
      %v1094 = vmax.f32 %v1092, %v1093
      %v1095 = vsel %vm301, %v646, -inf
      %v1096 = vrot.slane %v1095, 4
      %v1097 = vmax.f32 %v1095, %v1096
      %v1098 = vrot.slane %v1097, 2
      %v1099 = vmax.f32 %v1097, %v1098
      %v1100 = vrot.slane %v1099, 1
      %v1101 = vmax.f32 %v1099, %v1100
      %v1102 = vsel %vm301, %v645, -inf
      %v1103 = vrot.slane %v1102, 4
      %v1104 = vmax.f32 %v1102, %v1103
      %v1105 = vrot.slane %v1104, 2
      %v1106 = vmax.f32 %v1104, %v1105
      %v1107 = vrot.slane %v1106, 1
      %v1108 = vmax.f32 %v1106, %v1107
      %v1109 = vsel %vm301, %v647, -inf
      %v1110 = vrot.slane %v1109, 4
      %v1111 = vmax.f32 %v1109, %v1110
      %v1112 = vrot.slane %v1111, 2
      %v1113 = vmax.f32 %v1111, %v1112
      %v1114 = vrot.slane %v1113, 1
      %v1115 = vmax.f32 %v1113, %v1114
      %v1116 = vsel %vm301, %v655, -inf
      %v1117 = vrot.slane %v1116, 4
      %v1118 = vmax.f32 %v1116, %v1117
      %v1119 = vrot.slane %v1118, 2
      %v1120 = vmax.f32 %v1118, %v1119
      %v1121 = vrot.slane %v1120, 1
      %v1122 = vmax.f32 %v1120, %v1121
      %v1123 = vsel %vm301, %v663, -inf
      %v1124 = vrot.slane %v1123, 4
      %v1125 = vmax.f32 %v1123, %v1124
      %v1126 = vrot.slane %v1125, 2
      %v1127 = vmax.f32 %v1125, %v1126
      %v1128 = vrot.slane %v1127, 1
      %v1129 = vmax.f32 %v1127, %v1128
      %v1130 = vsel %vm301, %v662, -inf
      %v1131 = vrot.slane %v1130, 4
      %v1132 = vmax.f32 %v1130, %v1131
      %v1133 = vrot.slane %v1132, 2
      %v1134 = vmax.f32 %v1132, %v1133
      %v1135 = vrot.slane %v1134, 1
      %v1136 = vmax.f32 %v1134, %v1135
      %v1137 = vsel %vm301, %v664, -inf
      %v1138 = vrot.slane %v1137, 4
      %v1139 = vmax.f32 %v1137, %v1138
      %v1140 = vrot.slane %v1139, 2
      %v1141 = vmax.f32 %v1139, %v1140
      %v1142 = vrot.slane %v1141, 1
      %v1143 = vmax.f32 %v1141, %v1142
      %v1144 = vsel %vm301, %v672, -inf
      %v1145 = vrot.slane %v1144, 4
      %v1146 = vmax.f32 %v1144, %v1145
      %v1147 = vrot.slane %v1146, 2
      %v1148 = vmax.f32 %v1146, %v1147
      %v1149 = vrot.slane %v1148, 1
      %v1150 = vmax.f32 %v1148, %v1149
      %v1151 = vsel %vm301, %v680, -inf
      %v1152 = vrot.slane %v1151, 4
      %v1153 = vmax.f32 %v1151, %v1152
      %v1154 = vrot.slane %v1153, 2
      %v1155 = vmax.f32 %v1153, %v1154
      %v1156 = vrot.slane %v1155, 1
      %v1157 = vmax.f32 %v1155, %v1156
      %v1158 = vsel %vm301, %v679, -inf
      %v1159 = vrot.slane %v1158, 4
      %v1160 = vmax.f32 %v1158, %v1159
      %v1161 = vrot.slane %v1160, 2
      %v1162 = vmax.f32 %v1160, %v1161
      %v1163 = vrot.slane %v1162, 1
      %v1164 = vmax.f32 %v1162, %v1163
      %v1165 = vsel %vm301, %v681, -inf
      %v1166 = vrot.slane %v1165, 4
      %v1167 = vmax.f32 %v1165, %v1166
      %v1168 = vrot.slane %v1167, 2
      %v1169 = vmax.f32 %v1167, %v1168
      %v1170 = vrot.slane %v1169, 1
      %v1171 = vmax.f32 %v1169, %v1170
      %v1172 = vsel %vm301, %v689, -inf
      %v1173 = vrot.slane %v1172, 4
      %v1174 = vmax.f32 %v1172, %v1173
      %v1175 = vrot.slane %v1174, 2
      %v1176 = vmax.f32 %v1174, %v1175
      %v1177 = vrot.slane %v1176, 1
      %v1178 = vmax.f32 %v1176, %v1177
      %v1179 = vsel %vm301, %v697, -inf
      %v1180 = vrot.slane %v1179, 4
      %v1181 = vmax.f32 %v1179, %v1180
      %v1182 = vrot.slane %v1181, 2
      %v1183 = vmax.f32 %v1181, %v1182
      %v1184 = vrot.slane %v1183, 1
      %v1185 = vmax.f32 %v1183, %v1184
      %v1186 = vsel %vm301, %v696, -inf
      %v1187 = vrot.slane %v1186, 4
      %v1188 = vmax.f32 %v1186, %v1187
      %v1189 = vrot.slane %v1188, 2
      %v1190 = vmax.f32 %v1188, %v1189
      %v1191 = vrot.slane %v1190, 1
      %v1192 = vmax.f32 %v1190, %v1191
      %v1193 = vsel %vm301, %v698, -inf
      %v1194 = vrot.slane %v1193, 4
      %v1195 = vmax.f32 %v1193, %v1194
      %v1196 = vrot.slane %v1195, 2
      %v1197 = vmax.f32 %v1195, %v1196
      %v1198 = vrot.slane %v1197, 1
      %v1199 = vmax.f32 %v1197, %v1198
      %v1200 = vsel %vm301, %v706, -inf
      %v1201 = vrot.slane %v1200, 4
      %v1202 = vmax.f32 %v1200, %v1201
      %v1203 = vrot.slane %v1202, 2
      %v1204 = vmax.f32 %v1202, %v1203
      %v1205 = vrot.slane %v1204, 1
      %v1206 = vmax.f32 %v1204, %v1205
      %v1207 = vsel %vm301, %v714, -inf
      %v1208 = vrot.slane %v1207, 4
      %v1209 = vmax.f32 %v1207, %v1208
      %v1210 = vrot.slane %v1209, 2
      %v1211 = vmax.f32 %v1209, %v1210
      %v1212 = vrot.slane %v1211, 1
      %v1213 = vmax.f32 %v1211, %v1212
      %v1214 = vsel %vm301, %v713, -inf
      %v1215 = vrot.slane %v1214, 4
      %v1216 = vmax.f32 %v1214, %v1215
      %v1217 = vrot.slane %v1216, 2
      %v1218 = vmax.f32 %v1216, %v1217
      %v1219 = vrot.slane %v1218, 1
      %v1220 = vmax.f32 %v1218, %v1219
      %v1221 = vsel %vm301, %v715, -inf
      %v1222 = vrot.slane %v1221, 4
      %v1223 = vmax.f32 %v1221, %v1222
      %v1224 = vrot.slane %v1223, 2
      %v1225 = vmax.f32 %v1223, %v1224
      %v1226 = vrot.slane %v1225, 1
      %v1227 = vmax.f32 %v1225, %v1226
      %v1228 = vlaneseq
      %v1229 = vshrl.u32 %v1228, 7
      %v1230 = vadd.s32 %v1229, 8
      %v1231 = vadd.s32 %v1229, 16
      %v1232 = vadd.s32 %v1229, 24
      %vm1233 = vcmp.eq.s32.totalorder %v1229, 0
      %vm1234 = vcmp.eq.s32.totalorder %v1230, 0
      %vm1235 = vcmp.eq.s32.totalorder %v1231, 0
      %vm1236 = vcmp.eq.s32.totalorder %v1232, 0
      %v1237 = vsel %vm1233, 0.0, 1.0
      %v1238 = vsel %vm1234, 0.0, 1.0
      %v1239 = vsel %vm1235, 0.0, 1.0
      %v1240 = vsel %vm1236, 0.0, 1.0
      %vm1241 = vcmp.eq.s32.totalorder %v1229, 31
      %vm1242 = vcmp.eq.s32.totalorder %v1230, 31
      %vm1243 = vcmp.eq.s32.totalorder %v1231, 31
      %vm1244 = vcmp.eq.s32.totalorder %v1232, 31
      %v1245 = vsel %vm1241, 0.0, 1.0
      %v1246 = vsel %vm1242, 0.0, 1.0
      %v1247 = vsel %vm1243, 0.0, 1.0
      %v1248 = vsel %vm1244, 0.0, 1.0
      %vm1313 = vcmask 1041409
      %v1314 = vsel %vm1313, %v793, %v786
      %vm1315 = vcmask 1042434
      %v1316 = vsel %vm1315, %v800, %v1314
      %vm1317 = vcmask 1043459
      %v1318 = vsel %vm1317, %v807, %v1316
      %vm1319 = vcmask 1044484
      %v1320 = vsel %vm1319, %v814, %v1318
      %vm1321 = vcmask 1045509
      %v1322 = vsel %vm1321, %v821, %v1320
      %vm1323 = vcmask 1046534
      %v1324 = vsel %vm1323, %v828, %v1322
      %vm1325 = vcmask 1047559
      %v1326 = vsel %vm1325, %v835, %v1324
      %v1327 = vsel %vm1313, %v849, %v842
      %v1328 = vsel %vm1315, %v856, %v1327
      %v1329 = vsel %vm1317, %v863, %v1328
      %v1330 = vsel %vm1319, %v870, %v1329
      %v1331 = vsel %vm1321, %v877, %v1330
      %v1332 = vsel %vm1323, %v884, %v1331
      %v1333 = vsel %vm1325, %v891, %v1332
      %v1334 = vsel %vm1313, %v905, %v898
      %v1335 = vsel %vm1315, %v912, %v1334
      %v1336 = vsel %vm1317, %v919, %v1335
      %v1337 = vsel %vm1319, %v926, %v1336
      %v1338 = vsel %vm1321, %v933, %v1337
      %v1339 = vsel %vm1323, %v940, %v1338
      %v1340 = vsel %vm1325, %v947, %v1339
      %v1341 = vsel %vm1313, %v961, %v954
      %v1342 = vsel %vm1315, %v968, %v1341
      %v1343 = vsel %vm1317, %v975, %v1342
      %v1344 = vsel %vm1319, %v982, %v1343
      %v1345 = vsel %vm1321, %v989, %v1344
      %v1346 = vsel %vm1323, %v996, %v1345
      %v1347 = vsel %vm1325, %v1003, %v1346
      %v1348 = vsel %vm1313, %v1017, %v1010
      %v1349 = vsel %vm1315, %v1024, %v1348
      %v1350 = vsel %vm1317, %v1031, %v1349
      %v1351 = vsel %vm1319, %v1038, %v1350
      %v1352 = vsel %vm1321, %v1045, %v1351
      %v1353 = vsel %vm1323, %v1052, %v1352
      %v1354 = vsel %vm1325, %v1059, %v1353
      %v1355 = vsel %vm1313, %v1073, %v1066
      %v1356 = vsel %vm1315, %v1080, %v1355
      %v1357 = vsel %vm1317, %v1087, %v1356
      %v1358 = vsel %vm1319, %v1094, %v1357
      %v1359 = vsel %vm1321, %v1101, %v1358
      %v1360 = vsel %vm1323, %v1108, %v1359
      %v1361 = vsel %vm1325, %v1115, %v1360
      %v1362 = vsel %vm1313, %v1129, %v1122
      %v1363 = vsel %vm1315, %v1136, %v1362
      %v1364 = vsel %vm1317, %v1143, %v1363
      %v1365 = vsel %vm1319, %v1150, %v1364
      %v1366 = vsel %vm1321, %v1157, %v1365
      %v1367 = vsel %vm1323, %v1164, %v1366
      %v1368 = vsel %vm1325, %v1171, %v1367
      %v1369 = vsel %vm1313, %v1185, %v1178
      %v1370 = vsel %vm1315, %v1192, %v1369
      %v1371 = vsel %vm1317, %v1199, %v1370
      %v1372 = vsel %vm1319, %v1206, %v1371
      %v1373 = vsel %vm1321, %v1213, %v1372
      %v1374 = vsel %vm1323, %v1220, %v1373
      %v1375 = vsel %vm1325, %v1227, %v1374
      %v1384 = vrot.slane %v1326, 7
      %v1385 = vrot.slane %v1333, 7
      %v1386 = vrot.slane %v1340, 7
      %v1387 = vrot.slane %v1347, 7
      %v1388 = vrot.slane %v1354, 7
      %v1389 = vrot.slane %v1361, 7
      %v1390 = vrot.slane %v1368, 7
      %v1391 = vrot.slane %v1375, 7
      %vm1392 = vcmp.lt.s32.totalorder %v1229, 1
      %v1393 = vsel %vm1392, %v1390, %v1391
      %v1394 = vsel %vm1392, %v1389, %v1390
      %v1395 = vsel %vm1392, %v1388, %v1389
      %v1396 = vsel %vm1392, %v1387, %v1388
      %v1397 = vsel %vm1392, %v1386, %v1387
      %v1398 = vsel %vm1392, %v1385, %v1386
      %v1399 = vsel %vm1392, %v1384, %v1385
      %v1400 = vsel %vm1392, %v1391, %v1384
      %v1401 = vmul.f32 %v1400, %v1237
      %v1402 = vmul.f32 %v1399, %v1238
      %v1403 = vmul.f32 %v1398, %v1239
      %v1404 = vmul.f32 %v1397, %v1240
      %v1405 = vmul.f32 %v1396, %v1237
      %v1406 = vmul.f32 %v1395, %v1238
      %v1407 = vmul.f32 %v1394, %v1239
      %v1408 = vmul.f32 %v1393, %v1240
      %v1409 = vrot.slane %v1326, 1
      %v1410 = vrot.slane %v1333, 1
      %v1411 = vrot.slane %v1340, 1
      %v1412 = vrot.slane %v1347, 1
      %v1413 = vrot.slane %v1354, 1
      %v1414 = vrot.slane %v1361, 1
      %v1415 = vrot.slane %v1368, 1
      %v1416 = vrot.slane %v1375, 1
      %vm1417 = vcmp.lt.s32.totalorder %v1229, 7
      %v1418 = vsel %vm1417, %v1415, %v1416
      %v1419 = vsel %vm1417, %v1414, %v1415
      %v1420 = vsel %vm1417, %v1413, %v1414
      %v1421 = vsel %vm1417, %v1412, %v1413
      %v1422 = vsel %vm1417, %v1411, %v1412
      %v1423 = vsel %vm1417, %v1410, %v1411
      %v1424 = vsel %vm1417, %v1409, %v1410
      %v1425 = vsel %vm1417, %v1416, %v1409
      %v1426 = vmul.f32 %v1424, %v1245
      %v1427 = vmul.f32 %v1423, %v1246
      %v1428 = vmul.f32 %v1422, %v1247
      %v1429 = vmul.f32 %v1421, %v1248
      %v1430 = vmul.f32 %v1420, %v1245
      %v1431 = vmul.f32 %v1419, %v1246
      %v1432 = vmul.f32 %v1418, %v1247
      %v1433 = vmul.f32 %v1425, %v1248
      %v1434 = vpack.c.bf16 %v786, %v786
      %v1435 = vpack.c.bf16 %v793, %v793
      %v1436 = vpack.c.bf16 %v800, %v800
      %v1437 = vpack.c.bf16 %v807, %v807
      %v1438 = vpack.c.bf16 %v814, %v814
      %v1439 = vpack.c.bf16 %v821, %v821
      %v1440 = vpack.c.bf16 %v828, %v828
      %v1441 = vpack.c.bf16 %v835, %v835
      %v1442 = vpack.c.bf16 %v842, %v842
      %v1443 = vpack.c.bf16 %v849, %v849
      %v1444 = vpack.c.bf16 %v856, %v856
      %v1445 = vpack.c.bf16 %v863, %v863
      %v1446 = vpack.c.bf16 %v870, %v870
      %v1447 = vpack.c.bf16 %v877, %v877
      %v1448 = vpack.c.bf16 %v884, %v884
      %v1449 = vpack.c.bf16 %v891, %v891
      %v1450 = vpack.c.bf16 %v898, %v898
      %v1451 = vpack.c.bf16 %v905, %v905
      %v1452 = vpack.c.bf16 %v912, %v912
      %v1453 = vpack.c.bf16 %v919, %v919
      %v1454 = vpack.c.bf16 %v926, %v926
      %v1455 = vpack.c.bf16 %v933, %v933
      %v1456 = vpack.c.bf16 %v940, %v940
      %v1457 = vpack.c.bf16 %v947, %v947
      %v1458 = vpack.c.bf16 %v954, %v954
      %v1459 = vpack.c.bf16 %v961, %v961
      %v1460 = vpack.c.bf16 %v968, %v968
      %v1461 = vpack.c.bf16 %v975, %v975
      %v1462 = vpack.c.bf16 %v982, %v982
      %v1463 = vpack.c.bf16 %v989, %v989
      %v1464 = vpack.c.bf16 %v996, %v996
      %v1465 = vpack.c.bf16 %v1003, %v1003
      %v1466 = vpack.c.bf16 %v1010, %v1010
      %v1467 = vpack.c.bf16 %v1017, %v1017
      %v1468 = vpack.c.bf16 %v1024, %v1024
      %v1469 = vpack.c.bf16 %v1031, %v1031
      %v1470 = vpack.c.bf16 %v1038, %v1038
      %v1471 = vpack.c.bf16 %v1045, %v1045
      %v1472 = vpack.c.bf16 %v1052, %v1052
      %v1473 = vpack.c.bf16 %v1059, %v1059
      %v1474 = vpack.c.bf16 %v1066, %v1066
      %v1475 = vpack.c.bf16 %v1073, %v1073
      %v1476 = vpack.c.bf16 %v1080, %v1080
      %v1477 = vpack.c.bf16 %v1087, %v1087
      %v1478 = vpack.c.bf16 %v1094, %v1094
      %v1479 = vpack.c.bf16 %v1101, %v1101
      %v1480 = vpack.c.bf16 %v1108, %v1108
      %v1481 = vpack.c.bf16 %v1115, %v1115
      %v1482 = vpack.c.bf16 %v1122, %v1122
      %v1483 = vpack.c.bf16 %v1129, %v1129
      %v1484 = vpack.c.bf16 %v1136, %v1136
      %v1485 = vpack.c.bf16 %v1143, %v1143
      %v1486 = vpack.c.bf16 %v1150, %v1150
      %v1487 = vpack.c.bf16 %v1157, %v1157
      %v1488 = vpack.c.bf16 %v1164, %v1164
      %v1489 = vpack.c.bf16 %v1171, %v1171
      %v1490 = vpack.c.bf16 %v1178, %v1178
      %v1491 = vpack.c.bf16 %v1185, %v1185
      %v1492 = vpack.c.bf16 %v1192, %v1192
      %v1493 = vpack.c.bf16 %v1199, %v1199
      %v1494 = vpack.c.bf16 %v1206, %v1206
      %v1495 = vpack.c.bf16 %v1213, %v1213
      %v1496 = vpack.c.bf16 %v1220, %v1220
      %v1497 = vpack.c.bf16 %v1227, %v1227
      %v1498 = vpack.c.bf16 %v1402, %v1401
      %v1499 = vpack.c.bf16 %v1404, %v1403
      %v1500 = vpack.c.bf16 %v1406, %v1405
      %v1501 = vpack.c.bf16 %v1408, %v1407
      %v1502 = vpack.c.bf16 %v1427, %v1426
      %v1503 = vpack.c.bf16 %v1429, %v1428
      %v1504 = vpack.c.bf16 %v1431, %v1430
      %v1505 = vpack.c.bf16 %v1433, %v1432
      %v1506 = vld [vmem:[%s4] sm:$0xf]
      %v1507 = vld [vmem:[%s4 + $0x4] sm:$0xf]
      %s1508 = scalar_lea.vmem %s4, 8
      %v1509 = vld [vmem:[%s1508] sm:$0xf]
      %v1510 = vld [vmem:[%s1508 + $0x4] sm:$0xf]
      %v1575 = vunpack.c.l.b16 %v1434
      %v1576 = vunpack.c.l.b16 %v1435
      %v1577 = vunpack.c.l.b16 %v1436
      %v1578 = vunpack.c.l.b16 %v1437
      %v1579 = vunpack.c.l.b16 %v1438
      %v1580 = vunpack.c.l.b16 %v1439
      %v1581 = vunpack.c.l.b16 %v1440
      %v1582 = vunpack.c.l.b16 %v1441
      %v1583 = vunpack.c.l.b16 %v1442
      %v1584 = vunpack.c.l.b16 %v1443
      %v1585 = vunpack.c.l.b16 %v1444
      %v1586 = vunpack.c.l.b16 %v1445
      %v1587 = vunpack.c.l.b16 %v1446
      %v1588 = vunpack.c.l.b16 %v1447
      %v1589 = vunpack.c.l.b16 %v1448
      %v1590 = vunpack.c.l.b16 %v1449
      %v1591 = vunpack.c.l.b16 %v1450
      %v1592 = vunpack.c.l.b16 %v1451
      %v1593 = vunpack.c.l.b16 %v1452
      %v1594 = vunpack.c.l.b16 %v1453
      %v1595 = vunpack.c.l.b16 %v1454
      %v1596 = vunpack.c.l.b16 %v1455
      %v1597 = vunpack.c.l.b16 %v1456
      %v1598 = vunpack.c.l.b16 %v1457
      %v1599 = vunpack.c.l.b16 %v1458
      %v1600 = vunpack.c.l.b16 %v1459
      %v1601 = vunpack.c.l.b16 %v1460
      %v1602 = vunpack.c.l.b16 %v1461
      %v1603 = vunpack.c.l.b16 %v1462
      %v1604 = vunpack.c.l.b16 %v1463
      %v1605 = vunpack.c.l.b16 %v1464
      %v1606 = vunpack.c.l.b16 %v1465
      %v1607 = vunpack.c.l.b16 %v1466
      %v1608 = vunpack.c.l.b16 %v1467
      %v1609 = vunpack.c.l.b16 %v1468
      %v1610 = vunpack.c.l.b16 %v1469
      %v1611 = vunpack.c.l.b16 %v1470
      %v1612 = vunpack.c.l.b16 %v1471
      %v1613 = vunpack.c.l.b16 %v1472
      %v1614 = vunpack.c.l.b16 %v1473
      %v1615 = vunpack.c.l.b16 %v1474
      %v1616 = vunpack.c.l.b16 %v1475
      %v1617 = vunpack.c.l.b16 %v1476
      %v1618 = vunpack.c.l.b16 %v1477
      %v1619 = vunpack.c.l.b16 %v1478
      %v1620 = vunpack.c.l.b16 %v1479
      %v1621 = vunpack.c.l.b16 %v1480
      %v1622 = vunpack.c.l.b16 %v1481
      %v1623 = vunpack.c.l.b16 %v1482
      %v1624 = vunpack.c.l.b16 %v1483
      %v1625 = vunpack.c.l.b16 %v1484
      %v1626 = vunpack.c.l.b16 %v1485
      %v1627 = vunpack.c.l.b16 %v1486
      %v1628 = vunpack.c.l.b16 %v1487
      %v1629 = vunpack.c.l.b16 %v1488
      %v1630 = vunpack.c.l.b16 %v1489
      %v1631 = vunpack.c.l.b16 %v1490
      %v1632 = vunpack.c.l.b16 %v1491
      %v1633 = vunpack.c.l.b16 %v1492
      %v1634 = vunpack.c.l.b16 %v1493
      %v1635 = vunpack.c.l.b16 %v1494
      %v1636 = vunpack.c.l.b16 %v1495
      %v1637 = vunpack.c.l.b16 %v1496
      %v1638 = vunpack.c.l.b16 %v1497
      %v1639 = vsel %vm1313, %v1576, %v1575
      %v1640 = vsel %vm1315, %v1577, %v1639
      %v1641 = vsel %vm1317, %v1578, %v1640
      %v1642 = vsel %vm1319, %v1579, %v1641
      %v1643 = vsel %vm1321, %v1580, %v1642
      %v1644 = vsel %vm1323, %v1581, %v1643
      %v1645 = vsel %vm1325, %v1582, %v1644
      %v1646 = vsel %vm1313, %v1584, %v1583
      %v1647 = vsel %vm1315, %v1585, %v1646
      %v1648 = vsel %vm1317, %v1586, %v1647
      %v1649 = vsel %vm1319, %v1587, %v1648
      %v1650 = vsel %vm1321, %v1588, %v1649
      %v1651 = vsel %vm1323, %v1589, %v1650
      %v1652 = vsel %vm1325, %v1590, %v1651
      %v1653 = vsel %vm1313, %v1592, %v1591
      %v1654 = vsel %vm1315, %v1593, %v1653
      %v1655 = vsel %vm1317, %v1594, %v1654
      %v1656 = vsel %vm1319, %v1595, %v1655
      %v1657 = vsel %vm1321, %v1596, %v1656
      %v1658 = vsel %vm1323, %v1597, %v1657
      %v1659 = vsel %vm1325, %v1598, %v1658
      %v1660 = vsel %vm1313, %v1600, %v1599
      %v1661 = vsel %vm1315, %v1601, %v1660
      %v1662 = vsel %vm1317, %v1602, %v1661
      %v1663 = vsel %vm1319, %v1603, %v1662
      %v1664 = vsel %vm1321, %v1604, %v1663
      %v1665 = vsel %vm1323, %v1605, %v1664
      %v1666 = vsel %vm1325, %v1606, %v1665
      %v1667 = vsel %vm1313, %v1608, %v1607
      %v1668 = vsel %vm1315, %v1609, %v1667
      %v1669 = vsel %vm1317, %v1610, %v1668
      %v1670 = vsel %vm1319, %v1611, %v1669
      %v1671 = vsel %vm1321, %v1612, %v1670
      %v1672 = vsel %vm1323, %v1613, %v1671
      %v1673 = vsel %vm1325, %v1614, %v1672
      %v1674 = vsel %vm1313, %v1616, %v1615
      %v1675 = vsel %vm1315, %v1617, %v1674
      %v1676 = vsel %vm1317, %v1618, %v1675
      %v1677 = vsel %vm1319, %v1619, %v1676
      %v1678 = vsel %vm1321, %v1620, %v1677
      %v1679 = vsel %vm1323, %v1621, %v1678
      %v1680 = vsel %vm1325, %v1622, %v1679
      %v1681 = vsel %vm1313, %v1624, %v1623
      %v1682 = vsel %vm1315, %v1625, %v1681
      %v1683 = vsel %vm1317, %v1626, %v1682
      %v1684 = vsel %vm1319, %v1627, %v1683
      %v1685 = vsel %vm1321, %v1628, %v1684
      %v1686 = vsel %vm1323, %v1629, %v1685
      %v1687 = vsel %vm1325, %v1630, %v1686
      %v1688 = vsel %vm1313, %v1632, %v1631
      %v1689 = vsel %vm1315, %v1633, %v1688
      %v1690 = vsel %vm1317, %v1634, %v1689
      %v1691 = vsel %vm1319, %v1635, %v1690
      %v1692 = vsel %vm1321, %v1636, %v1691
      %v1693 = vsel %vm1323, %v1637, %v1692
      %v1694 = vsel %vm1325, %v1638, %v1693
      %v1695 = vpack.c.b16 %v1652, %v1645
      %v1696 = vpack.c.b16 %v1666, %v1659
      %v1697 = vpack.c.b16 %v1680, %v1673
      %v1698 = vpack.c.b16 %v1694, %v1687
      %v1701 = vunpack.c.l.b16 %v1509
      %v1702 = vunpack.c.l.b16 %v1510
      %v1703 = vpack.c.b16 %v1702, %v1701
      %vm1705 = vcmask 130048
      %v1707 = vsel %vm1705, %v1695, 0
      %v1710 = vsel %vm1705, %v1696, 0
      %v1713 = vsel %vm1705, %v1697, 0
      %v1716 = vsel %vm1705, %v1698, 0
      %1718 = vmatprep.subr.bf16.mxu0 0
      %1719 = vmatpush1.bf16.msra.mxu0 0
      %1720 = vmatprep.subr.bf16.mxu0 0
      %1721 = vmatpush1.bf16.msra.mxu0 0
      %1722 = vmatprep.subr.bf16.mxu0 0
      %1723 = vmatpush1.bf16.msra.mxu0 0
      %1724 = vmatprep.subr.bf16.mxu0 0
      %1725 = vmatpush1.bf16.msra.mxu0 0
      %1726 = vmatprep.subr.bf16.mxu0 0
      %1727 = vmatpush1.bf16.msra.mxu0 0
      %1728 = vmatprep.subr.bf16.mxu0 0
      %1729 = vmatpush1.bf16.msra.mxu0 0
      %1730 = vmatprep.subr.bf16.mxu0 0
      %1731 = vmatpush1.bf16.msra.mxu0 0
      %1732 = vmatprep.subr.bf16.mxu0 0
      %1733 = vmatpush1.bf16.msra.mxu0 %v1703
      %1734 = vmatprep.subr.bf16.mxu0 0
      %1735 = vmatpush2.bf16.msra.mxu0 0
      %1736 = vmatprep.subr.bf16.mxu0 0
      %1737 = vmatpush2.bf16.msra.mxu0 0
      %1738 = vmatprep.subr.bf16.mxu0 0
      %1739 = vmatpush2.bf16.msra.mxu0 0
      %1740 = vmatprep.subr.bf16.mxu0 0
      %1741 = vmatpush2.bf16.msra.mxu0 0
      %1742 = vmatprep.subr.bf16.mxu0 0
      %1743 = vmatpush2.bf16.msra.mxu0 0
      %1744 = vmatprep.subr.bf16.mxu0 0
      %1745 = vmatpush2.bf16.msra.mxu0 0
      %1746 = vmatprep.subr.bf16.mxu0 0
      %1747 = vmatpush2.bf16.msra.mxu0 0
      %1748 = vmatprep.subr.bf16.mxu0 0
      %1749 = vmatpush2.bf16.msra.mxu0 0
      %1750 = vmatprep.mubr.bf16.mxu0 0
      %1751 = vmatmul.mubr.bf16.gmra.mxu0 %v1707
      %v1752 = vpop.f32.mrf.mxu0
      %v1753 = vadd.f32 0.0, %v1752
      %v1754 = vpop.f32.mrf.mxu0
      %v1755 = vpop.f32.mrf.mxu0
      %v1756 = vadd.f32 0.0, %v1755
      %v1757 = vpop.f32.mrf.mxu0
      %1758 = vmatprep.mubr.bf16.mxu0 0
      %1759 = vmatmul.mubr.bf16.gmra.mxu0 %v1710
      %v1760 = vpop.f32.mrf.mxu0
      %v1761 = vadd.f32 0.0, %v1760
      %v1762 = vpop.f32.mrf.mxu0
      %v1763 = vpop.f32.mrf.mxu0
      %v1764 = vadd.f32 0.0, %v1763
      %v1765 = vpop.f32.mrf.mxu0
      %1766 = vmatprep.mubr.bf16.mxu0 0
      %1767 = vmatmul.mubr.bf16.gmra.mxu0 %v1713
      %v1768 = vpop.f32.mrf.mxu0
      %v1769 = vadd.f32 0.0, %v1768
      %v1770 = vpop.f32.mrf.mxu0
      %v1771 = vpop.f32.mrf.mxu0
      %v1772 = vadd.f32 0.0, %v1771
      %v1773 = vpop.f32.mrf.mxu0
      %1774 = vmatprep.mubr.bf16.mxu0 0
      %1775 = vmatmul.mubr.bf16.gmra.mxu0 %v1716
      %v1776 = vpop.f32.mrf.mxu0
      %v1777 = vadd.f32 0.0, %v1776
      %v1778 = vpop.f32.mrf.mxu0
      %v1779 = vpop.f32.mrf.mxu0
      %v1780 = vadd.f32 0.0, %v1779
      %v1781 = vpop.f32.mrf.mxu0
      %1782 = vdwg.mxu0
      %v1785 = vunpack.c.l.b16 %v1506
      %v1786 = vunpack.c.l.b16 %v1507
      %v1787 = vpack.c.b16 %v1786, %v1785
      %v1790 = vsel %vm1705, %v1498, 0
      %v1793 = vsel %vm1705, %v1499, 0
      %v1796 = vsel %vm1705, %v1500, 0
      %v1799 = vsel %vm1705, %v1501, 0
      %1801 = vmatprep.subr.bf16.mxu0 0
      %1802 = vmatpush1.bf16.msra.mxu0 0
      %1803 = vmatprep.subr.bf16.mxu0 0
      %1804 = vmatpush1.bf16.msra.mxu0 0
      %1805 = vmatprep.subr.bf16.mxu0 0
      %1806 = vmatpush1.bf16.msra.mxu0 0
      %1807 = vmatprep.subr.bf16.mxu0 0
      %1808 = vmatpush1.bf16.msra.mxu0 0
      %1809 = vmatprep.subr.bf16.mxu0 0
      %1810 = vmatpush1.bf16.msra.mxu0 0
      %1811 = vmatprep.subr.bf16.mxu0 0
      %1812 = vmatpush1.bf16.msra.mxu0 0
      %1813 = vmatprep.subr.bf16.mxu0 0
      %1814 = vmatpush1.bf16.msra.mxu0 0
      %1815 = vmatprep.subr.bf16.mxu0 0
      %1816 = vmatpush1.bf16.msra.mxu0 %v1787
      %1817 = vmatprep.subr.bf16.mxu0 0
      %1818 = vmatpush2.bf16.msra.mxu0 0
      %1819 = vmatprep.subr.bf16.mxu0 0
      %1820 = vmatpush2.bf16.msra.mxu0 0
      %1821 = vmatprep.subr.bf16.mxu0 0
      %1822 = vmatpush2.bf16.msra.mxu0 0
      %1823 = vmatprep.subr.bf16.mxu0 0
      %1824 = vmatpush2.bf16.msra.mxu0 0
      %1825 = vmatprep.subr.bf16.mxu0 0
      %1826 = vmatpush2.bf16.msra.mxu0 0
      %1827 = vmatprep.subr.bf16.mxu0 0
      %1828 = vmatpush2.bf16.msra.mxu0 0
      %1829 = vmatprep.subr.bf16.mxu0 0
      %1830 = vmatpush2.bf16.msra.mxu0 0
      %1831 = vmatprep.subr.bf16.mxu0 0
      %1832 = vmatpush2.bf16.msra.mxu0 0
      %1833 = vmatprep.mubr.bf16.mxu0 0
      %1834 = vmatmul.mubr.bf16.gmra.mxu0 %v1790
      %v1835 = vpop.f32.mrf.mxu0
      %v1836 = vadd.f32 %v1753, %v1835
      %v1837 = vpop.f32.mrf.mxu0
      %v1838 = vpop.f32.mrf.mxu0
      %v1839 = vadd.f32 %v1756, %v1838
      %v1840 = vpop.f32.mrf.mxu0
      %1841 = vmatprep.mubr.bf16.mxu0 0
      %1842 = vmatmul.mubr.bf16.gmra.mxu0 %v1793
      %v1843 = vpop.f32.mrf.mxu0
      %v1844 = vadd.f32 %v1761, %v1843
      %v1845 = vpop.f32.mrf.mxu0
      %v1846 = vpop.f32.mrf.mxu0
      %v1847 = vadd.f32 %v1764, %v1846
      %v1848 = vpop.f32.mrf.mxu0
      %1849 = vmatprep.mubr.bf16.mxu0 0
      %1850 = vmatmul.mubr.bf16.gmra.mxu0 %v1796
      %v1851 = vpop.f32.mrf.mxu0
      %v1852 = vadd.f32 %v1769, %v1851
      %v1853 = vpop.f32.mrf.mxu0
      %v1854 = vpop.f32.mrf.mxu0
      %v1855 = vadd.f32 %v1772, %v1854
      %v1856 = vpop.f32.mrf.mxu0
      %1857 = vmatprep.mubr.bf16.mxu0 0
      %1858 = vmatmul.mubr.bf16.gmra.mxu0 %v1799
      %v1859 = vpop.f32.mrf.mxu0
      %v1860 = vadd.f32 %v1777, %v1859
      %v1861 = vpop.f32.mrf.mxu0
      %v1862 = vpop.f32.mrf.mxu0
      %v1863 = vadd.f32 %v1780, %v1862
      %v1864 = vpop.f32.mrf.mxu0
      %1865 = vdwg.mxu0
      %s1866 = scalar_lea.vmem %s4, 16
      %v1867 = vld [vmem:[%s1866] sm:$0xf]
      %v1868 = vld [vmem:[%s1866 + $0x4] sm:$0xf]
      %v1871 = vunpack.c.l.b16 %v1867
      %v1872 = vunpack.c.l.b16 %v1868
      %v1873 = vpack.c.b16 %v1872, %v1871
      %v1876 = vsel %vm1705, %v1502, 0
      %v1879 = vsel %vm1705, %v1503, 0
      %v1882 = vsel %vm1705, %v1504, 0
      %v1885 = vsel %vm1705, %v1505, 0
      %1887 = vmatprep.subr.bf16.mxu0 0
      %1888 = vmatpush1.bf16.msra.mxu0 0
      %1889 = vmatprep.subr.bf16.mxu0 0
      %1890 = vmatpush1.bf16.msra.mxu0 0
      %1891 = vmatprep.subr.bf16.mxu0 0
      %1892 = vmatpush1.bf16.msra.mxu0 0
      %1893 = vmatprep.subr.bf16.mxu0 0
      %1894 = vmatpush1.bf16.msra.mxu0 0
      %1895 = vmatprep.subr.bf16.mxu0 0
      %1896 = vmatpush1.bf16.msra.mxu0 0
      %1897 = vmatprep.subr.bf16.mxu0 0
      %1898 = vmatpush1.bf16.msra.mxu0 0
      %1899 = vmatprep.subr.bf16.mxu0 0
      %1900 = vmatpush1.bf16.msra.mxu0 0
      %1901 = vmatprep.subr.bf16.mxu0 0
      %1902 = vmatpush1.bf16.msra.mxu0 %v1873
      %1903 = vmatprep.subr.bf16.mxu0 0
      %1904 = vmatpush2.bf16.msra.mxu0 0
      %1905 = vmatprep.subr.bf16.mxu0 0
      %1906 = vmatpush2.bf16.msra.mxu0 0
      %1907 = vmatprep.subr.bf16.mxu0 0
      %1908 = vmatpush2.bf16.msra.mxu0 0
      %1909 = vmatprep.subr.bf16.mxu0 0
      %1910 = vmatpush2.bf16.msra.mxu0 0
      %1911 = vmatprep.subr.bf16.mxu0 0
      %1912 = vmatpush2.bf16.msra.mxu0 0
      %1913 = vmatprep.subr.bf16.mxu0 0
      %1914 = vmatpush2.bf16.msra.mxu0 0
      %1915 = vmatprep.subr.bf16.mxu0 0
      %1916 = vmatpush2.bf16.msra.mxu0 0
      %1917 = vmatprep.subr.bf16.mxu0 0
      %1918 = vmatpush2.bf16.msra.mxu0 0
      %1919 = vmatprep.mubr.bf16.mxu0 0
      %1920 = vmatmul.mubr.bf16.gmra.mxu0 %v1876
      %v1921 = vpop.f32.mrf.mxu0
      %v1922 = vadd.f32 0.0, %v1921
      %v1923 = vpop.f32.mrf.mxu0
      %v1924 = vpop.f32.mrf.mxu0
      %v1925 = vadd.f32 0.0, %v1924
      %v1926 = vpop.f32.mrf.mxu0
      %1927 = vmatprep.mubr.bf16.mxu0 0
      %1928 = vmatmul.mubr.bf16.gmra.mxu0 %v1879
      %v1929 = vpop.f32.mrf.mxu0
      %v1930 = vadd.f32 0.0, %v1929
      %v1931 = vpop.f32.mrf.mxu0
      %v1932 = vpop.f32.mrf.mxu0
      %v1933 = vadd.f32 0.0, %v1932
      %v1934 = vpop.f32.mrf.mxu0
      %1935 = vmatprep.mubr.bf16.mxu0 0
      %1936 = vmatmul.mubr.bf16.gmra.mxu0 %v1882
      %v1937 = vpop.f32.mrf.mxu0
      %v1938 = vadd.f32 0.0, %v1937
      %v1939 = vpop.f32.mrf.mxu0
      %v1940 = vpop.f32.mrf.mxu0
      %v1941 = vadd.f32 0.0, %v1940
      %v1942 = vpop.f32.mrf.mxu0
      %1943 = vmatprep.mubr.bf16.mxu0 0
      %1944 = vmatmul.mubr.bf16.gmra.mxu0 %v1885
      %v1945 = vpop.f32.mrf.mxu0
      %v1946 = vadd.f32 0.0, %v1945
      %v1947 = vpop.f32.mrf.mxu0
      %v1948 = vpop.f32.mrf.mxu0
      %v1949 = vadd.f32 0.0, %v1948
      %v1950 = vpop.f32.mrf.mxu0
      %1951 = vdwg.mxu0
      %v1952 = vadd.f32 %v1836, %v1922
      %v1953 = vadd.f32 %v1839, %v1925
      %v1954 = vadd.f32 %v1844, %v1930
      %v1955 = vadd.f32 %v1847, %v1933
      %v1956 = vadd.f32 %v1852, %v1938
      %v1957 = vadd.f32 %v1855, %v1941
      %v1958 = vadd.f32 %v1860, %v1946
      %v1959 = vadd.f32 %v1863, %v1949
      %v1960 = vld [vmem:[%s5] sm:$0x1]
      %v1962 = vlaneseq
      %v1963 = vshrl.u32 %v1962, 7
      %v1964 = vsub.s32 0, %v1963
      %v1965 = vrot.slane %v1960, %v1964
      %v1967 = vadd.f32 %v1952, %v1965
      %v1968 = vadd.f32 %v1953, %v1965
      %v1969 = vadd.f32 %v1954, %v1965
      %v1970 = vadd.f32 %v1955, %v1965
      %v1971 = vadd.f32 %v1956, %v1965
      %v1972 = vadd.f32 %v1957, %v1965
      %v1973 = vadd.f32 %v1958, %v1965
      %v1974 = vadd.f32 %v1959, %v1965
      %vm1975 = vcmask 261120
      %v1976 = vsel %vm1975, %v1967, 0.0
      %v1977 = vsel %vm1975, %v1968, 0.0
      %v1978 = vadd.f32 %v1976, %v1977
      %v1979 = vsel %vm1975, %v1969, 0.0
      %v1980 = vadd.f32 %v1978, %v1979
      %v1981 = vsel %vm1975, %v1970, 0.0
      %v1982 = vadd.f32 %v1980, %v1981
      %v1983 = vsel %vm1975, %v1971, 0.0
      %v1984 = vadd.f32 %v1982, %v1983
      %v1985 = vsel %vm1975, %v1972, 0.0
      %v1986 = vadd.f32 %v1984, %v1985
      %v1987 = vsel %vm1975, %v1973, 0.0
      %v1988 = vadd.f32 %v1986, %v1987
      %v1989 = vsel %vm1975, %v1974, 0.0
      %v1990 = vadd.f32 %v1988, %v1989
      %v1991 = vrot.slane %v1990, 4
      %v1992 = vadd.f32 %v1990, %v1991
      %v1993 = vrot.slane %v1992, 2
      %v1994 = vadd.f32 %v1992, %v1993
      %v1995 = vrot.slane %v1994, 1
      %v1996 = vadd.f32 %v1994, %v1995
      %v1997 = vmul.f32 %v1967, %v1967
      %v1998 = vmul.f32 %v1968, %v1968
      %v1999 = vmul.f32 %v1969, %v1969
      %v2000 = vmul.f32 %v1970, %v1970
      %v2001 = vmul.f32 %v1971, %v1971
      %v2002 = vmul.f32 %v1972, %v1972
      %v2003 = vmul.f32 %v1973, %v1973
      %v2004 = vmul.f32 %v1974, %v1974
      %v2005 = vsel %vm1975, %v1997, 0.0
      %v2006 = vsel %vm1975, %v1998, 0.0
      %v2007 = vadd.f32 %v2005, %v2006
      %v2008 = vsel %vm1975, %v1999, 0.0
      %v2009 = vadd.f32 %v2007, %v2008
      %v2010 = vsel %vm1975, %v2000, 0.0
      %v2011 = vadd.f32 %v2009, %v2010
      %v2012 = vsel %vm1975, %v2001, 0.0
      %v2013 = vadd.f32 %v2011, %v2012
      %v2014 = vsel %vm1975, %v2002, 0.0
      %v2015 = vadd.f32 %v2013, %v2014
      %v2016 = vsel %vm1975, %v2003, 0.0
      %v2017 = vadd.f32 %v2015, %v2016
      %v2018 = vsel %vm1975, %v2004, 0.0
      %v2019 = vadd.f32 %v2017, %v2018
      %v2020 = vrot.slane %v2019, 4
      %v2021 = vadd.f32 %v2019, %v2020
      %v2022 = vrot.slane %v2021, 2
      %v2023 = vadd.f32 %v2021, %v2022
      %v2024 = vrot.slane %v2023, 1
      %v2025 = vadd.f32 %v2023, %v2024
      %vm2026 = vcmask 1040384
      %v2027 = vsel %vm2026, %v1996, %v2025
      %vm2028 = vcmask 254976
      %2029 = vst.msk [vmem:[%s297] sm:$0x3] %vm2028, %v2027
      %v2030 = vpack.c.bf16 %v1968, %v1967
      %v2031 = vpack.c.bf16 %v1970, %v1969
      %v2032 = vpack.c.bf16 %v1972, %v1971
      %v2033 = vpack.c.bf16 %v1974, %v1973
      %v2038 = vunpack.c.l.b16 %v2030
      %v2039 = vunpack.c.h.b16 %v2030
      %v2040 = vunpack.c.l.b16 %v2031
      %v2041 = vunpack.c.h.b16 %v2031
      %v2042 = vunpack.c.l.b16 %v2032
      %v2043 = vunpack.c.h.b16 %v2032
      %v2044 = vunpack.c.l.b16 %v2033
      %v2045 = vunpack.c.h.b16 %v2033
      %v2046 = vpack.c.b16 %v2038, %v2038
      %v2047 = vpack.c.b16 %v2039, %v2039
      %v2048 = vpack.c.b16 %v2040, %v2040
      %v2049 = vpack.c.b16 %v2041, %v2041
      %v2050 = vpack.c.b16 %v2042, %v2042
      %v2051 = vpack.c.b16 %v2043, %v2043
      %v2052 = vpack.c.b16 %v2044, %v2044
      %v2053 = vpack.c.b16 %v2045, %v2045
      %vm2062 = vcmask 257024
      %2063 = vst.msk [vmem:[%s292] sm:$0xf] %vm2062, %v2046
      %2064 = vst.msk [vmem:[%s292 + $0x4] sm:$0xf] %vm2062, %v2047
      %2065 = vst.msk [vmem:[%s292 + $0x8] sm:$0xf] %vm2062, %v2048
      %2066 = vst.msk [vmem:[%s292 + $0xc] sm:$0xf] %vm2062, %v2049
      %2067 = vst.msk [vmem:[%s292 + $0x10] sm:$0xf] %vm2062, %v2050
      %2068 = vst.msk [vmem:[%s292 + $0x14] sm:$0xf] %vm2062, %v2051
      %2069 = vst.msk [vmem:[%s292 + $0x18] sm:$0xf] %vm2062, %v2052
      %2070 = vst.msk [vmem:[%s292 + $0x1c] sm:$0xf] %vm2062, %v2053
      %s2071 = smul.u32 2, %s19
      %p2072 = scmp.lt.s32.totalorder %s2071, 3
      %s2073 = scalar_select %p2072, %s2071, 3
      %s2074 = smul.addr %s2073, 4
      %s2075 = smul.addr %s2074, 4
      %s2076 = scalar_lea.vmem %s6, %s2075
      %p2077 = scmp.lt.s32.totalorder %s19, 1
      %s2078 = scalar_select %p2077, %s19, 1
      %s2079 = smul.addr %s2078, 2
      %s2080 = scalar_lea.vmem %s7, %s2079
      // Predicated region
      $region45: #{cnn_forward.11} parent=43 // pred_check
        %p2081 = pneg %p168
      $region46: #{cnn_forward.11} parent=43 // pred_check_branch
        %2083 = sbr.rel (%p2081) target = $region48
      $region47: #{cnn_forward.11} parent=43 // pred_region
        %s2084 = smul.u32 2, %s19
      $region48: #{cnn_forward.11} parent=43 // pred_fallthru
        _
      // Predicated region
      $region49: #{cnn_forward.11} parent=43 // pred_check
        %p2085 = pneg %p194
      $region50: #{cnn_forward.11} parent=43 // pred_check_branch
        %2087 = sbr.rel (%p2085) target = $region52
      $region51: #{cnn_forward.11} parent=43 // pred_region
        _
      $region52: #{cnn_forward.11} parent=43 // pred_fallthru
        _
    $region44: #{cnn_forward.11} parent=5 // pred_fallthru
      _
    %p2088 = scmp.le.s32.totalorder 2, %s14
    // Predicated region
    $region53: #{cnn_forward.11} parent=5 // pred_check
      %p2089 = pneg %p2088
    $region54: #{cnn_forward.11} parent=5 // pred_check_branch
      %2091 = sbr.rel (%p2089) target = $region56
    $region55: #{cnn_forward.11} parent=5 // pred_region
      %s2092 = ssub.s32 %s14, 2
      // Predicated region
      $region57: #{cnn_forward.11} parent=55 // pred_check
        %p2093 = pneg %p174
      $region58: #{cnn_forward.11} parent=55 // pred_check_branch
        %2095 = sbr.rel (%p2093) target = $region60
      $region59: #{cnn_forward.11} parent=55 // pred_region
        %s2096 = smul.u32 2, %s20
        %p2097 = scmp.lt.s32.totalorder %s2096, 3
        %s2098 = scalar_select %p2097, %s2096, 3
        %s2099 = smul.addr %s2098, 4
        %s2100 = smul.addr %s2099, 4
        %s2101 = scalar_lea.vmem %s6, %s2100
      $region60: #{cnn_forward.11} parent=55 // pred_fallthru
        _
      // Predicated region
      $region61: #{cnn_forward.11} parent=55 // pred_check
        %p2102 = pneg %p200
      $region62: #{cnn_forward.11} parent=55 // pred_check_branch
        %2104 = sbr.rel (%p2102) target = $region64
      $region63: #{cnn_forward.11} parent=55 // pred_region
        %p2105 = scmp.lt.s32.totalorder %s20, 1
        %s2106 = scalar_select %p2105, %s20, 1
        %s2107 = smul.addr %s2106, 2
        %s2108 = scalar_lea.vmem %s7, %s2107
      $region64: #{cnn_forward.11} parent=55 // pred_fallthru
        _
    $region56: #{cnn_forward.11} parent=5 // pred_fallthru
      _
  $region6: #{cnn_forward.11} parent=0 // loop_footer
    %s18 = sadd.s32 1, %s14
  $region7: #{cnn_forward.11} parent=0 // loop_footer_branch
    %13 = sbr.rel target = $region3
  $region8: #{cnn_forward.11} parent=0 // loop_exit
    _

// kernel: cnn_forward.13
$region0: #{cnn_forward.13}
  #allocation0 [shape = 'u32[]', space=smem, size = 0x4, offset = 0x4, fixed_abs, tag = 'smem constant byte address 0x4 - core index']
  #allocation1 [shape = 'u32[144,128]{1,0:T(1,128)}', space=vmem, size = 0x12000, scoped, tag = 'internal scratch']
  %s0 = inlined_call_operand.vmem [shape: f32[2,2,32], index: 0, kind: input, shape index: {}]
  %s1 = inlined_call_operand.vmem [shape: f32[1,32], index: 1, kind: input, shape index: {}]
  %s2 = inlined_call_operand.vmem [shape: f32[1,32], index: 2, kind: input, shape index: {}]
  %s3 = inlined_call_operand.vmem [shape: bf16[4,32,32], index: 3, kind: input, shape index: {}]
  %s4 = inlined_call_operand.vmem [shape: bf16[3,32,64], index: 4, kind: input, shape index: {}]
  %s5 = inlined_call_operand.vmem [shape: f32[1,64], index: 5, kind: input, shape index: {}]
  %s6 = inlined_call_operand.vmem [shape: bf16[4,16,64], index: 6, kind: output, shape index: {0}]
  %s7 = inlined_call_operand.vmem [shape: f32[2,2,64], index: 7, kind: output, shape index: {1}]
  %8 = xla_tuple %s6, %s7
  %s9 = sld [smem:[#allocation0]]
  $region65: #{cnn_forward.13} parent=0
    _
  %s11 = ssub.s32 1, %s9
  %s12 = scalar_select 0, %s11, %s9
  loop: start=0, step=1, limit=4
  $region2: #{cnn_forward.13} parent=0 // loop_pre_header
    _
  $region3: #{cnn_forward.13} parent=0 // loop_header
    %s14 = sphi 0, %s18
    %p15 = scmp.ge.s32.totalorder %s14, 4
    %s22 = sphi 0, %s22
    %s24 = sphi 0, %s22
    %s25 = sphi 0, %s24
    %s39 = sphi 0, %s25
    %s43 = sphi 0, %s43
    %s45 = sphi 0, %s43
    %s46 = sphi 0, %s45
    %s60 = sphi 0, %s46
    %s64 = sphi 0, %s64
    %s66 = sphi 0, %s64
    %s67 = sphi 0, %s66
    %s81 = sphi 0, %s67
    %s87 = sphi 0, %s89
    %s90 = sphi 0, %s87
    %s91 = sphi 0, %s90
    %s107 = sphi 0, %s91
    %s111 = sphi 0, %s111
    %s113 = sphi 0, %s111
    %s114 = sphi 0, %s113
    %s128 = sphi 0, %s114
    %s132 = sphi 0, %s132
    %s134 = sphi 0, %s132
    %s135 = sphi 0, %s134
    %s149 = sphi 0, %s135
    %s155 = sphi 0, %s157
    %s158 = sphi 0, %s155
    %s159 = sphi 0, %s158
    %s175 = sphi 0, %s159
    %s181 = sphi 0, %s183
    %s184 = sphi 0, %s181
    %s185 = sphi 0, %s184
    %s201 = sphi 0, %s185
  $region4: #{cnn_forward.13} parent=0 // loop_header_branch
    %17 = sbr.rel (%p15) target = $region8
  $region5: #{cnn_forward.13} parent=0 // loop_body
    %s19 = ssub.s32 %s14, 1
    %s20 = ssub.s32 %s14, 2
    %s21 = sadd.s32 %s14, 1
    %s23 = sadd.s32 %s22, 1
    %p26 = scmp.eq.s32.totalorder %s14, 1
    %p27 = scmp.ne.s32.totalorder %s22, %s24
    %p28 = scmp.eq.s32.totalorder %s14, 0
    %p29 = por %p27, %p28
    %p30 = scmp.ne.s32.totalorder %s22, %s24
    %p31 = scmp.eq.s32.totalorder %s19, 1
    %p32 = por %p30, %p31
    %p33 = scmp.ne.s32.totalorder %s24, %s25
    %p34 = scmp.eq.s32.totalorder %s19, 0
    %p35 = por %p33, %p34
    %p36 = scmp.ne.s32.totalorder %s24, %s25
    %p37 = scmp.eq.s32.totalorder %s20, 1
    %p38 = por %p36, %p37
    %p40 = scmp.ne.s32.totalorder %s25, %s39
    %p41 = scmp.eq.s32.totalorder %s20, 0
    %p42 = por %p40, %p41
    %s44 = sadd.s32 %s43, 1
    %p47 = scmp.eq.s32.totalorder %s14, 1
    %p48 = scmp.ne.s32.totalorder %s43, %s45
    %p49 = scmp.eq.s32.totalorder %s14, 0
    %p50 = por %p48, %p49
    %p51 = scmp.ne.s32.totalorder %s43, %s45
    %p52 = scmp.eq.s32.totalorder %s19, 1
    %p53 = por %p51, %p52
    %p54 = scmp.ne.s32.totalorder %s45, %s46
    %p55 = scmp.eq.s32.totalorder %s19, 0
    %p56 = por %p54, %p55
    %p57 = scmp.ne.s32.totalorder %s45, %s46
    %p58 = scmp.eq.s32.totalorder %s20, 1
    %p59 = por %p57, %p58
    %p61 = scmp.ne.s32.totalorder %s46, %s60
    %p62 = scmp.eq.s32.totalorder %s20, 0
    %p63 = por %p61, %p62
    %s65 = sadd.s32 %s64, 1
    %p68 = scmp.eq.s32.totalorder %s14, 1
    %p69 = scmp.ne.s32.totalorder %s64, %s66
    %p70 = scmp.eq.s32.totalorder %s14, 0
    %p71 = por %p69, %p70
    %p72 = scmp.ne.s32.totalorder %s64, %s66
    %p73 = scmp.eq.s32.totalorder %s19, 1
    %p74 = por %p72, %p73
    %p75 = scmp.ne.s32.totalorder %s66, %s67
    %p76 = scmp.eq.s32.totalorder %s19, 0
    %p77 = por %p75, %p76
    %p78 = scmp.ne.s32.totalorder %s66, %s67
    %p79 = scmp.eq.s32.totalorder %s20, 1
    %p80 = por %p78, %p79
    %p82 = scmp.ne.s32.totalorder %s67, %s81
    %p83 = scmp.eq.s32.totalorder %s20, 0
    %p84 = por %p82, %p83
    %s85 = ssub.s32 %s14, %s21
    %p86 = scmp.eq.s32.totalorder %s85, 0
    %s88 = sadd.s32 %s87, 1
    %s89 = scalar_select %p86, %s87, %s88
    %p92 = pneg %p86
    %p93 = scmp.eq.s32.totalorder %s14, 1
    %p94 = por %p92, %p93
    %p95 = scmp.ne.s32.totalorder %s87, %s90
    %p96 = scmp.eq.s32.totalorder %s14, 0
    %p97 = por %p95, %p96
    %p98 = scmp.ne.s32.totalorder %s87, %s90
    %p99 = scmp.eq.s32.totalorder %s19, 1
    %p100 = por %p98, %p99
    %p101 = scmp.ne.s32.totalorder %s90, %s91
    %p102 = scmp.eq.s32.totalorder %s19, 0
    %p103 = por %p101, %p102
    %p104 = scmp.ne.s32.totalorder %s90, %s91
    %p105 = scmp.eq.s32.totalorder %s20, 1
    %p106 = por %p104, %p105
    %p108 = scmp.ne.s32.totalorder %s91, %s107
    %p109 = scmp.eq.s32.totalorder %s20, 0
    %p110 = por %p108, %p109
    %s112 = sadd.s32 %s111, 1
    %p115 = scmp.eq.s32.totalorder %s14, 1
    %p116 = scmp.ne.s32.totalorder %s111, %s113
    %p117 = scmp.eq.s32.totalorder %s14, 0
    %p118 = por %p116, %p117
    %p119 = scmp.ne.s32.totalorder %s111, %s113
    %p120 = scmp.eq.s32.totalorder %s19, 1
    %p121 = por %p119, %p120
    %p122 = scmp.ne.s32.totalorder %s113, %s114
    %p123 = scmp.eq.s32.totalorder %s19, 0
    %p124 = por %p122, %p123
    %p125 = scmp.ne.s32.totalorder %s113, %s114
    %p126 = scmp.eq.s32.totalorder %s20, 1
    %p127 = por %p125, %p126
    %p129 = scmp.ne.s32.totalorder %s114, %s128
    %p130 = scmp.eq.s32.totalorder %s20, 0
    %p131 = por %p129, %p130
    %s133 = sadd.s32 %s132, 1
    %p136 = scmp.eq.s32.totalorder %s14, 1
    %p137 = scmp.ne.s32.totalorder %s132, %s134
    %p138 = scmp.eq.s32.totalorder %s14, 0
    %p139 = por %p137, %p138
    %p140 = scmp.ne.s32.totalorder %s132, %s134
    %p141 = scmp.eq.s32.totalorder %s19, 1
    %p142 = por %p140, %p141
    %p143 = scmp.ne.s32.totalorder %s134, %s135
    %p144 = scmp.eq.s32.totalorder %s19, 0
    %p145 = por %p143, %p144
    %p146 = scmp.ne.s32.totalorder %s134, %s135
    %p147 = scmp.eq.s32.totalorder %s20, 1
    %p148 = por %p146, %p147
    %p150 = scmp.ne.s32.totalorder %s135, %s149
    %p151 = scmp.eq.s32.totalorder %s20, 0
    %p152 = por %p150, %p151
    %s153 = ssub.s32 %s14, %s21
    %p154 = scmp.eq.s32.totalorder %s153, 0
    %s156 = sadd.s32 %s155, 1
    %s157 = scalar_select %p154, %s155, %s156
    %p160 = pneg %p154
    %p161 = scmp.eq.s32.totalorder %s14, 1
    %p162 = por %p160, %p161
    %p163 = scmp.ne.s32.totalorder %s155, %s158
    %p164 = scmp.eq.s32.totalorder %s14, 0
    %p165 = por %p163, %p164
    %p166 = scmp.ne.s32.totalorder %s155, %s158
    %p167 = scmp.eq.s32.totalorder %s19, 1
    %p168 = por %p166, %p167
    %p169 = scmp.ne.s32.totalorder %s158, %s159
    %p170 = scmp.eq.s32.totalorder %s19, 0
    %p171 = por %p169, %p170
    %p172 = scmp.ne.s32.totalorder %s158, %s159
    %p173 = scmp.eq.s32.totalorder %s20, 1
    %p174 = por %p172, %p173
    %p176 = scmp.ne.s32.totalorder %s159, %s175
    %p177 = scmp.eq.s32.totalorder %s20, 0
    %p178 = por %p176, %p177
    %s179 = ssub.s32 %s14, %s21
    %p180 = scmp.eq.s32.totalorder %s179, 0
    %s182 = sadd.s32 %s181, 1
    %s183 = scalar_select %p180, %s181, %s182
    %p186 = pneg %p180
    %p187 = scmp.eq.s32.totalorder %s14, 1
    %p188 = por %p186, %p187
    %p189 = scmp.ne.s32.totalorder %s181, %s184
    %p190 = scmp.eq.s32.totalorder %s14, 0
    %p191 = por %p189, %p190
    %p192 = scmp.ne.s32.totalorder %s181, %s184
    %p193 = scmp.eq.s32.totalorder %s19, 1
    %p194 = por %p192, %p193
    %p195 = scmp.ne.s32.totalorder %s184, %s185
    %p196 = scmp.eq.s32.totalorder %s19, 0
    %p197 = por %p195, %p196
    %p198 = scmp.ne.s32.totalorder %s184, %s185
    %p199 = scmp.eq.s32.totalorder %s20, 1
    %p200 = por %p198, %p199
    %p202 = scmp.ne.s32.totalorder %s185, %s201
    %p203 = scmp.eq.s32.totalorder %s20, 0
    %p204 = por %p202, %p203
    %p205 = scmp.le.s32.totalorder 1, %s14
    %p206 = scmp.lt.s32.totalorder %s14, 3
    %p207 = pnand %p205, %p206
    %p208 = pneg %p207
    // Predicated region
    $region9: #{cnn_forward.13} parent=5 // pred_check
      _
    $region10: #{cnn_forward.13} parent=5 // pred_check_branch
      %210 = sbr.rel (%p207) target = $region12
    $region11: #{cnn_forward.13} parent=5 // pred_region
      %s211 = ssub.s32 %s14, 1
      // Predicated region
      $region13: #{cnn_forward.13} parent=11 // pred_check
        %p212 = pneg %p35
      $region14: #{cnn_forward.13} parent=11 // pred_check_branch
        %214 = sbr.rel (%p212) target = $region16
      $region15: #{cnn_forward.13} parent=11 // pred_region
        _
      $region16: #{cnn_forward.13} parent=11 // pred_fallthru
        _
      // Predicated region
      $region17: #{cnn_forward.13} parent=11 // pred_check
        %p215 = pneg %p56
      $region18: #{cnn_forward.13} parent=11 // pred_check_branch
        %217 = sbr.rel (%p215) target = $region20
      $region19: #{cnn_forward.13} parent=11 // pred_region
        _
      $region20: #{cnn_forward.13} parent=11 // pred_fallthru
        _
      // Predicated region
      $region21: #{cnn_forward.13} parent=11 // pred_check
        %p218 = pneg %p77
      $region22: #{cnn_forward.13} parent=11 // pred_check_branch
        %220 = sbr.rel (%p218) target = $region24
      $region23: #{cnn_forward.13} parent=11 // pred_region
        _
      $region24: #{cnn_forward.13} parent=11 // pred_fallthru
        _
      // Predicated region
      $region25: #{cnn_forward.13} parent=11 // pred_check
        %p221 = pneg %p124
      $region26: #{cnn_forward.13} parent=11 // pred_check_branch
        %223 = sbr.rel (%p221) target = $region28
      $region27: #{cnn_forward.13} parent=11 // pred_region
        _
      $region28: #{cnn_forward.13} parent=11 // pred_fallthru
        _
      // Predicated region
      $region29: #{cnn_forward.13} parent=11 // pred_check
        %p224 = pneg %p145
      $region30: #{cnn_forward.13} parent=11 // pred_check_branch
        %226 = sbr.rel (%p224) target = $region32
      $region31: #{cnn_forward.13} parent=11 // pred_region
        _
      $region32: #{cnn_forward.13} parent=11 // pred_fallthru
        _
    $region12: #{cnn_forward.13} parent=5 // pred_fallthru
      _
    %p227 = scmp.lt.s32.totalorder %s14, 2
    // Predicated region
    $region33: #{cnn_forward.13} parent=5 // pred_check
      %p228 = pneg %p227
    $region34: #{cnn_forward.13} parent=5 // pred_check_branch
      %230 = sbr.rel (%p228) target = $region36
    $region35: #{cnn_forward.13} parent=5 // pred_region
      // Predicated region
      $region37: #{cnn_forward.13} parent=35 // pred_check
        %p231 = pneg %p97
      $region38: #{cnn_forward.13} parent=35 // pred_check_branch
        %233 = sbr.rel (%p231) target = $region40
      $region39: #{cnn_forward.13} parent=35 // pred_region
        %s234 = smul.u32 2, %s14
        %p235 = scmp.lt.s32.totalorder %s234, 3
        %s236 = scalar_select %p235, %s234, 3
        %s237 = smul.addr %s236, 4
        %s238 = smul.addr %s237, 4
        %s239 = scalar_lea.vmem %s3, %s238
        %s240 = smul.u32 2, %s14
      $region40: #{cnn_forward.13} parent=35 // pred_fallthru
        _
    $region36: #{cnn_forward.13} parent=5 // pred_fallthru
      _
    %p241 = scmp.le.s32.totalorder 1, %s14
    %p242 = scmp.lt.s32.totalorder %s14, 3
    %p243 = pnand %p241, %p242
    %p244 = pneg %p243
    // Predicated region
    $region41: #{cnn_forward.13} parent=5 // pred_check
      _
    $region42: #{cnn_forward.13} parent=5 // pred_check_branch
      %246 = sbr.rel (%p243) target = $region44
    $region43: #{cnn_forward.13} parent=5 // pred_region
      %s247 = ssub.s32 %s14, 1
      %p248 = pneg %p35
      %p249 = pneg %p32
      %p250 = pneg %p56
      %p251 = pneg %p53
      %p252 = pneg %p77
      %p253 = pneg %p74
      %s254 = smul.u32 2, %s19
      %p255 = scmp.lt.s32.totalorder %s254, 3
      %s256 = scalar_select %p255, %s254, 3
      %s257 = smul.addr %s256, 4
      %s258 = smul.addr %s257, 4
      %s259 = scalar_lea.vmem %s3, %s258
      %p260 = pneg %p103
      %p261 = pneg %p100
      %p262 = pneg %p124
      %p263 = pneg %p121
      %p264 = pneg %p145
      %p265 = pneg %p142
      %p266 = pneg %p171
      %p267 = pneg %p168
      %s268 = smul.u32 2, %s19
      %p269 = scmp.lt.s32.totalorder %s268, 3
      %s270 = scalar_select %p269, %s268, 3
      %s271 = smul.addr %s270, 2
      %s272 = smul.addr %s271, 4
      %s273 = scalar_lea.vmem %s6, %s272
      %p274 = pneg %p197
      %p275 = pneg %p194
      %p276 = scmp.lt.s32.totalorder %s19, 1
      %s277 = scalar_select %p276, %s19, 1
      %s278 = smul.addr %s277, 2
      %s279 = scalar_lea.vmem %s7, %s278
      %s280 = smul.u32 2, %s19
      %p281 = scmp.lt.s32.totalorder %s280, 3
      %s282 = scalar_select %p281, %s280, 3
      %s283 = smul.addr %s282, 4
      %s284 = smul.addr %s283, 4
      %s285 = scalar_lea.vmem %s3, %s284
      %s286 = smul.u32 2, %s19
      %s287 = smul.u32 2, %s19
      %p288 = scmp.lt.s32.totalorder %s287, 3
      %s289 = scalar_select %p288, %s287, 3
      %s290 = smul.addr %s289, 2
      %s291 = smul.addr %s290, 4
      %s292 = scalar_lea.vmem %s6, %s291
      %s293 = smul.u32 2, %s19
      %p294 = scmp.lt.s32.totalorder %s19, 1
      %s295 = scalar_select %p294, %s19, 1
      %s296 = smul.addr %s295, 2
      %s297 = scalar_lea.vmem %s7, %s296
      %v299 = vld [vmem:[%s0] sm:$0x3]
      %v300 = vld [vmem:[%s0 + $0x2] sm:$0x3]
      %vm301 = vcmask 254976
      %v302 = vsel %vm301, %v299, 0.0
      %v303 = vsel %vm301, %v300, 0.0
      %v304 = vadd.f32 %v302, %v303
      %v305 = vld [vmem:[%s1] sm:$0x1]
      %v306 = vld [vmem:[%s2] sm:$0x1]
      %v307 = vmul.f32 %v304, 0.0078125
      %v308 = vmul.f32 %v307, %v307
      %v310 = vrot.slane %v308, 7
      %v312 = vsub.f32 %v307, %v310
      %v313 = vmax.f32 %v312, 0.0
      %v314 = vadd.f32 %v313, 1e-05
      %v315 = vrsqrt.pop %v314
      %v318 = vunpack.c.l.s4 1966171168
      %v319 = vunpack.c.0.s8 %v318
      %v320 = vlaneseq
      %v321 = vshrl.u32 %v320, 7
      %v322 = vsub.s32 %v319, %v321
      %v323 = vrot.slane %v315, %v322
      %v324 = vcombine.high %v323, %v323
      %v326 = vunpack.c.l.s4 1966171168
      %v327 = vunpack.c.0.s8 %v326
      %v328 = vlaneseq
      %v329 = vshrl.u32 %v328, 7
      %v330 = vsub.s32 %v327, %v329
      %v331 = vrot.slane %v324, %v330
      %v333 = vmul.f32 %v305, %v331
      %v334 = vmul.f32 %v307, %v333
      %v335 = vsub.f32 %v306, %v334
      %v336 = vld [vmem:[%s285] sm:$0xf]
      %v337 = vld [vmem:[%s285 + $0x4] sm:$0xf]
      %v338 = vld [vmem:[%s285 + $0x8] sm:$0xf]
      %v339 = vld [vmem:[%s285 + $0xc] sm:$0xf]
      %v340 = vld [vmem:[%s285 + $0x10] sm:$0xf]
      %v341 = vld [vmem:[%s285 + $0x14] sm:$0xf]
      %v342 = vld [vmem:[%s285 + $0x18] sm:$0xf]
      %v343 = vld [vmem:[%s285 + $0x1c] sm:$0xf]
      %v344 = vunpack.c.l.bf16 %v336
      %v345 = vunpack.c.l.bf16 %v337
      %v346 = vunpack.c.l.bf16 %v338
      %v347 = vunpack.c.l.bf16 %v339
      %v348 = vunpack.c.l.bf16 %v340
      %v349 = vunpack.c.l.bf16 %v341
      %v350 = vunpack.c.l.bf16 %v342
      %v351 = vunpack.c.l.bf16 %v343
      %v353 = vlaneseq
      %v354 = vshrl.u32 %v353, 7
      %v355 = vsub.s32 0, %v354
      %v356 = vrot.slane %v333, %v355
      %v358 = vmul.f32 %v356, %v344
      %v359 = vmul.f32 %v356, %v345
      %v360 = vmul.f32 %v356, %v346
      %v361 = vmul.f32 %v356, %v347
      %v362 = vmul.f32 %v356, %v348
      %v363 = vmul.f32 %v356, %v349
      %v364 = vmul.f32 %v356, %v350
      %v365 = vmul.f32 %v356, %v351
      %v367 = vlaneseq
      %v368 = vshrl.u32 %v367, 7
      %v369 = vsub.s32 0, %v368
      %v370 = vrot.slane %v335, %v369
      %v372 = vadd.f32 %v358, %v370
      %v373 = vadd.f32 %v359, %v370
      %v374 = vadd.f32 %v360, %v370
      %v375 = vadd.f32 %v361, %v370
      %v376 = vadd.f32 %v362, %v370
      %v377 = vadd.f32 %v363, %v370
      %v378 = vadd.f32 %v364, %v370
      %v379 = vadd.f32 %v365, %v370
      %v380 = vmax.f32 %v372, 0.0
      %v381 = vmax.f32 %v373, 0.0
      %v382 = vmax.f32 %v374, 0.0
      %v383 = vmax.f32 %v375, 0.0
      %v384 = vmax.f32 %v376, 0.0
      %v385 = vmax.f32 %v377, 0.0
      %v386 = vmax.f32 %v378, 0.0
      %v387 = vmax.f32 %v379, 0.0
      %v396 = vcombine.high %v380, %v380
      %v398 = vunpack.c.l.s4 1983009808
      %v399 = vunpack.c.0.s8 %v398
      %v400 = vlaneseq
      %v401 = vshrl.u32 %v400, 7
      %v402 = vsub.s32 %v399, %v401
      %v403 = vrot.slane %v380, %v402
      %v405 = vunpack.c.l.s4 1983009808
      %v406 = vunpack.c.0.s8 %v405
      %v407 = vlaneseq
      %v408 = vshrl.u32 %v407, 7
      %v409 = vsub.s32 %v406, %v408
      %v410 = vrot.slane %v396, %v409
      %v411 = vcombine.high %v403, %v403
      %v412 = vcombine.high %v410, %v410
      %v413 = vcombine.high %v381, %v381
      %v415 = vunpack.c.l.s4 1983009808
      %v416 = vunpack.c.0.s8 %v415
      %v417 = vlaneseq
      %v418 = vshrl.u32 %v417, 7
      %v419 = vsub.s32 %v416, %v418
      %v420 = vrot.slane %v381, %v419
      %v422 = vunpack.c.l.s4 1983009808
      %v423 = vunpack.c.0.s8 %v422
      %v424 = vlaneseq
      %v425 = vshrl.u32 %v424, 7
      %v426 = vsub.s32 %v423, %v425
      %v427 = vrot.slane %v413, %v426
      %v428 = vcombine.high %v420, %v420
      %v429 = vcombine.high %v427, %v427
      %v430 = vcombine.high %v382, %v382
      %v432 = vunpack.c.l.s4 1983009808
      %v433 = vunpack.c.0.s8 %v432
      %v434 = vlaneseq
      %v435 = vshrl.u32 %v434, 7
      %v436 = vsub.s32 %v433, %v435
      %v437 = vrot.slane %v382, %v436
      %v439 = vunpack.c.l.s4 1983009808
      %v440 = vunpack.c.0.s8 %v439
      %v441 = vlaneseq
      %v442 = vshrl.u32 %v441, 7
      %v443 = vsub.s32 %v440, %v442
      %v444 = vrot.slane %v430, %v443
      %v445 = vcombine.high %v437, %v437
      %v446 = vcombine.high %v444, %v444
      %v447 = vcombine.high %v383, %v383
      %v449 = vunpack.c.l.s4 1983009808
      %v450 = vunpack.c.0.s8 %v449
      %v451 = vlaneseq
      %v452 = vshrl.u32 %v451, 7
      %v453 = vsub.s32 %v450, %v452
      %v454 = vrot.slane %v383, %v453
      %v456 = vunpack.c.l.s4 1983009808
      %v457 = vunpack.c.0.s8 %v456
      %v458 = vlaneseq
      %v459 = vshrl.u32 %v458, 7
      %v460 = vsub.s32 %v457, %v459
      %v461 = vrot.slane %v447, %v460
      %v462 = vcombine.high %v454, %v454
      %v463 = vcombine.high %v461, %v461
      %v464 = vcombine.high %v384, %v384
      %v466 = vunpack.c.l.s4 1983009808
      %v467 = vunpack.c.0.s8 %v466
      %v468 = vlaneseq
      %v469 = vshrl.u32 %v468, 7
      %v470 = vsub.s32 %v467, %v469
      %v471 = vrot.slane %v384, %v470
      %v473 = vunpack.c.l.s4 1983009808
      %v474 = vunpack.c.0.s8 %v473
      %v475 = vlaneseq
      %v476 = vshrl.u32 %v475, 7
      %v477 = vsub.s32 %v474, %v476
      %v478 = vrot.slane %v464, %v477
      %v479 = vcombine.high %v471, %v471
      %v480 = vcombine.high %v478, %v478
      %v481 = vcombine.high %v385, %v385
      %v483 = vunpack.c.l.s4 1983009808
      %v484 = vunpack.c.0.s8 %v483
      %v485 = vlaneseq
      %v486 = vshrl.u32 %v485, 7
      %v487 = vsub.s32 %v484, %v486
      %v488 = vrot.slane %v385, %v487
      %v490 = vunpack.c.l.s4 1983009808
      %v491 = vunpack.c.0.s8 %v490
      %v492 = vlaneseq
      %v493 = vshrl.u32 %v492, 7
      %v494 = vsub.s32 %v491, %v493
      %v495 = vrot.slane %v481, %v494
      %v496 = vcombine.high %v488, %v488
      %v497 = vcombine.high %v495, %v495
      %v498 = vcombine.high %v386, %v386
      %v500 = vunpack.c.l.s4 1983009808
      %v501 = vunpack.c.0.s8 %v500
      %v502 = vlaneseq
      %v503 = vshrl.u32 %v502, 7
      %v504 = vsub.s32 %v501, %v503
      %v505 = vrot.slane %v386, %v504
      %v507 = vunpack.c.l.s4 1983009808
      %v508 = vunpack.c.0.s8 %v507
      %v509 = vlaneseq
      %v510 = vshrl.u32 %v509, 7
      %v511 = vsub.s32 %v508, %v510
      %v512 = vrot.slane %v498, %v511
      %v513 = vcombine.high %v505, %v505
      %v514 = vcombine.high %v512, %v512
      %v515 = vcombine.high %v387, %v387
      %v517 = vunpack.c.l.s4 1983009808
      %v518 = vunpack.c.0.s8 %v517
      %v519 = vlaneseq
      %v520 = vshrl.u32 %v519, 7
      %v521 = vsub.s32 %v518, %v520
      %v522 = vrot.slane %v387, %v521
      %v524 = vunpack.c.l.s4 1983009808
      %v525 = vunpack.c.0.s8 %v524
      %v526 = vlaneseq
      %v527 = vshrl.u32 %v526, 7
      %v528 = vsub.s32 %v525, %v527
      %v529 = vrot.slane %v515, %v528
      %v530 = vcombine.high %v522, %v522
      %v531 = vcombine.high %v529, %v529
      %v564 = vsel %vm301, %v403, -inf
      %v565 = vrot.slane %v564, 4
      %v566 = vmax.f32 %v564, %v565
      %v567 = vrot.slane %v566, 2
      %v568 = vmax.f32 %v566, %v567
      %v569 = vrot.slane %v568, 1
      %v570 = vmax.f32 %v568, %v569
      %v571 = vsel %vm301, %v411, -inf
      %v572 = vrot.slane %v571, 4
      %v573 = vmax.f32 %v571, %v572
      %v574 = vrot.slane %v573, 2
      %v575 = vmax.f32 %v573, %v574
      %v576 = vrot.slane %v575, 1
      %v577 = vmax.f32 %v575, %v576
      %v578 = vsel %vm301, %v410, -inf
      %v579 = vrot.slane %v578, 4
      %v580 = vmax.f32 %v578, %v579
      %v581 = vrot.slane %v580, 2
      %v582 = vmax.f32 %v580, %v581
      %v583 = vrot.slane %v582, 1
      %v584 = vmax.f32 %v582, %v583
      %v585 = vsel %vm301, %v412, -inf
      %v586 = vrot.slane %v585, 4
      %v587 = vmax.f32 %v585, %v586
      %v588 = vrot.slane %v587, 2
      %v589 = vmax.f32 %v587, %v588
      %v590 = vrot.slane %v589, 1
      %v591 = vmax.f32 %v589, %v590
      %v592 = vsel %vm301, %v420, -inf
      %v593 = vrot.slane %v592, 4
      %v594 = vmax.f32 %v592, %v593
      %v595 = vrot.slane %v594, 2
      %v596 = vmax.f32 %v594, %v595
      %v597 = vrot.slane %v596, 1
      %v598 = vmax.f32 %v596, %v597
      %v599 = vsel %vm301, %v428, -inf
      %v600 = vrot.slane %v599, 4
      %v601 = vmax.f32 %v599, %v600
      %v602 = vrot.slane %v601, 2
      %v603 = vmax.f32 %v601, %v602
      %v604 = vrot.slane %v603, 1
      %v605 = vmax.f32 %v603, %v604
      %v606 = vsel %vm301, %v427, -inf
      %v607 = vrot.slane %v606, 4
      %v608 = vmax.f32 %v606, %v607
      %v609 = vrot.slane %v608, 2
      %v610 = vmax.f32 %v608, %v609
      %v611 = vrot.slane %v610, 1
      %v612 = vmax.f32 %v610, %v611
      %v613 = vsel %vm301, %v429, -inf
      %v614 = vrot.slane %v613, 4
      %v615 = vmax.f32 %v613, %v614
      %v616 = vrot.slane %v615, 2
      %v617 = vmax.f32 %v615, %v616
      %v618 = vrot.slane %v617, 1
      %v619 = vmax.f32 %v617, %v618
      %v620 = vsel %vm301, %v437, -inf
      %v621 = vrot.slane %v620, 4
      %v622 = vmax.f32 %v620, %v621
      %v623 = vrot.slane %v622, 2
      %v624 = vmax.f32 %v622, %v623
      %v625 = vrot.slane %v624, 1
      %v626 = vmax.f32 %v624, %v625
      %v627 = vsel %vm301, %v445, -inf
      %v628 = vrot.slane %v627, 4
      %v629 = vmax.f32 %v627, %v628
      %v630 = vrot.slane %v629, 2
      %v631 = vmax.f32 %v629, %v630
      %v632 = vrot.slane %v631, 1
      %v633 = vmax.f32 %v631, %v632
      %v634 = vsel %vm301, %v444, -inf
      %v635 = vrot.slane %v634, 4
      %v636 = vmax.f32 %v634, %v635
      %v637 = vrot.slane %v636, 2
      %v638 = vmax.f32 %v636, %v637
      %v639 = vrot.slane %v638, 1
      %v640 = vmax.f32 %v638, %v639
      %v641 = vsel %vm301, %v446, -inf
      %v642 = vrot.slane %v641, 4
      %v643 = vmax.f32 %v641, %v642
      %v644 = vrot.slane %v643, 2
      %v645 = vmax.f32 %v643, %v644
      %v646 = vrot.slane %v645, 1
      %v647 = vmax.f32 %v645, %v646
      %v648 = vsel %vm301, %v454, -inf
      %v649 = vrot.slane %v648, 4
      %v650 = vmax.f32 %v648, %v649
      %v651 = vrot.slane %v650, 2
      %v652 = vmax.f32 %v650, %v651
      %v653 = vrot.slane %v652, 1
      %v654 = vmax.f32 %v652, %v653
      %v655 = vsel %vm301, %v462, -inf
      %v656 = vrot.slane %v655, 4
      %v657 = vmax.f32 %v655, %v656
      %v658 = vrot.slane %v657, 2
      %v659 = vmax.f32 %v657, %v658
      %v660 = vrot.slane %v659, 1
      %v661 = vmax.f32 %v659, %v660
      %v662 = vsel %vm301, %v461, -inf
      %v663 = vrot.slane %v662, 4
      %v664 = vmax.f32 %v662, %v663
      %v665 = vrot.slane %v664, 2
      %v666 = vmax.f32 %v664, %v665
      %v667 = vrot.slane %v666, 1
      %v668 = vmax.f32 %v666, %v667
      %v669 = vsel %vm301, %v463, -inf
      %v670 = vrot.slane %v669, 4
      %v671 = vmax.f32 %v669, %v670
      %v672 = vrot.slane %v671, 2
      %v673 = vmax.f32 %v671, %v672
      %v674 = vrot.slane %v673, 1
      %v675 = vmax.f32 %v673, %v674
      %v676 = vsel %vm301, %v471, -inf
      %v677 = vrot.slane %v676, 4
      %v678 = vmax.f32 %v676, %v677
      %v679 = vrot.slane %v678, 2
      %v680 = vmax.f32 %v678, %v679
      %v681 = vrot.slane %v680, 1
      %v682 = vmax.f32 %v680, %v681
      %v683 = vsel %vm301, %v479, -inf
      %v684 = vrot.slane %v683, 4
      %v685 = vmax.f32 %v683, %v684
      %v686 = vrot.slane %v685, 2
      %v687 = vmax.f32 %v685, %v686
      %v688 = vrot.slane %v687, 1
      %v689 = vmax.f32 %v687, %v688
      %v690 = vsel %vm301, %v478, -inf
      %v691 = vrot.slane %v690, 4
      %v692 = vmax.f32 %v690, %v691
      %v693 = vrot.slane %v692, 2
      %v694 = vmax.f32 %v692, %v693
      %v695 = vrot.slane %v694, 1
      %v696 = vmax.f32 %v694, %v695
      %v697 = vsel %vm301, %v480, -inf
      %v698 = vrot.slane %v697, 4
      %v699 = vmax.f32 %v697, %v698
      %v700 = vrot.slane %v699, 2
      %v701 = vmax.f32 %v699, %v700
      %v702 = vrot.slane %v701, 1
      %v703 = vmax.f32 %v701, %v702
      %v704 = vsel %vm301, %v488, -inf
      %v705 = vrot.slane %v704, 4
      %v706 = vmax.f32 %v704, %v705
      %v707 = vrot.slane %v706, 2
      %v708 = vmax.f32 %v706, %v707
      %v709 = vrot.slane %v708, 1
      %v710 = vmax.f32 %v708, %v709
      %v711 = vsel %vm301, %v496, -inf
      %v712 = vrot.slane %v711, 4
      %v713 = vmax.f32 %v711, %v712
      %v714 = vrot.slane %v713, 2
      %v715 = vmax.f32 %v713, %v714
      %v716 = vrot.slane %v715, 1
      %v717 = vmax.f32 %v715, %v716
      %v718 = vsel %vm301, %v495, -inf
      %v719 = vrot.slane %v718, 4
      %v720 = vmax.f32 %v718, %v719
      %v721 = vrot.slane %v720, 2
      %v722 = vmax.f32 %v720, %v721
      %v723 = vrot.slane %v722, 1
      %v724 = vmax.f32 %v722, %v723
      %v725 = vsel %vm301, %v497, -inf
      %v726 = vrot.slane %v725, 4
      %v727 = vmax.f32 %v725, %v726
      %v728 = vrot.slane %v727, 2
      %v729 = vmax.f32 %v727, %v728
      %v730 = vrot.slane %v729, 1
      %v731 = vmax.f32 %v729, %v730
      %v732 = vsel %vm301, %v505, -inf
      %v733 = vrot.slane %v732, 4
      %v734 = vmax.f32 %v732, %v733
      %v735 = vrot.slane %v734, 2
      %v736 = vmax.f32 %v734, %v735
      %v737 = vrot.slane %v736, 1
      %v738 = vmax.f32 %v736, %v737
      %v739 = vsel %vm301, %v513, -inf
      %v740 = vrot.slane %v739, 4
      %v741 = vmax.f32 %v739, %v740
      %v742 = vrot.slane %v741, 2
      %v743 = vmax.f32 %v741, %v742
      %v744 = vrot.slane %v743, 1
      %v745 = vmax.f32 %v743, %v744
      %v746 = vsel %vm301, %v512, -inf
      %v747 = vrot.slane %v746, 4
      %v748 = vmax.f32 %v746, %v747
      %v749 = vrot.slane %v748, 2
      %v750 = vmax.f32 %v748, %v749
      %v751 = vrot.slane %v750, 1
      %v752 = vmax.f32 %v750, %v751
      %v753 = vsel %vm301, %v514, -inf
      %v754 = vrot.slane %v753, 4
      %v755 = vmax.f32 %v753, %v754
      %v756 = vrot.slane %v755, 2
      %v757 = vmax.f32 %v755, %v756
      %v758 = vrot.slane %v757, 1
      %v759 = vmax.f32 %v757, %v758
      %v760 = vsel %vm301, %v522, -inf
      %v761 = vrot.slane %v760, 4
      %v762 = vmax.f32 %v760, %v761
      %v763 = vrot.slane %v762, 2
      %v764 = vmax.f32 %v762, %v763
      %v765 = vrot.slane %v764, 1
      %v766 = vmax.f32 %v764, %v765
      %v767 = vsel %vm301, %v530, -inf
      %v768 = vrot.slane %v767, 4
      %v769 = vmax.f32 %v767, %v768
      %v770 = vrot.slane %v769, 2
      %v771 = vmax.f32 %v769, %v770
      %v772 = vrot.slane %v771, 1
      %v773 = vmax.f32 %v771, %v772
      %v774 = vsel %vm301, %v529, -inf
      %v775 = vrot.slane %v774, 4
      %v776 = vmax.f32 %v774, %v775
      %v777 = vrot.slane %v776, 2
      %v778 = vmax.f32 %v776, %v777
      %v779 = vrot.slane %v778, 1
      %v780 = vmax.f32 %v778, %v779
      %v781 = vsel %vm301, %v531, -inf
      %v782 = vrot.slane %v781, 4
      %v783 = vmax.f32 %v781, %v782
      %v784 = vrot.slane %v783, 2
      %v785 = vmax.f32 %v783, %v784
      %v786 = vrot.slane %v785, 1
      %v787 = vmax.f32 %v785, %v786
      %v788 = vlaneseq
      %v789 = vshrl.u32 %v788, 7
      %v790 = vadd.s32 %v789, 8
      %vm791 = vcmp.eq.s32.totalorder %v789, 0
      %vm792 = vcmp.eq.s32.totalorder %v790, 0
      %v793 = vsel %vm791, 0.0, 1.0
      %v794 = vsel %vm792, 0.0, 1.0
      %vm795 = vcmp.eq.s32.totalorder %v789, 15
      %vm796 = vcmp.eq.s32.totalorder %v790, 15
      %v797 = vsel %vm795, 0.0, 1.0
      %v798 = vsel %vm796, 0.0, 1.0
      %vm831 = vcmask 1041409
      %v832 = vsel %vm831, %v577, %v570
      %vm833 = vcmask 1042434
      %v834 = vsel %vm833, %v584, %v832
      %vm835 = vcmask 1043459
      %v836 = vsel %vm835, %v591, %v834
      %vm837 = vcmask 1044484
      %v838 = vsel %vm837, %v598, %v836
      %vm839 = vcmask 1045509
      %v840 = vsel %vm839, %v605, %v838
      %vm841 = vcmask 1046534
      %v842 = vsel %vm841, %v612, %v840
      %vm843 = vcmask 1047559
      %v844 = vsel %vm843, %v619, %v842
      %v845 = vsel %vm831, %v633, %v626
      %v846 = vsel %vm833, %v640, %v845
      %v847 = vsel %vm835, %v647, %v846
      %v848 = vsel %vm837, %v654, %v847
      %v849 = vsel %vm839, %v661, %v848
      %v850 = vsel %vm841, %v668, %v849
      %v851 = vsel %vm843, %v675, %v850
      %v852 = vsel %vm831, %v689, %v682
      %v853 = vsel %vm833, %v696, %v852
      %v854 = vsel %vm835, %v703, %v853
      %v855 = vsel %vm837, %v710, %v854
      %v856 = vsel %vm839, %v717, %v855
      %v857 = vsel %vm841, %v724, %v856
      %v858 = vsel %vm843, %v731, %v857
      %v859 = vsel %vm831, %v745, %v738
      %v860 = vsel %vm833, %v752, %v859
      %v861 = vsel %vm835, %v759, %v860
      %v862 = vsel %vm837, %v766, %v861
      %v863 = vsel %vm839, %v773, %v862
      %v864 = vsel %vm841, %v780, %v863
      %v865 = vsel %vm843, %v787, %v864
      %v870 = vrot.slane %v844, 7
      %v871 = vrot.slane %v851, 7
      %v872 = vrot.slane %v858, 7
      %v873 = vrot.slane %v865, 7
      %vm874 = vcmp.lt.s32.totalorder %v789, 1
      %v875 = vsel %vm874, %v872, %v873
      %v876 = vsel %vm874, %v871, %v872
      %v877 = vsel %vm874, %v870, %v871
      %v878 = vsel %vm874, %v873, %v870
      %v879 = vmul.f32 %v878, %v793
      %v880 = vmul.f32 %v877, %v794
      %v881 = vmul.f32 %v876, %v793
      %v882 = vmul.f32 %v875, %v794
      %v883 = vrot.slane %v844, 1
      %v884 = vrot.slane %v851, 1
      %v885 = vrot.slane %v858, 1
      %v886 = vrot.slane %v865, 1
      %vm887 = vcmp.lt.s32.totalorder %v789, 7
      %v888 = vsel %vm887, %v885, %v886
      %v889 = vsel %vm887, %v884, %v885
      %v890 = vsel %vm887, %v883, %v884
      %v891 = vsel %vm887, %v886, %v883
      %v892 = vmul.f32 %v890, %v797
      %v893 = vmul.f32 %v889, %v798
      %v894 = vmul.f32 %v888, %v797
      %v895 = vmul.f32 %v891, %v798
      %v896 = vpack.c.bf16 %v570, %v570
      %v897 = vpack.c.bf16 %v577, %v577
      %v898 = vpack.c.bf16 %v584, %v584
      %v899 = vpack.c.bf16 %v591, %v591
      %v900 = vpack.c.bf16 %v598, %v598
      %v901 = vpack.c.bf16 %v605, %v605
      %v902 = vpack.c.bf16 %v612, %v612
      %v903 = vpack.c.bf16 %v619, %v619
      %v904 = vpack.c.bf16 %v626, %v626
      %v905 = vpack.c.bf16 %v633, %v633
      %v906 = vpack.c.bf16 %v640, %v640
      %v907 = vpack.c.bf16 %v647, %v647
      %v908 = vpack.c.bf16 %v654, %v654
      %v909 = vpack.c.bf16 %v661, %v661
      %v910 = vpack.c.bf16 %v668, %v668
      %v911 = vpack.c.bf16 %v675, %v675
      %v912 = vpack.c.bf16 %v682, %v682
      %v913 = vpack.c.bf16 %v689, %v689
      %v914 = vpack.c.bf16 %v696, %v696
      %v915 = vpack.c.bf16 %v703, %v703
      %v916 = vpack.c.bf16 %v710, %v710
      %v917 = vpack.c.bf16 %v717, %v717
      %v918 = vpack.c.bf16 %v724, %v724
      %v919 = vpack.c.bf16 %v731, %v731
      %v920 = vpack.c.bf16 %v738, %v738
      %v921 = vpack.c.bf16 %v745, %v745
      %v922 = vpack.c.bf16 %v752, %v752
      %v923 = vpack.c.bf16 %v759, %v759
      %v924 = vpack.c.bf16 %v766, %v766
      %v925 = vpack.c.bf16 %v773, %v773
      %v926 = vpack.c.bf16 %v780, %v780
      %v927 = vpack.c.bf16 %v787, %v787
      %v928 = vpack.c.bf16 %v880, %v879
      %v929 = vpack.c.bf16 %v882, %v881
      %v930 = vpack.c.bf16 %v893, %v892
      %v931 = vpack.c.bf16 %v895, %v894
      %v932 = vld [vmem:[%s4] sm:$0xf]
      %v933 = vld [vmem:[%s4 + $0x4] sm:$0xf]
      %v934 = vld [vmem:[%s4 + $0x8] sm:$0xf]
      %v935 = vld [vmem:[%s4 + $0xc] sm:$0xf]
      %s936 = scalar_lea.vmem %s4, 16
      %v937 = vld [vmem:[%s936] sm:$0xf]
      %v938 = vld [vmem:[%s936 + $0x4] sm:$0xf]
      %v939 = vld [vmem:[%s936 + $0x8] sm:$0xf]
      %v940 = vld [vmem:[%s936 + $0xc] sm:$0xf]
      %v973 = vunpack.c.l.b16 %v896
      %v974 = vunpack.c.l.b16 %v897
      %v975 = vunpack.c.l.b16 %v898
      %v976 = vunpack.c.l.b16 %v899
      %v977 = vunpack.c.l.b16 %v900
      %v978 = vunpack.c.l.b16 %v901
      %v979 = vunpack.c.l.b16 %v902
      %v980 = vunpack.c.l.b16 %v903
      %v981 = vunpack.c.l.b16 %v904
      %v982 = vunpack.c.l.b16 %v905
      %v983 = vunpack.c.l.b16 %v906
      %v984 = vunpack.c.l.b16 %v907
      %v985 = vunpack.c.l.b16 %v908
      %v986 = vunpack.c.l.b16 %v909
      %v987 = vunpack.c.l.b16 %v910
      %v988 = vunpack.c.l.b16 %v911
      %v989 = vunpack.c.l.b16 %v912
      %v990 = vunpack.c.l.b16 %v913
      %v991 = vunpack.c.l.b16 %v914
      %v992 = vunpack.c.l.b16 %v915
      %v993 = vunpack.c.l.b16 %v916
      %v994 = vunpack.c.l.b16 %v917
      %v995 = vunpack.c.l.b16 %v918
      %v996 = vunpack.c.l.b16 %v919
      %v997 = vunpack.c.l.b16 %v920
      %v998 = vunpack.c.l.b16 %v921
      %v999 = vunpack.c.l.b16 %v922
      %v1000 = vunpack.c.l.b16 %v923
      %v1001 = vunpack.c.l.b16 %v924
      %v1002 = vunpack.c.l.b16 %v925
      %v1003 = vunpack.c.l.b16 %v926
      %v1004 = vunpack.c.l.b16 %v927
      %v1005 = vsel %vm831, %v974, %v973
      %v1006 = vsel %vm833, %v975, %v1005
      %v1007 = vsel %vm835, %v976, %v1006
      %v1008 = vsel %vm837, %v977, %v1007
      %v1009 = vsel %vm839, %v978, %v1008
      %v1010 = vsel %vm841, %v979, %v1009
      %v1011 = vsel %vm843, %v980, %v1010
      %v1012 = vsel %vm831, %v982, %v981
      %v1013 = vsel %vm833, %v983, %v1012
      %v1014 = vsel %vm835, %v984, %v1013
      %v1015 = vsel %vm837, %v985, %v1014
      %v1016 = vsel %vm839, %v986, %v1015
      %v1017 = vsel %vm841, %v987, %v1016
      %v1018 = vsel %vm843, %v988, %v1017
      %v1019 = vsel %vm831, %v990, %v989
      %v1020 = vsel %vm833, %v991, %v1019
      %v1021 = vsel %vm835, %v992, %v1020
      %v1022 = vsel %vm837, %v993, %v1021
      %v1023 = vsel %vm839, %v994, %v1022
      %v1024 = vsel %vm841, %v995, %v1023
      %v1025 = vsel %vm843, %v996, %v1024
      %v1026 = vsel %vm831, %v998, %v997
      %v1027 = vsel %vm833, %v999, %v1026
      %v1028 = vsel %vm835, %v1000, %v1027
      %v1029 = vsel %vm837, %v1001, %v1028
      %v1030 = vsel %vm839, %v1002, %v1029
      %v1031 = vsel %vm841, %v1003, %v1030
      %v1032 = vsel %vm843, %v1004, %v1031
      %v1033 = vpack.c.b16 %v1018, %v1011
      %v1034 = vpack.c.b16 %v1032, %v1025
      %v1039 = vunpack.c.l.b16 %v937
      %v1040 = vunpack.c.l.b16 %v938
      %v1041 = vunpack.c.l.b16 %v939
      %v1042 = vunpack.c.l.b16 %v940
      %v1043 = vpack.c.b16 %v1040, %v1039
      %v1044 = vpack.c.b16 %v1042, %v1041
      %vm1047 = vcmask 261120
      %v1049 = vsel %vm1047, %v1033, 0
      %v1052 = vsel %vm1047, %v1034, 0
      %1054 = vmatprep.subr.bf16.mxu0 0
      %1055 = vmatpush1.bf16.msra.mxu0 0
      %1056 = vmatprep.subr.bf16.mxu0 0
      %1057 = vmatpush1.bf16.msra.mxu0 0
      %1058 = vmatprep.subr.bf16.mxu0 0
      %1059 = vmatpush1.bf16.msra.mxu0 0
      %1060 = vmatprep.subr.bf16.mxu0 0
      %1061 = vmatpush1.bf16.msra.mxu0 0
      %1062 = vmatprep.subr.bf16.mxu0 0
      %1063 = vmatpush1.bf16.msra.mxu0 0
      %1064 = vmatprep.subr.bf16.mxu0 0
      %1065 = vmatpush1.bf16.msra.mxu0 0
      %1066 = vmatprep.subr.bf16.mxu0 0
      %1067 = vmatpush1.bf16.msra.mxu0 %v1044
      %1068 = vmatprep.subr.bf16.mxu0 0
      %1069 = vmatpush1.bf16.msra.mxu0 %v1043
      %1070 = vmatprep.subr.bf16.mxu0 0
      %1071 = vmatpush2.bf16.msra.mxu0 0
      %1072 = vmatprep.subr.bf16.mxu0 0
      %1073 = vmatpush2.bf16.msra.mxu0 0
      %1074 = vmatprep.subr.bf16.mxu0 0
      %1075 = vmatpush2.bf16.msra.mxu0 0
      %1076 = vmatprep.subr.bf16.mxu0 0
      %1077 = vmatpush2.bf16.msra.mxu0 0
      %1078 = vmatprep.subr.bf16.mxu0 0
      %1079 = vmatpush2.bf16.msra.mxu0 0
      %1080 = vmatprep.subr.bf16.mxu0 0
      %1081 = vmatpush2.bf16.msra.mxu0 0
      %1082 = vmatprep.subr.bf16.mxu0 0
      %1083 = vmatpush2.bf16.msra.mxu0 0
      %1084 = vmatprep.subr.bf16.mxu0 0
      %1085 = vmatpush2.bf16.msra.mxu0 0
      %1086 = vmatprep.mubr.bf16.mxu0 0
      %1087 = vmatmul.mubr.bf16.gmra.mxu0 %v1049
      %v1088 = vpop.f32.mrf.mxu0
      %v1089 = vadd.f32 0.0, %v1088
      %v1090 = vpop.f32.mrf.mxu0
      %v1091 = vpop.f32.mrf.mxu0
      %v1092 = vadd.f32 0.0, %v1091
      %v1093 = vpop.f32.mrf.mxu0
      %1094 = vmatprep.mubr.bf16.mxu0 0
      %1095 = vmatmul.mubr.bf16.gmra.mxu0 %v1052
      %v1096 = vpop.f32.mrf.mxu0
      %v1097 = vadd.f32 0.0, %v1096
      %v1098 = vpop.f32.mrf.mxu0
      %v1099 = vpop.f32.mrf.mxu0
      %v1100 = vadd.f32 0.0, %v1099
      %v1101 = vpop.f32.mrf.mxu0
      %1102 = vdwg.mxu0
      %v1107 = vunpack.c.l.b16 %v932
      %v1108 = vunpack.c.l.b16 %v933
      %v1109 = vunpack.c.l.b16 %v934
      %v1110 = vunpack.c.l.b16 %v935
      %v1111 = vpack.c.b16 %v1108, %v1107
      %v1112 = vpack.c.b16 %v1110, %v1109
      %v1116 = vsel %vm1047, %v928, 0
      %v1119 = vsel %vm1047, %v929, 0
      %1121 = vmatprep.subr.bf16.mxu0 0
      %1122 = vmatpush1.bf16.msra.mxu0 0
      %1123 = vmatprep.subr.bf16.mxu0 0
      %1124 = vmatpush1.bf16.msra.mxu0 0
      %1125 = vmatprep.subr.bf16.mxu0 0
      %1126 = vmatpush1.bf16.msra.mxu0 0
      %1127 = vmatprep.subr.bf16.mxu0 0
      %1128 = vmatpush1.bf16.msra.mxu0 0
      %1129 = vmatprep.subr.bf16.mxu0 0
      %1130 = vmatpush1.bf16.msra.mxu0 0
      %1131 = vmatprep.subr.bf16.mxu0 0
      %1132 = vmatpush1.bf16.msra.mxu0 0
      %1133 = vmatprep.subr.bf16.mxu0 0
      %1134 = vmatpush1.bf16.msra.mxu0 %v1112
      %1135 = vmatprep.subr.bf16.mxu0 0
      %1136 = vmatpush1.bf16.msra.mxu0 %v1111
      %1137 = vmatprep.subr.bf16.mxu0 0
      %1138 = vmatpush2.bf16.msra.mxu0 0
      %1139 = vmatprep.subr.bf16.mxu0 0
      %1140 = vmatpush2.bf16.msra.mxu0 0
      %1141 = vmatprep.subr.bf16.mxu0 0
      %1142 = vmatpush2.bf16.msra.mxu0 0
      %1143 = vmatprep.subr.bf16.mxu0 0
      %1144 = vmatpush2.bf16.msra.mxu0 0
      %1145 = vmatprep.subr.bf16.mxu0 0
      %1146 = vmatpush2.bf16.msra.mxu0 0
      %1147 = vmatprep.subr.bf16.mxu0 0
      %1148 = vmatpush2.bf16.msra.mxu0 0
      %1149 = vmatprep.subr.bf16.mxu0 0
      %1150 = vmatpush2.bf16.msra.mxu0 0
      %1151 = vmatprep.subr.bf16.mxu0 0
      %1152 = vmatpush2.bf16.msra.mxu0 0
      %1153 = vmatprep.mubr.bf16.mxu0 0
      %1154 = vmatmul.mubr.bf16.gmra.mxu0 %v1116
      %v1155 = vpop.f32.mrf.mxu0
      %v1156 = vadd.f32 %v1089, %v1155
      %v1157 = vpop.f32.mrf.mxu0
      %v1158 = vpop.f32.mrf.mxu0
      %v1159 = vadd.f32 %v1092, %v1158
      %v1160 = vpop.f32.mrf.mxu0
      %1161 = vmatprep.mubr.bf16.mxu0 0
      %1162 = vmatmul.mubr.bf16.gmra.mxu0 %v1119
      %v1163 = vpop.f32.mrf.mxu0
      %v1164 = vadd.f32 %v1097, %v1163
      %v1165 = vpop.f32.mrf.mxu0
      %v1166 = vpop.f32.mrf.mxu0
      %v1167 = vadd.f32 %v1100, %v1166
      %v1168 = vpop.f32.mrf.mxu0
      %1169 = vdwg.mxu0
      %s1170 = scalar_lea.vmem %s4, 32
      %v1171 = vld [vmem:[%s1170] sm:$0xf]
      %v1172 = vld [vmem:[%s1170 + $0x4] sm:$0xf]
      %v1173 = vld [vmem:[%s1170 + $0x8] sm:$0xf]
      %v1174 = vld [vmem:[%s1170 + $0xc] sm:$0xf]
      %v1179 = vunpack.c.l.b16 %v1171
      %v1180 = vunpack.c.l.b16 %v1172
      %v1181 = vunpack.c.l.b16 %v1173
      %v1182 = vunpack.c.l.b16 %v1174
      %v1183 = vpack.c.b16 %v1180, %v1179
      %v1184 = vpack.c.b16 %v1182, %v1181
      %v1188 = vsel %vm1047, %v930, 0
      %v1191 = vsel %vm1047, %v931, 0
      %1193 = vmatprep.subr.bf16.mxu0 0
      %1194 = vmatpush1.bf16.msra.mxu0 0
      %1195 = vmatprep.subr.bf16.mxu0 0
      %1196 = vmatpush1.bf16.msra.mxu0 0
      %1197 = vmatprep.subr.bf16.mxu0 0
      %1198 = vmatpush1.bf16.msra.mxu0 0
      %1199 = vmatprep.subr.bf16.mxu0 0
      %1200 = vmatpush1.bf16.msra.mxu0 0
      %1201 = vmatprep.subr.bf16.mxu0 0
      %1202 = vmatpush1.bf16.msra.mxu0 0
      %1203 = vmatprep.subr.bf16.mxu0 0
      %1204 = vmatpush1.bf16.msra.mxu0 0
      %1205 = vmatprep.subr.bf16.mxu0 0
      %1206 = vmatpush1.bf16.msra.mxu0 %v1184
      %1207 = vmatprep.subr.bf16.mxu0 0
      %1208 = vmatpush1.bf16.msra.mxu0 %v1183
      %1209 = vmatprep.subr.bf16.mxu0 0
      %1210 = vmatpush2.bf16.msra.mxu0 0
      %1211 = vmatprep.subr.bf16.mxu0 0
      %1212 = vmatpush2.bf16.msra.mxu0 0
      %1213 = vmatprep.subr.bf16.mxu0 0
      %1214 = vmatpush2.bf16.msra.mxu0 0
      %1215 = vmatprep.subr.bf16.mxu0 0
      %1216 = vmatpush2.bf16.msra.mxu0 0
      %1217 = vmatprep.subr.bf16.mxu0 0
      %1218 = vmatpush2.bf16.msra.mxu0 0
      %1219 = vmatprep.subr.bf16.mxu0 0
      %1220 = vmatpush2.bf16.msra.mxu0 0
      %1221 = vmatprep.subr.bf16.mxu0 0
      %1222 = vmatpush2.bf16.msra.mxu0 0
      %1223 = vmatprep.subr.bf16.mxu0 0
      %1224 = vmatpush2.bf16.msra.mxu0 0
      %1225 = vmatprep.mubr.bf16.mxu0 0
      %1226 = vmatmul.mubr.bf16.gmra.mxu0 %v1188
      %v1227 = vpop.f32.mrf.mxu0
      %v1228 = vadd.f32 0.0, %v1227
      %v1229 = vpop.f32.mrf.mxu0
      %v1230 = vpop.f32.mrf.mxu0
      %v1231 = vadd.f32 0.0, %v1230
      %v1232 = vpop.f32.mrf.mxu0
      %1233 = vmatprep.mubr.bf16.mxu0 0
      %1234 = vmatmul.mubr.bf16.gmra.mxu0 %v1191
      %v1235 = vpop.f32.mrf.mxu0
      %v1236 = vadd.f32 0.0, %v1235
      %v1237 = vpop.f32.mrf.mxu0
      %v1238 = vpop.f32.mrf.mxu0
      %v1239 = vadd.f32 0.0, %v1238
      %v1240 = vpop.f32.mrf.mxu0
      %1241 = vdwg.mxu0
      %v1242 = vadd.f32 %v1156, %v1228
      %v1243 = vadd.f32 %v1159, %v1231
      %v1244 = vadd.f32 %v1164, %v1236
      %v1245 = vadd.f32 %v1167, %v1239
      %v1246 = vld [vmem:[%s5] sm:$0x1]
      %v1248 = vlaneseq
      %v1249 = vshrl.u32 %v1248, 7
      %v1250 = vsub.s32 0, %v1249
      %v1251 = vrot.slane %v1246, %v1250
      %v1253 = vadd.f32 %v1242, %v1251
      %v1254 = vadd.f32 %v1243, %v1251
      %v1255 = vadd.f32 %v1244, %v1251
      %v1256 = vadd.f32 %v1245, %v1251
      %vm1257 = vcmask 523264
      %v1258 = vsel %vm1257, %v1253, 0.0
      %v1259 = vsel %vm1257, %v1254, 0.0
      %v1260 = vadd.f32 %v1258, %v1259
      %v1261 = vsel %vm1257, %v1255, 0.0
      %v1262 = vadd.f32 %v1260, %v1261
      %v1263 = vsel %vm1257, %v1256, 0.0
      %v1264 = vadd.f32 %v1262, %v1263
      %v1265 = vrot.slane %v1264, 4
      %v1266 = vadd.f32 %v1264, %v1265
      %v1267 = vrot.slane %v1266, 2
      %v1268 = vadd.f32 %v1266, %v1267
      %v1269 = vrot.slane %v1268, 1
      %v1270 = vadd.f32 %v1268, %v1269
      %v1271 = vmul.f32 %v1253, %v1253
      %v1272 = vmul.f32 %v1254, %v1254
      %v1273 = vmul.f32 %v1255, %v1255
      %v1274 = vmul.f32 %v1256, %v1256
      %v1275 = vsel %vm1257, %v1271, 0.0
      %v1276 = vsel %vm1257, %v1272, 0.0
      %v1277 = vadd.f32 %v1275, %v1276
      %v1278 = vsel %vm1257, %v1273, 0.0
      %v1279 = vadd.f32 %v1277, %v1278
      %v1280 = vsel %vm1257, %v1274, 0.0
      %v1281 = vadd.f32 %v1279, %v1280
      %v1282 = vrot.slane %v1281, 4
      %v1283 = vadd.f32 %v1281, %v1282
      %v1284 = vrot.slane %v1283, 2
      %v1285 = vadd.f32 %v1283, %v1284
      %v1286 = vrot.slane %v1285, 1
      %v1287 = vadd.f32 %v1285, %v1286
      %vm1288 = vcmask 1040384
      %v1289 = vsel %vm1288, %v1270, %v1287
      %vm1290 = vcmask 517120
      %1291 = vst.msk [vmem:[%s297] sm:$0x3] %vm1290, %v1289
      %v1292 = vpack.c.bf16 %v1254, %v1253
      %v1293 = vpack.c.bf16 %v1256, %v1255
      %v1296 = vunpack.c.l.b16 %v1292
      %v1297 = vunpack.c.h.b16 %v1292
      %v1298 = vunpack.c.l.b16 %v1293
      %v1299 = vunpack.c.h.b16 %v1293
      %v1300 = vpack.c.b16 %v1296, %v1296
      %v1301 = vpack.c.b16 %v1297, %v1297
      %v1302 = vpack.c.b16 %v1298, %v1298
      %v1303 = vpack.c.b16 %v1299, %v1299
      %vm1308 = vcmask 519168
      %1309 = vst.msk [vmem:[%s292] sm:$0xf] %vm1308, %v1300
      %1310 = vst.msk [vmem:[%s292 + $0x4] sm:$0xf] %vm1308, %v1301
      %1311 = vst.msk [vmem:[%s292 + $0x8] sm:$0xf] %vm1308, %v1302
      %1312 = vst.msk [vmem:[%s292 + $0xc] sm:$0xf] %vm1308, %v1303
      %s1313 = smul.u32 2, %s19
      %p1314 = scmp.lt.s32.totalorder %s1313, 3
      %s1315 = scalar_select %p1314, %s1313, 3
      %s1316 = smul.addr %s1315, 2
      %s1317 = smul.addr %s1316, 4
      %s1318 = scalar_lea.vmem %s6, %s1317
      %p1319 = scmp.lt.s32.totalorder %s19, 1
      %s1320 = scalar_select %p1319, %s19, 1
      %s1321 = smul.addr %s1320, 2
      %s1322 = scalar_lea.vmem %s7, %s1321
      // Predicated region
      $region45: #{cnn_forward.13} parent=43 // pred_check
        %p1323 = pneg %p168
      $region46: #{cnn_forward.13} parent=43 // pred_check_branch
        %1325 = sbr.rel (%p1323) target = $region48
      $region47: #{cnn_forward.13} parent=43 // pred_region
        %s1326 = smul.u32 2, %s19
      $region48: #{cnn_forward.13} parent=43 // pred_fallthru
        _
      // Predicated region
      $region49: #{cnn_forward.13} parent=43 // pred_check
        %p1327 = pneg %p194
      $region50: #{cnn_forward.13} parent=43 // pred_check_branch
        %1329 = sbr.rel (%p1327) target = $region52
      $region51: #{cnn_forward.13} parent=43 // pred_region
        _
      $region52: #{cnn_forward.13} parent=43 // pred_fallthru
        _
    $region44: #{cnn_forward.13} parent=5 // pred_fallthru
      _
    %p1330 = scmp.le.s32.totalorder 2, %s14
    // Predicated region
    $region53: #{cnn_forward.13} parent=5 // pred_check
      %p1331 = pneg %p1330
    $region54: #{cnn_forward.13} parent=5 // pred_check_branch
      %1333 = sbr.rel (%p1331) target = $region56
    $region55: #{cnn_forward.13} parent=5 // pred_region
      %s1334 = ssub.s32 %s14, 2
      // Predicated region
      $region57: #{cnn_forward.13} parent=55 // pred_check
        %p1335 = pneg %p174
      $region58: #{cnn_forward.13} parent=55 // pred_check_branch
        %1337 = sbr.rel (%p1335) target = $region60
      $region59: #{cnn_forward.13} parent=55 // pred_region
        %s1338 = smul.u32 2, %s20
        %p1339 = scmp.lt.s32.totalorder %s1338, 3
        %s1340 = scalar_select %p1339, %s1338, 3
        %s1341 = smul.addr %s1340, 2
        %s1342 = smul.addr %s1341, 4
        %s1343 = scalar_lea.vmem %s6, %s1342
      $region60: #{cnn_forward.13} parent=55 // pred_fallthru
        _
      // Predicated region
      $region61: #{cnn_forward.13} parent=55 // pred_check
        %p1344 = pneg %p200
      $region62: #{cnn_forward.13} parent=55 // pred_check_branch
        %1346 = sbr.rel (%p1344) target = $region64
      $region63: #{cnn_forward.13} parent=55 // pred_region
        %p1347 = scmp.lt.s32.totalorder %s20, 1
        %s1348 = scalar_select %p1347, %s20, 1
        %s1349 = smul.addr %s1348, 2
        %s1350 = scalar_lea.vmem %s7, %s1349
      $region64: #{cnn_forward.13} parent=55 // pred_fallthru
        _
    $region56: #{cnn_forward.13} parent=5 // pred_fallthru
      _
  $region6: #{cnn_forward.13} parent=0 // loop_footer
    %s18 = sadd.s32 1, %s14
  $region7: #{cnn_forward.13} parent=0 // loop_footer_branch
    %13 = sbr.rel target = $region3
  $region8: #{cnn_forward.13} parent=0 // loop_exit
    _

// kernel: cnn_forward.15
$region0: #{cnn_forward.15}
  #allocation0 [shape = 'u32[]', space=smem, size = 0x4, offset = 0x4, fixed_abs, tag = 'smem constant byte address 0x4 - core index']
  #allocation1 [shape = 'u32[144,128]{1,0:T(1,128)}', space=vmem, size = 0x12000, scoped, tag = 'internal scratch']
  %s0 = inlined_call_operand.vmem [shape: f32[2,2,64], index: 0, kind: input, shape index: {}]
  %s1 = inlined_call_operand.vmem [shape: f32[1,64], index: 1, kind: input, shape index: {}]
  %s2 = inlined_call_operand.vmem [shape: f32[1,64], index: 2, kind: input, shape index: {}]
  %s3 = inlined_call_operand.vmem [shape: bf16[4,16,64], index: 3, kind: input, shape index: {}]
  %s4 = inlined_call_operand.vmem [shape: bf16[3,64,128], index: 4, kind: input, shape index: {}]
  %s5 = inlined_call_operand.vmem [shape: f32[1,128], index: 5, kind: input, shape index: {}]
  %s6 = inlined_call_operand.vmem [shape: bf16[4,8,128], index: 6, kind: output, shape index: {0}]
  %s7 = inlined_call_operand.vmem [shape: f32[2,2,128], index: 7, kind: output, shape index: {1}]
  %8 = xla_tuple %s6, %s7
  %s9 = sld [smem:[#allocation0]]
  $region65: #{cnn_forward.15} parent=0
    _
  %s11 = ssub.s32 1, %s9
  %s12 = scalar_select 0, %s11, %s9
  loop: start=0, step=1, limit=4
  $region2: #{cnn_forward.15} parent=0 // loop_pre_header
    _
  $region3: #{cnn_forward.15} parent=0 // loop_header
    %s14 = sphi 0, %s18
    %p15 = scmp.ge.s32.totalorder %s14, 4
    %s22 = sphi 0, %s22
    %s24 = sphi 0, %s22
    %s25 = sphi 0, %s24
    %s39 = sphi 0, %s25
    %s43 = sphi 0, %s43
    %s45 = sphi 0, %s43
    %s46 = sphi 0, %s45
    %s60 = sphi 0, %s46
    %s64 = sphi 0, %s64
    %s66 = sphi 0, %s64
    %s67 = sphi 0, %s66
    %s81 = sphi 0, %s67
    %s87 = sphi 0, %s89
    %s90 = sphi 0, %s87
    %s91 = sphi 0, %s90
    %s107 = sphi 0, %s91
    %s111 = sphi 0, %s111
    %s113 = sphi 0, %s111
    %s114 = sphi 0, %s113
    %s128 = sphi 0, %s114
    %s132 = sphi 0, %s132
    %s134 = sphi 0, %s132
    %s135 = sphi 0, %s134
    %s149 = sphi 0, %s135
    %s155 = sphi 0, %s157
    %s158 = sphi 0, %s155
    %s159 = sphi 0, %s158
    %s175 = sphi 0, %s159
    %s181 = sphi 0, %s183
    %s184 = sphi 0, %s181
    %s185 = sphi 0, %s184
    %s201 = sphi 0, %s185
  $region4: #{cnn_forward.15} parent=0 // loop_header_branch
    %17 = sbr.rel (%p15) target = $region8
  $region5: #{cnn_forward.15} parent=0 // loop_body
    %s19 = ssub.s32 %s14, 1
    %s20 = ssub.s32 %s14, 2
    %s21 = sadd.s32 %s14, 1
    %s23 = sadd.s32 %s22, 1
    %p26 = scmp.eq.s32.totalorder %s14, 1
    %p27 = scmp.ne.s32.totalorder %s22, %s24
    %p28 = scmp.eq.s32.totalorder %s14, 0
    %p29 = por %p27, %p28
    %p30 = scmp.ne.s32.totalorder %s22, %s24
    %p31 = scmp.eq.s32.totalorder %s19, 1
    %p32 = por %p30, %p31
    %p33 = scmp.ne.s32.totalorder %s24, %s25
    %p34 = scmp.eq.s32.totalorder %s19, 0
    %p35 = por %p33, %p34
    %p36 = scmp.ne.s32.totalorder %s24, %s25
    %p37 = scmp.eq.s32.totalorder %s20, 1
    %p38 = por %p36, %p37
    %p40 = scmp.ne.s32.totalorder %s25, %s39
    %p41 = scmp.eq.s32.totalorder %s20, 0
    %p42 = por %p40, %p41
    %s44 = sadd.s32 %s43, 1
    %p47 = scmp.eq.s32.totalorder %s14, 1
    %p48 = scmp.ne.s32.totalorder %s43, %s45
    %p49 = scmp.eq.s32.totalorder %s14, 0
    %p50 = por %p48, %p49
    %p51 = scmp.ne.s32.totalorder %s43, %s45
    %p52 = scmp.eq.s32.totalorder %s19, 1
    %p53 = por %p51, %p52
    %p54 = scmp.ne.s32.totalorder %s45, %s46
    %p55 = scmp.eq.s32.totalorder %s19, 0
    %p56 = por %p54, %p55
    %p57 = scmp.ne.s32.totalorder %s45, %s46
    %p58 = scmp.eq.s32.totalorder %s20, 1
    %p59 = por %p57, %p58
    %p61 = scmp.ne.s32.totalorder %s46, %s60
    %p62 = scmp.eq.s32.totalorder %s20, 0
    %p63 = por %p61, %p62
    %s65 = sadd.s32 %s64, 1
    %p68 = scmp.eq.s32.totalorder %s14, 1
    %p69 = scmp.ne.s32.totalorder %s64, %s66
    %p70 = scmp.eq.s32.totalorder %s14, 0
    %p71 = por %p69, %p70
    %p72 = scmp.ne.s32.totalorder %s64, %s66
    %p73 = scmp.eq.s32.totalorder %s19, 1
    %p74 = por %p72, %p73
    %p75 = scmp.ne.s32.totalorder %s66, %s67
    %p76 = scmp.eq.s32.totalorder %s19, 0
    %p77 = por %p75, %p76
    %p78 = scmp.ne.s32.totalorder %s66, %s67
    %p79 = scmp.eq.s32.totalorder %s20, 1
    %p80 = por %p78, %p79
    %p82 = scmp.ne.s32.totalorder %s67, %s81
    %p83 = scmp.eq.s32.totalorder %s20, 0
    %p84 = por %p82, %p83
    %s85 = ssub.s32 %s14, %s21
    %p86 = scmp.eq.s32.totalorder %s85, 0
    %s88 = sadd.s32 %s87, 1
    %s89 = scalar_select %p86, %s87, %s88
    %p92 = pneg %p86
    %p93 = scmp.eq.s32.totalorder %s14, 1
    %p94 = por %p92, %p93
    %p95 = scmp.ne.s32.totalorder %s87, %s90
    %p96 = scmp.eq.s32.totalorder %s14, 0
    %p97 = por %p95, %p96
    %p98 = scmp.ne.s32.totalorder %s87, %s90
    %p99 = scmp.eq.s32.totalorder %s19, 1
    %p100 = por %p98, %p99
    %p101 = scmp.ne.s32.totalorder %s90, %s91
    %p102 = scmp.eq.s32.totalorder %s19, 0
    %p103 = por %p101, %p102
    %p104 = scmp.ne.s32.totalorder %s90, %s91
    %p105 = scmp.eq.s32.totalorder %s20, 1
    %p106 = por %p104, %p105
    %p108 = scmp.ne.s32.totalorder %s91, %s107
    %p109 = scmp.eq.s32.totalorder %s20, 0
    %p110 = por %p108, %p109
    %s112 = sadd.s32 %s111, 1
    %p115 = scmp.eq.s32.totalorder %s14, 1
    %p116 = scmp.ne.s32.totalorder %s111, %s113
    %p117 = scmp.eq.s32.totalorder %s14, 0
    %p118 = por %p116, %p117
    %p119 = scmp.ne.s32.totalorder %s111, %s113
    %p120 = scmp.eq.s32.totalorder %s19, 1
    %p121 = por %p119, %p120
    %p122 = scmp.ne.s32.totalorder %s113, %s114
    %p123 = scmp.eq.s32.totalorder %s19, 0
    %p124 = por %p122, %p123
    %p125 = scmp.ne.s32.totalorder %s113, %s114
    %p126 = scmp.eq.s32.totalorder %s20, 1
    %p127 = por %p125, %p126
    %p129 = scmp.ne.s32.totalorder %s114, %s128
    %p130 = scmp.eq.s32.totalorder %s20, 0
    %p131 = por %p129, %p130
    %s133 = sadd.s32 %s132, 1
    %p136 = scmp.eq.s32.totalorder %s14, 1
    %p137 = scmp.ne.s32.totalorder %s132, %s134
    %p138 = scmp.eq.s32.totalorder %s14, 0
    %p139 = por %p137, %p138
    %p140 = scmp.ne.s32.totalorder %s132, %s134
    %p141 = scmp.eq.s32.totalorder %s19, 1
    %p142 = por %p140, %p141
    %p143 = scmp.ne.s32.totalorder %s134, %s135
    %p144 = scmp.eq.s32.totalorder %s19, 0
    %p145 = por %p143, %p144
    %p146 = scmp.ne.s32.totalorder %s134, %s135
    %p147 = scmp.eq.s32.totalorder %s20, 1
    %p148 = por %p146, %p147
    %p150 = scmp.ne.s32.totalorder %s135, %s149
    %p151 = scmp.eq.s32.totalorder %s20, 0
    %p152 = por %p150, %p151
    %s153 = ssub.s32 %s14, %s21
    %p154 = scmp.eq.s32.totalorder %s153, 0
    %s156 = sadd.s32 %s155, 1
    %s157 = scalar_select %p154, %s155, %s156
    %p160 = pneg %p154
    %p161 = scmp.eq.s32.totalorder %s14, 1
    %p162 = por %p160, %p161
    %p163 = scmp.ne.s32.totalorder %s155, %s158
    %p164 = scmp.eq.s32.totalorder %s14, 0
    %p165 = por %p163, %p164
    %p166 = scmp.ne.s32.totalorder %s155, %s158
    %p167 = scmp.eq.s32.totalorder %s19, 1
    %p168 = por %p166, %p167
    %p169 = scmp.ne.s32.totalorder %s158, %s159
    %p170 = scmp.eq.s32.totalorder %s19, 0
    %p171 = por %p169, %p170
    %p172 = scmp.ne.s32.totalorder %s158, %s159
    %p173 = scmp.eq.s32.totalorder %s20, 1
    %p174 = por %p172, %p173
    %p176 = scmp.ne.s32.totalorder %s159, %s175
    %p177 = scmp.eq.s32.totalorder %s20, 0
    %p178 = por %p176, %p177
    %s179 = ssub.s32 %s14, %s21
    %p180 = scmp.eq.s32.totalorder %s179, 0
    %s182 = sadd.s32 %s181, 1
    %s183 = scalar_select %p180, %s181, %s182
    %p186 = pneg %p180
    %p187 = scmp.eq.s32.totalorder %s14, 1
    %p188 = por %p186, %p187
    %p189 = scmp.ne.s32.totalorder %s181, %s184
    %p190 = scmp.eq.s32.totalorder %s14, 0
    %p191 = por %p189, %p190
    %p192 = scmp.ne.s32.totalorder %s181, %s184
    %p193 = scmp.eq.s32.totalorder %s19, 1
    %p194 = por %p192, %p193
    %p195 = scmp.ne.s32.totalorder %s184, %s185
    %p196 = scmp.eq.s32.totalorder %s19, 0
    %p197 = por %p195, %p196
    %p198 = scmp.ne.s32.totalorder %s184, %s185
    %p199 = scmp.eq.s32.totalorder %s20, 1
    %p200 = por %p198, %p199
    %p202 = scmp.ne.s32.totalorder %s185, %s201
    %p203 = scmp.eq.s32.totalorder %s20, 0
    %p204 = por %p202, %p203
    %p205 = scmp.le.s32.totalorder 1, %s14
    %p206 = scmp.lt.s32.totalorder %s14, 3
    %p207 = pnand %p205, %p206
    %p208 = pneg %p207
    // Predicated region
    $region9: #{cnn_forward.15} parent=5 // pred_check
      _
    $region10: #{cnn_forward.15} parent=5 // pred_check_branch
      %210 = sbr.rel (%p207) target = $region12
    $region11: #{cnn_forward.15} parent=5 // pred_region
      %s211 = ssub.s32 %s14, 1
      // Predicated region
      $region13: #{cnn_forward.15} parent=11 // pred_check
        %p212 = pneg %p35
      $region14: #{cnn_forward.15} parent=11 // pred_check_branch
        %214 = sbr.rel (%p212) target = $region16
      $region15: #{cnn_forward.15} parent=11 // pred_region
        _
      $region16: #{cnn_forward.15} parent=11 // pred_fallthru
        _
      // Predicated region
      $region17: #{cnn_forward.15} parent=11 // pred_check
        %p215 = pneg %p56
      $region18: #{cnn_forward.15} parent=11 // pred_check_branch
        %217 = sbr.rel (%p215) target = $region20
      $region19: #{cnn_forward.15} parent=11 // pred_region
        _
      $region20: #{cnn_forward.15} parent=11 // pred_fallthru
        _
      // Predicated region
      $region21: #{cnn_forward.15} parent=11 // pred_check
        %p218 = pneg %p77
      $region22: #{cnn_forward.15} parent=11 // pred_check_branch
        %220 = sbr.rel (%p218) target = $region24
      $region23: #{cnn_forward.15} parent=11 // pred_region
        _
      $region24: #{cnn_forward.15} parent=11 // pred_fallthru
        _
      // Predicated region
      $region25: #{cnn_forward.15} parent=11 // pred_check
        %p221 = pneg %p124
      $region26: #{cnn_forward.15} parent=11 // pred_check_branch
        %223 = sbr.rel (%p221) target = $region28
      $region27: #{cnn_forward.15} parent=11 // pred_region
        _
      $region28: #{cnn_forward.15} parent=11 // pred_fallthru
        _
      // Predicated region
      $region29: #{cnn_forward.15} parent=11 // pred_check
        %p224 = pneg %p145
      $region30: #{cnn_forward.15} parent=11 // pred_check_branch
        %226 = sbr.rel (%p224) target = $region32
      $region31: #{cnn_forward.15} parent=11 // pred_region
        _
      $region32: #{cnn_forward.15} parent=11 // pred_fallthru
        _
    $region12: #{cnn_forward.15} parent=5 // pred_fallthru
      _
    %p227 = scmp.lt.s32.totalorder %s14, 2
    // Predicated region
    $region33: #{cnn_forward.15} parent=5 // pred_check
      %p228 = pneg %p227
    $region34: #{cnn_forward.15} parent=5 // pred_check_branch
      %230 = sbr.rel (%p228) target = $region36
    $region35: #{cnn_forward.15} parent=5 // pred_region
      // Predicated region
      $region37: #{cnn_forward.15} parent=35 // pred_check
        %p231 = pneg %p97
      $region38: #{cnn_forward.15} parent=35 // pred_check_branch
        %233 = sbr.rel (%p231) target = $region40
      $region39: #{cnn_forward.15} parent=35 // pred_region
        %s234 = smul.u32 2, %s14
        %p235 = scmp.lt.s32.totalorder %s234, 3
        %s236 = scalar_select %p235, %s234, 3
        %s237 = smul.addr %s236, 2
        %s238 = smul.addr %s237, 4
        %s239 = scalar_lea.vmem %s3, %s238
        %s240 = smul.u32 2, %s14
      $region40: #{cnn_forward.15} parent=35 // pred_fallthru
        _
    $region36: #{cnn_forward.15} parent=5 // pred_fallthru
      _
    %p241 = scmp.le.s32.totalorder 1, %s14
    %p242 = scmp.lt.s32.totalorder %s14, 3
    %p243 = pnand %p241, %p242
    %p244 = pneg %p243
    // Predicated region
    $region41: #{cnn_forward.15} parent=5 // pred_check
      _
    $region42: #{cnn_forward.15} parent=5 // pred_check_branch
      %246 = sbr.rel (%p243) target = $region44
    $region43: #{cnn_forward.15} parent=5 // pred_region
      %s247 = ssub.s32 %s14, 1
      %p248 = pneg %p35
      %p249 = pneg %p32
      %p250 = pneg %p56
      %p251 = pneg %p53
      %p252 = pneg %p77
      %p253 = pneg %p74
      %s254 = smul.u32 2, %s19
      %p255 = scmp.lt.s32.totalorder %s254, 3
      %s256 = scalar_select %p255, %s254, 3
      %s257 = smul.addr %s256, 2
      %s258 = smul.addr %s257, 4
      %s259 = scalar_lea.vmem %s3, %s258
      %p260 = pneg %p103
      %p261 = pneg %p100
      %p262 = pneg %p124
      %p263 = pneg %p121
      %p264 = pneg %p145
      %p265 = pneg %p142
      %p266 = pneg %p171
      %p267 = pneg %p168
      %s268 = smul.u32 2, %s19
      %p269 = scmp.lt.s32.totalorder %s268, 3
      %s270 = scalar_select %p269, %s268, 3
      %s271 = smul.addr %s270, 4
      %s272 = scalar_lea.vmem %s6, %s271
      %p273 = pneg %p197
      %p274 = pneg %p194
      %p275 = scmp.lt.s32.totalorder %s19, 1
      %s276 = scalar_select %p275, %s19, 1
      %s277 = smul.addr %s276, 2
      %s278 = scalar_lea.vmem %s7, %s277
      %s279 = smul.u32 2, %s19
      %p280 = scmp.lt.s32.totalorder %s279, 3
      %s281 = scalar_select %p280, %s279, 3
      %s282 = smul.addr %s281, 2
      %s283 = smul.addr %s282, 4
      %s284 = scalar_lea.vmem %s3, %s283
      %s285 = smul.u32 2, %s19
      %s286 = smul.u32 2, %s19
      %p287 = scmp.lt.s32.totalorder %s286, 3
      %s288 = scalar_select %p287, %s286, 3
      %s289 = smul.addr %s288, 4
      %s290 = scalar_lea.vmem %s6, %s289
      %s291 = smul.u32 2, %s19
      %p292 = scmp.lt.s32.totalorder %s19, 1
      %s293 = scalar_select %p292, %s19, 1
      %s294 = smul.addr %s293, 2
      %s295 = scalar_lea.vmem %s7, %s294
      %v297 = vld [vmem:[%s0] sm:$0x3]
      %v298 = vld [vmem:[%s0 + $0x2] sm:$0x3]
      %vm299 = vcmask 517120
      %v300 = vsel %vm299, %v297, 0.0
      %v301 = vsel %vm299, %v298, 0.0
      %v302 = vadd.f32 %v300, %v301
      %v303 = vld [vmem:[%s1] sm:$0x1]
      %v304 = vld [vmem:[%s2] sm:$0x1]
      %v305 = vmul.f32 %v302, 0.015625
      %v306 = vmul.f32 %v305, %v305
      %v308 = vrot.slane %v306, 7
      %v310 = vsub.f32 %v305, %v308
      %v311 = vmax.f32 %v310, 0.0
      %v312 = vadd.f32 %v311, 1e-05
      %v313 = vrsqrt.pop %v312
      %v316 = vunpack.c.l.s4 1966171168
      %v317 = vunpack.c.0.s8 %v316
      %v318 = vlaneseq
      %v319 = vshrl.u32 %v318, 7
      %v320 = vsub.s32 %v317, %v319
      %v321 = vrot.slane %v313, %v320
      %v322 = vcombine.high %v321, %v321
      %v324 = vunpack.c.l.s4 1966171168
      %v325 = vunpack.c.0.s8 %v324
      %v326 = vlaneseq
      %v327 = vshrl.u32 %v326, 7
      %v328 = vsub.s32 %v325, %v327
      %v329 = vrot.slane %v322, %v328
      %v331 = vmul.f32 %v303, %v329
      %v332 = vmul.f32 %v305, %v331
      %v333 = vsub.f32 %v304, %v332
      %v334 = vld [vmem:[%s284] sm:$0xf]
      %v335 = vld [vmem:[%s284 + $0x4] sm:$0xf]
      %v336 = vld [vmem:[%s284 + $0x8] sm:$0xf]
      %v337 = vld [vmem:[%s284 + $0xc] sm:$0xf]
      %v338 = vunpack.c.l.bf16 %v334
      %v339 = vunpack.c.l.bf16 %v335
      %v340 = vunpack.c.l.bf16 %v336
      %v341 = vunpack.c.l.bf16 %v337
      %v343 = vlaneseq
      %v344 = vshrl.u32 %v343, 7
      %v345 = vsub.s32 0, %v344
      %v346 = vrot.slane %v331, %v345
      %v348 = vmul.f32 %v346, %v338
      %v349 = vmul.f32 %v346, %v339
      %v350 = vmul.f32 %v346, %v340
      %v351 = vmul.f32 %v346, %v341
      %v353 = vlaneseq
      %v354 = vshrl.u32 %v353, 7
      %v355 = vsub.s32 0, %v354
      %v356 = vrot.slane %v333, %v355
      %v358 = vadd.f32 %v348, %v356
      %v359 = vadd.f32 %v349, %v356
      %v360 = vadd.f32 %v350, %v356
      %v361 = vadd.f32 %v351, %v356
      %v362 = vmax.f32 %v358, 0.0
      %v363 = vmax.f32 %v359, 0.0
      %v364 = vmax.f32 %v360, 0.0
      %v365 = vmax.f32 %v361, 0.0
      %v370 = vcombine.high %v362, %v362
      %v372 = vunpack.c.l.s4 1983009808
      %v373 = vunpack.c.0.s8 %v372
      %v374 = vlaneseq
      %v375 = vshrl.u32 %v374, 7
      %v376 = vsub.s32 %v373, %v375
      %v377 = vrot.slane %v362, %v376
      %v379 = vunpack.c.l.s4 1983009808
      %v380 = vunpack.c.0.s8 %v379
      %v381 = vlaneseq
      %v382 = vshrl.u32 %v381, 7
      %v383 = vsub.s32 %v380, %v382
      %v384 = vrot.slane %v370, %v383
      %v385 = vcombine.high %v377, %v377
      %v386 = vcombine.high %v384, %v384
      %v387 = vcombine.high %v363, %v363
      %v389 = vunpack.c.l.s4 1983009808
      %v390 = vunpack.c.0.s8 %v389
      %v391 = vlaneseq
      %v392 = vshrl.u32 %v391, 7
      %v393 = vsub.s32 %v390, %v392
      %v394 = vrot.slane %v363, %v393
      %v396 = vunpack.c.l.s4 1983009808
      %v397 = vunpack.c.0.s8 %v396
      %v398 = vlaneseq
      %v399 = vshrl.u32 %v398, 7
      %v400 = vsub.s32 %v397, %v399
      %v401 = vrot.slane %v387, %v400
      %v402 = vcombine.high %v394, %v394
      %v403 = vcombine.high %v401, %v401
      %v404 = vcombine.high %v364, %v364
      %v406 = vunpack.c.l.s4 1983009808
      %v407 = vunpack.c.0.s8 %v406
      %v408 = vlaneseq
      %v409 = vshrl.u32 %v408, 7
      %v410 = vsub.s32 %v407, %v409
      %v411 = vrot.slane %v364, %v410
      %v413 = vunpack.c.l.s4 1983009808
      %v414 = vunpack.c.0.s8 %v413
      %v415 = vlaneseq
      %v416 = vshrl.u32 %v415, 7
      %v417 = vsub.s32 %v414, %v416
      %v418 = vrot.slane %v404, %v417
      %v419 = vcombine.high %v411, %v411
      %v420 = vcombine.high %v418, %v418
      %v421 = vcombine.high %v365, %v365
      %v423 = vunpack.c.l.s4 1983009808
      %v424 = vunpack.c.0.s8 %v423
      %v425 = vlaneseq
      %v426 = vshrl.u32 %v425, 7
      %v427 = vsub.s32 %v424, %v426
      %v428 = vrot.slane %v365, %v427
      %v430 = vunpack.c.l.s4 1983009808
      %v431 = vunpack.c.0.s8 %v430
      %v432 = vlaneseq
      %v433 = vshrl.u32 %v432, 7
      %v434 = vsub.s32 %v431, %v433
      %v435 = vrot.slane %v421, %v434
      %v436 = vcombine.high %v428, %v428
      %v437 = vcombine.high %v435, %v435
      %v454 = vsel %vm299, %v377, -inf
      %v455 = vrot.slane %v454, 4
      %v456 = vmax.f32 %v454, %v455
      %v457 = vrot.slane %v456, 2
      %v458 = vmax.f32 %v456, %v457
      %v459 = vrot.slane %v458, 1
      %v460 = vmax.f32 %v458, %v459
      %v461 = vsel %vm299, %v385, -inf
      %v462 = vrot.slane %v461, 4
      %v463 = vmax.f32 %v461, %v462
      %v464 = vrot.slane %v463, 2
      %v465 = vmax.f32 %v463, %v464
      %v466 = vrot.slane %v465, 1
      %v467 = vmax.f32 %v465, %v466
      %v468 = vsel %vm299, %v384, -inf
      %v469 = vrot.slane %v468, 4
      %v470 = vmax.f32 %v468, %v469
      %v471 = vrot.slane %v470, 2
      %v472 = vmax.f32 %v470, %v471
      %v473 = vrot.slane %v472, 1
      %v474 = vmax.f32 %v472, %v473
      %v475 = vsel %vm299, %v386, -inf
      %v476 = vrot.slane %v475, 4
      %v477 = vmax.f32 %v475, %v476
      %v478 = vrot.slane %v477, 2
      %v479 = vmax.f32 %v477, %v478
      %v480 = vrot.slane %v479, 1
      %v481 = vmax.f32 %v479, %v480
      %v482 = vsel %vm299, %v394, -inf
      %v483 = vrot.slane %v482, 4
      %v484 = vmax.f32 %v482, %v483
      %v485 = vrot.slane %v484, 2
      %v486 = vmax.f32 %v484, %v485
      %v487 = vrot.slane %v486, 1
      %v488 = vmax.f32 %v486, %v487
      %v489 = vsel %vm299, %v402, -inf
      %v490 = vrot.slane %v489, 4
      %v491 = vmax.f32 %v489, %v490
      %v492 = vrot.slane %v491, 2
      %v493 = vmax.f32 %v491, %v492
      %v494 = vrot.slane %v493, 1
      %v495 = vmax.f32 %v493, %v494
      %v496 = vsel %vm299, %v401, -inf
      %v497 = vrot.slane %v496, 4
      %v498 = vmax.f32 %v496, %v497
      %v499 = vrot.slane %v498, 2
      %v500 = vmax.f32 %v498, %v499
      %v501 = vrot.slane %v500, 1
      %v502 = vmax.f32 %v500, %v501
      %v503 = vsel %vm299, %v403, -inf
      %v504 = vrot.slane %v503, 4
      %v505 = vmax.f32 %v503, %v504
      %v506 = vrot.slane %v505, 2
      %v507 = vmax.f32 %v505, %v506
      %v508 = vrot.slane %v507, 1
      %v509 = vmax.f32 %v507, %v508
      %v510 = vsel %vm299, %v411, -inf
      %v511 = vrot.slane %v510, 4
      %v512 = vmax.f32 %v510, %v511
      %v513 = vrot.slane %v512, 2
      %v514 = vmax.f32 %v512, %v513
      %v515 = vrot.slane %v514, 1
      %v516 = vmax.f32 %v514, %v515
      %v517 = vsel %vm299, %v419, -inf
      %v518 = vrot.slane %v517, 4
      %v519 = vmax.f32 %v517, %v518
      %v520 = vrot.slane %v519, 2
      %v521 = vmax.f32 %v519, %v520
      %v522 = vrot.slane %v521, 1
      %v523 = vmax.f32 %v521, %v522
      %v524 = vsel %vm299, %v418, -inf
      %v525 = vrot.slane %v524, 4
      %v526 = vmax.f32 %v524, %v525
      %v527 = vrot.slane %v526, 2
      %v528 = vmax.f32 %v526, %v527
      %v529 = vrot.slane %v528, 1
      %v530 = vmax.f32 %v528, %v529
      %v531 = vsel %vm299, %v420, -inf
      %v532 = vrot.slane %v531, 4
      %v533 = vmax.f32 %v531, %v532
      %v534 = vrot.slane %v533, 2
      %v535 = vmax.f32 %v533, %v534
      %v536 = vrot.slane %v535, 1
      %v537 = vmax.f32 %v535, %v536
      %v538 = vsel %vm299, %v428, -inf
      %v539 = vrot.slane %v538, 4
      %v540 = vmax.f32 %v538, %v539
      %v541 = vrot.slane %v540, 2
      %v542 = vmax.f32 %v540, %v541
      %v543 = vrot.slane %v542, 1
      %v544 = vmax.f32 %v542, %v543
      %v545 = vsel %vm299, %v436, -inf
      %v546 = vrot.slane %v545, 4
      %v547 = vmax.f32 %v545, %v546
      %v548 = vrot.slane %v547, 2
      %v549 = vmax.f32 %v547, %v548
      %v550 = vrot.slane %v549, 1
      %v551 = vmax.f32 %v549, %v550
      %v552 = vsel %vm299, %v435, -inf
      %v553 = vrot.slane %v552, 4
      %v554 = vmax.f32 %v552, %v553
      %v555 = vrot.slane %v554, 2
      %v556 = vmax.f32 %v554, %v555
      %v557 = vrot.slane %v556, 1
      %v558 = vmax.f32 %v556, %v557
      %v559 = vsel %vm299, %v437, -inf
      %v560 = vrot.slane %v559, 4
      %v561 = vmax.f32 %v559, %v560
      %v562 = vrot.slane %v561, 2
      %v563 = vmax.f32 %v561, %v562
      %v564 = vrot.slane %v563, 1
      %v565 = vmax.f32 %v563, %v564
      %v566 = vlaneseq
      %v567 = vshrl.u32 %v566, 7
      %vm568 = vcmp.eq.s32.totalorder %v567, 0
      %v569 = vsel %vm568, 0.0, 1.0
      %vm570 = vcmp.eq.s32.totalorder %v567, 7
      %v571 = vsel %vm570, 0.0, 1.0
      %vm588 = vcmask 1041409
      %v589 = vsel %vm588, %v467, %v460
      %vm590 = vcmask 1042434
      %v591 = vsel %vm590, %v474, %v589
      %vm592 = vcmask 1043459
      %v593 = vsel %vm592, %v481, %v591
      %vm594 = vcmask 1044484
      %v595 = vsel %vm594, %v488, %v593
      %vm596 = vcmask 1045509
      %v597 = vsel %vm596, %v495, %v595
      %vm598 = vcmask 1046534
      %v599 = vsel %vm598, %v502, %v597
      %vm600 = vcmask 1047559
      %v601 = vsel %vm600, %v509, %v599
      %v602 = vsel %vm588, %v523, %v516
      %v603 = vsel %vm590, %v530, %v602
      %v604 = vsel %vm592, %v537, %v603
      %v605 = vsel %vm594, %v544, %v604
      %v606 = vsel %vm596, %v551, %v605
      %v607 = vsel %vm598, %v558, %v606
      %v608 = vsel %vm600, %v565, %v607
      %v611 = vrot.slane %v601, 7
      %v612 = vrot.slane %v608, 7
      %vm613 = vcmp.lt.s32.totalorder %v567, 1
      %v614 = vsel %vm613, %v611, %v612
      %v615 = vsel %vm613, %v612, %v611
      %v616 = vmul.f32 %v615, %v569
      %v617 = vmul.f32 %v614, %v569
      %v618 = vrot.slane %v601, 1
      %v619 = vrot.slane %v608, 1
      %vm620 = vcmp.lt.s32.totalorder %v567, 7
      %v621 = vsel %vm620, %v618, %v619
      %v622 = vsel %vm620, %v619, %v618
      %v623 = vmul.f32 %v621, %v571
      %v624 = vmul.f32 %v622, %v571
      %v625 = vpack.c.bf16 %v460, %v460
      %v626 = vpack.c.bf16 %v467, %v467
      %v627 = vpack.c.bf16 %v474, %v474
      %v628 = vpack.c.bf16 %v481, %v481
      %v629 = vpack.c.bf16 %v488, %v488
      %v630 = vpack.c.bf16 %v495, %v495
      %v631 = vpack.c.bf16 %v502, %v502
      %v632 = vpack.c.bf16 %v509, %v509
      %v633 = vpack.c.bf16 %v516, %v516
      %v634 = vpack.c.bf16 %v523, %v523
      %v635 = vpack.c.bf16 %v530, %v530
      %v636 = vpack.c.bf16 %v537, %v537
      %v637 = vpack.c.bf16 %v544, %v544
      %v638 = vpack.c.bf16 %v551, %v551
      %v639 = vpack.c.bf16 %v558, %v558
      %v640 = vpack.c.bf16 %v565, %v565
      %v641 = vpack.c.bf16 %v617, %v616
      %v642 = vpack.c.bf16 %v624, %v623
      %v643 = vld [vmem:[%s4] sm:$0xf]
      %v644 = vld [vmem:[%s4 + $0x4] sm:$0xf]
      %v645 = vld [vmem:[%s4 + $0x8] sm:$0xf]
      %v646 = vld [vmem:[%s4 + $0xc] sm:$0xf]
      %v647 = vld [vmem:[%s4 + $0x10] sm:$0xf]
      %v648 = vld [vmem:[%s4 + $0x14] sm:$0xf]
      %v649 = vld [vmem:[%s4 + $0x18] sm:$0xf]
      %v650 = vld [vmem:[%s4 + $0x1c] sm:$0xf]
      %s651 = scalar_lea.vmem %s4, 32
      %v652 = vld [vmem:[%s651] sm:$0xf]
      %v653 = vld [vmem:[%s651 + $0x4] sm:$0xf]
      %v654 = vld [vmem:[%s651 + $0x8] sm:$0xf]
      %v655 = vld [vmem:[%s651 + $0xc] sm:$0xf]
      %v656 = vld [vmem:[%s651 + $0x10] sm:$0xf]
      %v657 = vld [vmem:[%s651 + $0x14] sm:$0xf]
      %v658 = vld [vmem:[%s651 + $0x18] sm:$0xf]
      %v659 = vld [vmem:[%s651 + $0x1c] sm:$0xf]
      %v676 = vunpack.c.l.b16 %v625
      %v677 = vunpack.c.l.b16 %v626
      %v678 = vunpack.c.l.b16 %v627
      %v679 = vunpack.c.l.b16 %v628
      %v680 = vunpack.c.l.b16 %v629
      %v681 = vunpack.c.l.b16 %v630
      %v682 = vunpack.c.l.b16 %v631
      %v683 = vunpack.c.l.b16 %v632
      %v684 = vunpack.c.l.b16 %v633
      %v685 = vunpack.c.l.b16 %v634
      %v686 = vunpack.c.l.b16 %v635
      %v687 = vunpack.c.l.b16 %v636
      %v688 = vunpack.c.l.b16 %v637
      %v689 = vunpack.c.l.b16 %v638
      %v690 = vunpack.c.l.b16 %v639
      %v691 = vunpack.c.l.b16 %v640
      %v692 = vsel %vm588, %v677, %v676
      %v693 = vsel %vm590, %v678, %v692
      %v694 = vsel %vm592, %v679, %v693
      %v695 = vsel %vm594, %v680, %v694
      %v696 = vsel %vm596, %v681, %v695
      %v697 = vsel %vm598, %v682, %v696
      %v698 = vsel %vm600, %v683, %v697
      %v699 = vsel %vm588, %v685, %v684
      %v700 = vsel %vm590, %v686, %v699
      %v701 = vsel %vm592, %v687, %v700
      %v702 = vsel %vm594, %v688, %v701
      %v703 = vsel %vm596, %v689, %v702
      %v704 = vsel %vm598, %v690, %v703
      %v705 = vsel %vm600, %v691, %v704
      %v706 = vpack.c.b16 %v705, %v698
      %v715 = vunpack.c.l.b16 %v652
      %v716 = vunpack.c.l.b16 %v653
      %v717 = vunpack.c.l.b16 %v654
      %v718 = vunpack.c.l.b16 %v655
      %v719 = vunpack.c.l.b16 %v656
      %v720 = vunpack.c.l.b16 %v657
      %v721 = vunpack.c.l.b16 %v658
      %v722 = vunpack.c.l.b16 %v659
      %v723 = vpack.c.b16 %v716, %v715
      %v724 = vpack.c.b16 %v718, %v717
      %v725 = vpack.c.b16 %v720, %v719
      %v726 = vpack.c.b16 %v722, %v721
      %vm731 = vcmask 523264
      %v733 = vsel %vm731, %v706, 0
      %735 = vmatprep.subr.bf16.mxu0 0
      %736 = vmatpush1.bf16.msra.mxu0 0
      %737 = vmatprep.subr.bf16.mxu0 0
      %738 = vmatpush1.bf16.msra.mxu0 0
      %739 = vmatprep.subr.bf16.mxu0 0
      %740 = vmatpush1.bf16.msra.mxu0 0
      %741 = vmatprep.subr.bf16.mxu0 0
      %742 = vmatpush1.bf16.msra.mxu0 0
      %743 = vmatprep.subr.bf16.mxu0 0
      %744 = vmatpush1.bf16.msra.mxu0 %v726
      %745 = vmatprep.subr.bf16.mxu0 0
      %746 = vmatpush1.bf16.msra.mxu0 %v725
      %747 = vmatprep.subr.bf16.mxu0 0
      %748 = vmatpush1.bf16.msra.mxu0 %v724
      %749 = vmatprep.subr.bf16.mxu0 0
      %750 = vmatpush1.bf16.msra.mxu0 %v723
      %751 = vmatprep.subr.bf16.mxu0 0
      %752 = vmatpush2.bf16.msra.mxu0 0
      %753 = vmatprep.subr.bf16.mxu0 0
      %754 = vmatpush2.bf16.msra.mxu0 0
      %755 = vmatprep.subr.bf16.mxu0 0
      %756 = vmatpush2.bf16.msra.mxu0 0
      %757 = vmatprep.subr.bf16.mxu0 0
      %758 = vmatpush2.bf16.msra.mxu0 0
      %759 = vmatprep.subr.bf16.mxu0 0
      %760 = vmatpush2.bf16.msra.mxu0 0
      %761 = vmatprep.subr.bf16.mxu0 0
      %762 = vmatpush2.bf16.msra.mxu0 0
      %763 = vmatprep.subr.bf16.mxu0 0
      %764 = vmatpush2.bf16.msra.mxu0 0
      %765 = vmatprep.subr.bf16.mxu0 0
      %766 = vmatpush2.bf16.msra.mxu0 0
      %767 = vmatprep.mubr.bf16.mxu0 0
      %768 = vmatmul.mubr.bf16.gmra.mxu0 %v733
      %v769 = vpop.f32.mrf.mxu0
      %v770 = vadd.f32 0.0, %v769
      %v771 = vpop.f32.mrf.mxu0
      %v772 = vpop.f32.mrf.mxu0
      %v773 = vadd.f32 0.0, %v772
      %v774 = vpop.f32.mrf.mxu0
      %775 = vdwg.mxu0
      %v784 = vunpack.c.l.b16 %v643
      %v785 = vunpack.c.l.b16 %v644
      %v786 = vunpack.c.l.b16 %v645
      %v787 = vunpack.c.l.b16 %v646
      %v788 = vunpack.c.l.b16 %v647
      %v789 = vunpack.c.l.b16 %v648
      %v790 = vunpack.c.l.b16 %v649
      %v791 = vunpack.c.l.b16 %v650
      %v792 = vpack.c.b16 %v785, %v784
      %v793 = vpack.c.b16 %v787, %v786
      %v794 = vpack.c.b16 %v789, %v788
      %v795 = vpack.c.b16 %v791, %v790
      %v801 = vsel %vm731, %v641, 0
      %803 = vmatprep.subr.bf16.mxu0 0
      %804 = vmatpush1.bf16.msra.mxu0 0
      %805 = vmatprep.subr.bf16.mxu0 0
      %806 = vmatpush1.bf16.msra.mxu0 0
      %807 = vmatprep.subr.bf16.mxu0 0
      %808 = vmatpush1.bf16.msra.mxu0 0
      %809 = vmatprep.subr.bf16.mxu0 0
      %810 = vmatpush1.bf16.msra.mxu0 0
      %811 = vmatprep.subr.bf16.mxu0 0
      %812 = vmatpush1.bf16.msra.mxu0 %v795
      %813 = vmatprep.subr.bf16.mxu0 0
      %814 = vmatpush1.bf16.msra.mxu0 %v794
      %815 = vmatprep.subr.bf16.mxu0 0
      %816 = vmatpush1.bf16.msra.mxu0 %v793
      %817 = vmatprep.subr.bf16.mxu0 0
      %818 = vmatpush1.bf16.msra.mxu0 %v792
      %819 = vmatprep.subr.bf16.mxu0 0
      %820 = vmatpush2.bf16.msra.mxu0 0
      %821 = vmatprep.subr.bf16.mxu0 0
      %822 = vmatpush2.bf16.msra.mxu0 0
      %823 = vmatprep.subr.bf16.mxu0 0
      %824 = vmatpush2.bf16.msra.mxu0 0
      %825 = vmatprep.subr.bf16.mxu0 0
      %826 = vmatpush2.bf16.msra.mxu0 0
      %827 = vmatprep.subr.bf16.mxu0 0
      %828 = vmatpush2.bf16.msra.mxu0 0
      %829 = vmatprep.subr.bf16.mxu0 0
      %830 = vmatpush2.bf16.msra.mxu0 0
      %831 = vmatprep.subr.bf16.mxu0 0
      %832 = vmatpush2.bf16.msra.mxu0 0
      %833 = vmatprep.subr.bf16.mxu0 0
      %834 = vmatpush2.bf16.msra.mxu0 0
      %835 = vmatprep.mubr.bf16.mxu0 0
      %836 = vmatmul.mubr.bf16.gmra.mxu0 %v801
      %v837 = vpop.f32.mrf.mxu0
      %v838 = vadd.f32 %v770, %v837
      %v839 = vpop.f32.mrf.mxu0
      %v840 = vpop.f32.mrf.mxu0
      %v841 = vadd.f32 %v773, %v840
      %v842 = vpop.f32.mrf.mxu0
      %843 = vdwg.mxu0
      %s844 = scalar_lea.vmem %s4, 64
      %v845 = vld [vmem:[%s844] sm:$0xf]
      %v846 = vld [vmem:[%s844 + $0x4] sm:$0xf]
      %v847 = vld [vmem:[%s844 + $0x8] sm:$0xf]
      %v848 = vld [vmem:[%s844 + $0xc] sm:$0xf]
      %v849 = vld [vmem:[%s844 + $0x10] sm:$0xf]
      %v850 = vld [vmem:[%s844 + $0x14] sm:$0xf]
      %v851 = vld [vmem:[%s844 + $0x18] sm:$0xf]
      %v852 = vld [vmem:[%s844 + $0x1c] sm:$0xf]
      %v861 = vunpack.c.l.b16 %v845
      %v862 = vunpack.c.l.b16 %v846
      %v863 = vunpack.c.l.b16 %v847
      %v864 = vunpack.c.l.b16 %v848
      %v865 = vunpack.c.l.b16 %v849
      %v866 = vunpack.c.l.b16 %v850
      %v867 = vunpack.c.l.b16 %v851
      %v868 = vunpack.c.l.b16 %v852
      %v869 = vpack.c.b16 %v862, %v861
      %v870 = vpack.c.b16 %v864, %v863
      %v871 = vpack.c.b16 %v866, %v865
      %v872 = vpack.c.b16 %v868, %v867
      %v878 = vsel %vm731, %v642, 0
      %880 = vmatprep.subr.bf16.mxu0 0
      %881 = vmatpush1.bf16.msra.mxu0 0
      %882 = vmatprep.subr.bf16.mxu0 0
      %883 = vmatpush1.bf16.msra.mxu0 0
      %884 = vmatprep.subr.bf16.mxu0 0
      %885 = vmatpush1.bf16.msra.mxu0 0
      %886 = vmatprep.subr.bf16.mxu0 0
      %887 = vmatpush1.bf16.msra.mxu0 0
      %888 = vmatprep.subr.bf16.mxu0 0
      %889 = vmatpush1.bf16.msra.mxu0 %v872
      %890 = vmatprep.subr.bf16.mxu0 0
      %891 = vmatpush1.bf16.msra.mxu0 %v871
      %892 = vmatprep.subr.bf16.mxu0 0
      %893 = vmatpush1.bf16.msra.mxu0 %v870
      %894 = vmatprep.subr.bf16.mxu0 0
      %895 = vmatpush1.bf16.msra.mxu0 %v869
      %896 = vmatprep.subr.bf16.mxu0 0
      %897 = vmatpush2.bf16.msra.mxu0 0
      %898 = vmatprep.subr.bf16.mxu0 0
      %899 = vmatpush2.bf16.msra.mxu0 0
      %900 = vmatprep.subr.bf16.mxu0 0
      %901 = vmatpush2.bf16.msra.mxu0 0
      %902 = vmatprep.subr.bf16.mxu0 0
      %903 = vmatpush2.bf16.msra.mxu0 0
      %904 = vmatprep.subr.bf16.mxu0 0
      %905 = vmatpush2.bf16.msra.mxu0 0
      %906 = vmatprep.subr.bf16.mxu0 0
      %907 = vmatpush2.bf16.msra.mxu0 0
      %908 = vmatprep.subr.bf16.mxu0 0
      %909 = vmatpush2.bf16.msra.mxu0 0
      %910 = vmatprep.subr.bf16.mxu0 0
      %911 = vmatpush2.bf16.msra.mxu0 0
      %912 = vmatprep.mubr.bf16.mxu0 0
      %913 = vmatmul.mubr.bf16.gmra.mxu0 %v878
      %v914 = vpop.f32.mrf.mxu0
      %v915 = vadd.f32 0.0, %v914
      %v916 = vpop.f32.mrf.mxu0
      %v917 = vpop.f32.mrf.mxu0
      %v918 = vadd.f32 0.0, %v917
      %v919 = vpop.f32.mrf.mxu0
      %920 = vdwg.mxu0
      %v921 = vadd.f32 %v838, %v915
      %v922 = vadd.f32 %v841, %v918
      %v923 = vld [vmem:[%s5] sm:$0x1]
      %v925 = vlaneseq
      %v926 = vshrl.u32 %v925, 7
      %v927 = vsub.s32 0, %v926
      %v928 = vrot.slane %v923, %v927
      %v930 = vadd.f32 %v921, %v928
      %v931 = vadd.f32 %v922, %v928
      %v932 = vadd.f32 %v930, %v931
      %v933 = vrot.slane %v932, 4
      %v934 = vadd.f32 %v932, %v933
      %v935 = vrot.slane %v934, 2
      %v936 = vadd.f32 %v934, %v935
      %v937 = vrot.slane %v936, 1
      %v938 = vadd.f32 %v936, %v937
      %v939 = vmul.f32 %v930, %v930
      %v940 = vmul.f32 %v931, %v931
      %v941 = vadd.f32 %v939, %v940
      %v942 = vrot.slane %v941, 4
      %v943 = vadd.f32 %v941, %v942
      %v944 = vrot.slane %v943, 2
      %v945 = vadd.f32 %v943, %v944
      %v946 = vrot.slane %v945, 1
      %v947 = vadd.f32 %v945, %v946
      %vm948 = vcmask 1040384
      %v949 = vsel %vm948, %v938, %v947
      %950 = vst [vmem:[%s295] sm:$0x3] %v949
      %v951 = vpack.c.bf16 %v930, %v930
      %v952 = vpack.c.bf16 %v931, %v931
      %953 = vst [vmem:[%s290] sm:$0xf] %v951
      %954 = vst [vmem:[%s290 + $0x4] sm:$0xf] %v952
      %s955 = smul.u32 2, %s19
      %p956 = scmp.lt.s32.totalorder %s955, 3
      %s957 = scalar_select %p956, %s955, 3
      %s958 = smul.addr %s957, 4
      %s959 = scalar_lea.vmem %s6, %s958
      %p960 = scmp.lt.s32.totalorder %s19, 1
      %s961 = scalar_select %p960, %s19, 1
      %s962 = smul.addr %s961, 2
      %s963 = scalar_lea.vmem %s7, %s962
      // Predicated region
      $region45: #{cnn_forward.15} parent=43 // pred_check
        %p964 = pneg %p168
      $region46: #{cnn_forward.15} parent=43 // pred_check_branch
        %966 = sbr.rel (%p964) target = $region48
      $region47: #{cnn_forward.15} parent=43 // pred_region
        %s967 = smul.u32 2, %s19
      $region48: #{cnn_forward.15} parent=43 // pred_fallthru
        _
      // Predicated region
      $region49: #{cnn_forward.15} parent=43 // pred_check
        %p968 = pneg %p194
      $region50: #{cnn_forward.15} parent=43 // pred_check_branch
        %970 = sbr.rel (%p968) target = $region52
      $region51: #{cnn_forward.15} parent=43 // pred_region
        _
      $region52: #{cnn_forward.15} parent=43 // pred_fallthru
        _
    $region44: #{cnn_forward.15} parent=5 // pred_fallthru
      _
    %p971 = scmp.le.s32.totalorder 2, %s14
    // Predicated region
    $region53: #{cnn_forward.15} parent=5 // pred_check
      %p972 = pneg %p971
    $region54: #{cnn_forward.15} parent=5 // pred_check_branch
      %974 = sbr.rel (%p972) target = $region56
    $region55: #{cnn_forward.15} parent=5 // pred_region
      %s975 = ssub.s32 %s14, 2
      // Predicated region
      $region57: #{cnn_forward.15} parent=55 // pred_check
        %p976 = pneg %p174
      $region58: #{cnn_forward.15} parent=55 // pred_check_branch
        %978 = sbr.rel (%p976) target = $region60
      $region59: #{cnn_forward.15} parent=55 // pred_region
        %s979 = smul.u32 2, %s20
        %p980 = scmp.lt.s32.totalorder %s979, 3
        %s981 = scalar_select %p980, %s979, 3
        %s982 = smul.addr %s981, 4
        %s983 = scalar_lea.vmem %s6, %s982
      $region60: #{cnn_forward.15} parent=55 // pred_fallthru
        _
      // Predicated region
      $region61: #{cnn_forward.15} parent=55 // pred_check
        %p984 = pneg %p200
      $region62: #{cnn_forward.15} parent=55 // pred_check_branch
        %986 = sbr.rel (%p984) target = $region64
      $region63: #{cnn_forward.15} parent=55 // pred_region
        %p987 = scmp.lt.s32.totalorder %s20, 1
        %s988 = scalar_select %p987, %s20, 1
        %s989 = smul.addr %s988, 2
        %s990 = scalar_lea.vmem %s7, %s989
      $region64: #{cnn_forward.15} parent=55 // pred_fallthru
        _
    $region56: #{cnn_forward.15} parent=5 // pred_fallthru
      _
  $region6: #{cnn_forward.15} parent=0 // loop_footer
    %s18 = sadd.s32 1, %s14
  $region7: #{cnn_forward.15} parent=0 // loop_footer_branch
    %13 = sbr.rel target = $region3
  $region8: #{cnn_forward.15} parent=0 // loop_exit
    _

// kernel: cnn_forward.14
$region0: #{cnn_forward.14}
  #allocation0 [shape = 'u32[]', space=smem, size = 0x4, offset = 0x4, fixed_abs, tag = 'smem constant byte address 0x4 - core index']
  #allocation1 [shape = 'u32[144,128]{1,0:T(1,128)}', space=vmem, size = 0x12000, scoped, tag = 'internal scratch']
  %s0 = inlined_call_operand.vmem [shape: f32[2,2,64], index: 0, kind: input, shape index: {}]
  %s1 = inlined_call_operand.vmem [shape: f32[1,64], index: 1, kind: input, shape index: {}]
  %s2 = inlined_call_operand.vmem [shape: f32[1,64], index: 2, kind: input, shape index: {}]
  %s3 = inlined_call_operand.vmem [shape: bf16[4,16,64], index: 3, kind: input, shape index: {}]
  %s4 = inlined_call_operand.vmem [shape: bf16[3,64,64], index: 4, kind: input, shape index: {}]
  %s5 = inlined_call_operand.vmem [shape: f32[1,64], index: 5, kind: input, shape index: {}]
  %s6 = inlined_call_operand.vmem [shape: bf16[4,16,64], index: 6, kind: output, shape index: {0}]
  %s7 = inlined_call_operand.vmem [shape: f32[2,2,64], index: 7, kind: output, shape index: {1}]
  %8 = xla_tuple %s6, %s7
  %s9 = sld [smem:[#allocation0]]
  $region65: #{cnn_forward.14} parent=0
    _
  %s11 = ssub.s32 1, %s9
  %s12 = scalar_select 0, %s11, %s9
  loop: start=0, step=1, limit=4
  $region2: #{cnn_forward.14} parent=0 // loop_pre_header
    _
  $region3: #{cnn_forward.14} parent=0 // loop_header
    %s14 = sphi 0, %s18
    %p15 = scmp.ge.s32.totalorder %s14, 4
    %s22 = sphi 0, %s22
    %s24 = sphi 0, %s22
    %s25 = sphi 0, %s24
    %s39 = sphi 0, %s25
    %s43 = sphi 0, %s43
    %s45 = sphi 0, %s43
    %s46 = sphi 0, %s45
    %s60 = sphi 0, %s46
    %s64 = sphi 0, %s64
    %s66 = sphi 0, %s64
    %s67 = sphi 0, %s66
    %s81 = sphi 0, %s67
    %s87 = sphi 0, %s89
    %s90 = sphi 0, %s87
    %s91 = sphi 0, %s90
    %s107 = sphi 0, %s91
    %s111 = sphi 0, %s111
    %s113 = sphi 0, %s111
    %s114 = sphi 0, %s113
    %s128 = sphi 0, %s114
    %s132 = sphi 0, %s132
    %s134 = sphi 0, %s132
    %s135 = sphi 0, %s134
    %s149 = sphi 0, %s135
    %s155 = sphi 0, %s157
    %s158 = sphi 0, %s155
    %s159 = sphi 0, %s158
    %s175 = sphi 0, %s159
    %s181 = sphi 0, %s183
    %s184 = sphi 0, %s181
    %s185 = sphi 0, %s184
    %s201 = sphi 0, %s185
  $region4: #{cnn_forward.14} parent=0 // loop_header_branch
    %17 = sbr.rel (%p15) target = $region8
  $region5: #{cnn_forward.14} parent=0 // loop_body
    %s19 = ssub.s32 %s14, 1
    %s20 = ssub.s32 %s14, 2
    %s21 = sadd.s32 %s14, 1
    %s23 = sadd.s32 %s22, 1
    %p26 = scmp.eq.s32.totalorder %s14, 1
    %p27 = scmp.ne.s32.totalorder %s22, %s24
    %p28 = scmp.eq.s32.totalorder %s14, 0
    %p29 = por %p27, %p28
    %p30 = scmp.ne.s32.totalorder %s22, %s24
    %p31 = scmp.eq.s32.totalorder %s19, 1
    %p32 = por %p30, %p31
    %p33 = scmp.ne.s32.totalorder %s24, %s25
    %p34 = scmp.eq.s32.totalorder %s19, 0
    %p35 = por %p33, %p34
    %p36 = scmp.ne.s32.totalorder %s24, %s25
    %p37 = scmp.eq.s32.totalorder %s20, 1
    %p38 = por %p36, %p37
    %p40 = scmp.ne.s32.totalorder %s25, %s39
    %p41 = scmp.eq.s32.totalorder %s20, 0
    %p42 = por %p40, %p41
    %s44 = sadd.s32 %s43, 1
    %p47 = scmp.eq.s32.totalorder %s14, 1
    %p48 = scmp.ne.s32.totalorder %s43, %s45
    %p49 = scmp.eq.s32.totalorder %s14, 0
    %p50 = por %p48, %p49
    %p51 = scmp.ne.s32.totalorder %s43, %s45
    %p52 = scmp.eq.s32.totalorder %s19, 1
    %p53 = por %p51, %p52
    %p54 = scmp.ne.s32.totalorder %s45, %s46
    %p55 = scmp.eq.s32.totalorder %s19, 0
    %p56 = por %p54, %p55
    %p57 = scmp.ne.s32.totalorder %s45, %s46
    %p58 = scmp.eq.s32.totalorder %s20, 1
    %p59 = por %p57, %p58
    %p61 = scmp.ne.s32.totalorder %s46, %s60
    %p62 = scmp.eq.s32.totalorder %s20, 0
    %p63 = por %p61, %p62
    %s65 = sadd.s32 %s64, 1
    %p68 = scmp.eq.s32.totalorder %s14, 1
    %p69 = scmp.ne.s32.totalorder %s64, %s66
    %p70 = scmp.eq.s32.totalorder %s14, 0
    %p71 = por %p69, %p70
    %p72 = scmp.ne.s32.totalorder %s64, %s66
    %p73 = scmp.eq.s32.totalorder %s19, 1
    %p74 = por %p72, %p73
    %p75 = scmp.ne.s32.totalorder %s66, %s67
    %p76 = scmp.eq.s32.totalorder %s19, 0
    %p77 = por %p75, %p76
    %p78 = scmp.ne.s32.totalorder %s66, %s67
    %p79 = scmp.eq.s32.totalorder %s20, 1
    %p80 = por %p78, %p79
    %p82 = scmp.ne.s32.totalorder %s67, %s81
    %p83 = scmp.eq.s32.totalorder %s20, 0
    %p84 = por %p82, %p83
    %s85 = ssub.s32 %s14, %s21
    %p86 = scmp.eq.s32.totalorder %s85, 0
    %s88 = sadd.s32 %s87, 1
    %s89 = scalar_select %p86, %s87, %s88
    %p92 = pneg %p86
    %p93 = scmp.eq.s32.totalorder %s14, 1
    %p94 = por %p92, %p93
    %p95 = scmp.ne.s32.totalorder %s87, %s90
    %p96 = scmp.eq.s32.totalorder %s14, 0
    %p97 = por %p95, %p96
    %p98 = scmp.ne.s32.totalorder %s87, %s90
    %p99 = scmp.eq.s32.totalorder %s19, 1
    %p100 = por %p98, %p99
    %p101 = scmp.ne.s32.totalorder %s90, %s91
    %p102 = scmp.eq.s32.totalorder %s19, 0
    %p103 = por %p101, %p102
    %p104 = scmp.ne.s32.totalorder %s90, %s91
    %p105 = scmp.eq.s32.totalorder %s20, 1
    %p106 = por %p104, %p105
    %p108 = scmp.ne.s32.totalorder %s91, %s107
    %p109 = scmp.eq.s32.totalorder %s20, 0
    %p110 = por %p108, %p109
    %s112 = sadd.s32 %s111, 1
    %p115 = scmp.eq.s32.totalorder %s14, 1
    %p116 = scmp.ne.s32.totalorder %s111, %s113
    %p117 = scmp.eq.s32.totalorder %s14, 0
    %p118 = por %p116, %p117
    %p119 = scmp.ne.s32.totalorder %s111, %s113
    %p120 = scmp.eq.s32.totalorder %s19, 1
    %p121 = por %p119, %p120
    %p122 = scmp.ne.s32.totalorder %s113, %s114
    %p123 = scmp.eq.s32.totalorder %s19, 0
    %p124 = por %p122, %p123
    %p125 = scmp.ne.s32.totalorder %s113, %s114
    %p126 = scmp.eq.s32.totalorder %s20, 1
    %p127 = por %p125, %p126
    %p129 = scmp.ne.s32.totalorder %s114, %s128
    %p130 = scmp.eq.s32.totalorder %s20, 0
    %p131 = por %p129, %p130
    %s133 = sadd.s32 %s132, 1
    %p136 = scmp.eq.s32.totalorder %s14, 1
    %p137 = scmp.ne.s32.totalorder %s132, %s134
    %p138 = scmp.eq.s32.totalorder %s14, 0
    %p139 = por %p137, %p138
    %p140 = scmp.ne.s32.totalorder %s132, %s134
    %p141 = scmp.eq.s32.totalorder %s19, 1
    %p142 = por %p140, %p141
    %p143 = scmp.ne.s32.totalorder %s134, %s135
    %p144 = scmp.eq.s32.totalorder %s19, 0
    %p145 = por %p143, %p144
    %p146 = scmp.ne.s32.totalorder %s134, %s135
    %p147 = scmp.eq.s32.totalorder %s20, 1
    %p148 = por %p146, %p147
    %p150 = scmp.ne.s32.totalorder %s135, %s149
    %p151 = scmp.eq.s32.totalorder %s20, 0
    %p152 = por %p150, %p151
    %s153 = ssub.s32 %s14, %s21
    %p154 = scmp.eq.s32.totalorder %s153, 0
    %s156 = sadd.s32 %s155, 1
    %s157 = scalar_select %p154, %s155, %s156
    %p160 = pneg %p154
    %p161 = scmp.eq.s32.totalorder %s14, 1
    %p162 = por %p160, %p161
    %p163 = scmp.ne.s32.totalorder %s155, %s158
    %p164 = scmp.eq.s32.totalorder %s14, 0
    %p165 = por %p163, %p164
    %p166 = scmp.ne.s32.totalorder %s155, %s158
    %p167 = scmp.eq.s32.totalorder %s19, 1
    %p168 = por %p166, %p167
    %p169 = scmp.ne.s32.totalorder %s158, %s159
    %p170 = scmp.eq.s32.totalorder %s19, 0
    %p171 = por %p169, %p170
    %p172 = scmp.ne.s32.totalorder %s158, %s159
    %p173 = scmp.eq.s32.totalorder %s20, 1
    %p174 = por %p172, %p173
    %p176 = scmp.ne.s32.totalorder %s159, %s175
    %p177 = scmp.eq.s32.totalorder %s20, 0
    %p178 = por %p176, %p177
    %s179 = ssub.s32 %s14, %s21
    %p180 = scmp.eq.s32.totalorder %s179, 0
    %s182 = sadd.s32 %s181, 1
    %s183 = scalar_select %p180, %s181, %s182
    %p186 = pneg %p180
    %p187 = scmp.eq.s32.totalorder %s14, 1
    %p188 = por %p186, %p187
    %p189 = scmp.ne.s32.totalorder %s181, %s184
    %p190 = scmp.eq.s32.totalorder %s14, 0
    %p191 = por %p189, %p190
    %p192 = scmp.ne.s32.totalorder %s181, %s184
    %p193 = scmp.eq.s32.totalorder %s19, 1
    %p194 = por %p192, %p193
    %p195 = scmp.ne.s32.totalorder %s184, %s185
    %p196 = scmp.eq.s32.totalorder %s19, 0
    %p197 = por %p195, %p196
    %p198 = scmp.ne.s32.totalorder %s184, %s185
    %p199 = scmp.eq.s32.totalorder %s20, 1
    %p200 = por %p198, %p199
    %p202 = scmp.ne.s32.totalorder %s185, %s201
    %p203 = scmp.eq.s32.totalorder %s20, 0
    %p204 = por %p202, %p203
    %p205 = scmp.le.s32.totalorder 1, %s14
    %p206 = scmp.lt.s32.totalorder %s14, 3
    %p207 = pnand %p205, %p206
    %p208 = pneg %p207
    // Predicated region
    $region9: #{cnn_forward.14} parent=5 // pred_check
      _
    $region10: #{cnn_forward.14} parent=5 // pred_check_branch
      %210 = sbr.rel (%p207) target = $region12
    $region11: #{cnn_forward.14} parent=5 // pred_region
      %s211 = ssub.s32 %s14, 1
      // Predicated region
      $region13: #{cnn_forward.14} parent=11 // pred_check
        %p212 = pneg %p35
      $region14: #{cnn_forward.14} parent=11 // pred_check_branch
        %214 = sbr.rel (%p212) target = $region16
      $region15: #{cnn_forward.14} parent=11 // pred_region
        _
      $region16: #{cnn_forward.14} parent=11 // pred_fallthru
        _
      // Predicated region
      $region17: #{cnn_forward.14} parent=11 // pred_check
        %p215 = pneg %p56
      $region18: #{cnn_forward.14} parent=11 // pred_check_branch
        %217 = sbr.rel (%p215) target = $region20
      $region19: #{cnn_forward.14} parent=11 // pred_region
        _
      $region20: #{cnn_forward.14} parent=11 // pred_fallthru
        _
      // Predicated region
      $region21: #{cnn_forward.14} parent=11 // pred_check
        %p218 = pneg %p77
      $region22: #{cnn_forward.14} parent=11 // pred_check_branch
        %220 = sbr.rel (%p218) target = $region24
      $region23: #{cnn_forward.14} parent=11 // pred_region
        _
      $region24: #{cnn_forward.14} parent=11 // pred_fallthru
        _
      // Predicated region
      $region25: #{cnn_forward.14} parent=11 // pred_check
        %p221 = pneg %p124
      $region26: #{cnn_forward.14} parent=11 // pred_check_branch
        %223 = sbr.rel (%p221) target = $region28
      $region27: #{cnn_forward.14} parent=11 // pred_region
        _
      $region28: #{cnn_forward.14} parent=11 // pred_fallthru
        _
      // Predicated region
      $region29: #{cnn_forward.14} parent=11 // pred_check
        %p224 = pneg %p145
      $region30: #{cnn_forward.14} parent=11 // pred_check_branch
        %226 = sbr.rel (%p224) target = $region32
      $region31: #{cnn_forward.14} parent=11 // pred_region
        _
      $region32: #{cnn_forward.14} parent=11 // pred_fallthru
        _
    $region12: #{cnn_forward.14} parent=5 // pred_fallthru
      _
    %p227 = scmp.lt.s32.totalorder %s14, 2
    // Predicated region
    $region33: #{cnn_forward.14} parent=5 // pred_check
      %p228 = pneg %p227
    $region34: #{cnn_forward.14} parent=5 // pred_check_branch
      %230 = sbr.rel (%p228) target = $region36
    $region35: #{cnn_forward.14} parent=5 // pred_region
      // Predicated region
      $region37: #{cnn_forward.14} parent=35 // pred_check
        %p231 = pneg %p97
      $region38: #{cnn_forward.14} parent=35 // pred_check_branch
        %233 = sbr.rel (%p231) target = $region40
      $region39: #{cnn_forward.14} parent=35 // pred_region
        %s234 = smul.u32 2, %s14
        %p235 = scmp.lt.s32.totalorder %s234, 3
        %s236 = scalar_select %p235, %s234, 3
        %s237 = smul.addr %s236, 2
        %s238 = smul.addr %s237, 4
        %s239 = scalar_lea.vmem %s3, %s238
        %s240 = smul.u32 2, %s14
      $region40: #{cnn_forward.14} parent=35 // pred_fallthru
        _
    $region36: #{cnn_forward.14} parent=5 // pred_fallthru
      _
    %p241 = scmp.le.s32.totalorder 1, %s14
    %p242 = scmp.lt.s32.totalorder %s14, 3
    %p243 = pnand %p241, %p242
    %p244 = pneg %p243
    // Predicated region
    $region41: #{cnn_forward.14} parent=5 // pred_check
      _
    $region42: #{cnn_forward.14} parent=5 // pred_check_branch
      %246 = sbr.rel (%p243) target = $region44
    $region43: #{cnn_forward.14} parent=5 // pred_region
      %s247 = ssub.s32 %s14, 1
      %p248 = pneg %p35
      %p249 = pneg %p32
      %p250 = pneg %p56
      %p251 = pneg %p53
      %p252 = pneg %p77
      %p253 = pneg %p74
      %s254 = smul.u32 2, %s19
      %p255 = scmp.lt.s32.totalorder %s254, 3
      %s256 = scalar_select %p255, %s254, 3
      %s257 = smul.addr %s256, 2
      %s258 = smul.addr %s257, 4
      %s259 = scalar_lea.vmem %s3, %s258
      %p260 = pneg %p103
      %p261 = pneg %p100
      %p262 = pneg %p124
      %p263 = pneg %p121
      %p264 = pneg %p145
      %p265 = pneg %p142
      %p266 = pneg %p171
      %p267 = pneg %p168
      %s268 = smul.u32 2, %s19
      %p269 = scmp.lt.s32.totalorder %s268, 3
      %s270 = scalar_select %p269, %s268, 3
      %s271 = smul.addr %s270, 2
      %s272 = smul.addr %s271, 4
      %s273 = scalar_lea.vmem %s6, %s272
      %p274 = pneg %p197
      %p275 = pneg %p194
      %p276 = scmp.lt.s32.totalorder %s19, 1
      %s277 = scalar_select %p276, %s19, 1
      %s278 = smul.addr %s277, 2
      %s279 = scalar_lea.vmem %s7, %s278
      %s280 = smul.u32 2, %s19
      %p281 = scmp.lt.s32.totalorder %s280, 3
      %s282 = scalar_select %p281, %s280, 3
      %s283 = smul.addr %s282, 2
      %s284 = smul.addr %s283, 4
      %s285 = scalar_lea.vmem %s3, %s284
      %s286 = smul.u32 2, %s19
      %s287 = smul.u32 2, %s19
      %p288 = scmp.lt.s32.totalorder %s287, 3
      %s289 = scalar_select %p288, %s287, 3
      %s290 = smul.addr %s289, 2
      %s291 = smul.addr %s290, 4
      %s292 = scalar_lea.vmem %s6, %s291
      %s293 = smul.u32 2, %s19
      %p294 = scmp.lt.s32.totalorder %s19, 1
      %s295 = scalar_select %p294, %s19, 1
      %s296 = smul.addr %s295, 2
      %s297 = scalar_lea.vmem %s7, %s296
      %v299 = vld [vmem:[%s0] sm:$0x3]
      %v300 = vld [vmem:[%s0 + $0x2] sm:$0x3]
      %vm301 = vcmask 517120
      %v302 = vsel %vm301, %v299, 0.0
      %v303 = vsel %vm301, %v300, 0.0
      %v304 = vadd.f32 %v302, %v303
      %v305 = vld [vmem:[%s1] sm:$0x1]
      %v306 = vld [vmem:[%s2] sm:$0x1]
      %v307 = vmul.f32 %v304, 0.015625
      %v308 = vmul.f32 %v307, %v307
      %v310 = vrot.slane %v308, 7
      %v312 = vsub.f32 %v307, %v310
      %v313 = vmax.f32 %v312, 0.0
      %v314 = vadd.f32 %v313, 1e-05
      %v315 = vrsqrt.pop %v314
      %v318 = vunpack.c.l.s4 1966171168
      %v319 = vunpack.c.0.s8 %v318
      %v320 = vlaneseq
      %v321 = vshrl.u32 %v320, 7
      %v322 = vsub.s32 %v319, %v321
      %v323 = vrot.slane %v315, %v322
      %v324 = vcombine.high %v323, %v323
      %v326 = vunpack.c.l.s4 1966171168
      %v327 = vunpack.c.0.s8 %v326
      %v328 = vlaneseq
      %v329 = vshrl.u32 %v328, 7
      %v330 = vsub.s32 %v327, %v329
      %v331 = vrot.slane %v324, %v330
      %v333 = vmul.f32 %v305, %v331
      %v334 = vmul.f32 %v307, %v333
      %v335 = vsub.f32 %v306, %v334
      %v336 = vld [vmem:[%s285] sm:$0xf]
      %v337 = vld [vmem:[%s285 + $0x4] sm:$0xf]
      %v338 = vld [vmem:[%s285 + $0x8] sm:$0xf]
      %v339 = vld [vmem:[%s285 + $0xc] sm:$0xf]
      %v340 = vunpack.c.l.bf16 %v336
      %v341 = vunpack.c.l.bf16 %v337
      %v342 = vunpack.c.l.bf16 %v338
      %v343 = vunpack.c.l.bf16 %v339
      %v345 = vlaneseq
      %v346 = vshrl.u32 %v345, 7
      %v347 = vsub.s32 0, %v346
      %v348 = vrot.slane %v333, %v347
      %v350 = vmul.f32 %v348, %v340
      %v351 = vmul.f32 %v348, %v341
      %v352 = vmul.f32 %v348, %v342
      %v353 = vmul.f32 %v348, %v343
      %v355 = vlaneseq
      %v356 = vshrl.u32 %v355, 7
      %v357 = vsub.s32 0, %v356
      %v358 = vrot.slane %v335, %v357
      %v360 = vadd.f32 %v350, %v358
      %v361 = vadd.f32 %v351, %v358
      %v362 = vadd.f32 %v352, %v358
      %v363 = vadd.f32 %v353, %v358
      %v364 = vlaneseq
      %v365 = vshrl.u32 %v364, 7
      %v366 = vadd.s32 %v365, 8
      %vm367 = vcmp.eq.s32.totalorder %v365, 0
      %vm368 = vcmp.eq.s32.totalorder %v366, 0
      %v369 = vsel %vm367, 0.0, 1.0
      %v370 = vsel %vm368, 0.0, 1.0
      %vm371 = vcmp.eq.s32.totalorder %v365, 15
      %vm372 = vcmp.eq.s32.totalorder %v366, 15
      %v373 = vsel %vm371, 0.0, 1.0
      %v374 = vsel %vm372, 0.0, 1.0
      %v375 = vrot.slane %v360, 7
      %v376 = vrot.slane %v361, 7
      %v377 = vrot.slane %v362, 7
      %v378 = vrot.slane %v363, 7
      %vm379 = vcmp.lt.s32.totalorder %v365, 1
      %v380 = vsel %vm379, %v377, %v378
      %v381 = vsel %vm379, %v376, %v377
      %v382 = vsel %vm379, %v375, %v376
      %v383 = vsel %vm379, %v378, %v375
      %v384 = vmul.f32 %v383, %v369
      %v385 = vmul.f32 %v382, %v370
      %v386 = vmul.f32 %v381, %v369
      %v387 = vmul.f32 %v380, %v370
      %v388 = vrot.slane %v360, 1
      %v389 = vrot.slane %v361, 1
      %v390 = vrot.slane %v362, 1
      %v391 = vrot.slane %v363, 1
      %vm392 = vcmp.lt.s32.totalorder %v365, 7
      %v393 = vsel %vm392, %v390, %v391
      %v394 = vsel %vm392, %v389, %v390
      %v395 = vsel %vm392, %v388, %v389
      %v396 = vsel %vm392, %v391, %v388
      %v397 = vmul.f32 %v395, %v373
      %v398 = vmul.f32 %v394, %v374
      %v399 = vmul.f32 %v393, %v373
      %v400 = vmul.f32 %v396, %v374
      %v401 = vpack.c.bf16 %v361, %v360
      %v402 = vpack.c.bf16 %v363, %v362
      %v403 = vpack.c.bf16 %v385, %v384
      %v404 = vpack.c.bf16 %v387, %v386
      %v405 = vpack.c.bf16 %v398, %v397
      %v406 = vpack.c.bf16 %v400, %v399
      %v407 = vld [vmem:[%s4] sm:$0xf]
      %v408 = vld [vmem:[%s4 + $0x4] sm:$0xf]
      %v409 = vld [vmem:[%s4 + $0x8] sm:$0xf]
      %v410 = vld [vmem:[%s4 + $0xc] sm:$0xf]
      %v411 = vld [vmem:[%s4 + $0x10] sm:$0xf]
      %v412 = vld [vmem:[%s4 + $0x14] sm:$0xf]
      %v413 = vld [vmem:[%s4 + $0x18] sm:$0xf]
      %v414 = vld [vmem:[%s4 + $0x1c] sm:$0xf]
      %s415 = scalar_lea.vmem %s4, 32
      %v416 = vld [vmem:[%s415] sm:$0xf]
      %v417 = vld [vmem:[%s415 + $0x4] sm:$0xf]
      %v418 = vld [vmem:[%s415 + $0x8] sm:$0xf]
      %v419 = vld [vmem:[%s415 + $0xc] sm:$0xf]
      %v420 = vld [vmem:[%s415 + $0x10] sm:$0xf]
      %v421 = vld [vmem:[%s415 + $0x14] sm:$0xf]
      %v422 = vld [vmem:[%s415 + $0x18] sm:$0xf]
      %v423 = vld [vmem:[%s415 + $0x1c] sm:$0xf]
      %v432 = vunpack.c.l.b16 %v416
      %v433 = vunpack.c.l.b16 %v417
      %v434 = vunpack.c.l.b16 %v418
      %v435 = vunpack.c.l.b16 %v419
      %v436 = vunpack.c.l.b16 %v420
      %v437 = vunpack.c.l.b16 %v421
      %v438 = vunpack.c.l.b16 %v422
      %v439 = vunpack.c.l.b16 %v423
      %v440 = vpack.c.b16 %v433, %v432
      %v441 = vpack.c.b16 %v435, %v434
      %v442 = vpack.c.b16 %v437, %v436
      %v443 = vpack.c.b16 %v439, %v438
      %vm448 = vcmask 523264
      %v450 = vsel %vm448, %v401, 0
      %v453 = vsel %vm448, %v402, 0
      %455 = vmatprep.subr.bf16.mxu0 0
      %456 = vmatpush1.bf16.msra.mxu0 0
      %457 = vmatprep.subr.bf16.mxu0 0
      %458 = vmatpush1.bf16.msra.mxu0 0
      %459 = vmatprep.subr.bf16.mxu0 0
      %460 = vmatpush1.bf16.msra.mxu0 0
      %461 = vmatprep.subr.bf16.mxu0 0
      %462 = vmatpush1.bf16.msra.mxu0 0
      %463 = vmatprep.subr.bf16.mxu0 0
      %464 = vmatpush1.bf16.msra.mxu0 %v443
      %465 = vmatprep.subr.bf16.mxu0 0
      %466 = vmatpush1.bf16.msra.mxu0 %v442
      %467 = vmatprep.subr.bf16.mxu0 0
      %468 = vmatpush1.bf16.msra.mxu0 %v441
      %469 = vmatprep.subr.bf16.mxu0 0
      %470 = vmatpush1.bf16.msra.mxu0 %v440
      %471 = vmatprep.subr.bf16.mxu0 0
      %472 = vmatpush2.bf16.msra.mxu0 0
      %473 = vmatprep.subr.bf16.mxu0 0
      %474 = vmatpush2.bf16.msra.mxu0 0
      %475 = vmatprep.subr.bf16.mxu0 0
      %476 = vmatpush2.bf16.msra.mxu0 0
      %477 = vmatprep.subr.bf16.mxu0 0
      %478 = vmatpush2.bf16.msra.mxu0 0
      %479 = vmatprep.subr.bf16.mxu0 0
      %480 = vmatpush2.bf16.msra.mxu0 0
      %481 = vmatprep.subr.bf16.mxu0 0
      %482 = vmatpush2.bf16.msra.mxu0 0
      %483 = vmatprep.subr.bf16.mxu0 0
      %484 = vmatpush2.bf16.msra.mxu0 0
      %485 = vmatprep.subr.bf16.mxu0 0
      %486 = vmatpush2.bf16.msra.mxu0 0
      %487 = vmatprep.mubr.bf16.mxu0 0
      %488 = vmatmul.mubr.bf16.gmra.mxu0 %v450
      %v489 = vpop.f32.mrf.mxu0
      %v490 = vadd.f32 0.0, %v489
      %v491 = vpop.f32.mrf.mxu0
      %v492 = vpop.f32.mrf.mxu0
      %v493 = vadd.f32 0.0, %v492
      %v494 = vpop.f32.mrf.mxu0
      %495 = vmatprep.mubr.bf16.mxu0 0
      %496 = vmatmul.mubr.bf16.gmra.mxu0 %v453
      %v497 = vpop.f32.mrf.mxu0
      %v498 = vadd.f32 0.0, %v497
      %v499 = vpop.f32.mrf.mxu0
      %v500 = vpop.f32.mrf.mxu0
      %v501 = vadd.f32 0.0, %v500
      %v502 = vpop.f32.mrf.mxu0
      %503 = vdwg.mxu0
      %v512 = vunpack.c.l.b16 %v407
      %v513 = vunpack.c.l.b16 %v408
      %v514 = vunpack.c.l.b16 %v409
      %v515 = vunpack.c.l.b16 %v410
      %v516 = vunpack.c.l.b16 %v411
      %v517 = vunpack.c.l.b16 %v412
      %v518 = vunpack.c.l.b16 %v413
      %v519 = vunpack.c.l.b16 %v414
      %v520 = vpack.c.b16 %v513, %v512
      %v521 = vpack.c.b16 %v515, %v514
      %v522 = vpack.c.b16 %v517, %v516
      %v523 = vpack.c.b16 %v519, %v518
      %v529 = vsel %vm448, %v403, 0
      %v532 = vsel %vm448, %v404, 0
      %534 = vmatprep.subr.bf16.mxu0 0
      %535 = vmatpush1.bf16.msra.mxu0 0
      %536 = vmatprep.subr.bf16.mxu0 0
      %537 = vmatpush1.bf16.msra.mxu0 0
      %538 = vmatprep.subr.bf16.mxu0 0
      %539 = vmatpush1.bf16.msra.mxu0 0
      %540 = vmatprep.subr.bf16.mxu0 0
      %541 = vmatpush1.bf16.msra.mxu0 0
      %542 = vmatprep.subr.bf16.mxu0 0
      %543 = vmatpush1.bf16.msra.mxu0 %v523
      %544 = vmatprep.subr.bf16.mxu0 0
      %545 = vmatpush1.bf16.msra.mxu0 %v522
      %546 = vmatprep.subr.bf16.mxu0 0
      %547 = vmatpush1.bf16.msra.mxu0 %v521
      %548 = vmatprep.subr.bf16.mxu0 0
      %549 = vmatpush1.bf16.msra.mxu0 %v520
      %550 = vmatprep.subr.bf16.mxu0 0
      %551 = vmatpush2.bf16.msra.mxu0 0
      %552 = vmatprep.subr.bf16.mxu0 0
      %553 = vmatpush2.bf16.msra.mxu0 0
      %554 = vmatprep.subr.bf16.mxu0 0
      %555 = vmatpush2.bf16.msra.mxu0 0
      %556 = vmatprep.subr.bf16.mxu0 0
      %557 = vmatpush2.bf16.msra.mxu0 0
      %558 = vmatprep.subr.bf16.mxu0 0
      %559 = vmatpush2.bf16.msra.mxu0 0
      %560 = vmatprep.subr.bf16.mxu0 0
      %561 = vmatpush2.bf16.msra.mxu0 0
      %562 = vmatprep.subr.bf16.mxu0 0
      %563 = vmatpush2.bf16.msra.mxu0 0
      %564 = vmatprep.subr.bf16.mxu0 0
      %565 = vmatpush2.bf16.msra.mxu0 0
      %566 = vmatprep.mubr.bf16.mxu0 0
      %567 = vmatmul.mubr.bf16.gmra.mxu0 %v529
      %v568 = vpop.f32.mrf.mxu0
      %v569 = vadd.f32 %v490, %v568
      %v570 = vpop.f32.mrf.mxu0
      %v571 = vpop.f32.mrf.mxu0
      %v572 = vadd.f32 %v493, %v571
      %v573 = vpop.f32.mrf.mxu0
      %574 = vmatprep.mubr.bf16.mxu0 0
      %575 = vmatmul.mubr.bf16.gmra.mxu0 %v532
      %v576 = vpop.f32.mrf.mxu0
      %v577 = vadd.f32 %v498, %v576
      %v578 = vpop.f32.mrf.mxu0
      %v579 = vpop.f32.mrf.mxu0
      %v580 = vadd.f32 %v501, %v579
      %v581 = vpop.f32.mrf.mxu0
      %582 = vdwg.mxu0
      %s583 = scalar_lea.vmem %s4, 64
      %v584 = vld [vmem:[%s583] sm:$0xf]
      %v585 = vld [vmem:[%s583 + $0x4] sm:$0xf]
      %v586 = vld [vmem:[%s583 + $0x8] sm:$0xf]
      %v587 = vld [vmem:[%s583 + $0xc] sm:$0xf]
      %v588 = vld [vmem:[%s583 + $0x10] sm:$0xf]
      %v589 = vld [vmem:[%s583 + $0x14] sm:$0xf]
      %v590 = vld [vmem:[%s583 + $0x18] sm:$0xf]
      %v591 = vld [vmem:[%s583 + $0x1c] sm:$0xf]
      %v600 = vunpack.c.l.b16 %v584
      %v601 = vunpack.c.l.b16 %v585
      %v602 = vunpack.c.l.b16 %v586
      %v603 = vunpack.c.l.b16 %v587
      %v604 = vunpack.c.l.b16 %v588
      %v605 = vunpack.c.l.b16 %v589
      %v606 = vunpack.c.l.b16 %v590
      %v607 = vunpack.c.l.b16 %v591
      %v608 = vpack.c.b16 %v601, %v600
      %v609 = vpack.c.b16 %v603, %v602
      %v610 = vpack.c.b16 %v605, %v604
      %v611 = vpack.c.b16 %v607, %v606
      %v617 = vsel %vm448, %v405, 0
      %v620 = vsel %vm448, %v406, 0
      %622 = vmatprep.subr.bf16.mxu0 0
      %623 = vmatpush1.bf16.msra.mxu0 0
      %624 = vmatprep.subr.bf16.mxu0 0
      %625 = vmatpush1.bf16.msra.mxu0 0
      %626 = vmatprep.subr.bf16.mxu0 0
      %627 = vmatpush1.bf16.msra.mxu0 0
      %628 = vmatprep.subr.bf16.mxu0 0
      %629 = vmatpush1.bf16.msra.mxu0 0
      %630 = vmatprep.subr.bf16.mxu0 0
      %631 = vmatpush1.bf16.msra.mxu0 %v611
      %632 = vmatprep.subr.bf16.mxu0 0
      %633 = vmatpush1.bf16.msra.mxu0 %v610
      %634 = vmatprep.subr.bf16.mxu0 0
      %635 = vmatpush1.bf16.msra.mxu0 %v609
      %636 = vmatprep.subr.bf16.mxu0 0
      %637 = vmatpush1.bf16.msra.mxu0 %v608
      %638 = vmatprep.subr.bf16.mxu0 0
      %639 = vmatpush2.bf16.msra.mxu0 0
      %640 = vmatprep.subr.bf16.mxu0 0
      %641 = vmatpush2.bf16.msra.mxu0 0
      %642 = vmatprep.subr.bf16.mxu0 0
      %643 = vmatpush2.bf16.msra.mxu0 0
      %644 = vmatprep.subr.bf16.mxu0 0
      %645 = vmatpush2.bf16.msra.mxu0 0
      %646 = vmatprep.subr.bf16.mxu0 0
      %647 = vmatpush2.bf16.msra.mxu0 0
      %648 = vmatprep.subr.bf16.mxu0 0
      %649 = vmatpush2.bf16.msra.mxu0 0
      %650 = vmatprep.subr.bf16.mxu0 0
      %651 = vmatpush2.bf16.msra.mxu0 0
      %652 = vmatprep.subr.bf16.mxu0 0
      %653 = vmatpush2.bf16.msra.mxu0 0
      %654 = vmatprep.mubr.bf16.mxu0 0
      %655 = vmatmul.mubr.bf16.gmra.mxu0 %v617
      %v656 = vpop.f32.mrf.mxu0
      %v657 = vadd.f32 0.0, %v656
      %v658 = vpop.f32.mrf.mxu0
      %v659 = vpop.f32.mrf.mxu0
      %v660 = vadd.f32 0.0, %v659
      %v661 = vpop.f32.mrf.mxu0
      %662 = vmatprep.mubr.bf16.mxu0 0
      %663 = vmatmul.mubr.bf16.gmra.mxu0 %v620
      %v664 = vpop.f32.mrf.mxu0
      %v665 = vadd.f32 0.0, %v664
      %v666 = vpop.f32.mrf.mxu0
      %v667 = vpop.f32.mrf.mxu0
      %v668 = vadd.f32 0.0, %v667
      %v669 = vpop.f32.mrf.mxu0
      %670 = vdwg.mxu0
      %v671 = vadd.f32 %v569, %v657
      %v672 = vadd.f32 %v572, %v660
      %v673 = vadd.f32 %v577, %v665
      %v674 = vadd.f32 %v580, %v668
      %v675 = vld [vmem:[%s5] sm:$0x1]
      %v677 = vlaneseq
      %v678 = vshrl.u32 %v677, 7
      %v679 = vsub.s32 0, %v678
      %v680 = vrot.slane %v675, %v679
      %v682 = vadd.f32 %v671, %v680
      %v683 = vadd.f32 %v672, %v680
      %v684 = vadd.f32 %v673, %v680
      %v685 = vadd.f32 %v674, %v680
      %v686 = vsel %vm448, %v682, 0.0
      %v687 = vsel %vm448, %v683, 0.0
      %v688 = vadd.f32 %v686, %v687
      %v689 = vsel %vm448, %v684, 0.0
      %v690 = vadd.f32 %v688, %v689
      %v691 = vsel %vm448, %v685, 0.0
      %v692 = vadd.f32 %v690, %v691
      %v693 = vrot.slane %v692, 4
      %v694 = vadd.f32 %v692, %v693
      %v695 = vrot.slane %v694, 2
      %v696 = vadd.f32 %v694, %v695
      %v697 = vrot.slane %v696, 1
      %v698 = vadd.f32 %v696, %v697
      %v699 = vmul.f32 %v682, %v682
      %v700 = vmul.f32 %v683, %v683
      %v701 = vmul.f32 %v684, %v684
      %v702 = vmul.f32 %v685, %v685
      %v703 = vsel %vm448, %v699, 0.0
      %v704 = vsel %vm448, %v700, 0.0
      %v705 = vadd.f32 %v703, %v704
      %v706 = vsel %vm448, %v701, 0.0
      %v707 = vadd.f32 %v705, %v706
      %v708 = vsel %vm448, %v702, 0.0
      %v709 = vadd.f32 %v707, %v708
      %v710 = vrot.slane %v709, 4
      %v711 = vadd.f32 %v709, %v710
      %v712 = vrot.slane %v711, 2
      %v713 = vadd.f32 %v711, %v712
      %v714 = vrot.slane %v713, 1
      %v715 = vadd.f32 %v713, %v714
      %vm716 = vcmask 1040384
      %v717 = vsel %vm716, %v698, %v715
      %718 = vst.msk [vmem:[%s297] sm:$0x3] %vm301, %v717
      %v719 = vpack.c.bf16 %v683, %v682
      %v720 = vpack.c.bf16 %v685, %v684
      %v723 = vunpack.c.l.b16 %v719
      %v724 = vunpack.c.h.b16 %v719
      %v725 = vunpack.c.l.b16 %v720
      %v726 = vunpack.c.h.b16 %v720
      %v727 = vpack.c.b16 %v723, %v723
      %v728 = vpack.c.b16 %v724, %v724
      %v729 = vpack.c.b16 %v725, %v725
      %v730 = vpack.c.b16 %v726, %v726
      %vm735 = vcmask 519168
      %736 = vst.msk [vmem:[%s292] sm:$0xf] %vm735, %v727
      %737 = vst.msk [vmem:[%s292 + $0x4] sm:$0xf] %vm735, %v728
      %738 = vst.msk [vmem:[%s292 + $0x8] sm:$0xf] %vm735, %v729
      %739 = vst.msk [vmem:[%s292 + $0xc] sm:$0xf] %vm735, %v730
      %s740 = smul.u32 2, %s19
      %p741 = scmp.lt.s32.totalorder %s740, 3
      %s742 = scalar_select %p741, %s740, 3
      %s743 = smul.addr %s742, 2
      %s744 = smul.addr %s743, 4
      %s745 = scalar_lea.vmem %s6, %s744
      %p746 = scmp.lt.s32.totalorder %s19, 1
      %s747 = scalar_select %p746, %s19, 1
      %s748 = smul.addr %s747, 2
      %s749 = scalar_lea.vmem %s7, %s748
      // Predicated region
      $region45: #{cnn_forward.14} parent=43 // pred_check
        %p750 = pneg %p168
      $region46: #{cnn_forward.14} parent=43 // pred_check_branch
        %752 = sbr.rel (%p750) target = $region48
      $region47: #{cnn_forward.14} parent=43 // pred_region
        %s753 = smul.u32 2, %s19
      $region48: #{cnn_forward.14} parent=43 // pred_fallthru
        _
      // Predicated region
      $region49: #{cnn_forward.14} parent=43 // pred_check
        %p754 = pneg %p194
      $region50: #{cnn_forward.14} parent=43 // pred_check_branch
        %756 = sbr.rel (%p754) target = $region52
      $region51: #{cnn_forward.14} parent=43 // pred_region
        _
      $region52: #{cnn_forward.14} parent=43 // pred_fallthru
        _
    $region44: #{cnn_forward.14} parent=5 // pred_fallthru
      _
    %p757 = scmp.le.s32.totalorder 2, %s14
    // Predicated region
    $region53: #{cnn_forward.14} parent=5 // pred_check
      %p758 = pneg %p757
    $region54: #{cnn_forward.14} parent=5 // pred_check_branch
      %760 = sbr.rel (%p758) target = $region56
    $region55: #{cnn_forward.14} parent=5 // pred_region
      %s761 = ssub.s32 %s14, 2
      // Predicated region
      $region57: #{cnn_forward.14} parent=55 // pred_check
        %p762 = pneg %p174
      $region58: #{cnn_forward.14} parent=55 // pred_check_branch
        %764 = sbr.rel (%p762) target = $region60
      $region59: #{cnn_forward.14} parent=55 // pred_region
        %s765 = smul.u32 2, %s20
        %p766 = scmp.lt.s32.totalorder %s765, 3
        %s767 = scalar_select %p766, %s765, 3
        %s768 = smul.addr %s767, 2
        %s769 = smul.addr %s768, 4
        %s770 = scalar_lea.vmem %s6, %s769
      $region60: #{cnn_forward.14} parent=55 // pred_fallthru
        _
      // Predicated region
      $region61: #{cnn_forward.14} parent=55 // pred_check
        %p771 = pneg %p200
      $region62: #{cnn_forward.14} parent=55 // pred_check_branch
        %773 = sbr.rel (%p771) target = $region64
      $region63: #{cnn_forward.14} parent=55 // pred_region
        %p774 = scmp.lt.s32.totalorder %s20, 1
        %s775 = scalar_select %p774, %s20, 1
        %s776 = smul.addr %s775, 2
        %s777 = scalar_lea.vmem %s7, %s776
      $region64: #{cnn_forward.14} parent=55 // pred_fallthru
        _
    $region56: #{cnn_forward.14} parent=5 // pred_fallthru
      _
  $region6: #{cnn_forward.14} parent=0 // loop_footer
    %s18 = sadd.s32 1, %s14
  $region7: #{cnn_forward.14} parent=0 // loop_footer_branch
    %13 = sbr.rel target = $region3
  $region8: #{cnn_forward.14} parent=0 // loop_exit
    _

// kernel: cnn_forward.17
$region0: #{cnn_forward.17}
  #allocation0 [shape = 'u32[]', space=smem, size = 0x4, offset = 0x4, fixed_abs, tag = 'smem constant byte address 0x4 - core index']
  #allocation1 [shape = 'u32[144,128]{1,0:T(1,128)}', space=vmem, size = 0x12000, scoped, tag = 'internal scratch']
  %s0 = inlined_call_operand.vmem [shape: f32[2,2,128], index: 0, kind: input, shape index: {}]
  %s1 = inlined_call_operand.vmem [shape: f32[1,128], index: 1, kind: input, shape index: {}]
  %s2 = inlined_call_operand.vmem [shape: f32[1,128], index: 2, kind: input, shape index: {}]
  %s3 = inlined_call_operand.vmem [shape: bf16[4,8,128], index: 3, kind: input, shape index: {}]
  %s4 = inlined_call_operand.hbm [shape: f32[16,128], index: 4, kind: output, shape index: {}]
  %s5 = sld [smem:[#allocation0]]
  $region26: #{cnn_forward.17} parent=0
    _
  %s7 = ssub.s32 1, %s5
  %s8 = scalar_select 0, %s7, %s5
  $region1: #{cnn_forward.17} parent=0
    #allocation2 [shape = 'u8[8192]{0}', space=vmem, size = 0x2000, scoped, tag = 'output window, operand 0, single buffered']
    #allocation3 [shape = 's32[1]{0}', space=sflag, size = 0x4, scoped, tag = 'scoped memory for cnn_forward.17']
    %9 = vsyncpa [#allocation3], 0
    // Predicated region
    $region2: #{cnn_forward.17} parent=1 // pred_check
      _
    $region3: #{cnn_forward.17} parent=1 // pred_check_branch
      %11 = sbr.rel (0) target = $region5
    $region4: #{cnn_forward.17} parent=1 // pred_region
      _
    $region5: #{cnn_forward.17} parent=1 // pred_fallthru
      _
    // Predicated region
    $region6: #{cnn_forward.17} parent=1 // pred_check
      _
    $region7: #{cnn_forward.17} parent=1 // pred_check_branch
      %13 = sbr.rel (0) target = $region9
    $region8: #{cnn_forward.17} parent=1 // pred_region
      _
    $region9: #{cnn_forward.17} parent=1 // pred_fallthru
      _
    // Predicated region
    $region10: #{cnn_forward.17} parent=1 // pred_check
      _
    $region11: #{cnn_forward.17} parent=1 // pred_check_branch
      %15 = sbr.rel (0) target = $region13
    $region12: #{cnn_forward.17} parent=1 // pred_region
      _
    $region13: #{cnn_forward.17} parent=1 // pred_fallthru
      _
    // Predicated region
    $region14: #{cnn_forward.17} parent=1 // pred_check
      _
    $region15: #{cnn_forward.17} parent=1 // pred_check_branch
      %17 = sbr.rel (0) target = $region17
    $region16: #{cnn_forward.17} parent=1 // pred_region
      _
    $region17: #{cnn_forward.17} parent=1 // pred_fallthru
      _
    %v18 = vld [vmem:[%s0] sm:$0x3]
    %v19 = vld [vmem:[%s0 + $0x2] sm:$0x3]
    %vm20 = vcmask 1041408
    %v21 = vsel %vm20, %v18, 0.0
    %v22 = vsel %vm20, %v19, 0.0
    %v23 = vadd.f32 %v21, %v22
    %v24 = vld [vmem:[%s1] sm:$0x1]
    %v25 = vld [vmem:[%s2] sm:$0x1]
    %v26 = vmul.f32 %v23, 0.03125
    %v27 = vmul.f32 %v26, %v26
    %v29 = vrot.slane %v27, 7
    %v31 = vsub.f32 %v26, %v29
    %v32 = vmax.f32 %v31, 0.0
    %v33 = vadd.f32 %v32, 1e-05
    %v34 = vrsqrt.pop %v33
    %v37 = vunpack.c.l.s4 1966171168
    %v38 = vunpack.c.0.s8 %v37
    %v39 = vlaneseq
    %v40 = vshrl.u32 %v39, 7
    %v41 = vsub.s32 %v38, %v40
    %v42 = vrot.slane %v34, %v41
    %v43 = vcombine.high %v42, %v42
    %v45 = vunpack.c.l.s4 1966171168
    %v46 = vunpack.c.0.s8 %v45
    %v47 = vlaneseq
    %v48 = vshrl.u32 %v47, 7
    %v49 = vsub.s32 %v46, %v48
    %v50 = vrot.slane %v43, %v49
    %v52 = vmul.f32 %v24, %v50
    %v53 = vmul.f32 %v26, %v52
    %v54 = vsub.f32 %v25, %v53
    %v55 = vld [vmem:[%s3] sm:$0xf]
    %v56 = vld [vmem:[%s3 + $0x4] sm:$0xf]
    %v57 = vld [vmem:[%s3 + $0x8] sm:$0xf]
    %v58 = vld [vmem:[%s3 + $0xc] sm:$0xf]
    %v59 = vunpack.c.l.bf16 %v55
    %v60 = vunpack.c.l.bf16 %v56
    %v61 = vunpack.c.l.bf16 %v57
    %v62 = vunpack.c.l.bf16 %v58
    %v64 = vlaneseq
    %v65 = vshrl.u32 %v64, 7
    %v66 = vsub.s32 0, %v65
    %v67 = vrot.slane %v52, %v66
    %v69 = vmul.f32 %v67, %v59
    %v70 = vmul.f32 %v67, %v60
    %v71 = vmul.f32 %v67, %v61
    %v72 = vmul.f32 %v67, %v62
    %v74 = vlaneseq
    %v75 = vshrl.u32 %v74, 7
    %v76 = vsub.s32 0, %v75
    %v77 = vrot.slane %v54, %v76
    %v79 = vadd.f32 %v69, %v77
    %v80 = vadd.f32 %v70, %v77
    %v81 = vadd.f32 %v71, %v77
    %v82 = vadd.f32 %v72, %v77
    %v83 = vmax.f32 %v79, 0.0
    %v84 = vmax.f32 %v80, 0.0
    %v85 = vmax.f32 %v81, 0.0
    %v86 = vmax.f32 %v82, 0.0
    %v91 = vcombine.high %v83, %v83
    %v93 = vunpack.c.l.s4 1983009808
    %v94 = vunpack.c.0.s8 %v93
    %v95 = vlaneseq
    %v96 = vshrl.u32 %v95, 7
    %v97 = vsub.s32 %v94, %v96
    %v98 = vrot.slane %v83, %v97
    %v100 = vunpack.c.l.s4 1983009808
    %v101 = vunpack.c.0.s8 %v100
    %v102 = vlaneseq
    %v103 = vshrl.u32 %v102, 7
    %v104 = vsub.s32 %v101, %v103
    %v105 = vrot.slane %v91, %v104
    %v106 = vcombine.high %v98, %v98
    %v107 = vcombine.high %v105, %v105
    %v108 = vcombine.high %v84, %v84
    %v110 = vunpack.c.l.s4 1983009808
    %v111 = vunpack.c.0.s8 %v110
    %v112 = vlaneseq
    %v113 = vshrl.u32 %v112, 7
    %v114 = vsub.s32 %v111, %v113
    %v115 = vrot.slane %v84, %v114
    %v117 = vunpack.c.l.s4 1983009808
    %v118 = vunpack.c.0.s8 %v117
    %v119 = vlaneseq
    %v120 = vshrl.u32 %v119, 7
    %v121 = vsub.s32 %v118, %v120
    %v122 = vrot.slane %v108, %v121
    %v123 = vcombine.high %v115, %v115
    %v124 = vcombine.high %v122, %v122
    %v125 = vcombine.high %v85, %v85
    %v127 = vunpack.c.l.s4 1983009808
    %v128 = vunpack.c.0.s8 %v127
    %v129 = vlaneseq
    %v130 = vshrl.u32 %v129, 7
    %v131 = vsub.s32 %v128, %v130
    %v132 = vrot.slane %v85, %v131
    %v134 = vunpack.c.l.s4 1983009808
    %v135 = vunpack.c.0.s8 %v134
    %v136 = vlaneseq
    %v137 = vshrl.u32 %v136, 7
    %v138 = vsub.s32 %v135, %v137
    %v139 = vrot.slane %v125, %v138
    %v140 = vcombine.high %v132, %v132
    %v141 = vcombine.high %v139, %v139
    %v142 = vcombine.high %v86, %v86
    %v144 = vunpack.c.l.s4 1983009808
    %v145 = vunpack.c.0.s8 %v144
    %v146 = vlaneseq
    %v147 = vshrl.u32 %v146, 7
    %v148 = vsub.s32 %v145, %v147
    %v149 = vrot.slane %v86, %v148
    %v151 = vunpack.c.l.s4 1983009808
    %v152 = vunpack.c.0.s8 %v151
    %v153 = vlaneseq
    %v154 = vshrl.u32 %v153, 7
    %v155 = vsub.s32 %v152, %v154
    %v156 = vrot.slane %v142, %v155
    %v157 = vcombine.high %v149, %v149
    %v158 = vcombine.high %v156, %v156
    %v175 = vsel %vm20, %v98, -inf
    %v176 = vrot.slane %v175, 4
    %v177 = vmax.f32 %v175, %v176
    %v178 = vrot.slane %v177, 2
    %v179 = vmax.f32 %v177, %v178
    %v180 = vrot.slane %v179, 1
    %v181 = vmax.f32 %v179, %v180
    %v182 = vsel %vm20, %v106, -inf
    %v183 = vrot.slane %v182, 4
    %v184 = vmax.f32 %v182, %v183
    %v185 = vrot.slane %v184, 2
    %v186 = vmax.f32 %v184, %v185
    %v187 = vrot.slane %v186, 1
    %v188 = vmax.f32 %v186, %v187
    %v189 = vsel %vm20, %v105, -inf
    %v190 = vrot.slane %v189, 4
    %v191 = vmax.f32 %v189, %v190
    %v192 = vrot.slane %v191, 2
    %v193 = vmax.f32 %v191, %v192
    %v194 = vrot.slane %v193, 1
    %v195 = vmax.f32 %v193, %v194
    %v196 = vsel %vm20, %v107, -inf
    %v197 = vrot.slane %v196, 4
    %v198 = vmax.f32 %v196, %v197
    %v199 = vrot.slane %v198, 2
    %v200 = vmax.f32 %v198, %v199
    %v201 = vrot.slane %v200, 1
    %v202 = vmax.f32 %v200, %v201
    %v203 = vsel %vm20, %v115, -inf
    %v204 = vrot.slane %v203, 4
    %v205 = vmax.f32 %v203, %v204
    %v206 = vrot.slane %v205, 2
    %v207 = vmax.f32 %v205, %v206
    %v208 = vrot.slane %v207, 1
    %v209 = vmax.f32 %v207, %v208
    %v210 = vsel %vm20, %v123, -inf
    %v211 = vrot.slane %v210, 4
    %v212 = vmax.f32 %v210, %v211
    %v213 = vrot.slane %v212, 2
    %v214 = vmax.f32 %v212, %v213
    %v215 = vrot.slane %v214, 1
    %v216 = vmax.f32 %v214, %v215
    %v217 = vsel %vm20, %v122, -inf
    %v218 = vrot.slane %v217, 4
    %v219 = vmax.f32 %v217, %v218
    %v220 = vrot.slane %v219, 2
    %v221 = vmax.f32 %v219, %v220
    %v222 = vrot.slane %v221, 1
    %v223 = vmax.f32 %v221, %v222
    %v224 = vsel %vm20, %v124, -inf
    %v225 = vrot.slane %v224, 4
    %v226 = vmax.f32 %v224, %v225
    %v227 = vrot.slane %v226, 2
    %v228 = vmax.f32 %v226, %v227
    %v229 = vrot.slane %v228, 1
    %v230 = vmax.f32 %v228, %v229
    %v231 = vsel %vm20, %v132, -inf
    %v232 = vrot.slane %v231, 4
    %v233 = vmax.f32 %v231, %v232
    %v234 = vrot.slane %v233, 2
    %v235 = vmax.f32 %v233, %v234
    %v236 = vrot.slane %v235, 1
    %v237 = vmax.f32 %v235, %v236
    %v238 = vsel %vm20, %v140, -inf
    %v239 = vrot.slane %v238, 4
    %v240 = vmax.f32 %v238, %v239
    %v241 = vrot.slane %v240, 2
    %v242 = vmax.f32 %v240, %v241
    %v243 = vrot.slane %v242, 1
    %v244 = vmax.f32 %v242, %v243
    %v245 = vsel %vm20, %v139, -inf
    %v246 = vrot.slane %v245, 4
    %v247 = vmax.f32 %v245, %v246
    %v248 = vrot.slane %v247, 2
    %v249 = vmax.f32 %v247, %v248
    %v250 = vrot.slane %v249, 1
    %v251 = vmax.f32 %v249, %v250
    %v252 = vsel %vm20, %v141, -inf
    %v253 = vrot.slane %v252, 4
    %v254 = vmax.f32 %v252, %v253
    %v255 = vrot.slane %v254, 2
    %v256 = vmax.f32 %v254, %v255
    %v257 = vrot.slane %v256, 1
    %v258 = vmax.f32 %v256, %v257
    %v259 = vsel %vm20, %v149, -inf
    %v260 = vrot.slane %v259, 4
    %v261 = vmax.f32 %v259, %v260
    %v262 = vrot.slane %v261, 2
    %v263 = vmax.f32 %v261, %v262
    %v264 = vrot.slane %v263, 1
    %v265 = vmax.f32 %v263, %v264
    %v266 = vsel %vm20, %v157, -inf
    %v267 = vrot.slane %v266, 4
    %v268 = vmax.f32 %v266, %v267
    %v269 = vrot.slane %v268, 2
    %v270 = vmax.f32 %v268, %v269
    %v271 = vrot.slane %v270, 1
    %v272 = vmax.f32 %v270, %v271
    %v273 = vsel %vm20, %v156, -inf
    %v274 = vrot.slane %v273, 4
    %v275 = vmax.f32 %v273, %v274
    %v276 = vrot.slane %v275, 2
    %v277 = vmax.f32 %v275, %v276
    %v278 = vrot.slane %v277, 1
    %v279 = vmax.f32 %v277, %v278
    %v280 = vsel %vm20, %v158, -inf
    %v281 = vrot.slane %v280, 4
    %v282 = vmax.f32 %v280, %v281
    %v283 = vrot.slane %v282, 2
    %v284 = vmax.f32 %v282, %v283
    %v285 = vrot.slane %v284, 1
    %v286 = vmax.f32 %v284, %v285
    %vm303 = vcmask 1041409
    %v304 = vsel %vm303, %v188, %v181
    %vm305 = vcmask 1042434
    %v306 = vsel %vm305, %v195, %v304
    %vm307 = vcmask 1043459
    %v308 = vsel %vm307, %v202, %v306
    %vm309 = vcmask 1044484
    %v310 = vsel %vm309, %v209, %v308
    %vm311 = vcmask 1045509
    %v312 = vsel %vm311, %v216, %v310
    %vm313 = vcmask 1046534
    %v314 = vsel %vm313, %v223, %v312
    %vm315 = vcmask 1047559
    %v316 = vsel %vm315, %v230, %v314
    %v317 = vsel %vm303, %v244, %v237
    %v318 = vsel %vm305, %v251, %v317
    %v319 = vsel %vm307, %v258, %v318
    %v320 = vsel %vm309, %v265, %v319
    %v321 = vsel %vm311, %v272, %v320
    %v322 = vsel %vm313, %v279, %v321
    %v323 = vsel %vm315, %v286, %v322
    %326 = vst [vmem:[#allocation2] sm:$0xff] %v316
    %327 = vst [vmem:[#allocation2 + $0x8] sm:$0xff] %v323
    // Predicated region
    $region18: #{cnn_forward.17} parent=1 // pred_check
      _
    $region19: #{cnn_forward.17} parent=1 // pred_check_branch
      %329 = sbr.rel (0) target = $region21
    $region20: #{cnn_forward.17} parent=1 // pred_region
      %s331 = ssub.s32 256, 256
      %332 = vsyncadd [#allocation3], %s331
      %s333 = sshll.u32 [#allocation2], 4
      %s334 = int_to_ptr.vmem [resolvable:$true] %s333
      %339 = dma.vmem_to_hbm [thread:$0]  %s334, 256, %s4, [#allocation3], 128, 128, 8
    $region21: #{cnn_forward.17} parent=1 // pred_fallthru
      _
    // Predicated region
    $region22: #{cnn_forward.17} parent=1 // pred_check
      _
    $region23: #{cnn_forward.17} parent=1 // pred_check_branch
      %341 = sbr.rel (0) target = $region25
    $region24: #{cnn_forward.17} parent=1 // pred_region
      %342 = dma.done [#allocation3], 256
    $region25: #{cnn_forward.17} parent=1 // pred_fallthru
      _
    %343 = vsyncpa [#allocation3], 1

// kernel: cnn_forward.16
$region0: #{cnn_forward.16}
  #allocation0 [shape = 'u32[]', space=smem, size = 0x4, offset = 0x4, fixed_abs, tag = 'smem constant byte address 0x4 - core index']
  #allocation1 [shape = 'u32[144,128]{1,0:T(1,128)}', space=vmem, size = 0x12000, scoped, tag = 'internal scratch']
  %s0 = inlined_call_operand.vmem [shape: f32[2,2,128], index: 0, kind: input, shape index: {}]
  %s1 = inlined_call_operand.vmem [shape: f32[1,128], index: 1, kind: input, shape index: {}]
  %s2 = inlined_call_operand.vmem [shape: f32[1,128], index: 2, kind: input, shape index: {}]
  %s3 = inlined_call_operand.vmem [shape: bf16[4,8,128], index: 3, kind: input, shape index: {}]
  %s4 = inlined_call_operand.vmem [shape: bf16[3,128,128], index: 4, kind: input, shape index: {}]
  %s5 = inlined_call_operand.vmem [shape: f32[1,128], index: 5, kind: input, shape index: {}]
  %s6 = inlined_call_operand.vmem [shape: bf16[4,8,128], index: 6, kind: output, shape index: {0}]
  %s7 = inlined_call_operand.vmem [shape: f32[2,2,128], index: 7, kind: output, shape index: {1}]
  %8 = xla_tuple %s6, %s7
  %s9 = sld [smem:[#allocation0]]
  $region65: #{cnn_forward.16} parent=0
    _
  %s11 = ssub.s32 1, %s9
  %s12 = scalar_select 0, %s11, %s9
  loop: start=0, step=1, limit=4
  $region2: #{cnn_forward.16} parent=0 // loop_pre_header
    _
  $region3: #{cnn_forward.16} parent=0 // loop_header
    %s14 = sphi 0, %s18
    %p15 = scmp.ge.s32.totalorder %s14, 4
    %s22 = sphi 0, %s22
    %s24 = sphi 0, %s22
    %s25 = sphi 0, %s24
    %s39 = sphi 0, %s25
    %s43 = sphi 0, %s43
    %s45 = sphi 0, %s43
    %s46 = sphi 0, %s45
    %s60 = sphi 0, %s46
    %s64 = sphi 0, %s64
    %s66 = sphi 0, %s64
    %s67 = sphi 0, %s66
    %s81 = sphi 0, %s67
    %s87 = sphi 0, %s89
    %s90 = sphi 0, %s87
    %s91 = sphi 0, %s90
    %s107 = sphi 0, %s91
    %s111 = sphi 0, %s111
    %s113 = sphi 0, %s111
    %s114 = sphi 0, %s113
    %s128 = sphi 0, %s114
    %s132 = sphi 0, %s132
    %s134 = sphi 0, %s132
    %s135 = sphi 0, %s134
    %s149 = sphi 0, %s135
    %s155 = sphi 0, %s157
    %s158 = sphi 0, %s155
    %s159 = sphi 0, %s158
    %s175 = sphi 0, %s159
    %s181 = sphi 0, %s183
    %s184 = sphi 0, %s181
    %s185 = sphi 0, %s184
    %s201 = sphi 0, %s185
  $region4: #{cnn_forward.16} parent=0 // loop_header_branch
    %17 = sbr.rel (%p15) target = $region8
  $region5: #{cnn_forward.16} parent=0 // loop_body
    %s19 = ssub.s32 %s14, 1
    %s20 = ssub.s32 %s14, 2
    %s21 = sadd.s32 %s14, 1
    %s23 = sadd.s32 %s22, 1
    %p26 = scmp.eq.s32.totalorder %s14, 1
    %p27 = scmp.ne.s32.totalorder %s22, %s24
    %p28 = scmp.eq.s32.totalorder %s14, 0
    %p29 = por %p27, %p28
    %p30 = scmp.ne.s32.totalorder %s22, %s24
    %p31 = scmp.eq.s32.totalorder %s19, 1
    %p32 = por %p30, %p31
    %p33 = scmp.ne.s32.totalorder %s24, %s25
    %p34 = scmp.eq.s32.totalorder %s19, 0
    %p35 = por %p33, %p34
    %p36 = scmp.ne.s32.totalorder %s24, %s25
    %p37 = scmp.eq.s32.totalorder %s20, 1
    %p38 = por %p36, %p37
    %p40 = scmp.ne.s32.totalorder %s25, %s39
    %p41 = scmp.eq.s32.totalorder %s20, 0
    %p42 = por %p40, %p41
    %s44 = sadd.s32 %s43, 1
    %p47 = scmp.eq.s32.totalorder %s14, 1
    %p48 = scmp.ne.s32.totalorder %s43, %s45
    %p49 = scmp.eq.s32.totalorder %s14, 0
    %p50 = por %p48, %p49
    %p51 = scmp.ne.s32.totalorder %s43, %s45
    %p52 = scmp.eq.s32.totalorder %s19, 1
    %p53 = por %p51, %p52
    %p54 = scmp.ne.s32.totalorder %s45, %s46
    %p55 = scmp.eq.s32.totalorder %s19, 0
    %p56 = por %p54, %p55
    %p57 = scmp.ne.s32.totalorder %s45, %s46
    %p58 = scmp.eq.s32.totalorder %s20, 1
    %p59 = por %p57, %p58
    %p61 = scmp.ne.s32.totalorder %s46, %s60
    %p62 = scmp.eq.s32.totalorder %s20, 0
    %p63 = por %p61, %p62
    %s65 = sadd.s32 %s64, 1
    %p68 = scmp.eq.s32.totalorder %s14, 1
    %p69 = scmp.ne.s32.totalorder %s64, %s66
    %p70 = scmp.eq.s32.totalorder %s14, 0
    %p71 = por %p69, %p70
    %p72 = scmp.ne.s32.totalorder %s64, %s66
    %p73 = scmp.eq.s32.totalorder %s19, 1
    %p74 = por %p72, %p73
    %p75 = scmp.ne.s32.totalorder %s66, %s67
    %p76 = scmp.eq.s32.totalorder %s19, 0
    %p77 = por %p75, %p76
    %p78 = scmp.ne.s32.totalorder %s66, %s67
    %p79 = scmp.eq.s32.totalorder %s20, 1
    %p80 = por %p78, %p79
    %p82 = scmp.ne.s32.totalorder %s67, %s81
    %p83 = scmp.eq.s32.totalorder %s20, 0
    %p84 = por %p82, %p83
    %s85 = ssub.s32 %s14, %s21
    %p86 = scmp.eq.s32.totalorder %s85, 0
    %s88 = sadd.s32 %s87, 1
    %s89 = scalar_select %p86, %s87, %s88
    %p92 = pneg %p86
    %p93 = scmp.eq.s32.totalorder %s14, 1
    %p94 = por %p92, %p93
    %p95 = scmp.ne.s32.totalorder %s87, %s90
    %p96 = scmp.eq.s32.totalorder %s14, 0
    %p97 = por %p95, %p96
    %p98 = scmp.ne.s32.totalorder %s87, %s90
    %p99 = scmp.eq.s32.totalorder %s19, 1
    %p100 = por %p98, %p99
    %p101 = scmp.ne.s32.totalorder %s90, %s91
    %p102 = scmp.eq.s32.totalorder %s19, 0
    %p103 = por %p101, %p102
    %p104 = scmp.ne.s32.totalorder %s90, %s91
    %p105 = scmp.eq.s32.totalorder %s20, 1
    %p106 = por %p104, %p105
    %p108 = scmp.ne.s32.totalorder %s91, %s107
    %p109 = scmp.eq.s32.totalorder %s20, 0
    %p110 = por %p108, %p109
    %s112 = sadd.s32 %s111, 1
    %p115 = scmp.eq.s32.totalorder %s14, 1
    %p116 = scmp.ne.s32.totalorder %s111, %s113
    %p117 = scmp.eq.s32.totalorder %s14, 0
    %p118 = por %p116, %p117
    %p119 = scmp.ne.s32.totalorder %s111, %s113
    %p120 = scmp.eq.s32.totalorder %s19, 1
    %p121 = por %p119, %p120
    %p122 = scmp.ne.s32.totalorder %s113, %s114
    %p123 = scmp.eq.s32.totalorder %s19, 0
    %p124 = por %p122, %p123
    %p125 = scmp.ne.s32.totalorder %s113, %s114
    %p126 = scmp.eq.s32.totalorder %s20, 1
    %p127 = por %p125, %p126
    %p129 = scmp.ne.s32.totalorder %s114, %s128
    %p130 = scmp.eq.s32.totalorder %s20, 0
    %p131 = por %p129, %p130
    %s133 = sadd.s32 %s132, 1
    %p136 = scmp.eq.s32.totalorder %s14, 1
    %p137 = scmp.ne.s32.totalorder %s132, %s134
    %p138 = scmp.eq.s32.totalorder %s14, 0
    %p139 = por %p137, %p138
    %p140 = scmp.ne.s32.totalorder %s132, %s134
    %p141 = scmp.eq.s32.totalorder %s19, 1
    %p142 = por %p140, %p141
    %p143 = scmp.ne.s32.totalorder %s134, %s135
    %p144 = scmp.eq.s32.totalorder %s19, 0
    %p145 = por %p143, %p144
    %p146 = scmp.ne.s32.totalorder %s134, %s135
    %p147 = scmp.eq.s32.totalorder %s20, 1
    %p148 = por %p146, %p147
    %p150 = scmp.ne.s32.totalorder %s135, %s149
    %p151 = scmp.eq.s32.totalorder %s20, 0
    %p152 = por %p150, %p151
    %s153 = ssub.s32 %s14, %s21
    %p154 = scmp.eq.s32.totalorder %s153, 0
    %s156 = sadd.s32 %s155, 1
    %s157 = scalar_select %p154, %s155, %s156
    %p160 = pneg %p154
    %p161 = scmp.eq.s32.totalorder %s14, 1
    %p162 = por %p160, %p161
    %p163 = scmp.ne.s32.totalorder %s155, %s158
    %p164 = scmp.eq.s32.totalorder %s14, 0
    %p165 = por %p163, %p164
    %p166 = scmp.ne.s32.totalorder %s155, %s158
    %p167 = scmp.eq.s32.totalorder %s19, 1
    %p168 = por %p166, %p167
    %p169 = scmp.ne.s32.totalorder %s158, %s159
    %p170 = scmp.eq.s32.totalorder %s19, 0
    %p171 = por %p169, %p170
    %p172 = scmp.ne.s32.totalorder %s158, %s159
    %p173 = scmp.eq.s32.totalorder %s20, 1
    %p174 = por %p172, %p173
    %p176 = scmp.ne.s32.totalorder %s159, %s175
    %p177 = scmp.eq.s32.totalorder %s20, 0
    %p178 = por %p176, %p177
    %s179 = ssub.s32 %s14, %s21
    %p180 = scmp.eq.s32.totalorder %s179, 0
    %s182 = sadd.s32 %s181, 1
    %s183 = scalar_select %p180, %s181, %s182
    %p186 = pneg %p180
    %p187 = scmp.eq.s32.totalorder %s14, 1
    %p188 = por %p186, %p187
    %p189 = scmp.ne.s32.totalorder %s181, %s184
    %p190 = scmp.eq.s32.totalorder %s14, 0
    %p191 = por %p189, %p190
    %p192 = scmp.ne.s32.totalorder %s181, %s184
    %p193 = scmp.eq.s32.totalorder %s19, 1
    %p194 = por %p192, %p193
    %p195 = scmp.ne.s32.totalorder %s184, %s185
    %p196 = scmp.eq.s32.totalorder %s19, 0
    %p197 = por %p195, %p196
    %p198 = scmp.ne.s32.totalorder %s184, %s185
    %p199 = scmp.eq.s32.totalorder %s20, 1
    %p200 = por %p198, %p199
    %p202 = scmp.ne.s32.totalorder %s185, %s201
    %p203 = scmp.eq.s32.totalorder %s20, 0
    %p204 = por %p202, %p203
    %p205 = scmp.le.s32.totalorder 1, %s14
    %p206 = scmp.lt.s32.totalorder %s14, 3
    %p207 = pnand %p205, %p206
    %p208 = pneg %p207
    // Predicated region
    $region9: #{cnn_forward.16} parent=5 // pred_check
      _
    $region10: #{cnn_forward.16} parent=5 // pred_check_branch
      %210 = sbr.rel (%p207) target = $region12
    $region11: #{cnn_forward.16} parent=5 // pred_region
      %s211 = ssub.s32 %s14, 1
      // Predicated region
      $region13: #{cnn_forward.16} parent=11 // pred_check
        %p212 = pneg %p35
      $region14: #{cnn_forward.16} parent=11 // pred_check_branch
        %214 = sbr.rel (%p212) target = $region16
      $region15: #{cnn_forward.16} parent=11 // pred_region
        _
      $region16: #{cnn_forward.16} parent=11 // pred_fallthru
        _
      // Predicated region
      $region17: #{cnn_forward.16} parent=11 // pred_check
        %p215 = pneg %p56
      $region18: #{cnn_forward.16} parent=11 // pred_check_branch
        %217 = sbr.rel (%p215) target = $region20
      $region19: #{cnn_forward.16} parent=11 // pred_region
        _
      $region20: #{cnn_forward.16} parent=11 // pred_fallthru
        _
      // Predicated region
      $region21: #{cnn_forward.16} parent=11 // pred_check
        %p218 = pneg %p77
      $region22: #{cnn_forward.16} parent=11 // pred_check_branch
        %220 = sbr.rel (%p218) target = $region24
      $region23: #{cnn_forward.16} parent=11 // pred_region
        _
      $region24: #{cnn_forward.16} parent=11 // pred_fallthru
        _
      // Predicated region
      $region25: #{cnn_forward.16} parent=11 // pred_check
        %p221 = pneg %p124
      $region26: #{cnn_forward.16} parent=11 // pred_check_branch
        %223 = sbr.rel (%p221) target = $region28
      $region27: #{cnn_forward.16} parent=11 // pred_region
        _
      $region28: #{cnn_forward.16} parent=11 // pred_fallthru
        _
      // Predicated region
      $region29: #{cnn_forward.16} parent=11 // pred_check
        %p224 = pneg %p145
      $region30: #{cnn_forward.16} parent=11 // pred_check_branch
        %226 = sbr.rel (%p224) target = $region32
      $region31: #{cnn_forward.16} parent=11 // pred_region
        _
      $region32: #{cnn_forward.16} parent=11 // pred_fallthru
        _
    $region12: #{cnn_forward.16} parent=5 // pred_fallthru
      _
    %p227 = scmp.lt.s32.totalorder %s14, 2
    // Predicated region
    $region33: #{cnn_forward.16} parent=5 // pred_check
      %p228 = pneg %p227
    $region34: #{cnn_forward.16} parent=5 // pred_check_branch
      %230 = sbr.rel (%p228) target = $region36
    $region35: #{cnn_forward.16} parent=5 // pred_region
      // Predicated region
      $region37: #{cnn_forward.16} parent=35 // pred_check
        %p231 = pneg %p97
      $region38: #{cnn_forward.16} parent=35 // pred_check_branch
        %233 = sbr.rel (%p231) target = $region40
      $region39: #{cnn_forward.16} parent=35 // pred_region
        %s234 = smul.u32 2, %s14
        %p235 = scmp.lt.s32.totalorder %s234, 3
        %s236 = scalar_select %p235, %s234, 3
        %s237 = smul.addr %s236, 4
        %s238 = scalar_lea.vmem %s3, %s237
        %s239 = smul.u32 2, %s14
      $region40: #{cnn_forward.16} parent=35 // pred_fallthru
        _
    $region36: #{cnn_forward.16} parent=5 // pred_fallthru
      _
    %p240 = scmp.le.s32.totalorder 1, %s14
    %p241 = scmp.lt.s32.totalorder %s14, 3
    %p242 = pnand %p240, %p241
    %p243 = pneg %p242
    // Predicated region
    $region41: #{cnn_forward.16} parent=5 // pred_check
      _
    $region42: #{cnn_forward.16} parent=5 // pred_check_branch
      %245 = sbr.rel (%p242) target = $region44
    $region43: #{cnn_forward.16} parent=5 // pred_region
      %s246 = ssub.s32 %s14, 1
      %p247 = pneg %p35
      %p248 = pneg %p32
      %p249 = pneg %p56
      %p250 = pneg %p53
      %p251 = pneg %p77
      %p252 = pneg %p74
      %s253 = smul.u32 2, %s19
      %p254 = scmp.lt.s32.totalorder %s253, 3
      %s255 = scalar_select %p254, %s253, 3
      %s256 = smul.addr %s255, 4
      %s257 = scalar_lea.vmem %s3, %s256
      %p258 = pneg %p103
      %p259 = pneg %p100
      %p260 = pneg %p124
      %p261 = pneg %p121
      %p262 = pneg %p145
      %p263 = pneg %p142
      %p264 = pneg %p171
      %p265 = pneg %p168
      %s266 = smul.u32 2, %s19
      %p267 = scmp.lt.s32.totalorder %s266, 3
      %s268 = scalar_select %p267, %s266, 3
      %s269 = smul.addr %s268, 4
      %s270 = scalar_lea.vmem %s6, %s269
      %p271 = pneg %p197
      %p272 = pneg %p194
      %p273 = scmp.lt.s32.totalorder %s19, 1
      %s274 = scalar_select %p273, %s19, 1
      %s275 = smul.addr %s274, 2
      %s276 = scalar_lea.vmem %s7, %s275
      %s277 = smul.u32 2, %s19
      %p278 = scmp.lt.s32.totalorder %s277, 3
      %s279 = scalar_select %p278, %s277, 3
      %s280 = smul.addr %s279, 4
      %s281 = scalar_lea.vmem %s3, %s280
      %s282 = smul.u32 2, %s19
      %s283 = smul.u32 2, %s19
      %p284 = scmp.lt.s32.totalorder %s283, 3
      %s285 = scalar_select %p284, %s283, 3
      %s286 = smul.addr %s285, 4
      %s287 = scalar_lea.vmem %s6, %s286
      %s288 = smul.u32 2, %s19
      %p289 = scmp.lt.s32.totalorder %s19, 1
      %s290 = scalar_select %p289, %s19, 1
      %s291 = smul.addr %s290, 2
      %s292 = scalar_lea.vmem %s7, %s291
      %v294 = vld [vmem:[%s0] sm:$0x3]
      %v295 = vld [vmem:[%s0 + $0x2] sm:$0x3]
      %vm296 = vcmask 1041408
      %v297 = vsel %vm296, %v294, 0.0
      %v298 = vsel %vm296, %v295, 0.0
      %v299 = vadd.f32 %v297, %v298
      %v300 = vld [vmem:[%s1] sm:$0x1]
      %v301 = vld [vmem:[%s2] sm:$0x1]
      %v302 = vmul.f32 %v299, 0.03125
      %v303 = vmul.f32 %v302, %v302
      %v305 = vrot.slane %v303, 7
      %v307 = vsub.f32 %v302, %v305
      %v308 = vmax.f32 %v307, 0.0
      %v309 = vadd.f32 %v308, 1e-05
      %v310 = vrsqrt.pop %v309
      %v313 = vunpack.c.l.s4 1966171168
      %v314 = vunpack.c.0.s8 %v313
      %v315 = vlaneseq
      %v316 = vshrl.u32 %v315, 7
      %v317 = vsub.s32 %v314, %v316
      %v318 = vrot.slane %v310, %v317
      %v319 = vcombine.high %v318, %v318
      %v321 = vunpack.c.l.s4 1966171168
      %v322 = vunpack.c.0.s8 %v321
      %v323 = vlaneseq
      %v324 = vshrl.u32 %v323, 7
      %v325 = vsub.s32 %v322, %v324
      %v326 = vrot.slane %v319, %v325
      %v328 = vmul.f32 %v300, %v326
      %v329 = vmul.f32 %v302, %v328
      %v330 = vsub.f32 %v301, %v329
      %v331 = vld [vmem:[%s281] sm:$0xf]
      %v332 = vld [vmem:[%s281 + $0x4] sm:$0xf]
      %v333 = vunpack.c.l.bf16 %v331
      %v334 = vunpack.c.l.bf16 %v332
      %v336 = vlaneseq
      %v337 = vshrl.u32 %v336, 7
      %v338 = vsub.s32 0, %v337
      %v339 = vrot.slane %v328, %v338
      %v341 = vmul.f32 %v339, %v333
      %v342 = vmul.f32 %v339, %v334
      %v344 = vlaneseq
      %v345 = vshrl.u32 %v344, 7
      %v346 = vsub.s32 0, %v345
      %v347 = vrot.slane %v330, %v346
      %v349 = vadd.f32 %v341, %v347
      %v350 = vadd.f32 %v342, %v347
      %v351 = vlaneseq
      %v352 = vshrl.u32 %v351, 7
      %vm353 = vcmp.eq.s32.totalorder %v352, 0
      %v354 = vsel %vm353, 0.0, 1.0
      %vm355 = vcmp.eq.s32.totalorder %v352, 7
      %v356 = vsel %vm355, 0.0, 1.0
      %v357 = vrot.slane %v349, 7
      %v358 = vrot.slane %v350, 7
      %vm359 = vcmp.lt.s32.totalorder %v352, 1
      %v360 = vsel %vm359, %v357, %v358
      %v361 = vsel %vm359, %v358, %v357
      %v362 = vmul.f32 %v361, %v354
      %v363 = vmul.f32 %v360, %v354
      %v364 = vrot.slane %v349, 1
      %v365 = vrot.slane %v350, 1
      %vm366 = vcmp.lt.s32.totalorder %v352, 7
      %v367 = vsel %vm366, %v364, %v365
      %v368 = vsel %vm366, %v365, %v364
      %v369 = vmul.f32 %v367, %v356
      %v370 = vmul.f32 %v368, %v356
      %v371 = vpack.c.bf16 %v350, %v349
      %v372 = vpack.c.bf16 %v363, %v362
      %v373 = vpack.c.bf16 %v370, %v369
      %v374 = vld [vmem:[%s4] sm:$0xf]
      %v375 = vld [vmem:[%s4 + $0x4] sm:$0xf]
      %v376 = vld [vmem:[%s4 + $0x8] sm:$0xf]
      %v377 = vld [vmem:[%s4 + $0xc] sm:$0xf]
      %v378 = vld [vmem:[%s4 + $0x10] sm:$0xf]
      %v379 = vld [vmem:[%s4 + $0x14] sm:$0xf]
      %v380 = vld [vmem:[%s4 + $0x18] sm:$0xf]
      %v381 = vld [vmem:[%s4 + $0x1c] sm:$0xf]
      %v382 = vld [vmem:[%s4 + $0x20] sm:$0xf]
      %v383 = vld [vmem:[%s4 + $0x24] sm:$0xf]
      %v384 = vld [vmem:[%s4 + $0x28] sm:$0xf]
      %v385 = vld [vmem:[%s4 + $0x2c] sm:$0xf]
      %v386 = vld [vmem:[%s4 + $0x30] sm:$0xf]
      %v387 = vld [vmem:[%s4 + $0x34] sm:$0xf]
      %v388 = vld [vmem:[%s4 + $0x38] sm:$0xf]
      %v389 = vld [vmem:[%s4 + $0x3c] sm:$0xf]
      %s390 = scalar_lea.vmem %s4, 64
      %v391 = vld [vmem:[%s390] sm:$0xf]
      %v392 = vld [vmem:[%s390 + $0x4] sm:$0xf]
      %v393 = vld [vmem:[%s390 + $0x8] sm:$0xf]
      %v394 = vld [vmem:[%s390 + $0xc] sm:$0xf]
      %v395 = vld [vmem:[%s390 + $0x10] sm:$0xf]
      %v396 = vld [vmem:[%s390 + $0x14] sm:$0xf]
      %v397 = vld [vmem:[%s390 + $0x18] sm:$0xf]
      %v398 = vld [vmem:[%s390 + $0x1c] sm:$0xf]
      %v399 = vld [vmem:[%s390 + $0x20] sm:$0xf]
      %v400 = vld [vmem:[%s390 + $0x24] sm:$0xf]
      %v401 = vld [vmem:[%s390 + $0x28] sm:$0xf]
      %v402 = vld [vmem:[%s390 + $0x2c] sm:$0xf]
      %v403 = vld [vmem:[%s390 + $0x30] sm:$0xf]
      %v404 = vld [vmem:[%s390 + $0x34] sm:$0xf]
      %v405 = vld [vmem:[%s390 + $0x38] sm:$0xf]
      %v406 = vld [vmem:[%s390 + $0x3c] sm:$0xf]
      %v423 = vunpack.c.l.b16 %v391
      %v424 = vunpack.c.l.b16 %v392
      %v425 = vunpack.c.l.b16 %v393
      %v426 = vunpack.c.l.b16 %v394
      %v427 = vunpack.c.l.b16 %v395
      %v428 = vunpack.c.l.b16 %v396
      %v429 = vunpack.c.l.b16 %v397
      %v430 = vunpack.c.l.b16 %v398
      %v431 = vunpack.c.l.b16 %v399
      %v432 = vunpack.c.l.b16 %v400
      %v433 = vunpack.c.l.b16 %v401
      %v434 = vunpack.c.l.b16 %v402
      %v435 = vunpack.c.l.b16 %v403
      %v436 = vunpack.c.l.b16 %v404
      %v437 = vunpack.c.l.b16 %v405
      %v438 = vunpack.c.l.b16 %v406
      %v439 = vpack.c.b16 %v424, %v423
      %v440 = vpack.c.b16 %v426, %v425
      %v441 = vpack.c.b16 %v428, %v427
      %v442 = vpack.c.b16 %v430, %v429
      %v443 = vpack.c.b16 %v432, %v431
      %v444 = vpack.c.b16 %v434, %v433
      %v445 = vpack.c.b16 %v436, %v435
      %v446 = vpack.c.b16 %v438, %v437
      %455 = vmatprep.subr.bf16.mxu0 0
      %456 = vmatpush1.bf16.msra.mxu0 %v446
      %457 = vmatprep.subr.bf16.mxu0 0
      %458 = vmatpush1.bf16.msra.mxu0 %v445
      %459 = vmatprep.subr.bf16.mxu0 0
      %460 = vmatpush1.bf16.msra.mxu0 %v444
      %461 = vmatprep.subr.bf16.mxu0 0
      %462 = vmatpush1.bf16.msra.mxu0 %v443
      %463 = vmatprep.subr.bf16.mxu0 0
      %464 = vmatpush1.bf16.msra.mxu0 %v442
      %465 = vmatprep.subr.bf16.mxu0 0
      %466 = vmatpush1.bf16.msra.mxu0 %v441
      %467 = vmatprep.subr.bf16.mxu0 0
      %468 = vmatpush1.bf16.msra.mxu0 %v440
      %469 = vmatprep.subr.bf16.mxu0 0
      %470 = vmatpush1.bf16.msra.mxu0 %v439
      %471 = vmatprep.subr.bf16.mxu0 0
      %472 = vmatpush2.bf16.msra.mxu0 0
      %473 = vmatprep.subr.bf16.mxu0 0
      %474 = vmatpush2.bf16.msra.mxu0 0
      %475 = vmatprep.subr.bf16.mxu0 0
      %476 = vmatpush2.bf16.msra.mxu0 0
      %477 = vmatprep.subr.bf16.mxu0 0
      %478 = vmatpush2.bf16.msra.mxu0 0
      %479 = vmatprep.subr.bf16.mxu0 0
      %480 = vmatpush2.bf16.msra.mxu0 0
      %481 = vmatprep.subr.bf16.mxu0 0
      %482 = vmatpush2.bf16.msra.mxu0 0
      %483 = vmatprep.subr.bf16.mxu0 0
      %484 = vmatpush2.bf16.msra.mxu0 0
      %485 = vmatprep.subr.bf16.mxu0 0
      %486 = vmatpush2.bf16.msra.mxu0 0
      %487 = vmatprep.mubr.bf16.mxu0 0
      %488 = vmatmul.mubr.bf16.gmra.mxu0 %v371
      %v489 = vpop.f32.mrf.mxu0
      %v490 = vadd.f32 0.0, %v489
      %v491 = vpop.f32.mrf.mxu0
      %v492 = vpop.f32.mrf.mxu0
      %v493 = vadd.f32 0.0, %v492
      %v494 = vpop.f32.mrf.mxu0
      %495 = vdwg.mxu0
      %v512 = vunpack.c.l.b16 %v374
      %v513 = vunpack.c.l.b16 %v375
      %v514 = vunpack.c.l.b16 %v376
      %v515 = vunpack.c.l.b16 %v377
      %v516 = vunpack.c.l.b16 %v378
      %v517 = vunpack.c.l.b16 %v379
      %v518 = vunpack.c.l.b16 %v380
      %v519 = vunpack.c.l.b16 %v381
      %v520 = vunpack.c.l.b16 %v382
      %v521 = vunpack.c.l.b16 %v383
      %v522 = vunpack.c.l.b16 %v384
      %v523 = vunpack.c.l.b16 %v385
      %v524 = vunpack.c.l.b16 %v386
      %v525 = vunpack.c.l.b16 %v387
      %v526 = vunpack.c.l.b16 %v388
      %v527 = vunpack.c.l.b16 %v389
      %v528 = vpack.c.b16 %v513, %v512
      %v529 = vpack.c.b16 %v515, %v514
      %v530 = vpack.c.b16 %v517, %v516
      %v531 = vpack.c.b16 %v519, %v518
      %v532 = vpack.c.b16 %v521, %v520
      %v533 = vpack.c.b16 %v523, %v522
      %v534 = vpack.c.b16 %v525, %v524
      %v535 = vpack.c.b16 %v527, %v526
      %544 = vmatprep.subr.bf16.mxu0 0
      %545 = vmatpush1.bf16.msra.mxu0 %v535
      %546 = vmatprep.subr.bf16.mxu0 0
      %547 = vmatpush1.bf16.msra.mxu0 %v534
      %548 = vmatprep.subr.bf16.mxu0 0
      %549 = vmatpush1.bf16.msra.mxu0 %v533
      %550 = vmatprep.subr.bf16.mxu0 0
      %551 = vmatpush1.bf16.msra.mxu0 %v532
      %552 = vmatprep.subr.bf16.mxu0 0
      %553 = vmatpush1.bf16.msra.mxu0 %v531
      %554 = vmatprep.subr.bf16.mxu0 0
      %555 = vmatpush1.bf16.msra.mxu0 %v530
      %556 = vmatprep.subr.bf16.mxu0 0
      %557 = vmatpush1.bf16.msra.mxu0 %v529
      %558 = vmatprep.subr.bf16.mxu0 0
      %559 = vmatpush1.bf16.msra.mxu0 %v528
      %560 = vmatprep.subr.bf16.mxu0 0
      %561 = vmatpush2.bf16.msra.mxu0 0
      %562 = vmatprep.subr.bf16.mxu0 0
      %563 = vmatpush2.bf16.msra.mxu0 0
      %564 = vmatprep.subr.bf16.mxu0 0
      %565 = vmatpush2.bf16.msra.mxu0 0
      %566 = vmatprep.subr.bf16.mxu0 0
      %567 = vmatpush2.bf16.msra.mxu0 0
      %568 = vmatprep.subr.bf16.mxu0 0
      %569 = vmatpush2.bf16.msra.mxu0 0
      %570 = vmatprep.subr.bf16.mxu0 0
      %571 = vmatpush2.bf16.msra.mxu0 0
      %572 = vmatprep.subr.bf16.mxu0 0
      %573 = vmatpush2.bf16.msra.mxu0 0
      %574 = vmatprep.subr.bf16.mxu0 0
      %575 = vmatpush2.bf16.msra.mxu0 0
      %576 = vmatprep.mubr.bf16.mxu0 0
      %577 = vmatmul.mubr.bf16.gmra.mxu0 %v372
      %v578 = vpop.f32.mrf.mxu0
      %v579 = vadd.f32 %v490, %v578
      %v580 = vpop.f32.mrf.mxu0
      %v581 = vpop.f32.mrf.mxu0
      %v582 = vadd.f32 %v493, %v581
      %v583 = vpop.f32.mrf.mxu0
      %584 = vdwg.mxu0
      %s585 = scalar_lea.vmem %s4, 128
      %v586 = vld [vmem:[%s585] sm:$0xf]
      %v587 = vld [vmem:[%s585 + $0x4] sm:$0xf]
      %v588 = vld [vmem:[%s585 + $0x8] sm:$0xf]
      %v589 = vld [vmem:[%s585 + $0xc] sm:$0xf]
      %v590 = vld [vmem:[%s585 + $0x10] sm:$0xf]
      %v591 = vld [vmem:[%s585 + $0x14] sm:$0xf]
      %v592 = vld [vmem:[%s585 + $0x18] sm:$0xf]
      %v593 = vld [vmem:[%s585 + $0x1c] sm:$0xf]
      %v594 = vld [vmem:[%s585 + $0x20] sm:$0xf]
      %v595 = vld [vmem:[%s585 + $0x24] sm:$0xf]
      %v596 = vld [vmem:[%s585 + $0x28] sm:$0xf]
      %v597 = vld [vmem:[%s585 + $0x2c] sm:$0xf]
      %v598 = vld [vmem:[%s585 + $0x30] sm:$0xf]
      %v599 = vld [vmem:[%s585 + $0x34] sm:$0xf]
      %v600 = vld [vmem:[%s585 + $0x38] sm:$0xf]
      %v601 = vld [vmem:[%s585 + $0x3c] sm:$0xf]
      %v618 = vunpack.c.l.b16 %v586
      %v619 = vunpack.c.l.b16 %v587
      %v620 = vunpack.c.l.b16 %v588
      %v621 = vunpack.c.l.b16 %v589
      %v622 = vunpack.c.l.b16 %v590
      %v623 = vunpack.c.l.b16 %v591
      %v624 = vunpack.c.l.b16 %v592
      %v625 = vunpack.c.l.b16 %v593
      %v626 = vunpack.c.l.b16 %v594
      %v627 = vunpack.c.l.b16 %v595
      %v628 = vunpack.c.l.b16 %v596
      %v629 = vunpack.c.l.b16 %v597
      %v630 = vunpack.c.l.b16 %v598
      %v631 = vunpack.c.l.b16 %v599
      %v632 = vunpack.c.l.b16 %v600
      %v633 = vunpack.c.l.b16 %v601
      %v634 = vpack.c.b16 %v619, %v618
      %v635 = vpack.c.b16 %v621, %v620
      %v636 = vpack.c.b16 %v623, %v622
      %v637 = vpack.c.b16 %v625, %v624
      %v638 = vpack.c.b16 %v627, %v626
      %v639 = vpack.c.b16 %v629, %v628
      %v640 = vpack.c.b16 %v631, %v630
      %v641 = vpack.c.b16 %v633, %v632
      %650 = vmatprep.subr.bf16.mxu0 0
      %651 = vmatpush1.bf16.msra.mxu0 %v641
      %652 = vmatprep.subr.bf16.mxu0 0
      %653 = vmatpush1.bf16.msra.mxu0 %v640
      %654 = vmatprep.subr.bf16.mxu0 0
      %655 = vmatpush1.bf16.msra.mxu0 %v639
      %656 = vmatprep.subr.bf16.mxu0 0
      %657 = vmatpush1.bf16.msra.mxu0 %v638
      %658 = vmatprep.subr.bf16.mxu0 0
      %659 = vmatpush1.bf16.msra.mxu0 %v637
      %660 = vmatprep.subr.bf16.mxu0 0
      %661 = vmatpush1.bf16.msra.mxu0 %v636
      %662 = vmatprep.subr.bf16.mxu0 0
      %663 = vmatpush1.bf16.msra.mxu0 %v635
      %664 = vmatprep.subr.bf16.mxu0 0
      %665 = vmatpush1.bf16.msra.mxu0 %v634
      %666 = vmatprep.subr.bf16.mxu0 0
      %667 = vmatpush2.bf16.msra.mxu0 0
      %668 = vmatprep.subr.bf16.mxu0 0
      %669 = vmatpush2.bf16.msra.mxu0 0
      %670 = vmatprep.subr.bf16.mxu0 0
      %671 = vmatpush2.bf16.msra.mxu0 0
      %672 = vmatprep.subr.bf16.mxu0 0
      %673 = vmatpush2.bf16.msra.mxu0 0
      %674 = vmatprep.subr.bf16.mxu0 0
      %675 = vmatpush2.bf16.msra.mxu0 0
      %676 = vmatprep.subr.bf16.mxu0 0
      %677 = vmatpush2.bf16.msra.mxu0 0
      %678 = vmatprep.subr.bf16.mxu0 0
      %679 = vmatpush2.bf16.msra.mxu0 0
      %680 = vmatprep.subr.bf16.mxu0 0
      %681 = vmatpush2.bf16.msra.mxu0 0
      %682 = vmatprep.mubr.bf16.mxu0 0
      %683 = vmatmul.mubr.bf16.gmra.mxu0 %v373
      %v684 = vpop.f32.mrf.mxu0
      %v685 = vadd.f32 0.0, %v684
      %v686 = vpop.f32.mrf.mxu0
      %v687 = vpop.f32.mrf.mxu0
      %v688 = vadd.f32 0.0, %v687
      %v689 = vpop.f32.mrf.mxu0
      %690 = vdwg.mxu0
      %v691 = vadd.f32 %v579, %v685
      %v692 = vadd.f32 %v582, %v688
      %v693 = vld [vmem:[%s5] sm:$0x1]
      %v695 = vlaneseq
      %v696 = vshrl.u32 %v695, 7
      %v697 = vsub.s32 0, %v696
      %v698 = vrot.slane %v693, %v697
      %v700 = vadd.f32 %v691, %v698
      %v701 = vadd.f32 %v692, %v698
      %v702 = vadd.f32 %v700, %v701
      %v703 = vrot.slane %v702, 4
      %v704 = vadd.f32 %v702, %v703
      %v705 = vrot.slane %v704, 2
      %v706 = vadd.f32 %v704, %v705
      %v707 = vrot.slane %v706, 1
      %v708 = vadd.f32 %v706, %v707
      %v709 = vmul.f32 %v700, %v700
      %v710 = vmul.f32 %v701, %v701
      %v711 = vadd.f32 %v709, %v710
      %v712 = vrot.slane %v711, 4
      %v713 = vadd.f32 %v711, %v712
      %v714 = vrot.slane %v713, 2
      %v715 = vadd.f32 %v713, %v714
      %v716 = vrot.slane %v715, 1
      %v717 = vadd.f32 %v715, %v716
      %vm718 = vcmask 1040384
      %v719 = vsel %vm718, %v708, %v717
      %720 = vst [vmem:[%s292] sm:$0x3] %v719
      %v721 = vpack.c.bf16 %v700, %v700
      %v722 = vpack.c.bf16 %v701, %v701
      %723 = vst [vmem:[%s287] sm:$0xf] %v721
      %724 = vst [vmem:[%s287 + $0x4] sm:$0xf] %v722
      %s725 = smul.u32 2, %s19
      %p726 = scmp.lt.s32.totalorder %s725, 3
      %s727 = scalar_select %p726, %s725, 3
      %s728 = smul.addr %s727, 4
      %s729 = scalar_lea.vmem %s6, %s728
      %p730 = scmp.lt.s32.totalorder %s19, 1
      %s731 = scalar_select %p730, %s19, 1
      %s732 = smul.addr %s731, 2
      %s733 = scalar_lea.vmem %s7, %s732
      // Predicated region
      $region45: #{cnn_forward.16} parent=43 // pred_check
        %p734 = pneg %p168
      $region46: #{cnn_forward.16} parent=43 // pred_check_branch
        %736 = sbr.rel (%p734) target = $region48
      $region47: #{cnn_forward.16} parent=43 // pred_region
        %s737 = smul.u32 2, %s19
      $region48: #{cnn_forward.16} parent=43 // pred_fallthru
        _
      // Predicated region
      $region49: #{cnn_forward.16} parent=43 // pred_check
        %p738 = pneg %p194
      $region50: #{cnn_forward.16} parent=43 // pred_check_branch
        %740 = sbr.rel (%p738) target = $region52
      $region51: #{cnn_forward.16} parent=43 // pred_region
        _
      $region52: #{cnn_forward.16} parent=43 // pred_fallthru
        _
    $region44: #{cnn_forward.16} parent=5 // pred_fallthru
      _
    %p741 = scmp.le.s32.totalorder 2, %s14
    // Predicated region
    $region53: #{cnn_forward.16} parent=5 // pred_check
      %p742 = pneg %p741
    $region54: #{cnn_forward.16} parent=5 // pred_check_branch
      %744 = sbr.rel (%p742) target = $region56
    $region55: #{cnn_forward.16} parent=5 // pred_region
      %s745 = ssub.s32 %s14, 2
      // Predicated region
      $region57: #{cnn_forward.16} parent=55 // pred_check
        %p746 = pneg %p174
      $region58: #{cnn_forward.16} parent=55 // pred_check_branch
        %748 = sbr.rel (%p746) target = $region60
      $region59: #{cnn_forward.16} parent=55 // pred_region
        %s749 = smul.u32 2, %s20
        %p750 = scmp.lt.s32.totalorder %s749, 3
        %s751 = scalar_select %p750, %s749, 3
        %s752 = smul.addr %s751, 4
        %s753 = scalar_lea.vmem %s6, %s752
      $region60: #{cnn_forward.16} parent=55 // pred_fallthru
        _
      // Predicated region
      $region61: #{cnn_forward.16} parent=55 // pred_check
        %p754 = pneg %p200
      $region62: #{cnn_forward.16} parent=55 // pred_check_branch
        %756 = sbr.rel (%p754) target = $region64
      $region63: #{cnn_forward.16} parent=55 // pred_region
        %p757 = scmp.lt.s32.totalorder %s20, 1
        %s758 = scalar_select %p757, %s20, 1
        %s759 = smul.addr %s758, 2
        %s760 = scalar_lea.vmem %s7, %s759
      $region64: #{cnn_forward.16} parent=55 // pred_fallthru
        _
    $region56: #{cnn_forward.16} parent=5 // pred_fallthru
      _
  $region6: #{cnn_forward.16} parent=0 // loop_footer
    %s18 = sadd.s32 1, %s14
  $region7: #{cnn_forward.16} parent=0 // loop_footer_branch
    %13 = sbr.rel target = $region3
  $region8: #{cnn_forward.16} parent=0 // loop_exit
    _

</llo_original>
